<compile_context>
chip_gen: v6e
topology: v6e:2x2x1
jax: 0.10.0
libtpu: 0.0.40
codegen_flags: <defaults>
</compile_context>

<pallas_src>
import math
import functools

import jax
import jax.numpy as jnp
from jax.experimental import pallas as pl
from jax.experimental.pallas import tpu as pltpu

# ----------------------------- small config ---------------------------------
INPUT_DIM = 64      # module default 2048
D_MODEL = 32        # module default 1024
NUM_HEADS = 4       # module default 32
NUM_LAYERS = 2      # module default 16
MAX_LEN = 128       # module default 5000 (only [:seq_len] is used)
BATCH = 2
SEQ = 8
LN_EPS = 1e-5


# ------------------------- elementwise math helpers --------------------------
def _gelu(x):
    # TODO(synk): PyTorch nn.GELU() is exact erf-GELU; tanh approximation kept for a
    # Mosaic-safe lowering (difference ~1e-3, same approximation used in the reference).
    c = math.sqrt(2.0 / math.pi)
    return 0.5 * x * (1.0 + jnp.tanh(c * (x + 0.044715 * x * x * x)))


def _sigmoid(x):
    return 1.0 / (1.0 + jnp.exp(-x))


def _softplus(x):
    # torch Softplus (beta=1, threshold=20), numerically stable form.
    return jnp.where(x > 20.0, x,
                     jnp.maximum(x, 0.0) + jnp.log(1.0 + jnp.exp(-jnp.abs(x))))


def _layernorm(x, g, b):
    mu = jnp.mean(x, axis=-1, keepdims=True)
    var = jnp.mean((x - mu) * (x - mu), axis=-1, keepdims=True)
    return (x - mu) * jax.lax.rsqrt(var + LN_EPS) * g + b


# ----------------------- in-kernel multi-head attention ----------------------
def _mha(h_flat, w_qkv, b_qkv, w_out, b_out, *, batch, seq, num_heads):
    """Self-attention over `batch` independent length-`seq` sequences.

    h_flat: (batch*seq, D) tokens, feature dim on lanes (lane-dense).
    w_qkv:  (D, 3D)   torch in_proj_weight.T, columns ordered [q | k | v].
    w_out:  (D, D)    out_proj weight stored (in, out).
    No transposes anywhere; all matmuls consume the stored layouts directly.
    """
    D = h_flat.shape[-1]
    H = num_heads
    Dh = D // H
    scale = 1.0 / math.sqrt(Dh)

    # One lane-dense packed QKV projection over ALL tokens of ALL sequences.
    qkv = jnp.dot(h_flat, w_qkv, preferred_element_type=jnp.float32) + b_qkv  # (B*S, 3D)

    # Stack (batch, head) slabs so the score / PV matmuls run as ONE batched einsum
    # over every (batch, head) pair. Static slicing + leading-axis stack only
    # (data movement, no per-head matmuls, no accumulate-adds).
    def heads(col_off):
        return jnp.stack(
            [qkv[b * seq:(b + 1) * seq, col_off + hh * Dh: col_off + (hh + 1) * Dh]
             for b in range(batch) for hh in range(H)], axis=0)          # (B*H, S, Dh)

    q, k, v = heads(0), heads(D), heads(2 * D)

    s = jnp.einsum('bqd,bkd->bqk', q, k,
                   preferred_element_type=jnp.float32) * scale           # (B*H, S, S)
    m = jnp.max(s, axis=-1, keepdims=True)
    p = jnp.exp(s - m)
    p = p / jnp.sum(p, axis=-1, keepdims=True)          # exact softmax (f32)
    ctx = jnp.einsum('bqk,bkd->bqd', p, v,
                     preferred_element_type=jnp.float32)                 # (B*H, S, Dh)

    # Stack heads back onto the lane axis / sequences back onto rows, then do the
    # output projection as ONE (B*S, D) @ (D, D) matmul over all tokens.
    attn = jnp.concatenate(
        [jnp.concatenate([ctx[b * H + hh] for hh in range(H)], axis=-1)   # (S, D)
         for b in range(batch)], axis=0)                                  # (B*S, D)
    return jnp.dot(attn, w_out, preferred_element_type=jnp.float32) + b_out


# ------------------------------ fused kernel ---------------------------------
def fused_forward_kernel(*refs, batch, seq, num_layers, num_heads):
    x_ref, out_ref = refs[0], refs[-1]
    it = iter(refs[1:-1])

    def ld():
        return next(it)[...]

    x = x_ref[...]                                 # (B*S, input_dim), batch folded in rows
    pos = ld()                                     # (B*S, D), pre-tiled over batch
    in_g, in_b = ld(), ld()
    in_w, in_bias = ld(), ld()

    # input_norm -> input_proj (Linear + GELU; Dropout = identity) -> + pos_encoding
    h = _layernorm(x, in_g, in_b)
    h = _gelu(jnp.dot(h, in_w, preferred_element_type=jnp.float32) + in_bias)
    h = h + pos                                    # (B*S, D)

    # Transformer encoder stack (norm_first=True, activation='gelu', no final norm).
    # TODO(synk): at 16 real layers this unroll becomes stacked weights + a grid
    # axis over layers (auto-pipelined DMA); at 2 demo layers the unroll is fine.
    for _ in range(num_layers):
        n1g, n1b = ld(), ld()
        w_qkv, b_qkv, w_o, b_o = ld(), ld(), ld(), ld()
        n2g, n2b = ld(), ld()
        fw1, fb1, fw2, fb2 = ld(), ld(), ld(), ld()

        h = h + _mha(_layernorm(h, n1g, n1b), w_qkv, b_qkv, w_o, b_o,
                     batch=batch, seq=seq, num_heads=num_heads)
        hn = _layernorm(h, n2g, n2b)
        ff = jnp.dot(_gelu(jnp.dot(hn, fw1, preferred_element_type=jnp.float32) + fb1),
                     fw2, preferred_element_type=jnp.float32) + fb2
        h = h + ff

    # Final MultiheadAttention + mean pool over each sequence.
    fwq, fbq, fwo, fbo = ld(), ld(), ld(), ld()
    attn_out = _mha(h, fwq, fbq, fwo, fbo,
                    batch=batch, seq=seq, num_heads=num_heads)            # (B*S, D)

    # Mean pool as a tiny MXU matmul with an iota-built (B, B*S) pooling matrix
    # (avoids narrow-row concatenates).
    tokens = batch * seq
    row = jax.lax.broadcasted_iota(jnp.int32, (batch, tokens), 0)
    col = jax.lax.broadcasted_iota(jnp.int32, (batch, tokens), 1)
    pool = jnp.where((col >= row * seq) & (col < (row + 1) * seq),
                     jnp.float32(1.0 / seq), jnp.float32(0.0))
    pooled = jnp.dot(pool, attn_out, preferred_element_type=jnp.float32)  # (B, D)

    # Shared LayerNorm normalization for all four heads (gamma/beta applied per head:
    # explicitly for the price head, folded into the packed weights for the others).
    mu = jnp.mean(pooled, axis=-1, keepdims=True)
    var = jnp.mean((pooled - mu) * (pooled - mu), axis=-1, keepdims=True)
    pooled_n = (pooled - mu) * jax.lax.rsqrt(var + LN_EPS)

    # price head.
    pg, pb = ld(), ld()
    pw1, pb1, pw2, pb2, pw3, pb3 = ld(), ld(), ld(), ld(), ld(), ld()
    ph = pooled_n * pg + pb
    ph = _gelu(jnp.dot(ph, pw1, preferred_element_type=jnp.float32) + pb1)
    ph = _gelu(jnp.dot(ph, pw2, preferred_element_type=jnp.float32) + pb2)
    price = jnp.dot(ph, pw3, preferred_element_type=jnp.float32) + pb3    # (B, 1)

    # confidence / volatility / uncertainty heads, packed into two matmuls.
    sw1, sb1, sw2, sb2 = ld(), ld(), ld(), ld()
    sh = _gelu(jnp.dot(pooled_n, sw1, preferred_element_type=jnp.float32) + sb1)
    s4 = jnp.dot(sh, sw2, preferred_element_type=jnp.float32) + sb2       # (B, 4)

    # Pack [price, sigmoid(conf), softplus(vol), softplus(unc)] into one (B, 4) store.
    ocol = jax.lax.broadcasted_iota(jnp.int32, s4.shape, 1)
    out_ref[...] = jnp.where(ocol == 0, price,
                             jnp.where(ocol == 1, _sigmoid(s4), _softplus(s4)))


# ---------------------------- parameter packing -------------------------------
def _pack_params(params, batch, seq_len):
    """Flatten parameters into the exact ordered list the fused kernel consumes."""
    d = params["input_proj_w"].shape[1]
    din = params["input_proj_w"].shape[0]
    dq = d // 4

    pos = params["pos_enc"][:seq_len]
    pos_tiled = jnp.broadcast_to(pos[None], (batch, seq_len, d)).reshape(batch * seq_len, d)

    flat = [
        pos_tiled,
        params["input_norm_g"].reshape(1, din),
        params["input_norm_b"].reshape(1, din),
        params["input_proj_w"],
        params["input_proj_b"].reshape(1, d),
    ]

    def add_attn(ap):
        flat.extend([
            ap["in_proj_w"].T,                     # (D, 3D): lane-dense QKV columns [q|k|v]
            ap["in_proj_b"].reshape(1, 3 * d),
            ap["out_w"],                           # (D, D), (in, out) layout
            ap["out_b"].reshape(1, d),
        ])

    for lp in params["layers"]:
        flat.extend([lp["norm1_g"].reshape(1, d), lp["norm1_b"].reshape(1, d)])
        add_attn(lp["attn"])
        flat.extend([lp["norm2_g"].reshape(1, d), lp["norm2_b"].reshape(1, d),
                     lp["ffn_w1"], lp["ffn_b1"].reshape(1, 4 * d),
                     lp["ffn_w2"], lp["ffn_b2"].reshape(1, d)])

    add_attn(params["final_attn"])

    ph = params["price_head"]
    flat.extend([ph["ln_g"].reshape(1, d), ph["ln_b"].reshape(1, d),
                 ph["w1"], ph["b1"].reshape(1, d // 2),
                 ph["w2"], ph["b2"].reshape(1, dq),
                 ph["w3"], ph["b3"].reshape(1, 1)])

    # Small heads: fold each head's LayerNorm affine into its first Linear (exact,
    # the LN normalization itself is gamma/beta independent), pack the three first
    # Linears side by side and the three second Linears block-diagonally into
    # output columns [1, 2, 3] (column 0 is reserved for price).
    w1s, b1s = [], []
    sw2 = jnp.zeros((3 * dq, 4), jnp.float32)
    sb2 = jnp.zeros((4,), jnp.float32)
    for i, name in enumerate(("confidence_head", "volatility_head", "uncertainty_head")):
        hp = params[name]
        w1s.append(hp["ln_g"][:, None] * hp["w1"])
        b1s.append(hp["ln_b"] @ hp["w1"] + hp["b1"])
        sw2 = sw2.at[i * dq:(i + 1) * dq, i + 1].set(hp["w2"][:, 0])
        sb2 = sb2.at[i + 1].set(hp["b2"][0])
    flat.extend([jnp.concatenate(w1s, axis=1),
                 jnp.concatenate(b1s).reshape(1, 3 * dq),
                 sw2, sb2.reshape(1, 4)])
    return flat


# --------------------------------- wrapper ------------------------------------
def quantum_transformer_forward(x, params, *, num_heads=NUM_HEADS):
    B, S, Din = x.shape
    flat = _pack_params(params, B, S)
    x_flat = x.reshape(B * S, Din)     # fold batch into the token/row dim (lane-dense)

    kernel = functools.partial(fused_forward_kernel, batch=B, seq=S,
                               num_layers=len(params["layers"]), num_heads=num_heads)
    n_in = 1 + len(flat)
    out = pl.pallas_call(
        kernel,
        out_shape=jax.ShapeDtypeStruct((B, 4), jnp.float32),
        # No grid: one step, whole arrays resident in VMEM (weights DMA'd once).
        in_specs=[pl.BlockSpec(memory_space=pltpu.MemorySpace.VMEM)] * n_in,
        out_specs=pl.BlockSpec(memory_space=pltpu.MemorySpace.VMEM),
        # Raise the scoped VMEM cap above the conservative default (review item;
        # trivially satisfied at demo shapes, matters once blocks grow).
        compiler_params=pltpu.CompilerParams(vmem_limit_bytes=64 * 1024 * 1024),
    )(x_flat, *flat)

    return out[:, 0:1], out[:, 1:2], out[:, 2:3], out[:, 3:4]


# ------------------------------- parameters -----------------------------------
class _KeyGen:
    def __init__(self, key):
        self._key = key

    def __call__(self):
        self._key, sub = jax.random.split(self._key)
        return sub


def _dense(kg, fan_in, fan_out, w_scale=0.02, b_scale=0.01):
    w = jax.random.normal(kg(), (fan_in, fan_out), jnp.float32) * w_scale
    b = jax.random.normal(kg(), (fan_out,), jnp.float32) * b_scale
    return w, b


def _mha_params(kg, d):
    # in_proj kept in torch layout (3D, D) with row blocks [q; k; v]; out projection
    # stored (in, out) so y = x @ out_w + out_b.
    return dict(
        in_proj_w=jax.random.normal(kg(), (3 * d, d), jnp.float32) * 0.02,
        in_proj_b=jax.random.normal(kg(), (3 * d,), jnp.float32) * 0.01,
        out_w=jax.random.normal(kg(), (d, d), jnp.float32) * 0.02,
        out_b=jax.random.normal(kg(), (d,), jnp.float32) * 0.01,
    )


def init_params(key, input_dim, d_model, num_layers, max_len):
    kg = _KeyGen(key)
    d = d_model
    p = {}
    p["input_norm_g"] = jnp.ones((input_dim,), jnp.float32)
    p["input_norm_b"] = jnp.zeros((input_dim,), jnp.float32)
    p["input_proj_w"], p["input_proj_b"] = _dense(kg, input_dim, d)
    p["pos_enc"] = jax.random.normal(kg(), (max_len, d), jnp.float32)

    layers = []
    for _ in range(num_layers):
        lp = dict(
            norm1_g=jnp.ones((d,), jnp.float32), norm1_b=jnp.zeros((d,), jnp.float32),
            norm2_g=jnp.ones((d,), jnp.float32), norm2_b=jnp.zeros((d,), jnp.float32),
            attn=_mha_params(kg, d),
        )
        lp["ffn_w1"], lp["ffn_b1"] = _dense(kg, d, 4 * d)
        lp["ffn_w2"], lp["ffn_b2"] = _dense(kg, 4 * d, d)
        layers.append(lp)
    p["layers"] = layers

    p["final_attn"] = _mha_params(kg, d)

    ph = dict(ln_g=jnp.ones((d,), jnp.float32), ln_b=jnp.zeros((d,), jnp.float32))
    ph["w1"], ph["b1"] = _dense(kg, d, d // 2)
    ph["w2"], ph["b2"] = _dense(kg, d // 2, d // 4)
    ph["w3"], ph["b3"] = _dense(kg, d // 4, 1)
    p["price_head"] = ph

    for name in ("confidence_head", "volatility_head", "uncertainty_head"):
        hp = dict(ln_g=jnp.ones((d,), jnp.float32), ln_b=jnp.zeros((d,), jnp.float32))
        hp["w1"], hp["b1"] = _dense(kg, d, d // 4)
        hp["w2"], hp["b2"] = _dense(kg, d // 4, 1)
        p[name] = hp
    return p


# ------------------------ pure-JAX reference (validation) ---------------------
def _ln_ref(x, g, b):
    mu = x.mean(-1, keepdims=True)
    var = ((x - mu) ** 2).mean(-1, keepdims=True)
    return (x - mu) / jnp.sqrt(var + LN_EPS) * g + b


def _mha_ref(x, ap, num_heads):
    B, S, D = x.shape
    Dh = D // num_heads
    qkv = x @ ap["in_proj_w"].T + ap["in_proj_b"]
    q, k, v = qkv[..., :D], qkv[..., D:2 * D], qkv[..., 2 * D:]

    def split(t):
        return t.reshape(B, S, num_heads, Dh).transpose(0, 2, 1, 3)

    q, k, v = split(q), split(k), split(v)
    s = jnp.einsum("bhqd,bhkd->bhqk", q, k) / math.sqrt(Dh)
    p = jax.nn.softmax(s, axis=-1)
    o = jnp.einsum("bhqk,bhkd->bhqd", p, v).transpose(0, 2, 1, 3).reshape(B, S, D)
    return o @ ap["out_w"] + ap["out_b"]


def reference_forward(x, params, num_heads):
    h = _ln_ref(x, params["input_norm_g"], params["input_norm_b"])
    h = _gelu(h @ params["input_proj_w"] + params["input_proj_b"])
    h = h + params["pos_enc"][:x.shape[1]][None]
    for lp in params["layers"]:
        h = h + _mha_ref(_ln_ref(h, lp["norm1_g"], lp["norm1_b"]), lp["attn"], num_heads)
        hn = _ln_ref(h, lp["norm2_g"], lp["norm2_b"])
        h = h + (_gelu(hn @ lp["ffn_w1"] + lp["ffn_b1"]) @ lp["ffn_w2"] + lp["ffn_b2"])
    pooled = _mha_ref(h, params["final_attn"], num_heads).mean(axis=1)

    ph = params["price_head"]
    t = _ln_ref(pooled, ph["ln_g"], ph["ln_b"])
    t = _gelu(t @ ph["w1"] + ph["b1"])
    t = _gelu(t @ ph["w2"] + ph["b2"])
    outs = [t @ ph["w3"] + ph["b3"]]
    for name, act in (("confidence_head", _sigmoid), ("volatility_head", _softplus),
                      ("uncertainty_head", _softplus)):
        hp = params[name]
        t = _gelu(_ln_ref(pooled, hp["ln_g"], hp["ln_b"]) @ hp["w1"] + hp["b1"])
        outs.append(act(t @ hp["w2"] + hp["b2"]))
    return tuple(outs)


# ----------------------------------- main --------------------------------------
if __name__ == "__main__":
    key = jax.random.PRNGKey(0)
    kx, kp = jax.random.split(key)
    x = jax.random.normal(kx, (BATCH, SEQ, INPUT_DIM), jnp.float32)
    params = init_params(kp, INPUT_DIM, D_MODEL, NUM_LAYERS, MAX_LEN)

    fwd = jax.jit(functools.partial(quantum_transformer_forward, num_heads=NUM_HEADS))
    outs = jax.block_until_ready(fwd(x, params))

    price, confidence, volatility, uncertainty = outs
    assert price.shape == (BATCH, 1)
    assert confidence.shape == (BATCH, 1)
    assert volatility.shape == (BATCH, 1)
    assert uncertainty.shape == (BATCH, 1)
    for o in outs:
        assert bool(jnp.all(jnp.isfinite(o)))
    assert bool(jnp.all((confidence >= 0.0) & (confidence <= 1.0)))
    assert bool(jnp.all(volatility >= 0.0)) and bool(jnp.all(uncertainty >= 0.0))

    # Cross-check the fused kernel against a pure-JAX reference of the same module.
    refs = reference_forward(x, params, NUM_HEADS)
    for got, want in zip(outs, refs):
        assert bool(jnp.allclose(got, want, rtol=2e-2, atol=5e-3))

    print("KERNEL_OK")
</pallas_src>

<mosaic_0001>
module attributes {stable_mosaic.version = 11 : i64} {
  func.func @fused_forward_kernel(%arg0: memref<16x64xf32, #tpu.memory_space<vmem>>, %arg1: memref<16x32xf32, #tpu.memory_space<vmem>>, %arg2: memref<1x64xf32, #tpu.memory_space<vmem>>, %arg3: memref<1x64xf32, #tpu.memory_space<vmem>>, %arg4: memref<64x32xf32, #tpu.memory_space<vmem>>, %arg5: memref<1x32xf32, #tpu.memory_space<vmem>>, %arg6: memref<1x32xf32, #tpu.memory_space<vmem>>, %arg7: memref<1x32xf32, #tpu.memory_space<vmem>>, %arg8: memref<32x96xf32, #tpu.memory_space<vmem>>, %arg9: memref<1x96xf32, #tpu.memory_space<vmem>>, %arg10: memref<32x32xf32, #tpu.memory_space<vmem>>, %arg11: memref<1x32xf32, #tpu.memory_space<vmem>>, %arg12: memref<1x32xf32, #tpu.memory_space<vmem>>, %arg13: memref<1x32xf32, #tpu.memory_space<vmem>>, %arg14: memref<32x128xf32, #tpu.memory_space<vmem>>, %arg15: memref<1x128xf32, #tpu.memory_space<vmem>>, %arg16: memref<128x32xf32, #tpu.memory_space<vmem>>, %arg17: memref<1x32xf32, #tpu.memory_space<vmem>>, %arg18: memref<1x32xf32, #tpu.memory_space<vmem>>, %arg19: memref<1x32xf32, #tpu.memory_space<vmem>>, %arg20: memref<32x96xf32, #tpu.memory_space<vmem>>, %arg21: memref<1x96xf32, #tpu.memory_space<vmem>>, %arg22: memref<32x32xf32, #tpu.memory_space<vmem>>, %arg23: memref<1x32xf32, #tpu.memory_space<vmem>>, %arg24: memref<1x32xf32, #tpu.memory_space<vmem>>, %arg25: memref<1x32xf32, #tpu.memory_space<vmem>>, %arg26: memref<32x128xf32, #tpu.memory_space<vmem>>, %arg27: memref<1x128xf32, #tpu.memory_space<vmem>>, %arg28: memref<128x32xf32, #tpu.memory_space<vmem>>, %arg29: memref<1x32xf32, #tpu.memory_space<vmem>>, %arg30: memref<32x96xf32, #tpu.memory_space<vmem>>, %arg31: memref<1x96xf32, #tpu.memory_space<vmem>>, %arg32: memref<32x32xf32, #tpu.memory_space<vmem>>, %arg33: memref<1x32xf32, #tpu.memory_space<vmem>>, %arg34: memref<1x32xf32, #tpu.memory_space<vmem>>, %arg35: memref<1x32xf32, #tpu.memory_space<vmem>>, %arg36: memref<32x16xf32, #tpu.memory_space<vmem>>, %arg37: memref<1x16xf32, #tpu.memory_space<vmem>>, %arg38: memref<16x8xf32, #tpu.memory_space<vmem>>, %arg39: memref<1x8xf32, #tpu.memory_space<vmem>>, %arg40: memref<8x1xf32, #tpu.memory_space<vmem>>, %arg41: memref<1x1xf32, #tpu.memory_space<vmem>>, %arg42: memref<32x24xf32, #tpu.memory_space<vmem>>, %arg43: memref<1x24xf32, #tpu.memory_space<vmem>>, %arg44: memref<24x4xf32, #tpu.memory_space<vmem>>, %arg45: memref<1x4xf32, #tpu.memory_space<vmem>>, %arg46: memref<2x4xf32, #tpu.memory_space<vmem>>) attributes {dimension_semantics = [], scalar_prefetch = 0 : i64, scratch_operands = 0 : i64, tpu.core_type = #tpu.core_type<tc>} {
    %c0 = arith.constant 0 : index
    %c0_0 = arith.constant 0 : index
    %0 = vector.load %arg0[%c0, %c0_0] : memref<16x64xf32, #tpu.memory_space<vmem>>, vector<16x64xf32>
    %c0_1 = arith.constant 0 : index
    %c0_2 = arith.constant 0 : index
    %1 = vector.load %arg1[%c0_1, %c0_2] : memref<16x32xf32, #tpu.memory_space<vmem>>, vector<16x32xf32>
    %c0_3 = arith.constant 0 : index
    %c0_4 = arith.constant 0 : index
    %2 = vector.load %arg2[%c0_3, %c0_4] : memref<1x64xf32, #tpu.memory_space<vmem>>, vector<1x64xf32>
    %c0_5 = arith.constant 0 : index
    %c0_6 = arith.constant 0 : index
    %3 = vector.load %arg3[%c0_5, %c0_6] : memref<1x64xf32, #tpu.memory_space<vmem>>, vector<1x64xf32>
    %c0_7 = arith.constant 0 : index
    %c0_8 = arith.constant 0 : index
    %4 = vector.load %arg4[%c0_7, %c0_8] : memref<64x32xf32, #tpu.memory_space<vmem>>, vector<64x32xf32>
    %c0_9 = arith.constant 0 : index
    %c0_10 = arith.constant 0 : index
    %5 = vector.load %arg5[%c0_9, %c0_10] : memref<1x32xf32, #tpu.memory_space<vmem>>, vector<1x32xf32>
    %cst = arith.constant dense<0.000000e+00> : vector<16xf32>
    %6 = vector.multi_reduction <add>, %0, %cst [1] : vector<16x64xf32> to vector<16xf32>
    %7 = vector.shape_cast %6 : vector<16xf32> to vector<16x1xf32>
    %cst_11 = arith.constant 6.400000e+01 : f32
    %8 = vector.broadcast %cst_11 : f32 to vector<16x1xf32>
    %9 = arith.divf %7, %8 : vector<16x1xf32>
    %10 = vector.broadcast %9 : vector<16x1xf32> to vector<16x64xf32>
    %11 = arith.subf %0, %10 : vector<16x64xf32>
    %12 = vector.broadcast %9 : vector<16x1xf32> to vector<16x64xf32>
    %13 = arith.subf %0, %12 : vector<16x64xf32>
    %14 = arith.mulf %11, %13 : vector<16x64xf32>
    %cst_12 = arith.constant dense<0.000000e+00> : vector<16xf32>
    %15 = vector.multi_reduction <add>, %14, %cst_12 [1] : vector<16x64xf32> to vector<16xf32>
    %16 = vector.shape_cast %15 : vector<16xf32> to vector<16x1xf32>
    %cst_13 = arith.constant 6.400000e+01 : f32
    %17 = vector.broadcast %cst_13 : f32 to vector<16x1xf32>
    %18 = arith.divf %16, %17 : vector<16x1xf32>
    %19 = vector.broadcast %9 : vector<16x1xf32> to vector<16x64xf32>
    %20 = arith.subf %0, %19 : vector<16x64xf32>
    %cst_14 = arith.constant 9.99999974E-6 : f32
    %21 = vector.broadcast %cst_14 : f32 to vector<16x1xf32>
    %22 = arith.addf %18, %21 : vector<16x1xf32>
    %23 = math.rsqrt %22 : vector<16x1xf32>
    %24 = vector.broadcast %23 : vector<16x1xf32> to vector<16x64xf32>
    %25 = arith.mulf %20, %24 : vector<16x64xf32>
    %26 = vector.broadcast %2 : vector<1x64xf32> to vector<16x64xf32>
    %27 = arith.mulf %25, %26 : vector<16x64xf32>
    %28 = vector.broadcast %3 : vector<1x64xf32> to vector<16x64xf32>
    %29 = arith.addf %27, %28 : vector<16x64xf32>
    %cst_15 = arith.constant dense<0.000000e+00> : vector<16x32xf32>
    %30 = tpu.matmul %29, %4, %cst_15 {dimension_numbers = #tpu.dot_dimension_numbers<[1], [0], [0], [1], [0, 0, 1, 1], [], []>} : vector<16x64xf32>, vector<64x32xf32>, vector<16x32xf32> -> vector<16x32xf32>
    %31 = vector.broadcast %5 : vector<1x32xf32> to vector<16x32xf32>
    %32 = arith.addf %30, %31 : vector<16x32xf32>
    %cst_16 = arith.constant 5.000000e-01 : f32
    %33 = vector.broadcast %cst_16 : f32 to vector<16x32xf32>
    %34 = arith.mulf %33, %32 : vector<16x32xf32>
    %cst_17 = arith.constant 4.471500e-02 : f32
    %35 = vector.broadcast %cst_17 : f32 to vector<16x32xf32>
    %36 = arith.mulf %35, %32 : vector<16x32xf32>
    %37 = arith.mulf %36, %32 : vector<16x32xf32>
    %38 = arith.mulf %37, %32 : vector<16x32xf32>
    %39 = arith.addf %32, %38 : vector<16x32xf32>
    %cst_18 = arith.constant 0.797884583 : f32
    %40 = vector.broadcast %cst_18 : f32 to vector<16x32xf32>
    %41 = arith.mulf %40, %39 : vector<16x32xf32>
    %42 = math.tanh %41 : vector<16x32xf32>
    %cst_19 = arith.constant 1.000000e+00 : f32
    %43 = vector.broadcast %cst_19 : f32 to vector<16x32xf32>
    %44 = arith.addf %43, %42 : vector<16x32xf32>
    %45 = arith.mulf %34, %44 : vector<16x32xf32>
    %46 = arith.addf %45, %1 : vector<16x32xf32>
    %c0_20 = arith.constant 0 : index
    %c0_21 = arith.constant 0 : index
    %47 = vector.load %arg6[%c0_20, %c0_21] : memref<1x32xf32, #tpu.memory_space<vmem>>, vector<1x32xf32>
    %c0_22 = arith.constant 0 : index
    %c0_23 = arith.constant 0 : index
    %48 = vector.load %arg7[%c0_22, %c0_23] : memref<1x32xf32, #tpu.memory_space<vmem>>, vector<1x32xf32>
    %c0_24 = arith.constant 0 : index
    %c0_25 = arith.constant 0 : index
    %49 = vector.load %arg8[%c0_24, %c0_25] : memref<32x96xf32, #tpu.memory_space<vmem>>, vector<32x96xf32>
    %c0_26 = arith.constant 0 : index
    %c0_27 = arith.constant 0 : index
    %50 = vector.load %arg9[%c0_26, %c0_27] : memref<1x96xf32, #tpu.memory_space<vmem>>, vector<1x96xf32>
    %c0_28 = arith.constant 0 : index
    %c0_29 = arith.constant 0 : index
    %51 = vector.load %arg10[%c0_28, %c0_29] : memref<32x32xf32, #tpu.memory_space<vmem>>, vector<32x32xf32>
    %c0_30 = arith.constant 0 : index
    %c0_31 = arith.constant 0 : index
    %52 = vector.load %arg11[%c0_30, %c0_31] : memref<1x32xf32, #tpu.memory_space<vmem>>, vector<1x32xf32>
    %c0_32 = arith.constant 0 : index
    %c0_33 = arith.constant 0 : index
    %53 = vector.load %arg12[%c0_32, %c0_33] : memref<1x32xf32, #tpu.memory_space<vmem>>, vector<1x32xf32>
    %c0_34 = arith.constant 0 : index
    %c0_35 = arith.constant 0 : index
    %54 = vector.load %arg13[%c0_34, %c0_35] : memref<1x32xf32, #tpu.memory_space<vmem>>, vector<1x32xf32>
    %c0_36 = arith.constant 0 : index
    %c0_37 = arith.constant 0 : index
    %55 = vector.load %arg14[%c0_36, %c0_37] : memref<32x128xf32, #tpu.memory_space<vmem>>, vector<32x128xf32>
    %c0_38 = arith.constant 0 : index
    %c0_39 = arith.constant 0 : index
    %56 = vector.load %arg15[%c0_38, %c0_39] : memref<1x128xf32, #tpu.memory_space<vmem>>, vector<1x128xf32>
    %c0_40 = arith.constant 0 : index
    %c0_41 = arith.constant 0 : index
    %57 = vector.load %arg16[%c0_40, %c0_41] : memref<128x32xf32, #tpu.memory_space<vmem>>, vector<128x32xf32>
    %c0_42 = arith.constant 0 : index
    %c0_43 = arith.constant 0 : index
    %58 = vector.load %arg17[%c0_42, %c0_43] : memref<1x32xf32, #tpu.memory_space<vmem>>, vector<1x32xf32>
    %cst_44 = arith.constant dense<0.000000e+00> : vector<16xf32>
    %59 = vector.multi_reduction <add>, %46, %cst_44 [1] : vector<16x32xf32> to vector<16xf32>
    %60 = vector.shape_cast %59 : vector<16xf32> to vector<16x1xf32>
    %cst_45 = arith.constant 3.200000e+01 : f32
    %61 = vector.broadcast %cst_45 : f32 to vector<16x1xf32>
    %62 = arith.divf %60, %61 : vector<16x1xf32>
    %63 = vector.broadcast %62 : vector<16x1xf32> to vector<16x32xf32>
    %64 = arith.subf %46, %63 : vector<16x32xf32>
    %65 = vector.broadcast %62 : vector<16x1xf32> to vector<16x32xf32>
    %66 = arith.subf %46, %65 : vector<16x32xf32>
    %67 = arith.mulf %64, %66 : vector<16x32xf32>
    %cst_46 = arith.constant dense<0.000000e+00> : vector<16xf32>
    %68 = vector.multi_reduction <add>, %67, %cst_46 [1] : vector<16x32xf32> to vector<16xf32>
    %69 = vector.shape_cast %68 : vector<16xf32> to vector<16x1xf32>
    %cst_47 = arith.constant 3.200000e+01 : f32
    %70 = vector.broadcast %cst_47 : f32 to vector<16x1xf32>
    %71 = arith.divf %69, %70 : vector<16x1xf32>
    %72 = vector.broadcast %62 : vector<16x1xf32> to vector<16x32xf32>
    %73 = arith.subf %46, %72 : vector<16x32xf32>
    %cst_48 = arith.constant 9.99999974E-6 : f32
    %74 = vector.broadcast %cst_48 : f32 to vector<16x1xf32>
    %75 = arith.addf %71, %74 : vector<16x1xf32>
    %76 = math.rsqrt %75 : vector<16x1xf32>
    %77 = vector.broadcast %76 : vector<16x1xf32> to vector<16x32xf32>
    %78 = arith.mulf %73, %77 : vector<16x32xf32>
    %79 = vector.broadcast %47 : vector<1x32xf32> to vector<16x32xf32>
    %80 = arith.mulf %78, %79 : vector<16x32xf32>
    %81 = vector.broadcast %48 : vector<1x32xf32> to vector<16x32xf32>
    %82 = arith.addf %80, %81 : vector<16x32xf32>
    %cst_49 = arith.constant dense<0.000000e+00> : vector<16x96xf32>
    %83 = tpu.matmul %82, %49, %cst_49 {dimension_numbers = #tpu.dot_dimension_numbers<[1], [0], [0], [1], [0, 0, 1, 1], [], []>} : vector<16x32xf32>, vector<32x96xf32>, vector<16x96xf32> -> vector<16x96xf32>
    %84 = vector.broadcast %50 : vector<1x96xf32> to vector<16x96xf32>
    %85 = arith.addf %83, %84 : vector<16x96xf32>
    %86 = vector.extract_strided_slice %85 {offsets = [0, 0], sizes = [8, 8], strides = [1, 1]} : vector<16x96xf32> to vector<8x8xf32>
    %87 = vector.extract_strided_slice %85 {offsets = [0, 8], sizes = [8, 8], strides = [1, 1]} : vector<16x96xf32> to vector<8x8xf32>
    %88 = vector.extract_strided_slice %85 {offsets = [0, 16], sizes = [8, 8], strides = [1, 1]} : vector<16x96xf32> to vector<8x8xf32>
    %89 = vector.extract_strided_slice %85 {offsets = [0, 24], sizes = [8, 8], strides = [1, 1]} : vector<16x96xf32> to vector<8x8xf32>
    %90 = vector.extract_strided_slice %85 {offsets = [8, 0], sizes = [8, 8], strides = [1, 1]} : vector<16x96xf32> to vector<8x8xf32>
    %91 = vector.extract_strided_slice %85 {offsets = [8, 8], sizes = [8, 8], strides = [1, 1]} : vector<16x96xf32> to vector<8x8xf32>
    %92 = vector.extract_strided_slice %85 {offsets = [8, 16], sizes = [8, 8], strides = [1, 1]} : vector<16x96xf32> to vector<8x8xf32>
    %93 = vector.extract_strided_slice %85 {offsets = [8, 24], sizes = [8, 8], strides = [1, 1]} : vector<16x96xf32> to vector<8x8xf32>
    %94 = vector.shape_cast %86 : vector<8x8xf32> to vector<1x8x8xf32>
    %95 = vector.shape_cast %87 : vector<8x8xf32> to vector<1x8x8xf32>
    %96 = vector.shape_cast %88 : vector<8x8xf32> to vector<1x8x8xf32>
    %97 = vector.shape_cast %89 : vector<8x8xf32> to vector<1x8x8xf32>
    %98 = vector.shape_cast %90 : vector<8x8xf32> to vector<1x8x8xf32>
    %99 = vector.shape_cast %91 : vector<8x8xf32> to vector<1x8x8xf32>
    %100 = vector.shape_cast %92 : vector<8x8xf32> to vector<1x8x8xf32>
    %101 = vector.shape_cast %93 : vector<8x8xf32> to vector<1x8x8xf32>
    %102 = tpu.concatenate %94, %95, %96, %97, %98, %99, %100, %101 in 0 : vector<1x8x8xf32>, vector<1x8x8xf32>, vector<1x8x8xf32>, vector<1x8x8xf32>, vector<1x8x8xf32>, vector<1x8x8xf32>, vector<1x8x8xf32>, vector<1x8x8xf32> -> vector<8x8x8xf32>
    %103 = vector.extract_strided_slice %85 {offsets = [0, 32], sizes = [8, 8], strides = [1, 1]} : vector<16x96xf32> to vector<8x8xf32>
    %104 = vector.extract_strided_slice %85 {offsets = [0, 40], sizes = [8, 8], strides = [1, 1]} : vector<16x96xf32> to vector<8x8xf32>
    %105 = vector.extract_strided_slice %85 {offsets = [0, 48], sizes = [8, 8], strides = [1, 1]} : vector<16x96xf32> to vector<8x8xf32>
    %106 = vector.extract_strided_slice %85 {offsets = [0, 56], sizes = [8, 8], strides = [1, 1]} : vector<16x96xf32> to vector<8x8xf32>
    %107 = vector.extract_strided_slice %85 {offsets = [8, 32], sizes = [8, 8], strides = [1, 1]} : vector<16x96xf32> to vector<8x8xf32>
    %108 = vector.extract_strided_slice %85 {offsets = [8, 40], sizes = [8, 8], strides = [1, 1]} : vector<16x96xf32> to vector<8x8xf32>
    %109 = vector.extract_strided_slice %85 {offsets = [8, 48], sizes = [8, 8], strides = [1, 1]} : vector<16x96xf32> to vector<8x8xf32>
    %110 = vector.extract_strided_slice %85 {offsets = [8, 56], sizes = [8, 8], strides = [1, 1]} : vector<16x96xf32> to vector<8x8xf32>
    %111 = vector.shape_cast %103 : vector<8x8xf32> to vector<1x8x8xf32>
    %112 = vector.shape_cast %104 : vector<8x8xf32> to vector<1x8x8xf32>
    %113 = vector.shape_cast %105 : vector<8x8xf32> to vector<1x8x8xf32>
    %114 = vector.shape_cast %106 : vector<8x8xf32> to vector<1x8x8xf32>
    %115 = vector.shape_cast %107 : vector<8x8xf32> to vector<1x8x8xf32>
    %116 = vector.shape_cast %108 : vector<8x8xf32> to vector<1x8x8xf32>
    %117 = vector.shape_cast %109 : vector<8x8xf32> to vector<1x8x8xf32>
    %118 = vector.shape_cast %110 : vector<8x8xf32> to vector<1x8x8xf32>
    %119 = tpu.concatenate %111, %112, %113, %114, %115, %116, %117, %118 in 0 : vector<1x8x8xf32>, vector<1x8x8xf32>, vector<1x8x8xf32>, vector<1x8x8xf32>, vector<1x8x8xf32>, vector<1x8x8xf32>, vector<1x8x8xf32>, vector<1x8x8xf32> -> vector<8x8x8xf32>
    %120 = vector.extract_strided_slice %85 {offsets = [0, 64], sizes = [8, 8], strides = [1, 1]} : vector<16x96xf32> to vector<8x8xf32>
    %121 = vector.extract_strided_slice %85 {offsets = [0, 72], sizes = [8, 8], strides = [1, 1]} : vector<16x96xf32> to vector<8x8xf32>
    %122 = vector.extract_strided_slice %85 {offsets = [0, 80], sizes = [8, 8], strides = [1, 1]} : vector<16x96xf32> to vector<8x8xf32>
    %123 = vector.extract_strided_slice %85 {offsets = [0, 88], sizes = [8, 8], strides = [1, 1]} : vector<16x96xf32> to vector<8x8xf32>
    %124 = vector.extract_strided_slice %85 {offsets = [8, 64], sizes = [8, 8], strides = [1, 1]} : vector<16x96xf32> to vector<8x8xf32>
    %125 = vector.extract_strided_slice %85 {offsets = [8, 72], sizes = [8, 8], strides = [1, 1]} : vector<16x96xf32> to vector<8x8xf32>
    %126 = vector.extract_strided_slice %85 {offsets = [8, 80], sizes = [8, 8], strides = [1, 1]} : vector<16x96xf32> to vector<8x8xf32>
    %127 = vector.extract_strided_slice %85 {offsets = [8, 88], sizes = [8, 8], strides = [1, 1]} : vector<16x96xf32> to vector<8x8xf32>
    %128 = vector.shape_cast %120 : vector<8x8xf32> to vector<1x8x8xf32>
    %129 = vector.shape_cast %121 : vector<8x8xf32> to vector<1x8x8xf32>
    %130 = vector.shape_cast %122 : vector<8x8xf32> to vector<1x8x8xf32>
    %131 = vector.shape_cast %123 : vector<8x8xf32> to vector<1x8x8xf32>
    %132 = vector.shape_cast %124 : vector<8x8xf32> to vector<1x8x8xf32>
    %133 = vector.shape_cast %125 : vector<8x8xf32> to vector<1x8x8xf32>
    %134 = vector.shape_cast %126 : vector<8x8xf32> to vector<1x8x8xf32>
    %135 = vector.shape_cast %127 : vector<8x8xf32> to vector<1x8x8xf32>
    %136 = tpu.concatenate %128, %129, %130, %131, %132, %133, %134, %135 in 0 : vector<1x8x8xf32>, vector<1x8x8xf32>, vector<1x8x8xf32>, vector<1x8x8xf32>, vector<1x8x8xf32>, vector<1x8x8xf32>, vector<1x8x8xf32>, vector<1x8x8xf32> -> vector<8x8x8xf32>
    "tpu.trace_start"() <{level = 10 : i32, message = "bqd,bkd->bqk"}> : () -> ()
    %cst_50 = arith.constant dense<0.000000e+00> : vector<8x8x8xf32>
    %137 = tpu.matmul %102, %119, %cst_50 {dimension_numbers = #tpu.dot_dimension_numbers<[2], [2], [1], [1], [0, 0, 0, 1, 1, 1], [0], [0]>} : vector<8x8x8xf32>, vector<8x8x8xf32>, vector<8x8x8xf32> -> vector<8x8x8xf32>
    "tpu.trace_stop"() : () -> ()
    %cst_51 = arith.constant 0.353553385 : f32
    %138 = vector.broadcast %cst_51 : f32 to vector<8x8x8xf32>
    %139 = arith.mulf %137, %138 : vector<8x8x8xf32>
    %cst_52 = arith.constant dense<0xFF800000> : vector<8x8xf32>
    %140 = vector.multi_reduction <maximumf>, %139, %cst_52 [2] : vector<8x8x8xf32> to vector<8x8xf32>
    %141 = vector.shape_cast %140 : vector<8x8xf32> to vector<8x8x1xf32>
    %142 = vector.broadcast %141 : vector<8x8x1xf32> to vector<8x8x8xf32>
    %143 = arith.subf %139, %142 : vector<8x8x8xf32>
    %144 = math.exp %143 : vector<8x8x8xf32>
    %cst_53 = arith.constant dense<0.000000e+00> : vector<8x8xf32>
    %145 = vector.multi_reduction <add>, %144, %cst_53 [2] : vector<8x8x8xf32> to vector<8x8xf32>
    %146 = vector.shape_cast %145 : vector<8x8xf32> to vector<8x8x1xf32>
    %147 = vector.broadcast %146 : vector<8x8x1xf32> to vector<8x8x8xf32>
    %148 = arith.divf %144, %147 : vector<8x8x8xf32>
    "tpu.trace_start"() <{level = 10 : i32, message = "bqk,bkd->bqd"}> : () -> ()
    %cst_54 = arith.constant dense<0.000000e+00> : vector<8x8x8xf32>
    %149 = tpu.matmul %148, %136, %cst_54 {dimension_numbers = #tpu.dot_dimension_numbers<[2], [1], [1], [2], [0, 0, 0, 1, 1, 2], [0], [0]>} : vector<8x8x8xf32>, vector<8x8x8xf32>, vector<8x8x8xf32> -> vector<8x8x8xf32>
    "tpu.trace_stop"() : () -> ()
    %150 = vector.extract_strided_slice %149 {offsets = [0, 0, 0], sizes = [1, 8, 8], strides = [1, 1, 1]} : vector<8x8x8xf32> to vector<1x8x8xf32>
    %151 = vector.shape_cast %150 : vector<1x8x8xf32> to vector<8x8xf32>
    %152 = vector.extract_strided_slice %149 {offsets = [1, 0, 0], sizes = [1, 8, 8], strides = [1, 1, 1]} : vector<8x8x8xf32> to vector<1x8x8xf32>
    %153 = vector.shape_cast %152 : vector<1x8x8xf32> to vector<8x8xf32>
    %154 = vector.extract_strided_slice %149 {offsets = [2, 0, 0], sizes = [1, 8, 8], strides = [1, 1, 1]} : vector<8x8x8xf32> to vector<1x8x8xf32>
    %155 = vector.shape_cast %154 : vector<1x8x8xf32> to vector<8x8xf32>
    %156 = vector.extract_strided_slice %149 {offsets = [3, 0, 0], sizes = [1, 8, 8], strides = [1, 1, 1]} : vector<8x8x8xf32> to vector<1x8x8xf32>
    %157 = vector.shape_cast %156 : vector<1x8x8xf32> to vector<8x8xf32>
    %158 = tpu.concatenate %151, %153, %155, %157 in 1 : vector<8x8xf32>, vector<8x8xf32>, vector<8x8xf32>, vector<8x8xf32> -> vector<8x32xf32>
    %159 = vector.extract_strided_slice %149 {offsets = [4, 0, 0], sizes = [1, 8, 8], strides = [1, 1, 1]} : vector<8x8x8xf32> to vector<1x8x8xf32>
    %160 = vector.shape_cast %159 : vector<1x8x8xf32> to vector<8x8xf32>
    %161 = vector.extract_strided_slice %149 {offsets = [5, 0, 0], sizes = [1, 8, 8], strides = [1, 1, 1]} : vector<8x8x8xf32> to vector<1x8x8xf32>
    %162 = vector.shape_cast %161 : vector<1x8x8xf32> to vector<8x8xf32>
    %163 = vector.extract_strided_slice %149 {offsets = [6, 0, 0], sizes = [1, 8, 8], strides = [1, 1, 1]} : vector<8x8x8xf32> to vector<1x8x8xf32>
    %164 = vector.shape_cast %163 : vector<1x8x8xf32> to vector<8x8xf32>
    %165 = vector.extract_strided_slice %149 {offsets = [7, 0, 0], sizes = [1, 8, 8], strides = [1, 1, 1]} : vector<8x8x8xf32> to vector<1x8x8xf32>
    %166 = vector.shape_cast %165 : vector<1x8x8xf32> to vector<8x8xf32>
    %167 = tpu.concatenate %160, %162, %164, %166 in 1 : vector<8x8xf32>, vector<8x8xf32>, vector<8x8xf32>, vector<8x8xf32> -> vector<8x32xf32>
    %168 = tpu.concatenate %158, %167 in 0 : vector<8x32xf32>, vector<8x32xf32> -> vector<16x32xf32>
    %cst_55 = arith.constant dense<0.000000e+00> : vector<16x32xf32>
    %169 = tpu.matmul %168, %51, %cst_55 {dimension_numbers = #tpu.dot_dimension_numbers<[1], [0], [0], [1], [0, 0, 1, 1], [], []>} : vector<16x32xf32>, vector<32x32xf32>, vector<16x32xf32> -> vector<16x32xf32>
    %170 = vector.broadcast %52 : vector<1x32xf32> to vector<16x32xf32>
    %171 = arith.addf %169, %170 : vector<16x32xf32>
    %172 = arith.addf %46, %171 : vector<16x32xf32>
    %cst_56 = arith.constant dense<0.000000e+00> : vector<16xf32>
    %173 = vector.multi_reduction <add>, %172, %cst_56 [1] : vector<16x32xf32> to vector<16xf32>
    %174 = vector.shape_cast %173 : vector<16xf32> to vector<16x1xf32>
    %cst_57 = arith.constant 3.200000e+01 : f32
    %175 = vector.broadcast %cst_57 : f32 to vector<16x1xf32>
    %176 = arith.divf %174, %175 : vector<16x1xf32>
    %177 = vector.broadcast %176 : vector<16x1xf32> to vector<16x32xf32>
    %178 = arith.subf %172, %177 : vector<16x32xf32>
    %179 = vector.broadcast %176 : vector<16x1xf32> to vector<16x32xf32>
    %180 = arith.subf %172, %179 : vector<16x32xf32>
    %181 = arith.mulf %178, %180 : vector<16x32xf32>
    %cst_58 = arith.constant dense<0.000000e+00> : vector<16xf32>
    %182 = vector.multi_reduction <add>, %181, %cst_58 [1] : vector<16x32xf32> to vector<16xf32>
    %183 = vector.shape_cast %182 : vector<16xf32> to vector<16x1xf32>
    %cst_59 = arith.constant 3.200000e+01 : f32
    %184 = vector.broadcast %cst_59 : f32 to vector<16x1xf32>
    %185 = arith.divf %183, %184 : vector<16x1xf32>
    %186 = vector.broadcast %176 : vector<16x1xf32> to vector<16x32xf32>
    %187 = arith.subf %172, %186 : vector<16x32xf32>
    %cst_60 = arith.constant 9.99999974E-6 : f32
    %188 = vector.broadcast %cst_60 : f32 to vector<16x1xf32>
    %189 = arith.addf %185, %188 : vector<16x1xf32>
    %190 = math.rsqrt %189 : vector<16x1xf32>
    %191 = vector.broadcast %190 : vector<16x1xf32> to vector<16x32xf32>
    %192 = arith.mulf %187, %191 : vector<16x32xf32>
    %193 = vector.broadcast %53 : vector<1x32xf32> to vector<16x32xf32>
    %194 = arith.mulf %192, %193 : vector<16x32xf32>
    %195 = vector.broadcast %54 : vector<1x32xf32> to vector<16x32xf32>
    %196 = arith.addf %194, %195 : vector<16x32xf32>
    %cst_61 = arith.constant dense<0.000000e+00> : vector<16x128xf32>
    %197 = tpu.matmul %196, %55, %cst_61 {dimension_numbers = #tpu.dot_dimension_numbers<[1], [0], [0], [1], [0, 0, 1, 1], [], []>} : vector<16x32xf32>, vector<32x128xf32>, vector<16x128xf32> -> vector<16x128xf32>
    %198 = vector.broadcast %56 : vector<1x128xf32> to vector<16x128xf32>
    %199 = arith.addf %197, %198 : vector<16x128xf32>
    %cst_62 = arith.constant 5.000000e-01 : f32
    %200 = vector.broadcast %cst_62 : f32 to vector<16x128xf32>
    %201 = arith.mulf %200, %199 : vector<16x128xf32>
    %cst_63 = arith.constant 4.471500e-02 : f32
    %202 = vector.broadcast %cst_63 : f32 to vector<16x128xf32>
    %203 = arith.mulf %202, %199 : vector<16x128xf32>
    %204 = arith.mulf %203, %199 : vector<16x128xf32>
    %205 = arith.mulf %204, %199 : vector<16x128xf32>
    %206 = arith.addf %199, %205 : vector<16x128xf32>
    %cst_64 = arith.constant 0.797884583 : f32
    %207 = vector.broadcast %cst_64 : f32 to vector<16x128xf32>
    %208 = arith.mulf %207, %206 : vector<16x128xf32>
    %209 = math.tanh %208 : vector<16x128xf32>
    %cst_65 = arith.constant 1.000000e+00 : f32
    %210 = vector.broadcast %cst_65 : f32 to vector<16x128xf32>
    %211 = arith.addf %210, %209 : vector<16x128xf32>
    %212 = arith.mulf %201, %211 : vector<16x128xf32>
    %cst_66 = arith.constant dense<0.000000e+00> : vector<16x32xf32>
    %213 = tpu.matmul %212, %57, %cst_66 {dimension_numbers = #tpu.dot_dimension_numbers<[1], [0], [0], [1], [0, 0, 1, 1], [], []>} : vector<16x128xf32>, vector<128x32xf32>, vector<16x32xf32> -> vector<16x32xf32>
    %214 = vector.broadcast %58 : vector<1x32xf32> to vector<16x32xf32>
    %215 = arith.addf %213, %214 : vector<16x32xf32>
    %216 = arith.addf %172, %215 : vector<16x32xf32>
    %c0_67 = arith.constant 0 : index
    %c0_68 = arith.constant 0 : index
    %217 = vector.load %arg18[%c0_67, %c0_68] : memref<1x32xf32, #tpu.memory_space<vmem>>, vector<1x32xf32>
    %c0_69 = arith.constant 0 : index
    %c0_70 = arith.constant 0 : index
    %218 = vector.load %arg19[%c0_69, %c0_70] : memref<1x32xf32, #tpu.memory_space<vmem>>, vector<1x32xf32>
    %c0_71 = arith.constant 0 : index
    %c0_72 = arith.constant 0 : index
    %219 = vector.load %arg20[%c0_71, %c0_72] : memref<32x96xf32, #tpu.memory_space<vmem>>, vector<32x96xf32>
    %c0_73 = arith.constant 0 : index
    %c0_74 = arith.constant 0 : index
    %220 = vector.load %arg21[%c0_73, %c0_74] : memref<1x96xf32, #tpu.memory_space<vmem>>, vector<1x96xf32>
    %c0_75 = arith.constant 0 : index
    %c0_76 = arith.constant 0 : index
    %221 = vector.load %arg22[%c0_75, %c0_76] : memref<32x32xf32, #tpu.memory_space<vmem>>, vector<32x32xf32>
    %c0_77 = arith.constant 0 : index
    %c0_78 = arith.constant 0 : index
    %222 = vector.load %arg23[%c0_77, %c0_78] : memref<1x32xf32, #tpu.memory_space<vmem>>, vector<1x32xf32>
    %c0_79 = arith.constant 0 : index
    %c0_80 = arith.constant 0 : index
    %223 = vector.load %arg24[%c0_79, %c0_80] : memref<1x32xf32, #tpu.memory_space<vmem>>, vector<1x32xf32>
    %c0_81 = arith.constant 0 : index
    %c0_82 = arith.constant 0 : index
    %224 = vector.load %arg25[%c0_81, %c0_82] : memref<1x32xf32, #tpu.memory_space<vmem>>, vector<1x32xf32>
    %c0_83 = arith.constant 0 : index
    %c0_84 = arith.constant 0 : index
    %225 = vector.load %arg26[%c0_83, %c0_84] : memref<32x128xf32, #tpu.memory_space<vmem>>, vector<32x128xf32>
    %c0_85 = arith.constant 0 : index
    %c0_86 = arith.constant 0 : index
    %226 = vector.load %arg27[%c0_85, %c0_86] : memref<1x128xf32, #tpu.memory_space<vmem>>, vector<1x128xf32>
    %c0_87 = arith.constant 0 : index
    %c0_88 = arith.constant 0 : index
    %227 = vector.load %arg28[%c0_87, %c0_88] : memref<128x32xf32, #tpu.memory_space<vmem>>, vector<128x32xf32>
    %c0_89 = arith.constant 0 : index
    %c0_90 = arith.constant 0 : index
    %228 = vector.load %arg29[%c0_89, %c0_90] : memref<1x32xf32, #tpu.memory_space<vmem>>, vector<1x32xf32>
    %cst_91 = arith.constant dense<0.000000e+00> : vector<16xf32>
    %229 = vector.multi_reduction <add>, %216, %cst_91 [1] : vector<16x32xf32> to vector<16xf32>
    %230 = vector.shape_cast %229 : vector<16xf32> to vector<16x1xf32>
    %cst_92 = arith.constant 3.200000e+01 : f32
    %231 = vector.broadcast %cst_92 : f32 to vector<16x1xf32>
    %232 = arith.divf %230, %231 : vector<16x1xf32>
    %233 = vector.broadcast %232 : vector<16x1xf32> to vector<16x32xf32>
    %234 = arith.subf %216, %233 : vector<16x32xf32>
    %235 = vector.broadcast %232 : vector<16x1xf32> to vector<16x32xf32>
    %236 = arith.subf %216, %235 : vector<16x32xf32>
    %237 = arith.mulf %234, %236 : vector<16x32xf32>
    %cst_93 = arith.constant dense<0.000000e+00> : vector<16xf32>
    %238 = vector.multi_reduction <add>, %237, %cst_93 [1] : vector<16x32xf32> to vector<16xf32>
    %239 = vector.shape_cast %238 : vector<16xf32> to vector<16x1xf32>
    %cst_94 = arith.constant 3.200000e+01 : f32
    %240 = vector.broadcast %cst_94 : f32 to vector<16x1xf32>
    %241 = arith.divf %239, %240 : vector<16x1xf32>
    %242 = vector.broadcast %232 : vector<16x1xf32> to vector<16x32xf32>
    %243 = arith.subf %216, %242 : vector<16x32xf32>
    %cst_95 = arith.constant 9.99999974E-6 : f32
    %244 = vector.broadcast %cst_95 : f32 to vector<16x1xf32>
    %245 = arith.addf %241, %244 : vector<16x1xf32>
    %246 = math.rsqrt %245 : vector<16x1xf32>
    %247 = vector.broadcast %246 : vector<16x1xf32> to vector<16x32xf32>
    %248 = arith.mulf %243, %247 : vector<16x32xf32>
    %249 = vector.broadcast %217 : vector<1x32xf32> to vector<16x32xf32>
    %250 = arith.mulf %248, %249 : vector<16x32xf32>
    %251 = vector.broadcast %218 : vector<1x32xf32> to vector<16x32xf32>
    %252 = arith.addf %250, %251 : vector<16x32xf32>
    %cst_96 = arith.constant dense<0.000000e+00> : vector<16x96xf32>
    %253 = tpu.matmul %252, %219, %cst_96 {dimension_numbers = #tpu.dot_dimension_numbers<[1], [0], [0], [1], [0, 0, 1, 1], [], []>} : vector<16x32xf32>, vector<32x96xf32>, vector<16x96xf32> -> vector<16x96xf32>
    %254 = vector.broadcast %220 : vector<1x96xf32> to vector<16x96xf32>
    %255 = arith.addf %253, %254 : vector<16x96xf32>
    %256 = vector.extract_strided_slice %255 {offsets = [0, 0], sizes = [8, 8], strides = [1, 1]} : vector<16x96xf32> to vector<8x8xf32>
    %257 = vector.extract_strided_slice %255 {offsets = [0, 8], sizes = [8, 8], strides = [1, 1]} : vector<16x96xf32> to vector<8x8xf32>
    %258 = vector.extract_strided_slice %255 {offsets = [0, 16], sizes = [8, 8], strides = [1, 1]} : vector<16x96xf32> to vector<8x8xf32>
    %259 = vector.extract_strided_slice %255 {offsets = [0, 24], sizes = [8, 8], strides = [1, 1]} : vector<16x96xf32> to vector<8x8xf32>
    %260 = vector.extract_strided_slice %255 {offsets = [8, 0], sizes = [8, 8], strides = [1, 1]} : vector<16x96xf32> to vector<8x8xf32>
    %261 = vector.extract_strided_slice %255 {offsets = [8, 8], sizes = [8, 8], strides = [1, 1]} : vector<16x96xf32> to vector<8x8xf32>
    %262 = vector.extract_strided_slice %255 {offsets = [8, 16], sizes = [8, 8], strides = [1, 1]} : vector<16x96xf32> to vector<8x8xf32>
    %263 = vector.extract_strided_slice %255 {offsets = [8, 24], sizes = [8, 8], strides = [1, 1]} : vector<16x96xf32> to vector<8x8xf32>
    %264 = vector.shape_cast %256 : vector<8x8xf32> to vector<1x8x8xf32>
    %265 = vector.shape_cast %257 : vector<8x8xf32> to vector<1x8x8xf32>
    %266 = vector.shape_cast %258 : vector<8x8xf32> to vector<1x8x8xf32>
    %267 = vector.shape_cast %259 : vector<8x8xf32> to vector<1x8x8xf32>
    %268 = vector.shape_cast %260 : vector<8x8xf32> to vector<1x8x8xf32>
    %269 = vector.shape_cast %261 : vector<8x8xf32> to vector<1x8x8xf32>
    %270 = vector.shape_cast %262 : vector<8x8xf32> to vector<1x8x8xf32>
    %271 = vector.shape_cast %263 : vector<8x8xf32> to vector<1x8x8xf32>
    %272 = tpu.concatenate %264, %265, %266, %267, %268, %269, %270, %271 in 0 : vector<1x8x8xf32>, vector<1x8x8xf32>, vector<1x8x8xf32>, vector<1x8x8xf32>, vector<1x8x8xf32>, vector<1x8x8xf32>, vector<1x8x8xf32>, vector<1x8x8xf32> -> vector<8x8x8xf32>
    %273 = vector.extract_strided_slice %255 {offsets = [0, 32], sizes = [8, 8], strides = [1, 1]} : vector<16x96xf32> to vector<8x8xf32>
    %274 = vector.extract_strided_slice %255 {offsets = [0, 40], sizes = [8, 8], strides = [1, 1]} : vector<16x96xf32> to vector<8x8xf32>
    %275 = vector.extract_strided_slice %255 {offsets = [0, 48], sizes = [8, 8], strides = [1, 1]} : vector<16x96xf32> to vector<8x8xf32>
    %276 = vector.extract_strided_slice %255 {offsets = [0, 56], sizes = [8, 8], strides = [1, 1]} : vector<16x96xf32> to vector<8x8xf32>
    %277 = vector.extract_strided_slice %255 {offsets = [8, 32], sizes = [8, 8], strides = [1, 1]} : vector<16x96xf32> to vector<8x8xf32>
    %278 = vector.extract_strided_slice %255 {offsets = [8, 40], sizes = [8, 8], strides = [1, 1]} : vector<16x96xf32> to vector<8x8xf32>
    %279 = vector.extract_strided_slice %255 {offsets = [8, 48], sizes = [8, 8], strides = [1, 1]} : vector<16x96xf32> to vector<8x8xf32>
    %280 = vector.extract_strided_slice %255 {offsets = [8, 56], sizes = [8, 8], strides = [1, 1]} : vector<16x96xf32> to vector<8x8xf32>
    %281 = vector.shape_cast %273 : vector<8x8xf32> to vector<1x8x8xf32>
    %282 = vector.shape_cast %274 : vector<8x8xf32> to vector<1x8x8xf32>
    %283 = vector.shape_cast %275 : vector<8x8xf32> to vector<1x8x8xf32>
    %284 = vector.shape_cast %276 : vector<8x8xf32> to vector<1x8x8xf32>
    %285 = vector.shape_cast %277 : vector<8x8xf32> to vector<1x8x8xf32>
    %286 = vector.shape_cast %278 : vector<8x8xf32> to vector<1x8x8xf32>
    %287 = vector.shape_cast %279 : vector<8x8xf32> to vector<1x8x8xf32>
    %288 = vector.shape_cast %280 : vector<8x8xf32> to vector<1x8x8xf32>
    %289 = tpu.concatenate %281, %282, %283, %284, %285, %286, %287, %288 in 0 : vector<1x8x8xf32>, vector<1x8x8xf32>, vector<1x8x8xf32>, vector<1x8x8xf32>, vector<1x8x8xf32>, vector<1x8x8xf32>, vector<1x8x8xf32>, vector<1x8x8xf32> -> vector<8x8x8xf32>
    %290 = vector.extract_strided_slice %255 {offsets = [0, 64], sizes = [8, 8], strides = [1, 1]} : vector<16x96xf32> to vector<8x8xf32>
    %291 = vector.extract_strided_slice %255 {offsets = [0, 72], sizes = [8, 8], strides = [1, 1]} : vector<16x96xf32> to vector<8x8xf32>
    %292 = vector.extract_strided_slice %255 {offsets = [0, 80], sizes = [8, 8], strides = [1, 1]} : vector<16x96xf32> to vector<8x8xf32>
    %293 = vector.extract_strided_slice %255 {offsets = [0, 88], sizes = [8, 8], strides = [1, 1]} : vector<16x96xf32> to vector<8x8xf32>
    %294 = vector.extract_strided_slice %255 {offsets = [8, 64], sizes = [8, 8], strides = [1, 1]} : vector<16x96xf32> to vector<8x8xf32>
    %295 = vector.extract_strided_slice %255 {offsets = [8, 72], sizes = [8, 8], strides = [1, 1]} : vector<16x96xf32> to vector<8x8xf32>
    %296 = vector.extract_strided_slice %255 {offsets = [8, 80], sizes = [8, 8], strides = [1, 1]} : vector<16x96xf32> to vector<8x8xf32>
    %297 = vector.extract_strided_slice %255 {offsets = [8, 88], sizes = [8, 8], strides = [1, 1]} : vector<16x96xf32> to vector<8x8xf32>
    %298 = vector.shape_cast %290 : vector<8x8xf32> to vector<1x8x8xf32>
    %299 = vector.shape_cast %291 : vector<8x8xf32> to vector<1x8x8xf32>
    %300 = vector.shape_cast %292 : vector<8x8xf32> to vector<1x8x8xf32>
    %301 = vector.shape_cast %293 : vector<8x8xf32> to vector<1x8x8xf32>
    %302 = vector.shape_cast %294 : vector<8x8xf32> to vector<1x8x8xf32>
    %303 = vector.shape_cast %295 : vector<8x8xf32> to vector<1x8x8xf32>
    %304 = vector.shape_cast %296 : vector<8x8xf32> to vector<1x8x8xf32>
    %305 = vector.shape_cast %297 : vector<8x8xf32> to vector<1x8x8xf32>
    %306 = tpu.concatenate %298, %299, %300, %301, %302, %303, %304, %305 in 0 : vector<1x8x8xf32>, vector<1x8x8xf32>, vector<1x8x8xf32>, vector<1x8x8xf32>, vector<1x8x8xf32>, vector<1x8x8xf32>, vector<1x8x8xf32>, vector<1x8x8xf32> -> vector<8x8x8xf32>
    "tpu.trace_start"() <{level = 10 : i32, message = "bqd,bkd->bqk"}> : () -> ()
    %cst_97 = arith.constant dense<0.000000e+00> : vector<8x8x8xf32>
    %307 = tpu.matmul %272, %289, %cst_97 {dimension_numbers = #tpu.dot_dimension_numbers<[2], [2], [1], [1], [0, 0, 0, 1, 1, 1], [0], [0]>} : vector<8x8x8xf32>, vector<8x8x8xf32>, vector<8x8x8xf32> -> vector<8x8x8xf32>
    "tpu.trace_stop"() : () -> ()
    %cst_98 = arith.constant 0.353553385 : f32
    %308 = vector.broadcast %cst_98 : f32 to vector<8x8x8xf32>
    %309 = arith.mulf %307, %308 : vector<8x8x8xf32>
    %cst_99 = arith.constant dense<0xFF800000> : vector<8x8xf32>
    %310 = vector.multi_reduction <maximumf>, %309, %cst_99 [2] : vector<8x8x8xf32> to vector<8x8xf32>
    %311 = vector.shape_cast %310 : vector<8x8xf32> to vector<8x8x1xf32>
    %312 = vector.broadcast %311 : vector<8x8x1xf32> to vector<8x8x8xf32>
    %313 = arith.subf %309, %312 : vector<8x8x8xf32>
    %314 = math.exp %313 : vector<8x8x8xf32>
    %cst_100 = arith.constant dense<0.000000e+00> : vector<8x8xf32>
    %315 = vector.multi_reduction <add>, %314, %cst_100 [2] : vector<8x8x8xf32> to vector<8x8xf32>
    %316 = vector.shape_cast %315 : vector<8x8xf32> to vector<8x8x1xf32>
    %317 = vector.broadcast %316 : vector<8x8x1xf32> to vector<8x8x8xf32>
    %318 = arith.divf %314, %317 : vector<8x8x8xf32>
    "tpu.trace_start"() <{level = 10 : i32, message = "bqk,bkd->bqd"}> : () -> ()
    %cst_101 = arith.constant dense<0.000000e+00> : vector<8x8x8xf32>
    %319 = tpu.matmul %318, %306, %cst_101 {dimension_numbers = #tpu.dot_dimension_numbers<[2], [1], [1], [2], [0, 0, 0, 1, 1, 2], [0], [0]>} : vector<8x8x8xf32>, vector<8x8x8xf32>, vector<8x8x8xf32> -> vector<8x8x8xf32>
    "tpu.trace_stop"() : () -> ()
    %320 = vector.extract_strided_slice %319 {offsets = [0, 0, 0], sizes = [1, 8, 8], strides = [1, 1, 1]} : vector<8x8x8xf32> to vector<1x8x8xf32>
    %321 = vector.shape_cast %320 : vector<1x8x8xf32> to vector<8x8xf32>
    %322 = vector.extract_strided_slice %319 {offsets = [1, 0, 0], sizes = [1, 8, 8], strides = [1, 1, 1]} : vector<8x8x8xf32> to vector<1x8x8xf32>
    %323 = vector.shape_cast %322 : vector<1x8x8xf32> to vector<8x8xf32>
    %324 = vector.extract_strided_slice %319 {offsets = [2, 0, 0], sizes = [1, 8, 8], strides = [1, 1, 1]} : vector<8x8x8xf32> to vector<1x8x8xf32>
    %325 = vector.shape_cast %324 : vector<1x8x8xf32> to vector<8x8xf32>
    %326 = vector.extract_strided_slice %319 {offsets = [3, 0, 0], sizes = [1, 8, 8], strides = [1, 1, 1]} : vector<8x8x8xf32> to vector<1x8x8xf32>
    %327 = vector.shape_cast %326 : vector<1x8x8xf32> to vector<8x8xf32>
    %328 = tpu.concatenate %321, %323, %325, %327 in 1 : vector<8x8xf32>, vector<8x8xf32>, vector<8x8xf32>, vector<8x8xf32> -> vector<8x32xf32>
    %329 = vector.extract_strided_slice %319 {offsets = [4, 0, 0], sizes = [1, 8, 8], strides = [1, 1, 1]} : vector<8x8x8xf32> to vector<1x8x8xf32>
    %330 = vector.shape_cast %329 : vector<1x8x8xf32> to vector<8x8xf32>
    %331 = vector.extract_strided_slice %319 {offsets = [5, 0, 0], sizes = [1, 8, 8], strides = [1, 1, 1]} : vector<8x8x8xf32> to vector<1x8x8xf32>
    %332 = vector.shape_cast %331 : vector<1x8x8xf32> to vector<8x8xf32>
    %333 = vector.extract_strided_slice %319 {offsets = [6, 0, 0], sizes = [1, 8, 8], strides = [1, 1, 1]} : vector<8x8x8xf32> to vector<1x8x8xf32>
    %334 = vector.shape_cast %333 : vector<1x8x8xf32> to vector<8x8xf32>
    %335 = vector.extract_strided_slice %319 {offsets = [7, 0, 0], sizes = [1, 8, 8], strides = [1, 1, 1]} : vector<8x8x8xf32> to vector<1x8x8xf32>
    %336 = vector.shape_cast %335 : vector<1x8x8xf32> to vector<8x8xf32>
    %337 = tpu.concatenate %330, %332, %334, %336 in 1 : vector<8x8xf32>, vector<8x8xf32>, vector<8x8xf32>, vector<8x8xf32> -> vector<8x32xf32>
    %338 = tpu.concatenate %328, %337 in 0 : vector<8x32xf32>, vector<8x32xf32> -> vector<16x32xf32>
    %cst_102 = arith.constant dense<0.000000e+00> : vector<16x32xf32>
    %339 = tpu.matmul %338, %221, %cst_102 {dimension_numbers = #tpu.dot_dimension_numbers<[1], [0], [0], [1], [0, 0, 1, 1], [], []>} : vector<16x32xf32>, vector<32x32xf32>, vector<16x32xf32> -> vector<16x32xf32>
    %340 = vector.broadcast %222 : vector<1x32xf32> to vector<16x32xf32>
    %341 = arith.addf %339, %340 : vector<16x32xf32>
    %342 = arith.addf %216, %341 : vector<16x32xf32>
    %cst_103 = arith.constant dense<0.000000e+00> : vector<16xf32>
    %343 = vector.multi_reduction <add>, %342, %cst_103 [1] : vector<16x32xf32> to vector<16xf32>
    %344 = vector.shape_cast %343 : vector<16xf32> to vector<16x1xf32>
    %cst_104 = arith.constant 3.200000e+01 : f32
    %345 = vector.broadcast %cst_104 : f32 to vector<16x1xf32>
    %346 = arith.divf %344, %345 : vector<16x1xf32>
    %347 = vector.broadcast %346 : vector<16x1xf32> to vector<16x32xf32>
    %348 = arith.subf %342, %347 : vector<16x32xf32>
    %349 = vector.broadcast %346 : vector<16x1xf32> to vector<16x32xf32>
    %350 = arith.subf %342, %349 : vector<16x32xf32>
    %351 = arith.mulf %348, %350 : vector<16x32xf32>
    %cst_105 = arith.constant dense<0.000000e+00> : vector<16xf32>
    %352 = vector.multi_reduction <add>, %351, %cst_105 [1] : vector<16x32xf32> to vector<16xf32>
    %353 = vector.shape_cast %352 : vector<16xf32> to vector<16x1xf32>
    %cst_106 = arith.constant 3.200000e+01 : f32
    %354 = vector.broadcast %cst_106 : f32 to vector<16x1xf32>
    %355 = arith.divf %353, %354 : vector<16x1xf32>
    %356 = vector.broadcast %346 : vector<16x1xf32> to vector<16x32xf32>
    %357 = arith.subf %342, %356 : vector<16x32xf32>
    %cst_107 = arith.constant 9.99999974E-6 : f32
    %358 = vector.broadcast %cst_107 : f32 to vector<16x1xf32>
    %359 = arith.addf %355, %358 : vector<16x1xf32>
    %360 = math.rsqrt %359 : vector<16x1xf32>
    %361 = vector.broadcast %360 : vector<16x1xf32> to vector<16x32xf32>
    %362 = arith.mulf %357, %361 : vector<16x32xf32>
    %363 = vector.broadcast %223 : vector<1x32xf32> to vector<16x32xf32>
    %364 = arith.mulf %362, %363 : vector<16x32xf32>
    %365 = vector.broadcast %224 : vector<1x32xf32> to vector<16x32xf32>
    %366 = arith.addf %364, %365 : vector<16x32xf32>
    %cst_108 = arith.constant dense<0.000000e+00> : vector<16x128xf32>
    %367 = tpu.matmul %366, %225, %cst_108 {dimension_numbers = #tpu.dot_dimension_numbers<[1], [0], [0], [1], [0, 0, 1, 1], [], []>} : vector<16x32xf32>, vector<32x128xf32>, vector<16x128xf32> -> vector<16x128xf32>
    %368 = vector.broadcast %226 : vector<1x128xf32> to vector<16x128xf32>
    %369 = arith.addf %367, %368 : vector<16x128xf32>
    %cst_109 = arith.constant 5.000000e-01 : f32
    %370 = vector.broadcast %cst_109 : f32 to vector<16x128xf32>
    %371 = arith.mulf %370, %369 : vector<16x128xf32>
    %cst_110 = arith.constant 4.471500e-02 : f32
    %372 = vector.broadcast %cst_110 : f32 to vector<16x128xf32>
    %373 = arith.mulf %372, %369 : vector<16x128xf32>
    %374 = arith.mulf %373, %369 : vector<16x128xf32>
    %375 = arith.mulf %374, %369 : vector<16x128xf32>
    %376 = arith.addf %369, %375 : vector<16x128xf32>
    %cst_111 = arith.constant 0.797884583 : f32
    %377 = vector.broadcast %cst_111 : f32 to vector<16x128xf32>
    %378 = arith.mulf %377, %376 : vector<16x128xf32>
    %379 = math.tanh %378 : vector<16x128xf32>
    %cst_112 = arith.constant 1.000000e+00 : f32
    %380 = vector.broadcast %cst_112 : f32 to vector<16x128xf32>
    %381 = arith.addf %380, %379 : vector<16x128xf32>
    %382 = arith.mulf %371, %381 : vector<16x128xf32>
    %cst_113 = arith.constant dense<0.000000e+00> : vector<16x32xf32>
    %383 = tpu.matmul %382, %227, %cst_113 {dimension_numbers = #tpu.dot_dimension_numbers<[1], [0], [0], [1], [0, 0, 1, 1], [], []>} : vector<16x128xf32>, vector<128x32xf32>, vector<16x32xf32> -> vector<16x32xf32>
    %384 = vector.broadcast %228 : vector<1x32xf32> to vector<16x32xf32>
    %385 = arith.addf %383, %384 : vector<16x32xf32>
    %386 = arith.addf %342, %385 : vector<16x32xf32>
    %c0_114 = arith.constant 0 : index
    %c0_115 = arith.constant 0 : index
    %387 = vector.load %arg30[%c0_114, %c0_115] : memref<32x96xf32, #tpu.memory_space<vmem>>, vector<32x96xf32>
    %c0_116 = arith.constant 0 : index
    %c0_117 = arith.constant 0 : index
    %388 = vector.load %arg31[%c0_116, %c0_117] : memref<1x96xf32, #tpu.memory_space<vmem>>, vector<1x96xf32>
    %c0_118 = arith.constant 0 : index
    %c0_119 = arith.constant 0 : index
    %389 = vector.load %arg32[%c0_118, %c0_119] : memref<32x32xf32, #tpu.memory_space<vmem>>, vector<32x32xf32>
    %c0_120 = arith.constant 0 : index
    %c0_121 = arith.constant 0 : index
    %390 = vector.load %arg33[%c0_120, %c0_121] : memref<1x32xf32, #tpu.memory_space<vmem>>, vector<1x32xf32>
    %cst_122 = arith.constant dense<0.000000e+00> : vector<16x96xf32>
    %391 = tpu.matmul %386, %387, %cst_122 {dimension_numbers = #tpu.dot_dimension_numbers<[1], [0], [0], [1], [0, 0, 1, 1], [], []>} : vector<16x32xf32>, vector<32x96xf32>, vector<16x96xf32> -> vector<16x96xf32>
    %392 = vector.broadcast %388 : vector<1x96xf32> to vector<16x96xf32>
    %393 = arith.addf %391, %392 : vector<16x96xf32>
    %394 = vector.extract_strided_slice %393 {offsets = [0, 0], sizes = [8, 8], strides = [1, 1]} : vector<16x96xf32> to vector<8x8xf32>
    %395 = vector.extract_strided_slice %393 {offsets = [0, 8], sizes = [8, 8], strides = [1, 1]} : vector<16x96xf32> to vector<8x8xf32>
    %396 = vector.extract_strided_slice %393 {offsets = [0, 16], sizes = [8, 8], strides = [1, 1]} : vector<16x96xf32> to vector<8x8xf32>
    %397 = vector.extract_strided_slice %393 {offsets = [0, 24], sizes = [8, 8], strides = [1, 1]} : vector<16x96xf32> to vector<8x8xf32>
    %398 = vector.extract_strided_slice %393 {offsets = [8, 0], sizes = [8, 8], strides = [1, 1]} : vector<16x96xf32> to vector<8x8xf32>
    %399 = vector.extract_strided_slice %393 {offsets = [8, 8], sizes = [8, 8], strides = [1, 1]} : vector<16x96xf32> to vector<8x8xf32>
    %400 = vector.extract_strided_slice %393 {offsets = [8, 16], sizes = [8, 8], strides = [1, 1]} : vector<16x96xf32> to vector<8x8xf32>
    %401 = vector.extract_strided_slice %393 {offsets = [8, 24], sizes = [8, 8], strides = [1, 1]} : vector<16x96xf32> to vector<8x8xf32>
    %402 = vector.shape_cast %394 : vector<8x8xf32> to vector<1x8x8xf32>
    %403 = vector.shape_cast %395 : vector<8x8xf32> to vector<1x8x8xf32>
    %404 = vector.shape_cast %396 : vector<8x8xf32> to vector<1x8x8xf32>
    %405 = vector.shape_cast %397 : vector<8x8xf32> to vector<1x8x8xf32>
    %406 = vector.shape_cast %398 : vector<8x8xf32> to vector<1x8x8xf32>
    %407 = vector.shape_cast %399 : vector<8x8xf32> to vector<1x8x8xf32>
    %408 = vector.shape_cast %400 : vector<8x8xf32> to vector<1x8x8xf32>
    %409 = vector.shape_cast %401 : vector<8x8xf32> to vector<1x8x8xf32>
    %410 = tpu.concatenate %402, %403, %404, %405, %406, %407, %408, %409 in 0 : vector<1x8x8xf32>, vector<1x8x8xf32>, vector<1x8x8xf32>, vector<1x8x8xf32>, vector<1x8x8xf32>, vector<1x8x8xf32>, vector<1x8x8xf32>, vector<1x8x8xf32> -> vector<8x8x8xf32>
    %411 = vector.extract_strided_slice %393 {offsets = [0, 32], sizes = [8, 8], strides = [1, 1]} : vector<16x96xf32> to vector<8x8xf32>
    %412 = vector.extract_strided_slice %393 {offsets = [0, 40], sizes = [8, 8], strides = [1, 1]} : vector<16x96xf32> to vector<8x8xf32>
    %413 = vector.extract_strided_slice %393 {offsets = [0, 48], sizes = [8, 8], strides = [1, 1]} : vector<16x96xf32> to vector<8x8xf32>
    %414 = vector.extract_strided_slice %393 {offsets = [0, 56], sizes = [8, 8], strides = [1, 1]} : vector<16x96xf32> to vector<8x8xf32>
    %415 = vector.extract_strided_slice %393 {offsets = [8, 32], sizes = [8, 8], strides = [1, 1]} : vector<16x96xf32> to vector<8x8xf32>
    %416 = vector.extract_strided_slice %393 {offsets = [8, 40], sizes = [8, 8], strides = [1, 1]} : vector<16x96xf32> to vector<8x8xf32>
    %417 = vector.extract_strided_slice %393 {offsets = [8, 48], sizes = [8, 8], strides = [1, 1]} : vector<16x96xf32> to vector<8x8xf32>
    %418 = vector.extract_strided_slice %393 {offsets = [8, 56], sizes = [8, 8], strides = [1, 1]} : vector<16x96xf32> to vector<8x8xf32>
    %419 = vector.shape_cast %411 : vector<8x8xf32> to vector<1x8x8xf32>
    %420 = vector.shape_cast %412 : vector<8x8xf32> to vector<1x8x8xf32>
    %421 = vector.shape_cast %413 : vector<8x8xf32> to vector<1x8x8xf32>
    %422 = vector.shape_cast %414 : vector<8x8xf32> to vector<1x8x8xf32>
    %423 = vector.shape_cast %415 : vector<8x8xf32> to vector<1x8x8xf32>
    %424 = vector.shape_cast %416 : vector<8x8xf32> to vector<1x8x8xf32>
    %425 = vector.shape_cast %417 : vector<8x8xf32> to vector<1x8x8xf32>
    %426 = vector.shape_cast %418 : vector<8x8xf32> to vector<1x8x8xf32>
    %427 = tpu.concatenate %419, %420, %421, %422, %423, %424, %425, %426 in 0 : vector<1x8x8xf32>, vector<1x8x8xf32>, vector<1x8x8xf32>, vector<1x8x8xf32>, vector<1x8x8xf32>, vector<1x8x8xf32>, vector<1x8x8xf32>, vector<1x8x8xf32> -> vector<8x8x8xf32>
    %428 = vector.extract_strided_slice %393 {offsets = [0, 64], sizes = [8, 8], strides = [1, 1]} : vector<16x96xf32> to vector<8x8xf32>
    %429 = vector.extract_strided_slice %393 {offsets = [0, 72], sizes = [8, 8], strides = [1, 1]} : vector<16x96xf32> to vector<8x8xf32>
    %430 = vector.extract_strided_slice %393 {offsets = [0, 80], sizes = [8, 8], strides = [1, 1]} : vector<16x96xf32> to vector<8x8xf32>
    %431 = vector.extract_strided_slice %393 {offsets = [0, 88], sizes = [8, 8], strides = [1, 1]} : vector<16x96xf32> to vector<8x8xf32>
    %432 = vector.extract_strided_slice %393 {offsets = [8, 64], sizes = [8, 8], strides = [1, 1]} : vector<16x96xf32> to vector<8x8xf32>
    %433 = vector.extract_strided_slice %393 {offsets = [8, 72], sizes = [8, 8], strides = [1, 1]} : vector<16x96xf32> to vector<8x8xf32>
    %434 = vector.extract_strided_slice %393 {offsets = [8, 80], sizes = [8, 8], strides = [1, 1]} : vector<16x96xf32> to vector<8x8xf32>
    %435 = vector.extract_strided_slice %393 {offsets = [8, 88], sizes = [8, 8], strides = [1, 1]} : vector<16x96xf32> to vector<8x8xf32>
    %436 = vector.shape_cast %428 : vector<8x8xf32> to vector<1x8x8xf32>
    %437 = vector.shape_cast %429 : vector<8x8xf32> to vector<1x8x8xf32>
    %438 = vector.shape_cast %430 : vector<8x8xf32> to vector<1x8x8xf32>
    %439 = vector.shape_cast %431 : vector<8x8xf32> to vector<1x8x8xf32>
    %440 = vector.shape_cast %432 : vector<8x8xf32> to vector<1x8x8xf32>
    %441 = vector.shape_cast %433 : vector<8x8xf32> to vector<1x8x8xf32>
    %442 = vector.shape_cast %434 : vector<8x8xf32> to vector<1x8x8xf32>
    %443 = vector.shape_cast %435 : vector<8x8xf32> to vector<1x8x8xf32>
    %444 = tpu.concatenate %436, %437, %438, %439, %440, %441, %442, %443 in 0 : vector<1x8x8xf32>, vector<1x8x8xf32>, vector<1x8x8xf32>, vector<1x8x8xf32>, vector<1x8x8xf32>, vector<1x8x8xf32>, vector<1x8x8xf32>, vector<1x8x8xf32> -> vector<8x8x8xf32>
    "tpu.trace_start"() <{level = 10 : i32, message = "bqd,bkd->bqk"}> : () -> ()
    %cst_123 = arith.constant dense<0.000000e+00> : vector<8x8x8xf32>
    %445 = tpu.matmul %410, %427, %cst_123 {dimension_numbers = #tpu.dot_dimension_numbers<[2], [2], [1], [1], [0, 0, 0, 1, 1, 1], [0], [0]>} : vector<8x8x8xf32>, vector<8x8x8xf32>, vector<8x8x8xf32> -> vector<8x8x8xf32>
    "tpu.trace_stop"() : () -> ()
    %cst_124 = arith.constant 0.353553385 : f32
    %446 = vector.broadcast %cst_124 : f32 to vector<8x8x8xf32>
    %447 = arith.mulf %445, %446 : vector<8x8x8xf32>
    %cst_125 = arith.constant dense<0xFF800000> : vector<8x8xf32>
    %448 = vector.multi_reduction <maximumf>, %447, %cst_125 [2] : vector<8x8x8xf32> to vector<8x8xf32>
    %449 = vector.shape_cast %448 : vector<8x8xf32> to vector<8x8x1xf32>
    %450 = vector.broadcast %449 : vector<8x8x1xf32> to vector<8x8x8xf32>
    %451 = arith.subf %447, %450 : vector<8x8x8xf32>
    %452 = math.exp %451 : vector<8x8x8xf32>
    %cst_126 = arith.constant dense<0.000000e+00> : vector<8x8xf32>
    %453 = vector.multi_reduction <add>, %452, %cst_126 [2] : vector<8x8x8xf32> to vector<8x8xf32>
    %454 = vector.shape_cast %453 : vector<8x8xf32> to vector<8x8x1xf32>
    %455 = vector.broadcast %454 : vector<8x8x1xf32> to vector<8x8x8xf32>
    %456 = arith.divf %452, %455 : vector<8x8x8xf32>
    "tpu.trace_start"() <{level = 10 : i32, message = "bqk,bkd->bqd"}> : () -> ()
    %cst_127 = arith.constant dense<0.000000e+00> : vector<8x8x8xf32>
    %457 = tpu.matmul %456, %444, %cst_127 {dimension_numbers = #tpu.dot_dimension_numbers<[2], [1], [1], [2], [0, 0, 0, 1, 1, 2], [0], [0]>} : vector<8x8x8xf32>, vector<8x8x8xf32>, vector<8x8x8xf32> -> vector<8x8x8xf32>
    "tpu.trace_stop"() : () -> ()
    %458 = vector.extract_strided_slice %457 {offsets = [0, 0, 0], sizes = [1, 8, 8], strides = [1, 1, 1]} : vector<8x8x8xf32> to vector<1x8x8xf32>
    %459 = vector.shape_cast %458 : vector<1x8x8xf32> to vector<8x8xf32>
    %460 = vector.extract_strided_slice %457 {offsets = [1, 0, 0], sizes = [1, 8, 8], strides = [1, 1, 1]} : vector<8x8x8xf32> to vector<1x8x8xf32>
    %461 = vector.shape_cast %460 : vector<1x8x8xf32> to vector<8x8xf32>
    %462 = vector.extract_strided_slice %457 {offsets = [2, 0, 0], sizes = [1, 8, 8], strides = [1, 1, 1]} : vector<8x8x8xf32> to vector<1x8x8xf32>
    %463 = vector.shape_cast %462 : vector<1x8x8xf32> to vector<8x8xf32>
    %464 = vector.extract_strided_slice %457 {offsets = [3, 0, 0], sizes = [1, 8, 8], strides = [1, 1, 1]} : vector<8x8x8xf32> to vector<1x8x8xf32>
    %465 = vector.shape_cast %464 : vector<1x8x8xf32> to vector<8x8xf32>
    %466 = tpu.concatenate %459, %461, %463, %465 in 1 : vector<8x8xf32>, vector<8x8xf32>, vector<8x8xf32>, vector<8x8xf32> -> vector<8x32xf32>
    %467 = vector.extract_strided_slice %457 {offsets = [4, 0, 0], sizes = [1, 8, 8], strides = [1, 1, 1]} : vector<8x8x8xf32> to vector<1x8x8xf32>
    %468 = vector.shape_cast %467 : vector<1x8x8xf32> to vector<8x8xf32>
    %469 = vector.extract_strided_slice %457 {offsets = [5, 0, 0], sizes = [1, 8, 8], strides = [1, 1, 1]} : vector<8x8x8xf32> to vector<1x8x8xf32>
    %470 = vector.shape_cast %469 : vector<1x8x8xf32> to vector<8x8xf32>
    %471 = vector.extract_strided_slice %457 {offsets = [6, 0, 0], sizes = [1, 8, 8], strides = [1, 1, 1]} : vector<8x8x8xf32> to vector<1x8x8xf32>
    %472 = vector.shape_cast %471 : vector<1x8x8xf32> to vector<8x8xf32>
    %473 = vector.extract_strided_slice %457 {offsets = [7, 0, 0], sizes = [1, 8, 8], strides = [1, 1, 1]} : vector<8x8x8xf32> to vector<1x8x8xf32>
    %474 = vector.shape_cast %473 : vector<1x8x8xf32> to vector<8x8xf32>
    %475 = tpu.concatenate %468, %470, %472, %474 in 1 : vector<8x8xf32>, vector<8x8xf32>, vector<8x8xf32>, vector<8x8xf32> -> vector<8x32xf32>
    %476 = tpu.concatenate %466, %475 in 0 : vector<8x32xf32>, vector<8x32xf32> -> vector<16x32xf32>
    %cst_128 = arith.constant dense<0.000000e+00> : vector<16x32xf32>
    %477 = tpu.matmul %476, %389, %cst_128 {dimension_numbers = #tpu.dot_dimension_numbers<[1], [0], [0], [1], [0, 0, 1, 1], [], []>} : vector<16x32xf32>, vector<32x32xf32>, vector<16x32xf32> -> vector<16x32xf32>
    %478 = vector.broadcast %390 : vector<1x32xf32> to vector<16x32xf32>
    %479 = arith.addf %477, %478 : vector<16x32xf32>
    %480 = tpu.iota {dimensions = array<i32: 0>} : vector<2x16xi32>
    %481 = tpu.iota {dimensions = array<i32: 1>} : vector<2x16xi32>
    %c8_i32 = arith.constant 8 : i32
    %482 = vector.broadcast %c8_i32 : i32 to vector<2x16xi32>
    %483 = arith.muli %480, %482 : vector<2x16xi32>
    %484 = arith.cmpi sge, %481, %483 : vector<2x16xi32>
    %c1_i32 = arith.constant 1 : i32
    %485 = vector.broadcast %c1_i32 : i32 to vector<2x16xi32>
    %486 = arith.addi %480, %485 : vector<2x16xi32>
    %c8_i32_129 = arith.constant 8 : i32
    %487 = vector.broadcast %c8_i32_129 : i32 to vector<2x16xi32>
    %488 = arith.muli %486, %487 : vector<2x16xi32>
    %489 = arith.cmpi slt, %481, %488 : vector<2x16xi32>
    %490 = arith.andi %484, %489 : vector<2x16xi1>
    %cst_130 = arith.constant 1.250000e-01 : f32
    %cst_131 = arith.constant 0.000000e+00 : f32
    %491 = vector.broadcast %cst_130 : f32 to vector<2x16xf32>
    %492 = vector.broadcast %cst_131 : f32 to vector<2x16xf32>
    %493 = arith.select %490, %491, %492 : vector<2x16xi1>, vector<2x16xf32>
    %cst_132 = arith.constant dense<0.000000e+00> : vector<2x32xf32>
    %494 = tpu.matmul %493, %479, %cst_132 {dimension_numbers = #tpu.dot_dimension_numbers<[1], [0], [0], [1], [0, 0, 1, 1], [], []>} : vector<2x16xf32>, vector<16x32xf32>, vector<2x32xf32> -> vector<2x32xf32>
    %cst_133 = arith.constant dense<0.000000e+00> : vector<2xf32>
    %495 = vector.multi_reduction <add>, %494, %cst_133 [1] : vector<2x32xf32> to vector<2xf32>
    %496 = vector.shape_cast %495 : vector<2xf32> to vector<2x1xf32>
    %cst_134 = arith.constant 3.200000e+01 : f32
    %497 = vector.broadcast %cst_134 : f32 to vector<2x1xf32>
    %498 = arith.divf %496, %497 : vector<2x1xf32>
    %499 = vector.broadcast %498 : vector<2x1xf32> to vector<2x32xf32>
    %500 = arith.subf %494, %499 : vector<2x32xf32>
    %501 = vector.broadcast %498 : vector<2x1xf32> to vector<2x32xf32>
    %502 = arith.subf %494, %501 : vector<2x32xf32>
    %503 = arith.mulf %500, %502 : vector<2x32xf32>
    %cst_135 = arith.constant dense<0.000000e+00> : vector<2xf32>
    %504 = vector.multi_reduction <add>, %503, %cst_135 [1] : vector<2x32xf32> to vector<2xf32>
    %505 = vector.shape_cast %504 : vector<2xf32> to vector<2x1xf32>
    %cst_136 = arith.constant 3.200000e+01 : f32
    %506 = vector.broadcast %cst_136 : f32 to vector<2x1xf32>
    %507 = arith.divf %505, %506 : vector<2x1xf32>
    %508 = vector.broadcast %498 : vector<2x1xf32> to vector<2x32xf32>
    %509 = arith.subf %494, %508 : vector<2x32xf32>
    %cst_137 = arith.constant 9.99999974E-6 : f32
    %510 = vector.broadcast %cst_137 : f32 to vector<2x1xf32>
    %511 = arith.addf %507, %510 : vector<2x1xf32>
    %512 = math.rsqrt %511 : vector<2x1xf32>
    %513 = vector.broadcast %512 : vector<2x1xf32> to vector<2x32xf32>
    %514 = arith.mulf %509, %513 : vector<2x32xf32>
    %c0_138 = arith.constant 0 : index
    %c0_139 = arith.constant 0 : index
    %515 = vector.load %arg34[%c0_138, %c0_139] : memref<1x32xf32, #tpu.memory_space<vmem>>, vector<1x32xf32>
    %c0_140 = arith.constant 0 : index
    %c0_141 = arith.constant 0 : index
    %516 = vector.load %arg35[%c0_140, %c0_141] : memref<1x32xf32, #tpu.memory_space<vmem>>, vector<1x32xf32>
    %c0_142 = arith.constant 0 : index
    %c0_143 = arith.constant 0 : index
    %517 = vector.load %arg36[%c0_142, %c0_143] : memref<32x16xf32, #tpu.memory_space<vmem>>, vector<32x16xf32>
    %c0_144 = arith.constant 0 : index
    %c0_145 = arith.constant 0 : index
    %518 = vector.load %arg37[%c0_144, %c0_145] : memref<1x16xf32, #tpu.memory_space<vmem>>, vector<1x16xf32>
    %c0_146 = arith.constant 0 : index
    %c0_147 = arith.constant 0 : index
    %519 = vector.load %arg38[%c0_146, %c0_147] : memref<16x8xf32, #tpu.memory_space<vmem>>, vector<16x8xf32>
    %c0_148 = arith.constant 0 : index
    %c0_149 = arith.constant 0 : index
    %520 = vector.load %arg39[%c0_148, %c0_149] : memref<1x8xf32, #tpu.memory_space<vmem>>, vector<1x8xf32>
    %c0_150 = arith.constant 0 : index
    %c0_151 = arith.constant 0 : index
    %521 = vector.load %arg40[%c0_150, %c0_151] : memref<8x1xf32, #tpu.memory_space<vmem>>, vector<8x1xf32>
    %c0_152 = arith.constant 0 : index
    %c0_153 = arith.constant 0 : index
    %522 = vector.load %arg41[%c0_152, %c0_153] : memref<1x1xf32, #tpu.memory_space<vmem>>, vector<1x1xf32>
    %523 = vector.broadcast %515 : vector<1x32xf32> to vector<2x32xf32>
    %524 = arith.mulf %514, %523 : vector<2x32xf32>
    %525 = vector.broadcast %516 : vector<1x32xf32> to vector<2x32xf32>
    %526 = arith.addf %524, %525 : vector<2x32xf32>
    %cst_154 = arith.constant dense<0.000000e+00> : vector<2x16xf32>
    %527 = tpu.matmul %526, %517, %cst_154 {dimension_numbers = #tpu.dot_dimension_numbers<[1], [0], [0], [1], [0, 0, 1, 1], [], []>} : vector<2x32xf32>, vector<32x16xf32>, vector<2x16xf32> -> vector<2x16xf32>
    %528 = vector.broadcast %518 : vector<1x16xf32> to vector<2x16xf32>
    %529 = arith.addf %527, %528 : vector<2x16xf32>
    %cst_155 = arith.constant 5.000000e-01 : f32
    %530 = vector.broadcast %cst_155 : f32 to vector<2x16xf32>
    %531 = arith.mulf %530, %529 : vector<2x16xf32>
    %cst_156 = arith.constant 4.471500e-02 : f32
    %532 = vector.broadcast %cst_156 : f32 to vector<2x16xf32>
    %533 = arith.mulf %532, %529 : vector<2x16xf32>
    %534 = arith.mulf %533, %529 : vector<2x16xf32>
    %535 = arith.mulf %534, %529 : vector<2x16xf32>
    %536 = arith.addf %529, %535 : vector<2x16xf32>
    %cst_157 = arith.constant 0.797884583 : f32
    %537 = vector.broadcast %cst_157 : f32 to vector<2x16xf32>
    %538 = arith.mulf %537, %536 : vector<2x16xf32>
    %539 = math.tanh %538 : vector<2x16xf32>
    %cst_158 = arith.constant 1.000000e+00 : f32
    %540 = vector.broadcast %cst_158 : f32 to vector<2x16xf32>
    %541 = arith.addf %540, %539 : vector<2x16xf32>
    %542 = arith.mulf %531, %541 : vector<2x16xf32>
    %cst_159 = arith.constant dense<0.000000e+00> : vector<2x8xf32>
    %543 = tpu.matmul %542, %519, %cst_159 {dimension_numbers = #tpu.dot_dimension_numbers<[1], [0], [0], [1], [0, 0, 1, 1], [], []>} : vector<2x16xf32>, vector<16x8xf32>, vector<2x8xf32> -> vector<2x8xf32>
    %544 = vector.broadcast %520 : vector<1x8xf32> to vector<2x8xf32>
    %545 = arith.addf %543, %544 : vector<2x8xf32>
    %cst_160 = arith.constant 5.000000e-01 : f32
    %546 = vector.broadcast %cst_160 : f32 to vector<2x8xf32>
    %547 = arith.mulf %546, %545 : vector<2x8xf32>
    %cst_161 = arith.constant 4.471500e-02 : f32
    %548 = vector.broadcast %cst_161 : f32 to vector<2x8xf32>
    %549 = arith.mulf %548, %545 : vector<2x8xf32>
    %550 = arith.mulf %549, %545 : vector<2x8xf32>
    %551 = arith.mulf %550, %545 : vector<2x8xf32>
    %552 = arith.addf %545, %551 : vector<2x8xf32>
    %cst_162 = arith.constant 0.797884583 : f32
    %553 = vector.broadcast %cst_162 : f32 to vector<2x8xf32>
    %554 = arith.mulf %553, %552 : vector<2x8xf32>
    %555 = math.tanh %554 : vector<2x8xf32>
    %cst_163 = arith.constant 1.000000e+00 : f32
    %556 = vector.broadcast %cst_163 : f32 to vector<2x8xf32>
    %557 = arith.addf %556, %555 : vector<2x8xf32>
    %558 = arith.mulf %547, %557 : vector<2x8xf32>
    %cst_164 = arith.constant dense<0.000000e+00> : vector<2x1xf32>
    %559 = tpu.matmul %558, %521, %cst_164 {dimension_numbers = #tpu.dot_dimension_numbers<[1], [0], [0], [1], [0, 0, 1, 1], [], []>} : vector<2x8xf32>, vector<8x1xf32>, vector<2x1xf32> -> vector<2x1xf32>
    %560 = vector.broadcast %522 : vector<1x1xf32> to vector<2x1xf32>
    %561 = arith.addf %559, %560 : vector<2x1xf32>
    %c0_165 = arith.constant 0 : index
    %c0_166 = arith.constant 0 : index
    %562 = vector.load %arg42[%c0_165, %c0_166] : memref<32x24xf32, #tpu.memory_space<vmem>>, vector<32x24xf32>
    %c0_167 = arith.constant 0 : index
    %c0_168 = arith.constant 0 : index
    %563 = vector.load %arg43[%c0_167, %c0_168] : memref<1x24xf32, #tpu.memory_space<vmem>>, vector<1x24xf32>
    %c0_169 = arith.constant 0 : index
    %c0_170 = arith.constant 0 : index
    %564 = vector.load %arg44[%c0_169, %c0_170] : memref<24x4xf32, #tpu.memory_space<vmem>>, vector<24x4xf32>
    %c0_171 = arith.constant 0 : index
    %c0_172 = arith.constant 0 : index
    %565 = vector.load %arg45[%c0_171, %c0_172] : memref<1x4xf32, #tpu.memory_space<vmem>>, vector<1x4xf32>
    %cst_173 = arith.constant dense<0.000000e+00> : vector<2x24xf32>
    %566 = tpu.matmul %514, %562, %cst_173 {dimension_numbers = #tpu.dot_dimension_numbers<[1], [0], [0], [1], [0, 0, 1, 1], [], []>} : vector<2x32xf32>, vector<32x24xf32>, vector<2x24xf32> -> vector<2x24xf32>
    %567 = vector.broadcast %563 : vector<1x24xf32> to vector<2x24xf32>
    %568 = arith.addf %566, %567 : vector<2x24xf32>
    %cst_174 = arith.constant 5.000000e-01 : f32
    %569 = vector.broadcast %cst_174 : f32 to vector<2x24xf32>
    %570 = arith.mulf %569, %568 : vector<2x24xf32>
    %cst_175 = arith.constant 4.471500e-02 : f32
    %571 = vector.broadcast %cst_175 : f32 to vector<2x24xf32>
    %572 = arith.mulf %571, %568 : vector<2x24xf32>
    %573 = arith.mulf %572, %568 : vector<2x24xf32>
    %574 = arith.mulf %573, %568 : vector<2x24xf32>
    %575 = arith.addf %568, %574 : vector<2x24xf32>
    %cst_176 = arith.constant 0.797884583 : f32
    %576 = vector.broadcast %cst_176 : f32 to vector<2x24xf32>
    %577 = arith.mulf %576, %575 : vector<2x24xf32>
    %578 = math.tanh %577 : vector<2x24xf32>
    %cst_177 = arith.constant 1.000000e+00 : f32
    %579 = vector.broadcast %cst_177 : f32 to vector<2x24xf32>
    %580 = arith.addf %579, %578 : vector<2x24xf32>
    %581 = arith.mulf %570, %580 : vector<2x24xf32>
    %cst_178 = arith.constant dense<0.000000e+00> : vector<2x4xf32>
    %582 = tpu.matmul %581, %564, %cst_178 {dimension_numbers = #tpu.dot_dimension_numbers<[1], [0], [0], [1], [0, 0, 1, 1], [], []>} : vector<2x24xf32>, vector<24x4xf32>, vector<2x4xf32> -> vector<2x4xf32>
    %583 = vector.broadcast %565 : vector<1x4xf32> to vector<2x4xf32>
    %584 = arith.addf %582, %583 : vector<2x4xf32>
    %585 = tpu.iota {dimensions = array<i32: 1>} : vector<2x4xi32>
    %c0_i32 = arith.constant 0 : i32
    %586 = vector.broadcast %c0_i32 : i32 to vector<2x4xi32>
    %587 = arith.cmpi eq, %585, %586 : vector<2x4xi32>
    %c1_i32_179 = arith.constant 1 : i32
    %588 = vector.broadcast %c1_i32_179 : i32 to vector<2x4xi32>
    %589 = arith.cmpi eq, %585, %588 : vector<2x4xi32>
    %cst_180 = arith.constant 0.000000e+00 : f32
    %590 = vector.broadcast %cst_180 : f32 to vector<2x4xf32>
    %591 = arith.subf %590, %584 : vector<2x4xf32>
    %592 = math.exp %591 : vector<2x4xf32>
    %cst_181 = arith.constant 1.000000e+00 : f32
    %593 = vector.broadcast %cst_181 : f32 to vector<2x4xf32>
    %594 = arith.addf %593, %592 : vector<2x4xf32>
    %cst_182 = arith.constant 1.000000e+00 : f32
    %595 = vector.broadcast %cst_182 : f32 to vector<2x4xf32>
    %596 = arith.divf %595, %594 : vector<2x4xf32>
    %cst_183 = arith.constant 2.000000e+01 : f32
    %597 = vector.broadcast %cst_183 : f32 to vector<2x4xf32>
    %598 = arith.cmpf ogt, %584, %597 : vector<2x4xf32>
    %cst_184 = arith.constant 0.000000e+00 : f32
    %599 = vector.broadcast %cst_184 : f32 to vector<2x4xf32>
    %600 = arith.maximumf %584, %599 : vector<2x4xf32>
    %601 = math.absf %584 : vector<2x4xf32>
    %cst_185 = arith.constant 0.000000e+00 : f32
    %602 = vector.broadcast %cst_185 : f32 to vector<2x4xf32>
    %603 = arith.subf %602, %601 : vector<2x4xf32>
    %604 = math.exp %603 : vector<2x4xf32>
    %cst_186 = arith.constant 1.000000e+00 : f32
    %605 = vector.broadcast %cst_186 : f32 to vector<2x4xf32>
    %606 = arith.addf %605, %604 : vector<2x4xf32>
    %607 = math.log %606 : vector<2x4xf32>
    %608 = arith.addf %600, %607 : vector<2x4xf32>
    %609 = arith.select %598, %584, %608 : vector<2x4xi1>, vector<2x4xf32>
    %610 = arith.select %589, %596, %609 : vector<2x4xi1>, vector<2x4xf32>
    %611 = vector.shape_cast %561 : vector<2x1xf32> to vector<2x1xf32>
    %612 = vector.broadcast %611 : vector<2x1xf32> to vector<2x4xf32>
    %613 = arith.select %587, %612, %610 : vector<2x4xi1>, vector<2x4xf32>
    %c0_187 = arith.constant 0 : index
    %c0_188 = arith.constant 0 : index
    %614 = vector.load %arg46[%c0_187, %c0_188] : memref<2x4xf32, #tpu.memory_space<vmem>>, vector<2x4xf32>
    tpu.vector_store %arg46[%c0_187, %c0_188], %613 {strides = array<i32>} : memref<2x4xf32, #tpu.memory_space<vmem>>, vector<2x4xf32>,
    return
  }
}

</mosaic_0001>

<llo_original>
// kernel: quantum_transformer_forward.1
$region0: #{quantum_transformer_forward.1}
  #allocation0 [shape = 'u32[]', space=smem, size = 0x4, offset = 0x4, fixed_abs, tag = 'smem constant byte address 0x4 - core index']
  #allocation1 [shape = 'u32[144,128]{1,0:T(1,128)}', space=vmem, size = 0x12000, scoped, tag = 'internal scratch']
  #allocation2 [shape = 'f32[1,1]{1,0:T(1,128)S(1)}', space=vmem, size = 0x200, scoped, tag = 'scoped memory for quantum_transformer_forward.1']
  %s0 = inlined_call_operand.smem [shape: u32[47], index: -1, kind: input, shape index: {}]
  %s1 = sld [smem:[%s0]]
  %s2 = scalar_lea.smem %s0, 1
  %s3 = sld [smem:[%s2]]
  %s4 = scalar_lea.smem %s0, 2
  %s5 = sld [smem:[%s4]]
  %s6 = scalar_lea.smem %s0, 3
  %s7 = sld [smem:[%s6]]
  %s8 = scalar_lea.smem %s0, 4
  %s9 = sld [smem:[%s8]]
  %s10 = scalar_lea.smem %s0, 5
  %s11 = sld [smem:[%s10]]
  %s12 = scalar_lea.smem %s0, 6
  %s13 = sld [smem:[%s12]]
  %s14 = scalar_lea.smem %s0, 7
  %s15 = sld [smem:[%s14]]
  %s16 = scalar_lea.smem %s0, 8
  %s17 = sld [smem:[%s16]]
  %s18 = scalar_lea.smem %s0, 9
  %s19 = sld [smem:[%s18]]
  %s20 = scalar_lea.smem %s0, 10
  %s21 = sld [smem:[%s20]]
  %s22 = scalar_lea.smem %s0, 11
  %s23 = sld [smem:[%s22]]
  %s24 = scalar_lea.smem %s0, 12
  %s25 = sld [smem:[%s24]]
  %s26 = scalar_lea.smem %s0, 13
  %s27 = sld [smem:[%s26]]
  %s28 = scalar_lea.smem %s0, 14
  %s29 = sld [smem:[%s28]]
  %s30 = scalar_lea.smem %s0, 15
  %s31 = sld [smem:[%s30]]
  %s32 = scalar_lea.smem %s0, 16
  %s33 = sld [smem:[%s32]]
  %s34 = scalar_lea.smem %s0, 17
  %s35 = sld [smem:[%s34]]
  %s36 = scalar_lea.smem %s0, 18
  %s37 = sld [smem:[%s36]]
  %s38 = scalar_lea.smem %s0, 19
  %s39 = sld [smem:[%s38]]
  %s40 = scalar_lea.smem %s0, 20
  %s41 = sld [smem:[%s40]]
  %s42 = scalar_lea.smem %s0, 21
  %s43 = sld [smem:[%s42]]
  %s44 = scalar_lea.smem %s0, 22
  %s45 = sld [smem:[%s44]]
  %s46 = scalar_lea.smem %s0, 23
  %s47 = sld [smem:[%s46]]
  %s48 = scalar_lea.smem %s0, 24
  %s49 = sld [smem:[%s48]]
  %s50 = scalar_lea.smem %s0, 25
  %s51 = sld [smem:[%s50]]
  %s52 = scalar_lea.smem %s0, 26
  %s53 = sld [smem:[%s52]]
  %s54 = scalar_lea.smem %s0, 27
  %s55 = sld [smem:[%s54]]
  %s56 = scalar_lea.smem %s0, 28
  %s57 = sld [smem:[%s56]]
  %s58 = scalar_lea.smem %s0, 29
  %s59 = sld [smem:[%s58]]
  %s60 = scalar_lea.smem %s0, 30
  %s61 = sld [smem:[%s60]]
  %s62 = scalar_lea.smem %s0, 31
  %s63 = sld [smem:[%s62]]
  %s64 = scalar_lea.smem %s0, 32
  %s65 = sld [smem:[%s64]]
  %s66 = scalar_lea.smem %s0, 33
  %s67 = sld [smem:[%s66]]
  %s68 = scalar_lea.smem %s0, 34
  %s69 = sld [smem:[%s68]]
  %s70 = scalar_lea.smem %s0, 35
  %s71 = sld [smem:[%s70]]
  %s72 = scalar_lea.smem %s0, 36
  %s73 = sld [smem:[%s72]]
  %s74 = scalar_lea.smem %s0, 37
  %s75 = sld [smem:[%s74]]
  %s76 = scalar_lea.smem %s0, 38
  %s77 = sld [smem:[%s76]]
  %s78 = scalar_lea.smem %s0, 39
  %s79 = sld [smem:[%s78]]
  %s80 = scalar_lea.smem %s0, 40
  %s81 = sld [smem:[%s80]]
  %s82 = scalar_lea.smem %s0, 41
  %s83 = sld [smem:[%s82]]
  %s84 = scalar_lea.smem %s0, 42
  %s85 = sld [smem:[%s84]]
  %s86 = scalar_lea.smem %s0, 43
  %s87 = sld [smem:[%s86]]
  %s88 = scalar_lea.smem %s0, 44
  %s89 = sld [smem:[%s88]]
  %s90 = scalar_lea.smem %s0, 45
  %s91 = sld [smem:[%s90]]
  %s92 = scalar_lea.smem %s0, 46
  %s93 = sld [smem:[%s92]]
  %s94 = sld [smem:[#allocation0]]
  $region194: #{quantum_transformer_forward.1} parent=0
    _
  %s96 = ssub.s32 1, %s94
  %s97 = scalar_select 0, %s96, %s94
  %v98 = vstv %s83
  %99 = vst [vmem:[#allocation2] sm:$0x1] %v98
  // Predicated region
  $region2: #{quantum_transformer_forward.1} parent=0 // pred_check
    _
  $region3: #{quantum_transformer_forward.1} parent=0 // pred_check_branch
    %101 = sbr.rel (0) target = $region5
  $region4: #{quantum_transformer_forward.1} parent=0 // pred_region
    _
  $region5: #{quantum_transformer_forward.1} parent=0 // pred_fallthru
    _
  // Predicated region
  $region6: #{quantum_transformer_forward.1} parent=0 // pred_check
    _
  $region7: #{quantum_transformer_forward.1} parent=0 // pred_check_branch
    %103 = sbr.rel (0) target = $region9
  $region8: #{quantum_transformer_forward.1} parent=0 // pred_region
    _
  $region9: #{quantum_transformer_forward.1} parent=0 // pred_fallthru
    _
  // Predicated region
  $region10: #{quantum_transformer_forward.1} parent=0 // pred_check
    _
  $region11: #{quantum_transformer_forward.1} parent=0 // pred_check_branch
    %105 = sbr.rel (0) target = $region13
  $region12: #{quantum_transformer_forward.1} parent=0 // pred_region
    _
  $region13: #{quantum_transformer_forward.1} parent=0 // pred_fallthru
    _
  // Predicated region
  $region14: #{quantum_transformer_forward.1} parent=0 // pred_check
    _
  $region15: #{quantum_transformer_forward.1} parent=0 // pred_check_branch
    %107 = sbr.rel (0) target = $region17
  $region16: #{quantum_transformer_forward.1} parent=0 // pred_region
    _
  $region17: #{quantum_transformer_forward.1} parent=0 // pred_fallthru
    _
  // Predicated region
  $region18: #{quantum_transformer_forward.1} parent=0 // pred_check
    _
  $region19: #{quantum_transformer_forward.1} parent=0 // pred_check_branch
    %109 = sbr.rel (0) target = $region21
  $region20: #{quantum_transformer_forward.1} parent=0 // pred_region
    _
  $region21: #{quantum_transformer_forward.1} parent=0 // pred_fallthru
    _
  // Predicated region
  $region22: #{quantum_transformer_forward.1} parent=0 // pred_check
    _
  $region23: #{quantum_transformer_forward.1} parent=0 // pred_check_branch
    %111 = sbr.rel (0) target = $region25
  $region24: #{quantum_transformer_forward.1} parent=0 // pred_region
    _
  $region25: #{quantum_transformer_forward.1} parent=0 // pred_fallthru
    _
  // Predicated region
  $region26: #{quantum_transformer_forward.1} parent=0 // pred_check
    _
  $region27: #{quantum_transformer_forward.1} parent=0 // pred_check_branch
    %113 = sbr.rel (0) target = $region29
  $region28: #{quantum_transformer_forward.1} parent=0 // pred_region
    _
  $region29: #{quantum_transformer_forward.1} parent=0 // pred_fallthru
    _
  // Predicated region
  $region30: #{quantum_transformer_forward.1} parent=0 // pred_check
    _
  $region31: #{quantum_transformer_forward.1} parent=0 // pred_check_branch
    %115 = sbr.rel (0) target = $region33
  $region32: #{quantum_transformer_forward.1} parent=0 // pred_region
    _
  $region33: #{quantum_transformer_forward.1} parent=0 // pred_fallthru
    _
  // Predicated region
  $region34: #{quantum_transformer_forward.1} parent=0 // pred_check
    _
  $region35: #{quantum_transformer_forward.1} parent=0 // pred_check_branch
    %117 = sbr.rel (0) target = $region37
  $region36: #{quantum_transformer_forward.1} parent=0 // pred_region
    _
  $region37: #{quantum_transformer_forward.1} parent=0 // pred_fallthru
    _
  // Predicated region
  $region38: #{quantum_transformer_forward.1} parent=0 // pred_check
    _
  $region39: #{quantum_transformer_forward.1} parent=0 // pred_check_branch
    %119 = sbr.rel (0) target = $region41
  $region40: #{quantum_transformer_forward.1} parent=0 // pred_region
    _
  $region41: #{quantum_transformer_forward.1} parent=0 // pred_fallthru
    _
  // Predicated region
  $region42: #{quantum_transformer_forward.1} parent=0 // pred_check
    _
  $region43: #{quantum_transformer_forward.1} parent=0 // pred_check_branch
    %121 = sbr.rel (0) target = $region45
  $region44: #{quantum_transformer_forward.1} parent=0 // pred_region
    _
  $region45: #{quantum_transformer_forward.1} parent=0 // pred_fallthru
    _
  // Predicated region
  $region46: #{quantum_transformer_forward.1} parent=0 // pred_check
    _
  $region47: #{quantum_transformer_forward.1} parent=0 // pred_check_branch
    %123 = sbr.rel (0) target = $region49
  $region48: #{quantum_transformer_forward.1} parent=0 // pred_region
    _
  $region49: #{quantum_transformer_forward.1} parent=0 // pred_fallthru
    _
  // Predicated region
  $region50: #{quantum_transformer_forward.1} parent=0 // pred_check
    _
  $region51: #{quantum_transformer_forward.1} parent=0 // pred_check_branch
    %125 = sbr.rel (0) target = $region53
  $region52: #{quantum_transformer_forward.1} parent=0 // pred_region
    _
  $region53: #{quantum_transformer_forward.1} parent=0 // pred_fallthru
    _
  // Predicated region
  $region54: #{quantum_transformer_forward.1} parent=0 // pred_check
    _
  $region55: #{quantum_transformer_forward.1} parent=0 // pred_check_branch
    %127 = sbr.rel (0) target = $region57
  $region56: #{quantum_transformer_forward.1} parent=0 // pred_region
    _
  $region57: #{quantum_transformer_forward.1} parent=0 // pred_fallthru
    _
  // Predicated region
  $region58: #{quantum_transformer_forward.1} parent=0 // pred_check
    _
  $region59: #{quantum_transformer_forward.1} parent=0 // pred_check_branch
    %129 = sbr.rel (0) target = $region61
  $region60: #{quantum_transformer_forward.1} parent=0 // pred_region
    _
  $region61: #{quantum_transformer_forward.1} parent=0 // pred_fallthru
    _
  // Predicated region
  $region62: #{quantum_transformer_forward.1} parent=0 // pred_check
    _
  $region63: #{quantum_transformer_forward.1} parent=0 // pred_check_branch
    %131 = sbr.rel (0) target = $region65
  $region64: #{quantum_transformer_forward.1} parent=0 // pred_region
    _
  $region65: #{quantum_transformer_forward.1} parent=0 // pred_fallthru
    _
  // Predicated region
  $region66: #{quantum_transformer_forward.1} parent=0 // pred_check
    _
  $region67: #{quantum_transformer_forward.1} parent=0 // pred_check_branch
    %133 = sbr.rel (0) target = $region69
  $region68: #{quantum_transformer_forward.1} parent=0 // pred_region
    _
  $region69: #{quantum_transformer_forward.1} parent=0 // pred_fallthru
    _
  // Predicated region
  $region70: #{quantum_transformer_forward.1} parent=0 // pred_check
    _
  $region71: #{quantum_transformer_forward.1} parent=0 // pred_check_branch
    %135 = sbr.rel (0) target = $region73
  $region72: #{quantum_transformer_forward.1} parent=0 // pred_region
    _
  $region73: #{quantum_transformer_forward.1} parent=0 // pred_fallthru
    _
  // Predicated region
  $region74: #{quantum_transformer_forward.1} parent=0 // pred_check
    _
  $region75: #{quantum_transformer_forward.1} parent=0 // pred_check_branch
    %137 = sbr.rel (0) target = $region77
  $region76: #{quantum_transformer_forward.1} parent=0 // pred_region
    _
  $region77: #{quantum_transformer_forward.1} parent=0 // pred_fallthru
    _
  // Predicated region
  $region78: #{quantum_transformer_forward.1} parent=0 // pred_check
    _
  $region79: #{quantum_transformer_forward.1} parent=0 // pred_check_branch
    %139 = sbr.rel (0) target = $region81
  $region80: #{quantum_transformer_forward.1} parent=0 // pred_region
    _
  $region81: #{quantum_transformer_forward.1} parent=0 // pred_fallthru
    _
  // Predicated region
  $region82: #{quantum_transformer_forward.1} parent=0 // pred_check
    _
  $region83: #{quantum_transformer_forward.1} parent=0 // pred_check_branch
    %141 = sbr.rel (0) target = $region85
  $region84: #{quantum_transformer_forward.1} parent=0 // pred_region
    _
  $region85: #{quantum_transformer_forward.1} parent=0 // pred_fallthru
    _
  // Predicated region
  $region86: #{quantum_transformer_forward.1} parent=0 // pred_check
    _
  $region87: #{quantum_transformer_forward.1} parent=0 // pred_check_branch
    %143 = sbr.rel (0) target = $region89
  $region88: #{quantum_transformer_forward.1} parent=0 // pred_region
    _
  $region89: #{quantum_transformer_forward.1} parent=0 // pred_fallthru
    _
  // Predicated region
  $region90: #{quantum_transformer_forward.1} parent=0 // pred_check
    _
  $region91: #{quantum_transformer_forward.1} parent=0 // pred_check_branch
    %145 = sbr.rel (0) target = $region93
  $region92: #{quantum_transformer_forward.1} parent=0 // pred_region
    _
  $region93: #{quantum_transformer_forward.1} parent=0 // pred_fallthru
    _
  // Predicated region
  $region94: #{quantum_transformer_forward.1} parent=0 // pred_check
    _
  $region95: #{quantum_transformer_forward.1} parent=0 // pred_check_branch
    %147 = sbr.rel (0) target = $region97
  $region96: #{quantum_transformer_forward.1} parent=0 // pred_region
    _
  $region97: #{quantum_transformer_forward.1} parent=0 // pred_fallthru
    _
  // Predicated region
  $region98: #{quantum_transformer_forward.1} parent=0 // pred_check
    _
  $region99: #{quantum_transformer_forward.1} parent=0 // pred_check_branch
    %149 = sbr.rel (0) target = $region101
  $region100: #{quantum_transformer_forward.1} parent=0 // pred_region
    _
  $region101: #{quantum_transformer_forward.1} parent=0 // pred_fallthru
    _
  // Predicated region
  $region102: #{quantum_transformer_forward.1} parent=0 // pred_check
    _
  $region103: #{quantum_transformer_forward.1} parent=0 // pred_check_branch
    %151 = sbr.rel (0) target = $region105
  $region104: #{quantum_transformer_forward.1} parent=0 // pred_region
    _
  $region105: #{quantum_transformer_forward.1} parent=0 // pred_fallthru
    _
  // Predicated region
  $region106: #{quantum_transformer_forward.1} parent=0 // pred_check
    _
  $region107: #{quantum_transformer_forward.1} parent=0 // pred_check_branch
    %153 = sbr.rel (0) target = $region109
  $region108: #{quantum_transformer_forward.1} parent=0 // pred_region
    _
  $region109: #{quantum_transformer_forward.1} parent=0 // pred_fallthru
    _
  // Predicated region
  $region110: #{quantum_transformer_forward.1} parent=0 // pred_check
    _
  $region111: #{quantum_transformer_forward.1} parent=0 // pred_check_branch
    %155 = sbr.rel (0) target = $region113
  $region112: #{quantum_transformer_forward.1} parent=0 // pred_region
    _
  $region113: #{quantum_transformer_forward.1} parent=0 // pred_fallthru
    _
  // Predicated region
  $region114: #{quantum_transformer_forward.1} parent=0 // pred_check
    _
  $region115: #{quantum_transformer_forward.1} parent=0 // pred_check_branch
    %157 = sbr.rel (0) target = $region117
  $region116: #{quantum_transformer_forward.1} parent=0 // pred_region
    _
  $region117: #{quantum_transformer_forward.1} parent=0 // pred_fallthru
    _
  // Predicated region
  $region118: #{quantum_transformer_forward.1} parent=0 // pred_check
    _
  $region119: #{quantum_transformer_forward.1} parent=0 // pred_check_branch
    %159 = sbr.rel (0) target = $region121
  $region120: #{quantum_transformer_forward.1} parent=0 // pred_region
    _
  $region121: #{quantum_transformer_forward.1} parent=0 // pred_fallthru
    _
  // Predicated region
  $region122: #{quantum_transformer_forward.1} parent=0 // pred_check
    _
  $region123: #{quantum_transformer_forward.1} parent=0 // pred_check_branch
    %161 = sbr.rel (0) target = $region125
  $region124: #{quantum_transformer_forward.1} parent=0 // pred_region
    _
  $region125: #{quantum_transformer_forward.1} parent=0 // pred_fallthru
    _
  // Predicated region
  $region126: #{quantum_transformer_forward.1} parent=0 // pred_check
    _
  $region127: #{quantum_transformer_forward.1} parent=0 // pred_check_branch
    %163 = sbr.rel (0) target = $region129
  $region128: #{quantum_transformer_forward.1} parent=0 // pred_region
    _
  $region129: #{quantum_transformer_forward.1} parent=0 // pred_fallthru
    _
  // Predicated region
  $region130: #{quantum_transformer_forward.1} parent=0 // pred_check
    _
  $region131: #{quantum_transformer_forward.1} parent=0 // pred_check_branch
    %165 = sbr.rel (0) target = $region133
  $region132: #{quantum_transformer_forward.1} parent=0 // pred_region
    _
  $region133: #{quantum_transformer_forward.1} parent=0 // pred_fallthru
    _
  // Predicated region
  $region134: #{quantum_transformer_forward.1} parent=0 // pred_check
    _
  $region135: #{quantum_transformer_forward.1} parent=0 // pred_check_branch
    %167 = sbr.rel (0) target = $region137
  $region136: #{quantum_transformer_forward.1} parent=0 // pred_region
    _
  $region137: #{quantum_transformer_forward.1} parent=0 // pred_fallthru
    _
  // Predicated region
  $region138: #{quantum_transformer_forward.1} parent=0 // pred_check
    _
  $region139: #{quantum_transformer_forward.1} parent=0 // pred_check_branch
    %169 = sbr.rel (0) target = $region141
  $region140: #{quantum_transformer_forward.1} parent=0 // pred_region
    _
  $region141: #{quantum_transformer_forward.1} parent=0 // pred_fallthru
    _
  // Predicated region
  $region142: #{quantum_transformer_forward.1} parent=0 // pred_check
    _
  $region143: #{quantum_transformer_forward.1} parent=0 // pred_check_branch
    %171 = sbr.rel (0) target = $region145
  $region144: #{quantum_transformer_forward.1} parent=0 // pred_region
    _
  $region145: #{quantum_transformer_forward.1} parent=0 // pred_fallthru
    _
  // Predicated region
  $region146: #{quantum_transformer_forward.1} parent=0 // pred_check
    _
  $region147: #{quantum_transformer_forward.1} parent=0 // pred_check_branch
    %173 = sbr.rel (0) target = $region149
  $region148: #{quantum_transformer_forward.1} parent=0 // pred_region
    _
  $region149: #{quantum_transformer_forward.1} parent=0 // pred_fallthru
    _
  // Predicated region
  $region150: #{quantum_transformer_forward.1} parent=0 // pred_check
    _
  $region151: #{quantum_transformer_forward.1} parent=0 // pred_check_branch
    %175 = sbr.rel (0) target = $region153
  $region152: #{quantum_transformer_forward.1} parent=0 // pred_region
    _
  $region153: #{quantum_transformer_forward.1} parent=0 // pred_fallthru
    _
  // Predicated region
  $region154: #{quantum_transformer_forward.1} parent=0 // pred_check
    _
  $region155: #{quantum_transformer_forward.1} parent=0 // pred_check_branch
    %177 = sbr.rel (0) target = $region157
  $region156: #{quantum_transformer_forward.1} parent=0 // pred_region
    _
  $region157: #{quantum_transformer_forward.1} parent=0 // pred_fallthru
    _
  // Predicated region
  $region158: #{quantum_transformer_forward.1} parent=0 // pred_check
    _
  $region159: #{quantum_transformer_forward.1} parent=0 // pred_check_branch
    %179 = sbr.rel (0) target = $region161
  $region160: #{quantum_transformer_forward.1} parent=0 // pred_region
    _
  $region161: #{quantum_transformer_forward.1} parent=0 // pred_fallthru
    _
  // Predicated region
  $region162: #{quantum_transformer_forward.1} parent=0 // pred_check
    _
  $region163: #{quantum_transformer_forward.1} parent=0 // pred_check_branch
    %181 = sbr.rel (0) target = $region165
  $region164: #{quantum_transformer_forward.1} parent=0 // pred_region
    _
  $region165: #{quantum_transformer_forward.1} parent=0 // pred_fallthru
    _
  // Predicated region
  $region166: #{quantum_transformer_forward.1} parent=0 // pred_check
    _
  $region167: #{quantum_transformer_forward.1} parent=0 // pred_check_branch
    %183 = sbr.rel (0) target = $region169
  $region168: #{quantum_transformer_forward.1} parent=0 // pred_region
    _
  $region169: #{quantum_transformer_forward.1} parent=0 // pred_fallthru
    _
  // Predicated region
  $region170: #{quantum_transformer_forward.1} parent=0 // pred_check
    _
  $region171: #{quantum_transformer_forward.1} parent=0 // pred_check_branch
    %185 = sbr.rel (0) target = $region173
  $region172: #{quantum_transformer_forward.1} parent=0 // pred_region
    _
  $region173: #{quantum_transformer_forward.1} parent=0 // pred_fallthru
    _
  // Predicated region
  $region174: #{quantum_transformer_forward.1} parent=0 // pred_check
    _
  $region175: #{quantum_transformer_forward.1} parent=0 // pred_check_branch
    %187 = sbr.rel (0) target = $region177
  $region176: #{quantum_transformer_forward.1} parent=0 // pred_region
    _
  $region177: #{quantum_transformer_forward.1} parent=0 // pred_fallthru
    _
  // Predicated region
  $region178: #{quantum_transformer_forward.1} parent=0 // pred_check
    _
  $region179: #{quantum_transformer_forward.1} parent=0 // pred_check_branch
    %189 = sbr.rel (0) target = $region181
  $region180: #{quantum_transformer_forward.1} parent=0 // pred_region
    _
  $region181: #{quantum_transformer_forward.1} parent=0 // pred_fallthru
    _
  // Predicated region
  $region182: #{quantum_transformer_forward.1} parent=0 // pred_check
    _
  $region183: #{quantum_transformer_forward.1} parent=0 // pred_check_branch
    %191 = sbr.rel (0) target = $region185
  $region184: #{quantum_transformer_forward.1} parent=0 // pred_region
    _
  $region185: #{quantum_transformer_forward.1} parent=0 // pred_fallthru
    _
  %v192 = vld [vmem:[%s1] sm:$0xff]
  %v193 = vld [vmem:[%s1 + $0x8] sm:$0xff]
  %v194 = vld [vmem:[%s3] sm:$0xff]
  %v195 = vld [vmem:[%s3 + $0x8] sm:$0xff]
  %v196 = vld [vmem:[%s5] sm:$0x1]
  %v197 = vld [vmem:[%s7] sm:$0x1]
  %v198 = vld [vmem:[%s9] sm:$0xff]
  %v199 = vld [vmem:[%s9 + $0x8] sm:$0xff]
  %v200 = vld [vmem:[%s9 + $0x10] sm:$0xff]
  %v201 = vld [vmem:[%s9 + $0x18] sm:$0xff]
  %v202 = vld [vmem:[%s9 + $0x20] sm:$0xff]
  %v203 = vld [vmem:[%s9 + $0x28] sm:$0xff]
  %v204 = vld [vmem:[%s9 + $0x30] sm:$0xff]
  %v205 = vld [vmem:[%s9 + $0x38] sm:$0xff]
  %v206 = vld [vmem:[%s11] sm:$0x1]
  %vm207 = vcmask 523264
  %v208 = vsel %vm207, %v192, 0.0
  %209 = vadd.xlane.f32.xlu0 %v208
  %v210 = vpop.xlane.xlu0 %209
  %v211 = vsel %vm207, %v193, 0.0
  %212 = vadd.xlane.f32.xlu0 %v211
  %v213 = vpop.xlane.xlu0 %212
  %v214 = vrcp.pop 64.0
  %v215 = vmul.f32 %v210, %v214
  %v216 = vmul.f32 %v213, %v214
  %v217 = vsub.f32 %v192, %v215
  %v218 = vsub.f32 %v193, %v216
  %v219 = vmul.f32 %v217, %v217
  %v220 = vmul.f32 %v218, %v218
  %v221 = vsel %vm207, %v219, 0.0
  %222 = vadd.xlane.f32.xlu0 %v221
  %v223 = vpop.xlane.xlu0 %222
  %v224 = vsel %vm207, %v220, 0.0
  %225 = vadd.xlane.f32.xlu0 %v224
  %v226 = vpop.xlane.xlu0 %225
  %v227 = vmul.f32 %v223, %v214
  %v228 = vmul.f32 %v226, %v214
  %v229 = vadd.f32 %v227, 1e-05
  %v230 = vadd.f32 %v228, 1e-05
  %v231 = vrsqrt.pop %v229
  %v232 = vrsqrt.pop %v230
  %v233 = vmul.f32 %v217, %v231
  %v234 = vmul.f32 %v218, %v232
  %v236 = vlaneseq
  %v237 = vshrl.u32 %v236, 7
  %v238 = vsub.s32 0, %v237
  %v239 = vrot.slane %v196, %v238
  %v241 = vmul.f32 %v233, %v239
  %v242 = vmul.f32 %v234, %v239
  %v244 = vlaneseq
  %v245 = vshrl.u32 %v244, 7
  %v246 = vsub.s32 0, %v245
  %v247 = vrot.slane %v197, %v246
  %v249 = vadd.f32 %v241, %v247
  %v250 = vadd.f32 %v242, %v247
  %v252 = vlaneseq
  %v253 = vshrl.u32 %v252, 7
  %v254 = vsub.s32 0, %v253
  %v255 = vrot.slane %v206, %v254
  %v258 = vsel %vm207, %v249, 0
  %v261 = vsel %vm207, %v250, 0
  %263 = vmatprep.subr.mxu0 0.0
  %264 = vmatpush1.msra.mxu0 0.0
  %265 = vmatprep.subr.mxu0 0.0
  %266 = vmatpush1.msra.mxu0 0.0
  %267 = vmatprep.subr.mxu0 0.0
  %268 = vmatpush1.msra.mxu0 0.0
  %269 = vmatprep.subr.mxu0 0.0
  %270 = vmatpush1.msra.mxu0 0.0
  %271 = vmatprep.subr.mxu0 0.0
  %272 = vmatpush1.msra.mxu0 0.0
  %273 = vmatprep.subr.mxu0 0.0
  %274 = vmatpush1.msra.mxu0 0.0
  %275 = vmatprep.subr.mxu0 0.0
  %276 = vmatpush1.msra.mxu0 0.0
  %277 = vmatprep.subr.mxu0 0.0
  %278 = vmatpush1.msra.mxu0 0.0
  %279 = vmatprep.subr.mxu0 0.0
  %280 = vmatpush1.msra.mxu0 %v205
  %281 = vmatprep.subr.mxu0 0.0
  %282 = vmatpush1.msra.mxu0 %v204
  %283 = vmatprep.subr.mxu0 0.0
  %284 = vmatpush1.msra.mxu0 %v203
  %285 = vmatprep.subr.mxu0 0.0
  %286 = vmatpush1.msra.mxu0 %v202
  %287 = vmatprep.subr.mxu0 0.0
  %288 = vmatpush1.msra.mxu0 %v201
  %289 = vmatprep.subr.mxu0 0.0
  %290 = vmatpush1.msra.mxu0 %v200
  %291 = vmatprep.subr.mxu0 0.0
  %292 = vmatpush1.msra.mxu0 %v199
  %293 = vmatprep.subr.mxu0 0.0
  %294 = vmatpush1.msra.mxu0 %v198
  %295 = vmatprep.subr.mxu0 0.0
  %296 = vmatpush2.msra.mxu0 0.0
  %297 = vmatprep.subr.mxu0 0.0
  %298 = vmatpush2.msra.mxu0 0.0
  %299 = vmatprep.subr.mxu0 0.0
  %300 = vmatpush2.msra.mxu0 0.0
  %301 = vmatprep.subr.mxu0 0.0
  %302 = vmatpush2.msra.mxu0 0.0
  %303 = vmatprep.subr.mxu0 0.0
  %304 = vmatpush2.msra.mxu0 0.0
  %305 = vmatprep.subr.mxu0 0.0
  %306 = vmatpush2.msra.mxu0 0.0
  %307 = vmatprep.subr.mxu0 0.0
  %308 = vmatpush2.msra.mxu0 0.0
  %309 = vmatprep.subr.mxu0 0.0
  %310 = vmatpush2.msra.mxu0 0.0
  %311 = vmatprep.subr.mxu0 0.0
  %312 = vmatpush2.msra.mxu0 0.0
  %313 = vmatprep.subr.mxu0 0.0
  %314 = vmatpush2.msra.mxu0 0.0
  %315 = vmatprep.subr.mxu0 0.0
  %316 = vmatpush2.msra.mxu0 0.0
  %317 = vmatprep.subr.mxu0 0.0
  %318 = vmatpush2.msra.mxu0 0.0
  %319 = vmatprep.subr.mxu0 0.0
  %320 = vmatpush2.msra.mxu0 0.0
  %321 = vmatprep.subr.mxu0 0.0
  %322 = vmatpush2.msra.mxu0 0.0
  %323 = vmatprep.subr.mxu0 0.0
  %324 = vmatpush2.msra.mxu0 0.0
  %325 = vmatprep.subr.mxu0 0.0
  %326 = vmatpush2.msra.mxu0 0.0
  %327 = vmatprep.mubr.f32.mxu0 0.0
  %328 = vmatmul.mubr.f32.gmra.mxu0 %v258
  %v329 = vpop.f32.mrf.mxu0
  %v330 = vadd.f32 %v255, %v329
  %v331 = vpop.f32.mrf.mxu0
  %332 = vmatprep.mubr.f32.mxu0 0.0
  %333 = vmatmul.mubr.f32.gmra.mxu0 %v261
  %v334 = vpop.f32.mrf.mxu0
  %v335 = vadd.f32 %v255, %v334
  %v336 = vpop.f32.mrf.mxu0
  %337 = vdwg.mxu0
  %v338 = vmul.f32 %v330, 0.5
  %v339 = vmul.f32 %v335, 0.5
  %v340 = vmul.f32 %v330, 0.044715
  %v341 = vmul.f32 %v335, 0.044715
  %v342 = vmul.f32 %v340, %v330
  %v343 = vmul.f32 %v341, %v335
  %v344 = vmul.f32 %v342, %v330
  %v345 = vmul.f32 %v343, %v335
  %v346 = vadd.f32 %v330, %v344
  %v347 = vadd.f32 %v335, %v345
  %v348 = vmul.f32 %v346, 0.7978846
  %v349 = vmul.f32 %v347, 0.7978846
  %v350 = vtanh.pop %v348
  %v351 = vtanh.pop %v349
  %v352 = vadd.f32 %v350, 1.0
  %v353 = vadd.f32 %v351, 1.0
  %v354 = vmul.f32 %v338, %v352
  %v355 = vmul.f32 %v339, %v353
  %v356 = vadd.f32 %v354, %v194
  %v357 = vadd.f32 %v355, %v195
  %v358 = vld [vmem:[%s13] sm:$0x1]
  %v359 = vld [vmem:[%s15] sm:$0x1]
  %v360 = vld [vmem:[%s17] sm:$0xff]
  %v361 = vld [vmem:[%s17 + $0x8] sm:$0xff]
  %v362 = vld [vmem:[%s17 + $0x10] sm:$0xff]
  %v363 = vld [vmem:[%s17 + $0x18] sm:$0xff]
  %v364 = vld [vmem:[%s19] sm:$0x1]
  %v365 = vld [vmem:[%s21] sm:$0xff]
  %v366 = vld [vmem:[%s21 + $0x8] sm:$0xff]
  %v367 = vld [vmem:[%s21 + $0x10] sm:$0xff]
  %v368 = vld [vmem:[%s21 + $0x18] sm:$0xff]
  %v369 = vld [vmem:[%s23] sm:$0x1]
  %v370 = vld [vmem:[%s25] sm:$0x1]
  %v371 = vld [vmem:[%s27] sm:$0x1]
  %v372 = vld [vmem:[%s29] sm:$0xff]
  %v373 = vld [vmem:[%s29 + $0x8] sm:$0xff]
  %v374 = vld [vmem:[%s29 + $0x10] sm:$0xff]
  %v375 = vld [vmem:[%s29 + $0x18] sm:$0xff]
  %v376 = vld [vmem:[%s31] sm:$0x1]
  %v377 = vld [vmem:[%s33] sm:$0xff]
  %v378 = vld [vmem:[%s33 + $0x8] sm:$0xff]
  %v379 = vld [vmem:[%s33 + $0x10] sm:$0xff]
  %v380 = vld [vmem:[%s33 + $0x18] sm:$0xff]
  %v381 = vld [vmem:[%s33 + $0x20] sm:$0xff]
  %v382 = vld [vmem:[%s33 + $0x28] sm:$0xff]
  %v383 = vld [vmem:[%s33 + $0x30] sm:$0xff]
  %v384 = vld [vmem:[%s33 + $0x38] sm:$0xff]
  %v385 = vld [vmem:[%s33 + $0x40] sm:$0xff]
  %v386 = vld [vmem:[%s33 + $0x48] sm:$0xff]
  %v387 = vld [vmem:[%s33 + $0x50] sm:$0xff]
  %v388 = vld [vmem:[%s33 + $0x58] sm:$0xff]
  %v389 = vld [vmem:[%s33 + $0x60] sm:$0xff]
  %v390 = vld [vmem:[%s33 + $0x68] sm:$0xff]
  %v391 = vld [vmem:[%s33 + $0x70] sm:$0xff]
  %v392 = vld [vmem:[%s33 + $0x78] sm:$0xff]
  %v393 = vld [vmem:[%s35] sm:$0x1]
  %vm394 = vcmask 261120
  %v395 = vsel %vm394, %v356, 0.0
  %396 = vadd.xlane.f32.xlu0 %v395
  %v397 = vpop.xlane.xlu0 %396
  %v398 = vsel %vm394, %v357, 0.0
  %399 = vadd.xlane.f32.xlu0 %v398
  %v400 = vpop.xlane.xlu0 %399
  %v401 = vrcp.pop 32.0
  %v402 = vmul.f32 %v397, %v401
  %v403 = vmul.f32 %v400, %v401
  %v404 = vsub.f32 %v356, %v402
  %v405 = vsub.f32 %v357, %v403
  %v406 = vmul.f32 %v404, %v404
  %v407 = vmul.f32 %v405, %v405
  %v408 = vsel %vm394, %v406, 0.0
  %409 = vadd.xlane.f32.xlu0 %v408
  %v410 = vpop.xlane.xlu0 %409
  %v411 = vsel %vm394, %v407, 0.0
  %412 = vadd.xlane.f32.xlu0 %v411
  %v413 = vpop.xlane.xlu0 %412
  %v414 = vmul.f32 %v410, %v401
  %v415 = vmul.f32 %v413, %v401
  %v416 = vadd.f32 %v414, 1e-05
  %v417 = vadd.f32 %v415, 1e-05
  %v418 = vrsqrt.pop %v416
  %v419 = vrsqrt.pop %v417
  %v420 = vmul.f32 %v404, %v418
  %v421 = vmul.f32 %v405, %v419
  %v423 = vlaneseq
  %v424 = vshrl.u32 %v423, 7
  %v425 = vsub.s32 0, %v424
  %v426 = vrot.slane %v358, %v425
  %v428 = vmul.f32 %v420, %v426
  %v429 = vmul.f32 %v421, %v426
  %v431 = vlaneseq
  %v432 = vshrl.u32 %v431, 7
  %v433 = vsub.s32 0, %v432
  %v434 = vrot.slane %v359, %v433
  %v436 = vadd.f32 %v428, %v434
  %v437 = vadd.f32 %v429, %v434
  %v439 = vlaneseq
  %v440 = vshrl.u32 %v439, 7
  %v441 = vsub.s32 0, %v440
  %v442 = vrot.slane %v364, %v441
  %v445 = vsel %vm394, %v436, 0
  %v448 = vsel %vm394, %v437, 0
  %450 = vmatprep.subr.mxu0 0.0
  %451 = vmatpush1.msra.mxu0 0.0
  %452 = vmatprep.subr.mxu0 0.0
  %453 = vmatpush1.msra.mxu0 0.0
  %454 = vmatprep.subr.mxu0 0.0
  %455 = vmatpush1.msra.mxu0 0.0
  %456 = vmatprep.subr.mxu0 0.0
  %457 = vmatpush1.msra.mxu0 0.0
  %458 = vmatprep.subr.mxu0 0.0
  %459 = vmatpush1.msra.mxu0 0.0
  %460 = vmatprep.subr.mxu0 0.0
  %461 = vmatpush1.msra.mxu0 0.0
  %462 = vmatprep.subr.mxu0 0.0
  %463 = vmatpush1.msra.mxu0 0.0
  %464 = vmatprep.subr.mxu0 0.0
  %465 = vmatpush1.msra.mxu0 0.0
  %466 = vmatprep.subr.mxu0 0.0
  %467 = vmatpush1.msra.mxu0 0.0
  %468 = vmatprep.subr.mxu0 0.0
  %469 = vmatpush1.msra.mxu0 0.0
  %470 = vmatprep.subr.mxu0 0.0
  %471 = vmatpush1.msra.mxu0 0.0
  %472 = vmatprep.subr.mxu0 0.0
  %473 = vmatpush1.msra.mxu0 0.0
  %474 = vmatprep.subr.mxu0 0.0
  %475 = vmatpush1.msra.mxu0 %v363
  %476 = vmatprep.subr.mxu0 0.0
  %477 = vmatpush1.msra.mxu0 %v362
  %478 = vmatprep.subr.mxu0 0.0
  %479 = vmatpush1.msra.mxu0 %v361
  %480 = vmatprep.subr.mxu0 0.0
  %481 = vmatpush1.msra.mxu0 %v360
  %482 = vmatprep.subr.mxu0 0.0
  %483 = vmatpush2.msra.mxu0 0.0
  %484 = vmatprep.subr.mxu0 0.0
  %485 = vmatpush2.msra.mxu0 0.0
  %486 = vmatprep.subr.mxu0 0.0
  %487 = vmatpush2.msra.mxu0 0.0
  %488 = vmatprep.subr.mxu0 0.0
  %489 = vmatpush2.msra.mxu0 0.0
  %490 = vmatprep.subr.mxu0 0.0
  %491 = vmatpush2.msra.mxu0 0.0
  %492 = vmatprep.subr.mxu0 0.0
  %493 = vmatpush2.msra.mxu0 0.0
  %494 = vmatprep.subr.mxu0 0.0
  %495 = vmatpush2.msra.mxu0 0.0
  %496 = vmatprep.subr.mxu0 0.0
  %497 = vmatpush2.msra.mxu0 0.0
  %498 = vmatprep.subr.mxu0 0.0
  %499 = vmatpush2.msra.mxu0 0.0
  %500 = vmatprep.subr.mxu0 0.0
  %501 = vmatpush2.msra.mxu0 0.0
  %502 = vmatprep.subr.mxu0 0.0
  %503 = vmatpush2.msra.mxu0 0.0
  %504 = vmatprep.subr.mxu0 0.0
  %505 = vmatpush2.msra.mxu0 0.0
  %506 = vmatprep.subr.mxu0 0.0
  %507 = vmatpush2.msra.mxu0 0.0
  %508 = vmatprep.subr.mxu0 0.0
  %509 = vmatpush2.msra.mxu0 0.0
  %510 = vmatprep.subr.mxu0 0.0
  %511 = vmatpush2.msra.mxu0 0.0
  %512 = vmatprep.subr.mxu0 0.0
  %513 = vmatpush2.msra.mxu0 0.0
  %514 = vmatprep.mubr.f32.mxu0 0.0
  %515 = vmatmul.mubr.f32.gmra.mxu0 %v445
  %v516 = vpop.f32.mrf.mxu0
  %v517 = vadd.f32 %v442, %v516
  %v518 = vpop.f32.mrf.mxu0
  %519 = vmatprep.mubr.f32.mxu0 0.0
  %520 = vmatmul.mubr.f32.gmra.mxu0 %v448
  %v521 = vpop.f32.mrf.mxu0
  %v522 = vadd.f32 %v442, %v521
  %v523 = vpop.f32.mrf.mxu0
  %524 = vdwg.mxu0
  %526 = vrot.lane.b32.xlu0 %v517, 120
  %v527 = vpop.permute.xlu0 %526
  %528 = vrot.lane.b32.xlu0 %v517, 112
  %v529 = vpop.permute.xlu0 %528
  %530 = vrot.lane.b32.xlu0 %v517, 104
  %v531 = vpop.permute.xlu0 %530
  %533 = vrot.lane.b32.xlu0 %v522, 120
  %v534 = vpop.permute.xlu0 %533
  %535 = vrot.lane.b32.xlu0 %v522, 112
  %v536 = vpop.permute.xlu0 %535
  %537 = vrot.lane.b32.xlu0 %v522, 104
  %v538 = vpop.permute.xlu0 %537
  %539 = vrot.lane.b32.xlu0 %v517, 96
  %v540 = vpop.permute.xlu0 %539
  %vm541 = vcmask 64512
  %v542 = vsel %vm541, %v517, 0
  %v544 = vsel %vm541, %v540, 0
  %546 = vmatprep.subr.mxu0 0.0
  %547 = vmatpush1.xpose.msra.mxu0 0.0
  %548 = vmatprep.subr.mxu0 0.0
  %549 = vmatpush1.xpose.msra.mxu0 0.0
  %550 = vmatprep.subr.mxu0 0.0
  %551 = vmatpush1.xpose.msra.mxu0 0.0
  %552 = vmatprep.subr.mxu0 0.0
  %553 = vmatpush1.xpose.msra.mxu0 0.0
  %554 = vmatprep.subr.mxu0 0.0
  %555 = vmatpush1.xpose.msra.mxu0 0.0
  %556 = vmatprep.subr.mxu0 0.0
  %557 = vmatpush1.xpose.msra.mxu0 0.0
  %558 = vmatprep.subr.mxu0 0.0
  %559 = vmatpush1.xpose.msra.mxu0 0.0
  %560 = vmatprep.subr.mxu0 0.0
  %561 = vmatpush1.xpose.msra.mxu0 0.0
  %562 = vmatprep.subr.mxu0 0.0
  %563 = vmatpush1.xpose.msra.mxu0 0.0
  %564 = vmatprep.subr.mxu0 0.0
  %565 = vmatpush1.xpose.msra.mxu0 0.0
  %566 = vmatprep.subr.mxu0 0.0
  %567 = vmatpush1.xpose.msra.mxu0 0.0
  %568 = vmatprep.subr.mxu0 0.0
  %569 = vmatpush1.xpose.msra.mxu0 0.0
  %570 = vmatprep.subr.mxu0 0.0
  %571 = vmatpush1.xpose.msra.mxu0 0.0
  %572 = vmatprep.subr.mxu0 0.0
  %573 = vmatpush1.xpose.msra.mxu0 0.0
  %574 = vmatprep.subr.mxu0 0.0
  %575 = vmatpush1.xpose.msra.mxu0 0.0
  %576 = vmatprep.subr.mxu0 0.0
  %577 = vmatpush1.xpose.msra.mxu0 %v544
  %578 = vmatprep.subr.mxu0 0.0
  %579 = vmatpush2.xpose.msra.mxu0 0.0
  %580 = vmatprep.subr.mxu0 0.0
  %581 = vmatpush2.xpose.msra.mxu0 0.0
  %582 = vmatprep.subr.mxu0 0.0
  %583 = vmatpush2.xpose.msra.mxu0 0.0
  %584 = vmatprep.subr.mxu0 0.0
  %585 = vmatpush2.xpose.msra.mxu0 0.0
  %586 = vmatprep.subr.mxu0 0.0
  %587 = vmatpush2.xpose.msra.mxu0 0.0
  %588 = vmatprep.subr.mxu0 0.0
  %589 = vmatpush2.xpose.msra.mxu0 0.0
  %590 = vmatprep.subr.mxu0 0.0
  %591 = vmatpush2.xpose.msra.mxu0 0.0
  %592 = vmatprep.subr.mxu0 0.0
  %593 = vmatpush2.xpose.msra.mxu0 0.0
  %594 = vmatprep.subr.mxu0 0.0
  %595 = vmatpush2.xpose.msra.mxu0 0.0
  %596 = vmatprep.subr.mxu0 0.0
  %597 = vmatpush2.xpose.msra.mxu0 0.0
  %598 = vmatprep.subr.mxu0 0.0
  %599 = vmatpush2.xpose.msra.mxu0 0.0
  %600 = vmatprep.subr.mxu0 0.0
  %601 = vmatpush2.xpose.msra.mxu0 0.0
  %602 = vmatprep.subr.mxu0 0.0
  %603 = vmatpush2.xpose.msra.mxu0 0.0
  %604 = vmatprep.subr.mxu0 0.0
  %605 = vmatpush2.xpose.msra.mxu0 0.0
  %606 = vmatprep.subr.mxu0 0.0
  %607 = vmatpush2.xpose.msra.mxu0 0.0
  %608 = vmatprep.subr.mxu0 0.0
  %609 = vmatpush2.xpose.msra.mxu0 0.0
  %610 = vmatprep.mubr.f32.mxu0 0.0
  %611 = vmatmul.mubr.f32.gmra.mxu0 %v542
  %v612 = vpop.f32.mrf.mxu0
  %v613 = vadd.f32 0.0, %v612
  %v614 = vpop.f32.mrf.mxu0
  %615 = vdwg.mxu0
  %616 = vrot.lane.b32.xlu0 %v527, 96
  %v617 = vpop.permute.xlu0 %616
  %v618 = vsel %vm541, %v527, 0
  %v620 = vsel %vm541, %v617, 0
  %622 = vmatprep.subr.mxu0 0.0
  %623 = vmatpush1.xpose.msra.mxu0 0.0
  %624 = vmatprep.subr.mxu0 0.0
  %625 = vmatpush1.xpose.msra.mxu0 0.0
  %626 = vmatprep.subr.mxu0 0.0
  %627 = vmatpush1.xpose.msra.mxu0 0.0
  %628 = vmatprep.subr.mxu0 0.0
  %629 = vmatpush1.xpose.msra.mxu0 0.0
  %630 = vmatprep.subr.mxu0 0.0
  %631 = vmatpush1.xpose.msra.mxu0 0.0
  %632 = vmatprep.subr.mxu0 0.0
  %633 = vmatpush1.xpose.msra.mxu0 0.0
  %634 = vmatprep.subr.mxu0 0.0
  %635 = vmatpush1.xpose.msra.mxu0 0.0
  %636 = vmatprep.subr.mxu0 0.0
  %637 = vmatpush1.xpose.msra.mxu0 0.0
  %638 = vmatprep.subr.mxu0 0.0
  %639 = vmatpush1.xpose.msra.mxu0 0.0
  %640 = vmatprep.subr.mxu0 0.0
  %641 = vmatpush1.xpose.msra.mxu0 0.0
  %642 = vmatprep.subr.mxu0 0.0
  %643 = vmatpush1.xpose.msra.mxu0 0.0
  %644 = vmatprep.subr.mxu0 0.0
  %645 = vmatpush1.xpose.msra.mxu0 0.0
  %646 = vmatprep.subr.mxu0 0.0
  %647 = vmatpush1.xpose.msra.mxu0 0.0
  %648 = vmatprep.subr.mxu0 0.0
  %649 = vmatpush1.xpose.msra.mxu0 0.0
  %650 = vmatprep.subr.mxu0 0.0
  %651 = vmatpush1.xpose.msra.mxu0 0.0
  %652 = vmatprep.subr.mxu0 0.0
  %653 = vmatpush1.xpose.msra.mxu0 %v620
  %654 = vmatprep.subr.mxu0 0.0
  %655 = vmatpush2.xpose.msra.mxu0 0.0
  %656 = vmatprep.subr.mxu0 0.0
  %657 = vmatpush2.xpose.msra.mxu0 0.0
  %658 = vmatprep.subr.mxu0 0.0
  %659 = vmatpush2.xpose.msra.mxu0 0.0
  %660 = vmatprep.subr.mxu0 0.0
  %661 = vmatpush2.xpose.msra.mxu0 0.0
  %662 = vmatprep.subr.mxu0 0.0
  %663 = vmatpush2.xpose.msra.mxu0 0.0
  %664 = vmatprep.subr.mxu0 0.0
  %665 = vmatpush2.xpose.msra.mxu0 0.0
  %666 = vmatprep.subr.mxu0 0.0
  %667 = vmatpush2.xpose.msra.mxu0 0.0
  %668 = vmatprep.subr.mxu0 0.0
  %669 = vmatpush2.xpose.msra.mxu0 0.0
  %670 = vmatprep.subr.mxu0 0.0
  %671 = vmatpush2.xpose.msra.mxu0 0.0
  %672 = vmatprep.subr.mxu0 0.0
  %673 = vmatpush2.xpose.msra.mxu0 0.0
  %674 = vmatprep.subr.mxu0 0.0
  %675 = vmatpush2.xpose.msra.mxu0 0.0
  %676 = vmatprep.subr.mxu0 0.0
  %677 = vmatpush2.xpose.msra.mxu0 0.0
  %678 = vmatprep.subr.mxu0 0.0
  %679 = vmatpush2.xpose.msra.mxu0 0.0
  %680 = vmatprep.subr.mxu0 0.0
  %681 = vmatpush2.xpose.msra.mxu0 0.0
  %682 = vmatprep.subr.mxu0 0.0
  %683 = vmatpush2.xpose.msra.mxu0 0.0
  %684 = vmatprep.subr.mxu0 0.0
  %685 = vmatpush2.xpose.msra.mxu0 0.0
  %686 = vmatprep.mubr.f32.mxu0 0.0
  %687 = vmatmul.mubr.f32.gmra.mxu0 %v618
  %v688 = vpop.f32.mrf.mxu0
  %v689 = vadd.f32 0.0, %v688
  %v690 = vpop.f32.mrf.mxu0
  %691 = vdwg.mxu0
  %692 = vrot.lane.b32.xlu0 %v529, 96
  %v693 = vpop.permute.xlu0 %692
  %v694 = vsel %vm541, %v529, 0
  %v696 = vsel %vm541, %v693, 0
  %698 = vmatprep.subr.mxu0 0.0
  %699 = vmatpush1.xpose.msra.mxu0 0.0
  %700 = vmatprep.subr.mxu0 0.0
  %701 = vmatpush1.xpose.msra.mxu0 0.0
  %702 = vmatprep.subr.mxu0 0.0
  %703 = vmatpush1.xpose.msra.mxu0 0.0
  %704 = vmatprep.subr.mxu0 0.0
  %705 = vmatpush1.xpose.msra.mxu0 0.0
  %706 = vmatprep.subr.mxu0 0.0
  %707 = vmatpush1.xpose.msra.mxu0 0.0
  %708 = vmatprep.subr.mxu0 0.0
  %709 = vmatpush1.xpose.msra.mxu0 0.0
  %710 = vmatprep.subr.mxu0 0.0
  %711 = vmatpush1.xpose.msra.mxu0 0.0
  %712 = vmatprep.subr.mxu0 0.0
  %713 = vmatpush1.xpose.msra.mxu0 0.0
  %714 = vmatprep.subr.mxu0 0.0
  %715 = vmatpush1.xpose.msra.mxu0 0.0
  %716 = vmatprep.subr.mxu0 0.0
  %717 = vmatpush1.xpose.msra.mxu0 0.0
  %718 = vmatprep.subr.mxu0 0.0
  %719 = vmatpush1.xpose.msra.mxu0 0.0
  %720 = vmatprep.subr.mxu0 0.0
  %721 = vmatpush1.xpose.msra.mxu0 0.0
  %722 = vmatprep.subr.mxu0 0.0
  %723 = vmatpush1.xpose.msra.mxu0 0.0
  %724 = vmatprep.subr.mxu0 0.0
  %725 = vmatpush1.xpose.msra.mxu0 0.0
  %726 = vmatprep.subr.mxu0 0.0
  %727 = vmatpush1.xpose.msra.mxu0 0.0
  %728 = vmatprep.subr.mxu0 0.0
  %729 = vmatpush1.xpose.msra.mxu0 %v696
  %730 = vmatprep.subr.mxu0 0.0
  %731 = vmatpush2.xpose.msra.mxu0 0.0
  %732 = vmatprep.subr.mxu0 0.0
  %733 = vmatpush2.xpose.msra.mxu0 0.0
  %734 = vmatprep.subr.mxu0 0.0
  %735 = vmatpush2.xpose.msra.mxu0 0.0
  %736 = vmatprep.subr.mxu0 0.0
  %737 = vmatpush2.xpose.msra.mxu0 0.0
  %738 = vmatprep.subr.mxu0 0.0
  %739 = vmatpush2.xpose.msra.mxu0 0.0
  %740 = vmatprep.subr.mxu0 0.0
  %741 = vmatpush2.xpose.msra.mxu0 0.0
  %742 = vmatprep.subr.mxu0 0.0
  %743 = vmatpush2.xpose.msra.mxu0 0.0
  %744 = vmatprep.subr.mxu0 0.0
  %745 = vmatpush2.xpose.msra.mxu0 0.0
  %746 = vmatprep.subr.mxu0 0.0
  %747 = vmatpush2.xpose.msra.mxu0 0.0
  %748 = vmatprep.subr.mxu0 0.0
  %749 = vmatpush2.xpose.msra.mxu0 0.0
  %750 = vmatprep.subr.mxu0 0.0
  %751 = vmatpush2.xpose.msra.mxu0 0.0
  %752 = vmatprep.subr.mxu0 0.0
  %753 = vmatpush2.xpose.msra.mxu0 0.0
  %754 = vmatprep.subr.mxu0 0.0
  %755 = vmatpush2.xpose.msra.mxu0 0.0
  %756 = vmatprep.subr.mxu0 0.0
  %757 = vmatpush2.xpose.msra.mxu0 0.0
  %758 = vmatprep.subr.mxu0 0.0
  %759 = vmatpush2.xpose.msra.mxu0 0.0
  %760 = vmatprep.subr.mxu0 0.0
  %761 = vmatpush2.xpose.msra.mxu0 0.0
  %762 = vmatprep.mubr.f32.mxu0 0.0
  %763 = vmatmul.mubr.f32.gmra.mxu0 %v694
  %v764 = vpop.f32.mrf.mxu0
  %v765 = vadd.f32 0.0, %v764
  %v766 = vpop.f32.mrf.mxu0
  %767 = vdwg.mxu0
  %768 = vrot.lane.b32.xlu0 %v531, 96
  %v769 = vpop.permute.xlu0 %768
  %v770 = vsel %vm541, %v531, 0
  %v772 = vsel %vm541, %v769, 0
  %774 = vmatprep.subr.mxu0 0.0
  %775 = vmatpush1.xpose.msra.mxu0 0.0
  %776 = vmatprep.subr.mxu0 0.0
  %777 = vmatpush1.xpose.msra.mxu0 0.0
  %778 = vmatprep.subr.mxu0 0.0
  %779 = vmatpush1.xpose.msra.mxu0 0.0
  %780 = vmatprep.subr.mxu0 0.0
  %781 = vmatpush1.xpose.msra.mxu0 0.0
  %782 = vmatprep.subr.mxu0 0.0
  %783 = vmatpush1.xpose.msra.mxu0 0.0
  %784 = vmatprep.subr.mxu0 0.0
  %785 = vmatpush1.xpose.msra.mxu0 0.0
  %786 = vmatprep.subr.mxu0 0.0
  %787 = vmatpush1.xpose.msra.mxu0 0.0
  %788 = vmatprep.subr.mxu0 0.0
  %789 = vmatpush1.xpose.msra.mxu0 0.0
  %790 = vmatprep.subr.mxu0 0.0
  %791 = vmatpush1.xpose.msra.mxu0 0.0
  %792 = vmatprep.subr.mxu0 0.0
  %793 = vmatpush1.xpose.msra.mxu0 0.0
  %794 = vmatprep.subr.mxu0 0.0
  %795 = vmatpush1.xpose.msra.mxu0 0.0
  %796 = vmatprep.subr.mxu0 0.0
  %797 = vmatpush1.xpose.msra.mxu0 0.0
  %798 = vmatprep.subr.mxu0 0.0
  %799 = vmatpush1.xpose.msra.mxu0 0.0
  %800 = vmatprep.subr.mxu0 0.0
  %801 = vmatpush1.xpose.msra.mxu0 0.0
  %802 = vmatprep.subr.mxu0 0.0
  %803 = vmatpush1.xpose.msra.mxu0 0.0
  %804 = vmatprep.subr.mxu0 0.0
  %805 = vmatpush1.xpose.msra.mxu0 %v772
  %806 = vmatprep.subr.mxu0 0.0
  %807 = vmatpush2.xpose.msra.mxu0 0.0
  %808 = vmatprep.subr.mxu0 0.0
  %809 = vmatpush2.xpose.msra.mxu0 0.0
  %810 = vmatprep.subr.mxu0 0.0
  %811 = vmatpush2.xpose.msra.mxu0 0.0
  %812 = vmatprep.subr.mxu0 0.0
  %813 = vmatpush2.xpose.msra.mxu0 0.0
  %814 = vmatprep.subr.mxu0 0.0
  %815 = vmatpush2.xpose.msra.mxu0 0.0
  %816 = vmatprep.subr.mxu0 0.0
  %817 = vmatpush2.xpose.msra.mxu0 0.0
  %818 = vmatprep.subr.mxu0 0.0
  %819 = vmatpush2.xpose.msra.mxu0 0.0
  %820 = vmatprep.subr.mxu0 0.0
  %821 = vmatpush2.xpose.msra.mxu0 0.0
  %822 = vmatprep.subr.mxu0 0.0
  %823 = vmatpush2.xpose.msra.mxu0 0.0
  %824 = vmatprep.subr.mxu0 0.0
  %825 = vmatpush2.xpose.msra.mxu0 0.0
  %826 = vmatprep.subr.mxu0 0.0
  %827 = vmatpush2.xpose.msra.mxu0 0.0
  %828 = vmatprep.subr.mxu0 0.0
  %829 = vmatpush2.xpose.msra.mxu0 0.0
  %830 = vmatprep.subr.mxu0 0.0
  %831 = vmatpush2.xpose.msra.mxu0 0.0
  %832 = vmatprep.subr.mxu0 0.0
  %833 = vmatpush2.xpose.msra.mxu0 0.0
  %834 = vmatprep.subr.mxu0 0.0
  %835 = vmatpush2.xpose.msra.mxu0 0.0
  %836 = vmatprep.subr.mxu0 0.0
  %837 = vmatpush2.xpose.msra.mxu0 0.0
  %838 = vmatprep.mubr.f32.mxu0 0.0
  %839 = vmatmul.mubr.f32.gmra.mxu0 %v770
  %v840 = vpop.f32.mrf.mxu0
  %v841 = vadd.f32 0.0, %v840
  %v842 = vpop.f32.mrf.mxu0
  %843 = vdwg.mxu0
  %844 = vrot.lane.b32.xlu0 %v522, 96
  %v845 = vpop.permute.xlu0 %844
  %v846 = vsel %vm541, %v522, 0
  %v848 = vsel %vm541, %v845, 0
  %850 = vmatprep.subr.mxu0 0.0
  %851 = vmatpush1.xpose.msra.mxu0 0.0
  %852 = vmatprep.subr.mxu0 0.0
  %853 = vmatpush1.xpose.msra.mxu0 0.0
  %854 = vmatprep.subr.mxu0 0.0
  %855 = vmatpush1.xpose.msra.mxu0 0.0
  %856 = vmatprep.subr.mxu0 0.0
  %857 = vmatpush1.xpose.msra.mxu0 0.0
  %858 = vmatprep.subr.mxu0 0.0
  %859 = vmatpush1.xpose.msra.mxu0 0.0
  %860 = vmatprep.subr.mxu0 0.0
  %861 = vmatpush1.xpose.msra.mxu0 0.0
  %862 = vmatprep.subr.mxu0 0.0
  %863 = vmatpush1.xpose.msra.mxu0 0.0
  %864 = vmatprep.subr.mxu0 0.0
  %865 = vmatpush1.xpose.msra.mxu0 0.0
  %866 = vmatprep.subr.mxu0 0.0
  %867 = vmatpush1.xpose.msra.mxu0 0.0
  %868 = vmatprep.subr.mxu0 0.0
  %869 = vmatpush1.xpose.msra.mxu0 0.0
  %870 = vmatprep.subr.mxu0 0.0
  %871 = vmatpush1.xpose.msra.mxu0 0.0
  %872 = vmatprep.subr.mxu0 0.0
  %873 = vmatpush1.xpose.msra.mxu0 0.0
  %874 = vmatprep.subr.mxu0 0.0
  %875 = vmatpush1.xpose.msra.mxu0 0.0
  %876 = vmatprep.subr.mxu0 0.0
  %877 = vmatpush1.xpose.msra.mxu0 0.0
  %878 = vmatprep.subr.mxu0 0.0
  %879 = vmatpush1.xpose.msra.mxu0 0.0
  %880 = vmatprep.subr.mxu0 0.0
  %881 = vmatpush1.xpose.msra.mxu0 %v848
  %882 = vmatprep.subr.mxu0 0.0
  %883 = vmatpush2.xpose.msra.mxu0 0.0
  %884 = vmatprep.subr.mxu0 0.0
  %885 = vmatpush2.xpose.msra.mxu0 0.0
  %886 = vmatprep.subr.mxu0 0.0
  %887 = vmatpush2.xpose.msra.mxu0 0.0
  %888 = vmatprep.subr.mxu0 0.0
  %889 = vmatpush2.xpose.msra.mxu0 0.0
  %890 = vmatprep.subr.mxu0 0.0
  %891 = vmatpush2.xpose.msra.mxu0 0.0
  %892 = vmatprep.subr.mxu0 0.0
  %893 = vmatpush2.xpose.msra.mxu0 0.0
  %894 = vmatprep.subr.mxu0 0.0
  %895 = vmatpush2.xpose.msra.mxu0 0.0
  %896 = vmatprep.subr.mxu0 0.0
  %897 = vmatpush2.xpose.msra.mxu0 0.0
  %898 = vmatprep.subr.mxu0 0.0
  %899 = vmatpush2.xpose.msra.mxu0 0.0
  %900 = vmatprep.subr.mxu0 0.0
  %901 = vmatpush2.xpose.msra.mxu0 0.0
  %902 = vmatprep.subr.mxu0 0.0
  %903 = vmatpush2.xpose.msra.mxu0 0.0
  %904 = vmatprep.subr.mxu0 0.0
  %905 = vmatpush2.xpose.msra.mxu0 0.0
  %906 = vmatprep.subr.mxu0 0.0
  %907 = vmatpush2.xpose.msra.mxu0 0.0
  %908 = vmatprep.subr.mxu0 0.0
  %909 = vmatpush2.xpose.msra.mxu0 0.0
  %910 = vmatprep.subr.mxu0 0.0
  %911 = vmatpush2.xpose.msra.mxu0 0.0
  %912 = vmatprep.subr.mxu0 0.0
  %913 = vmatpush2.xpose.msra.mxu0 0.0
  %914 = vmatprep.mubr.f32.mxu0 0.0
  %915 = vmatmul.mubr.f32.gmra.mxu0 %v846
  %v916 = vpop.f32.mrf.mxu0
  %v917 = vadd.f32 0.0, %v916
  %v918 = vpop.f32.mrf.mxu0
  %919 = vdwg.mxu0
  %920 = vrot.lane.b32.xlu0 %v534, 96
  %v921 = vpop.permute.xlu0 %920
  %v922 = vsel %vm541, %v534, 0
  %v924 = vsel %vm541, %v921, 0
  %926 = vmatprep.subr.mxu0 0.0
  %927 = vmatpush1.xpose.msra.mxu0 0.0
  %928 = vmatprep.subr.mxu0 0.0
  %929 = vmatpush1.xpose.msra.mxu0 0.0
  %930 = vmatprep.subr.mxu0 0.0
  %931 = vmatpush1.xpose.msra.mxu0 0.0
  %932 = vmatprep.subr.mxu0 0.0
  %933 = vmatpush1.xpose.msra.mxu0 0.0
  %934 = vmatprep.subr.mxu0 0.0
  %935 = vmatpush1.xpose.msra.mxu0 0.0
  %936 = vmatprep.subr.mxu0 0.0
  %937 = vmatpush1.xpose.msra.mxu0 0.0
  %938 = vmatprep.subr.mxu0 0.0
  %939 = vmatpush1.xpose.msra.mxu0 0.0
  %940 = vmatprep.subr.mxu0 0.0
  %941 = vmatpush1.xpose.msra.mxu0 0.0
  %942 = vmatprep.subr.mxu0 0.0
  %943 = vmatpush1.xpose.msra.mxu0 0.0
  %944 = vmatprep.subr.mxu0 0.0
  %945 = vmatpush1.xpose.msra.mxu0 0.0
  %946 = vmatprep.subr.mxu0 0.0
  %947 = vmatpush1.xpose.msra.mxu0 0.0
  %948 = vmatprep.subr.mxu0 0.0
  %949 = vmatpush1.xpose.msra.mxu0 0.0
  %950 = vmatprep.subr.mxu0 0.0
  %951 = vmatpush1.xpose.msra.mxu0 0.0
  %952 = vmatprep.subr.mxu0 0.0
  %953 = vmatpush1.xpose.msra.mxu0 0.0
  %954 = vmatprep.subr.mxu0 0.0
  %955 = vmatpush1.xpose.msra.mxu0 0.0
  %956 = vmatprep.subr.mxu0 0.0
  %957 = vmatpush1.xpose.msra.mxu0 %v924
  %958 = vmatprep.subr.mxu0 0.0
  %959 = vmatpush2.xpose.msra.mxu0 0.0
  %960 = vmatprep.subr.mxu0 0.0
  %961 = vmatpush2.xpose.msra.mxu0 0.0
  %962 = vmatprep.subr.mxu0 0.0
  %963 = vmatpush2.xpose.msra.mxu0 0.0
  %964 = vmatprep.subr.mxu0 0.0
  %965 = vmatpush2.xpose.msra.mxu0 0.0
  %966 = vmatprep.subr.mxu0 0.0
  %967 = vmatpush2.xpose.msra.mxu0 0.0
  %968 = vmatprep.subr.mxu0 0.0
  %969 = vmatpush2.xpose.msra.mxu0 0.0
  %970 = vmatprep.subr.mxu0 0.0
  %971 = vmatpush2.xpose.msra.mxu0 0.0
  %972 = vmatprep.subr.mxu0 0.0
  %973 = vmatpush2.xpose.msra.mxu0 0.0
  %974 = vmatprep.subr.mxu0 0.0
  %975 = vmatpush2.xpose.msra.mxu0 0.0
  %976 = vmatprep.subr.mxu0 0.0
  %977 = vmatpush2.xpose.msra.mxu0 0.0
  %978 = vmatprep.subr.mxu0 0.0
  %979 = vmatpush2.xpose.msra.mxu0 0.0
  %980 = vmatprep.subr.mxu0 0.0
  %981 = vmatpush2.xpose.msra.mxu0 0.0
  %982 = vmatprep.subr.mxu0 0.0
  %983 = vmatpush2.xpose.msra.mxu0 0.0
  %984 = vmatprep.subr.mxu0 0.0
  %985 = vmatpush2.xpose.msra.mxu0 0.0
  %986 = vmatprep.subr.mxu0 0.0
  %987 = vmatpush2.xpose.msra.mxu0 0.0
  %988 = vmatprep.subr.mxu0 0.0
  %989 = vmatpush2.xpose.msra.mxu0 0.0
  %990 = vmatprep.mubr.f32.mxu0 0.0
  %991 = vmatmul.mubr.f32.gmra.mxu0 %v922
  %v992 = vpop.f32.mrf.mxu0
  %v993 = vadd.f32 0.0, %v992
  %v994 = vpop.f32.mrf.mxu0
  %995 = vdwg.mxu0
  %996 = vrot.lane.b32.xlu0 %v536, 96
  %v997 = vpop.permute.xlu0 %996
  %v998 = vsel %vm541, %v536, 0
  %v1000 = vsel %vm541, %v997, 0
  %1002 = vmatprep.subr.mxu0 0.0
  %1003 = vmatpush1.xpose.msra.mxu0 0.0
  %1004 = vmatprep.subr.mxu0 0.0
  %1005 = vmatpush1.xpose.msra.mxu0 0.0
  %1006 = vmatprep.subr.mxu0 0.0
  %1007 = vmatpush1.xpose.msra.mxu0 0.0
  %1008 = vmatprep.subr.mxu0 0.0
  %1009 = vmatpush1.xpose.msra.mxu0 0.0
  %1010 = vmatprep.subr.mxu0 0.0
  %1011 = vmatpush1.xpose.msra.mxu0 0.0
  %1012 = vmatprep.subr.mxu0 0.0
  %1013 = vmatpush1.xpose.msra.mxu0 0.0
  %1014 = vmatprep.subr.mxu0 0.0
  %1015 = vmatpush1.xpose.msra.mxu0 0.0
  %1016 = vmatprep.subr.mxu0 0.0
  %1017 = vmatpush1.xpose.msra.mxu0 0.0
  %1018 = vmatprep.subr.mxu0 0.0
  %1019 = vmatpush1.xpose.msra.mxu0 0.0
  %1020 = vmatprep.subr.mxu0 0.0
  %1021 = vmatpush1.xpose.msra.mxu0 0.0
  %1022 = vmatprep.subr.mxu0 0.0
  %1023 = vmatpush1.xpose.msra.mxu0 0.0
  %1024 = vmatprep.subr.mxu0 0.0
  %1025 = vmatpush1.xpose.msra.mxu0 0.0
  %1026 = vmatprep.subr.mxu0 0.0
  %1027 = vmatpush1.xpose.msra.mxu0 0.0
  %1028 = vmatprep.subr.mxu0 0.0
  %1029 = vmatpush1.xpose.msra.mxu0 0.0
  %1030 = vmatprep.subr.mxu0 0.0
  %1031 = vmatpush1.xpose.msra.mxu0 0.0
  %1032 = vmatprep.subr.mxu0 0.0
  %1033 = vmatpush1.xpose.msra.mxu0 %v1000
  %1034 = vmatprep.subr.mxu0 0.0
  %1035 = vmatpush2.xpose.msra.mxu0 0.0
  %1036 = vmatprep.subr.mxu0 0.0
  %1037 = vmatpush2.xpose.msra.mxu0 0.0
  %1038 = vmatprep.subr.mxu0 0.0
  %1039 = vmatpush2.xpose.msra.mxu0 0.0
  %1040 = vmatprep.subr.mxu0 0.0
  %1041 = vmatpush2.xpose.msra.mxu0 0.0
  %1042 = vmatprep.subr.mxu0 0.0
  %1043 = vmatpush2.xpose.msra.mxu0 0.0
  %1044 = vmatprep.subr.mxu0 0.0
  %1045 = vmatpush2.xpose.msra.mxu0 0.0
  %1046 = vmatprep.subr.mxu0 0.0
  %1047 = vmatpush2.xpose.msra.mxu0 0.0
  %1048 = vmatprep.subr.mxu0 0.0
  %1049 = vmatpush2.xpose.msra.mxu0 0.0
  %1050 = vmatprep.subr.mxu0 0.0
  %1051 = vmatpush2.xpose.msra.mxu0 0.0
  %1052 = vmatprep.subr.mxu0 0.0
  %1053 = vmatpush2.xpose.msra.mxu0 0.0
  %1054 = vmatprep.subr.mxu0 0.0
  %1055 = vmatpush2.xpose.msra.mxu0 0.0
  %1056 = vmatprep.subr.mxu0 0.0
  %1057 = vmatpush2.xpose.msra.mxu0 0.0
  %1058 = vmatprep.subr.mxu0 0.0
  %1059 = vmatpush2.xpose.msra.mxu0 0.0
  %1060 = vmatprep.subr.mxu0 0.0
  %1061 = vmatpush2.xpose.msra.mxu0 0.0
  %1062 = vmatprep.subr.mxu0 0.0
  %1063 = vmatpush2.xpose.msra.mxu0 0.0
  %1064 = vmatprep.subr.mxu0 0.0
  %1065 = vmatpush2.xpose.msra.mxu0 0.0
  %1066 = vmatprep.mubr.f32.mxu0 0.0
  %1067 = vmatmul.mubr.f32.gmra.mxu0 %v998
  %v1068 = vpop.f32.mrf.mxu0
  %v1069 = vadd.f32 0.0, %v1068
  %v1070 = vpop.f32.mrf.mxu0
  %1071 = vdwg.mxu0
  %1072 = vrot.lane.b32.xlu0 %v538, 96
  %v1073 = vpop.permute.xlu0 %1072
  %v1074 = vsel %vm541, %v538, 0
  %v1076 = vsel %vm541, %v1073, 0
  %1078 = vmatprep.subr.mxu0 0.0
  %1079 = vmatpush1.xpose.msra.mxu0 0.0
  %1080 = vmatprep.subr.mxu0 0.0
  %1081 = vmatpush1.xpose.msra.mxu0 0.0
  %1082 = vmatprep.subr.mxu0 0.0
  %1083 = vmatpush1.xpose.msra.mxu0 0.0
  %1084 = vmatprep.subr.mxu0 0.0
  %1085 = vmatpush1.xpose.msra.mxu0 0.0
  %1086 = vmatprep.subr.mxu0 0.0
  %1087 = vmatpush1.xpose.msra.mxu0 0.0
  %1088 = vmatprep.subr.mxu0 0.0
  %1089 = vmatpush1.xpose.msra.mxu0 0.0
  %1090 = vmatprep.subr.mxu0 0.0
  %1091 = vmatpush1.xpose.msra.mxu0 0.0
  %1092 = vmatprep.subr.mxu0 0.0
  %1093 = vmatpush1.xpose.msra.mxu0 0.0
  %1094 = vmatprep.subr.mxu0 0.0
  %1095 = vmatpush1.xpose.msra.mxu0 0.0
  %1096 = vmatprep.subr.mxu0 0.0
  %1097 = vmatpush1.xpose.msra.mxu0 0.0
  %1098 = vmatprep.subr.mxu0 0.0
  %1099 = vmatpush1.xpose.msra.mxu0 0.0
  %1100 = vmatprep.subr.mxu0 0.0
  %1101 = vmatpush1.xpose.msra.mxu0 0.0
  %1102 = vmatprep.subr.mxu0 0.0
  %1103 = vmatpush1.xpose.msra.mxu0 0.0
  %1104 = vmatprep.subr.mxu0 0.0
  %1105 = vmatpush1.xpose.msra.mxu0 0.0
  %1106 = vmatprep.subr.mxu0 0.0
  %1107 = vmatpush1.xpose.msra.mxu0 0.0
  %1108 = vmatprep.subr.mxu0 0.0
  %1109 = vmatpush1.xpose.msra.mxu0 %v1076
  %1110 = vmatprep.subr.mxu0 0.0
  %1111 = vmatpush2.xpose.msra.mxu0 0.0
  %1112 = vmatprep.subr.mxu0 0.0
  %1113 = vmatpush2.xpose.msra.mxu0 0.0
  %1114 = vmatprep.subr.mxu0 0.0
  %1115 = vmatpush2.xpose.msra.mxu0 0.0
  %1116 = vmatprep.subr.mxu0 0.0
  %1117 = vmatpush2.xpose.msra.mxu0 0.0
  %1118 = vmatprep.subr.mxu0 0.0
  %1119 = vmatpush2.xpose.msra.mxu0 0.0
  %1120 = vmatprep.subr.mxu0 0.0
  %1121 = vmatpush2.xpose.msra.mxu0 0.0
  %1122 = vmatprep.subr.mxu0 0.0
  %1123 = vmatpush2.xpose.msra.mxu0 0.0
  %1124 = vmatprep.subr.mxu0 0.0
  %1125 = vmatpush2.xpose.msra.mxu0 0.0
  %1126 = vmatprep.subr.mxu0 0.0
  %1127 = vmatpush2.xpose.msra.mxu0 0.0
  %1128 = vmatprep.subr.mxu0 0.0
  %1129 = vmatpush2.xpose.msra.mxu0 0.0
  %1130 = vmatprep.subr.mxu0 0.0
  %1131 = vmatpush2.xpose.msra.mxu0 0.0
  %1132 = vmatprep.subr.mxu0 0.0
  %1133 = vmatpush2.xpose.msra.mxu0 0.0
  %1134 = vmatprep.subr.mxu0 0.0
  %1135 = vmatpush2.xpose.msra.mxu0 0.0
  %1136 = vmatprep.subr.mxu0 0.0
  %1137 = vmatpush2.xpose.msra.mxu0 0.0
  %1138 = vmatprep.subr.mxu0 0.0
  %1139 = vmatpush2.xpose.msra.mxu0 0.0
  %1140 = vmatprep.subr.mxu0 0.0
  %1141 = vmatpush2.xpose.msra.mxu0 0.0
  %1142 = vmatprep.mubr.f32.mxu0 0.0
  %1143 = vmatmul.mubr.f32.gmra.mxu0 %v1074
  %v1144 = vpop.f32.mrf.mxu0
  %v1145 = vadd.f32 0.0, %v1144
  %v1146 = vpop.f32.mrf.mxu0
  %1147 = vdwg.mxu0
  %v1148 = vmul.f32 %v613, 0.35355338
  %v1149 = vmul.f32 %v689, 0.35355338
  %v1150 = vmul.f32 %v765, 0.35355338
  %v1151 = vmul.f32 %v841, 0.35355338
  %v1152 = vmul.f32 %v917, 0.35355338
  %v1153 = vmul.f32 %v993, 0.35355338
  %v1154 = vmul.f32 %v1069, 0.35355338
  %v1155 = vmul.f32 %v1145, 0.35355338
  %v1156 = vsel %vm541, %v1148, -inf
  %1157 = vmax.xlane.f32.xlu0 %v1156
  %v1158 = vpop.xlane.xlu0 %1157
  %v1159 = vsel %vm541, %v1149, -inf
  %1160 = vmax.xlane.f32.xlu0 %v1159
  %v1161 = vpop.xlane.xlu0 %1160
  %v1162 = vsel %vm541, %v1150, -inf
  %1163 = vmax.xlane.f32.xlu0 %v1162
  %v1164 = vpop.xlane.xlu0 %1163
  %v1165 = vsel %vm541, %v1151, -inf
  %1166 = vmax.xlane.f32.xlu0 %v1165
  %v1167 = vpop.xlane.xlu0 %1166
  %v1168 = vsel %vm541, %v1152, -inf
  %1169 = vmax.xlane.f32.xlu0 %v1168
  %v1170 = vpop.xlane.xlu0 %1169
  %v1171 = vsel %vm541, %v1153, -inf
  %1172 = vmax.xlane.f32.xlu0 %v1171
  %v1173 = vpop.xlane.xlu0 %1172
  %v1174 = vsel %vm541, %v1154, -inf
  %1175 = vmax.xlane.f32.xlu0 %v1174
  %v1176 = vpop.xlane.xlu0 %1175
  %v1177 = vsel %vm541, %v1155, -inf
  %1178 = vmax.xlane.f32.xlu0 %v1177
  %v1179 = vpop.xlane.xlu0 %1178
  %v1180 = vsub.f32 %v1148, %v1158
  %v1181 = vsub.f32 %v1149, %v1161
  %v1182 = vsub.f32 %v1150, %v1164
  %v1183 = vsub.f32 %v1151, %v1167
  %v1184 = vsub.f32 %v1152, %v1170
  %v1185 = vsub.f32 %v1153, %v1173
  %v1186 = vsub.f32 %v1154, %v1176
  %v1187 = vsub.f32 %v1155, %v1179
  %v1188 = vmul.f32 %v1180, 1.442695
  %v1189 = vpow.pop %v1188
  %v1190 = vmul.f32 %v1181, 1.442695
  %v1191 = vpow.pop %v1190
  %v1192 = vmul.f32 %v1182, 1.442695
  %v1193 = vpow.pop %v1192
  %v1194 = vmul.f32 %v1183, 1.442695
  %v1195 = vpow.pop %v1194
  %v1196 = vmul.f32 %v1184, 1.442695
  %v1197 = vpow.pop %v1196
  %v1198 = vmul.f32 %v1185, 1.442695
  %v1199 = vpow.pop %v1198
  %v1200 = vmul.f32 %v1186, 1.442695
  %v1201 = vpow.pop %v1200
  %v1202 = vmul.f32 %v1187, 1.442695
  %v1203 = vpow.pop %v1202
  %v1204 = vsel %vm541, %v1189, 0.0
  %1205 = vadd.xlane.f32.xlu0 %v1204
  %v1206 = vpop.xlane.xlu0 %1205
  %v1207 = vsel %vm541, %v1191, 0.0
  %1208 = vadd.xlane.f32.xlu0 %v1207
  %v1209 = vpop.xlane.xlu0 %1208
  %v1210 = vsel %vm541, %v1193, 0.0
  %1211 = vadd.xlane.f32.xlu0 %v1210
  %v1212 = vpop.xlane.xlu0 %1211
  %v1213 = vsel %vm541, %v1195, 0.0
  %1214 = vadd.xlane.f32.xlu0 %v1213
  %v1215 = vpop.xlane.xlu0 %1214
  %v1216 = vsel %vm541, %v1197, 0.0
  %1217 = vadd.xlane.f32.xlu0 %v1216
  %v1218 = vpop.xlane.xlu0 %1217
  %v1219 = vsel %vm541, %v1199, 0.0
  %1220 = vadd.xlane.f32.xlu0 %v1219
  %v1221 = vpop.xlane.xlu0 %1220
  %v1222 = vsel %vm541, %v1201, 0.0
  %1223 = vadd.xlane.f32.xlu0 %v1222
  %v1224 = vpop.xlane.xlu0 %1223
  %v1225 = vsel %vm541, %v1203, 0.0
  %1226 = vadd.xlane.f32.xlu0 %v1225
  %v1227 = vpop.xlane.xlu0 %1226
  %v1228 = vrcp.pop %v1206
  %v1229 = vmul.f32 %v1189, %v1228
  %v1230 = vrcp.pop %v1209
  %v1231 = vmul.f32 %v1191, %v1230
  %v1232 = vrcp.pop %v1212
  %v1233 = vmul.f32 %v1193, %v1232
  %v1234 = vrcp.pop %v1215
  %v1235 = vmul.f32 %v1195, %v1234
  %v1236 = vrcp.pop %v1218
  %v1237 = vmul.f32 %v1197, %v1236
  %v1238 = vrcp.pop %v1221
  %v1239 = vmul.f32 %v1199, %v1238
  %v1240 = vrcp.pop %v1224
  %v1241 = vmul.f32 %v1201, %v1240
  %v1242 = vrcp.pop %v1227
  %v1243 = vmul.f32 %v1203, %v1242
  %1244 = vrot.lane.b32.xlu0 %v517, 64
  %v1245 = vpop.permute.xlu0 %1244
  %v1248 = vsel %vm541, %v1229, 0
  %1250 = vmatprep.subr.mxu0 0.0
  %1251 = vmatpush1.msra.mxu0 0.0
  %1252 = vmatprep.subr.mxu0 0.0
  %1253 = vmatpush1.msra.mxu0 0.0
  %1254 = vmatprep.subr.mxu0 0.0
  %1255 = vmatpush1.msra.mxu0 0.0
  %1256 = vmatprep.subr.mxu0 0.0
  %1257 = vmatpush1.msra.mxu0 0.0
  %1258 = vmatprep.subr.mxu0 0.0
  %1259 = vmatpush1.msra.mxu0 0.0
  %1260 = vmatprep.subr.mxu0 0.0
  %1261 = vmatpush1.msra.mxu0 0.0
  %1262 = vmatprep.subr.mxu0 0.0
  %1263 = vmatpush1.msra.mxu0 0.0
  %1264 = vmatprep.subr.mxu0 0.0
  %1265 = vmatpush1.msra.mxu0 0.0
  %1266 = vmatprep.subr.mxu0 0.0
  %1267 = vmatpush1.msra.mxu0 0.0
  %1268 = vmatprep.subr.mxu0 0.0
  %1269 = vmatpush1.msra.mxu0 0.0
  %1270 = vmatprep.subr.mxu0 0.0
  %1271 = vmatpush1.msra.mxu0 0.0
  %1272 = vmatprep.subr.mxu0 0.0
  %1273 = vmatpush1.msra.mxu0 0.0
  %1274 = vmatprep.subr.mxu0 0.0
  %1275 = vmatpush1.msra.mxu0 0.0
  %1276 = vmatprep.subr.mxu0 0.0
  %1277 = vmatpush1.msra.mxu0 0.0
  %1278 = vmatprep.subr.mxu0 0.0
  %1279 = vmatpush1.msra.mxu0 0.0
  %1280 = vmatprep.subr.mxu0 0.0
  %1281 = vmatpush1.msra.mxu0 %v1245
  %1282 = vmatprep.subr.mxu0 0.0
  %1283 = vmatpush2.msra.mxu0 0.0
  %1284 = vmatprep.subr.mxu0 0.0
  %1285 = vmatpush2.msra.mxu0 0.0
  %1286 = vmatprep.subr.mxu0 0.0
  %1287 = vmatpush2.msra.mxu0 0.0
  %1288 = vmatprep.subr.mxu0 0.0
  %1289 = vmatpush2.msra.mxu0 0.0
  %1290 = vmatprep.subr.mxu0 0.0
  %1291 = vmatpush2.msra.mxu0 0.0
  %1292 = vmatprep.subr.mxu0 0.0
  %1293 = vmatpush2.msra.mxu0 0.0
  %1294 = vmatprep.subr.mxu0 0.0
  %1295 = vmatpush2.msra.mxu0 0.0
  %1296 = vmatprep.subr.mxu0 0.0
  %1297 = vmatpush2.msra.mxu0 0.0
  %1298 = vmatprep.subr.mxu0 0.0
  %1299 = vmatpush2.msra.mxu0 0.0
  %1300 = vmatprep.subr.mxu0 0.0
  %1301 = vmatpush2.msra.mxu0 0.0
  %1302 = vmatprep.subr.mxu0 0.0
  %1303 = vmatpush2.msra.mxu0 0.0
  %1304 = vmatprep.subr.mxu0 0.0
  %1305 = vmatpush2.msra.mxu0 0.0
  %1306 = vmatprep.subr.mxu0 0.0
  %1307 = vmatpush2.msra.mxu0 0.0
  %1308 = vmatprep.subr.mxu0 0.0
  %1309 = vmatpush2.msra.mxu0 0.0
  %1310 = vmatprep.subr.mxu0 0.0
  %1311 = vmatpush2.msra.mxu0 0.0
  %1312 = vmatprep.subr.mxu0 0.0
  %1313 = vmatpush2.msra.mxu0 0.0
  %1314 = vmatprep.mubr.f32.mxu0 0.0
  %1315 = vmatmul.mubr.f32.gmra.mxu0 %v1248
  %v1316 = vpop.f32.mrf.mxu0
  %v1317 = vadd.f32 0.0, %v1316
  %v1318 = vpop.f32.mrf.mxu0
  %1319 = vdwg.mxu0
  %1320 = vrot.lane.b32.xlu0 %v527, 64
  %v1321 = vpop.permute.xlu0 %1320
  %v1324 = vsel %vm541, %v1231, 0
  %1326 = vmatprep.subr.mxu0 0.0
  %1327 = vmatpush1.msra.mxu0 0.0
  %1328 = vmatprep.subr.mxu0 0.0
  %1329 = vmatpush1.msra.mxu0 0.0
  %1330 = vmatprep.subr.mxu0 0.0
  %1331 = vmatpush1.msra.mxu0 0.0
  %1332 = vmatprep.subr.mxu0 0.0
  %1333 = vmatpush1.msra.mxu0 0.0
  %1334 = vmatprep.subr.mxu0 0.0
  %1335 = vmatpush1.msra.mxu0 0.0
  %1336 = vmatprep.subr.mxu0 0.0
  %1337 = vmatpush1.msra.mxu0 0.0
  %1338 = vmatprep.subr.mxu0 0.0
  %1339 = vmatpush1.msra.mxu0 0.0
  %1340 = vmatprep.subr.mxu0 0.0
  %1341 = vmatpush1.msra.mxu0 0.0
  %1342 = vmatprep.subr.mxu0 0.0
  %1343 = vmatpush1.msra.mxu0 0.0
  %1344 = vmatprep.subr.mxu0 0.0
  %1345 = vmatpush1.msra.mxu0 0.0
  %1346 = vmatprep.subr.mxu0 0.0
  %1347 = vmatpush1.msra.mxu0 0.0
  %1348 = vmatprep.subr.mxu0 0.0
  %1349 = vmatpush1.msra.mxu0 0.0
  %1350 = vmatprep.subr.mxu0 0.0
  %1351 = vmatpush1.msra.mxu0 0.0
  %1352 = vmatprep.subr.mxu0 0.0
  %1353 = vmatpush1.msra.mxu0 0.0
  %1354 = vmatprep.subr.mxu0 0.0
  %1355 = vmatpush1.msra.mxu0 0.0
  %1356 = vmatprep.subr.mxu0 0.0
  %1357 = vmatpush1.msra.mxu0 %v1321
  %1358 = vmatprep.subr.mxu0 0.0
  %1359 = vmatpush2.msra.mxu0 0.0
  %1360 = vmatprep.subr.mxu0 0.0
  %1361 = vmatpush2.msra.mxu0 0.0
  %1362 = vmatprep.subr.mxu0 0.0
  %1363 = vmatpush2.msra.mxu0 0.0
  %1364 = vmatprep.subr.mxu0 0.0
  %1365 = vmatpush2.msra.mxu0 0.0
  %1366 = vmatprep.subr.mxu0 0.0
  %1367 = vmatpush2.msra.mxu0 0.0
  %1368 = vmatprep.subr.mxu0 0.0
  %1369 = vmatpush2.msra.mxu0 0.0
  %1370 = vmatprep.subr.mxu0 0.0
  %1371 = vmatpush2.msra.mxu0 0.0
  %1372 = vmatprep.subr.mxu0 0.0
  %1373 = vmatpush2.msra.mxu0 0.0
  %1374 = vmatprep.subr.mxu0 0.0
  %1375 = vmatpush2.msra.mxu0 0.0
  %1376 = vmatprep.subr.mxu0 0.0
  %1377 = vmatpush2.msra.mxu0 0.0
  %1378 = vmatprep.subr.mxu0 0.0
  %1379 = vmatpush2.msra.mxu0 0.0
  %1380 = vmatprep.subr.mxu0 0.0
  %1381 = vmatpush2.msra.mxu0 0.0
  %1382 = vmatprep.subr.mxu0 0.0
  %1383 = vmatpush2.msra.mxu0 0.0
  %1384 = vmatprep.subr.mxu0 0.0
  %1385 = vmatpush2.msra.mxu0 0.0
  %1386 = vmatprep.subr.mxu0 0.0
  %1387 = vmatpush2.msra.mxu0 0.0
  %1388 = vmatprep.subr.mxu0 0.0
  %1389 = vmatpush2.msra.mxu0 0.0
  %1390 = vmatprep.mubr.f32.mxu0 0.0
  %1391 = vmatmul.mubr.f32.gmra.mxu0 %v1324
  %v1392 = vpop.f32.mrf.mxu0
  %v1393 = vadd.f32 0.0, %v1392
  %v1394 = vpop.f32.mrf.mxu0
  %1395 = vdwg.mxu0
  %1396 = vrot.lane.b32.xlu0 %v529, 64
  %v1397 = vpop.permute.xlu0 %1396
  %v1400 = vsel %vm541, %v1233, 0
  %1402 = vmatprep.subr.mxu0 0.0
  %1403 = vmatpush1.msra.mxu0 0.0
  %1404 = vmatprep.subr.mxu0 0.0
  %1405 = vmatpush1.msra.mxu0 0.0
  %1406 = vmatprep.subr.mxu0 0.0
  %1407 = vmatpush1.msra.mxu0 0.0
  %1408 = vmatprep.subr.mxu0 0.0
  %1409 = vmatpush1.msra.mxu0 0.0
  %1410 = vmatprep.subr.mxu0 0.0
  %1411 = vmatpush1.msra.mxu0 0.0
  %1412 = vmatprep.subr.mxu0 0.0
  %1413 = vmatpush1.msra.mxu0 0.0
  %1414 = vmatprep.subr.mxu0 0.0
  %1415 = vmatpush1.msra.mxu0 0.0
  %1416 = vmatprep.subr.mxu0 0.0
  %1417 = vmatpush1.msra.mxu0 0.0
  %1418 = vmatprep.subr.mxu0 0.0
  %1419 = vmatpush1.msra.mxu0 0.0
  %1420 = vmatprep.subr.mxu0 0.0
  %1421 = vmatpush1.msra.mxu0 0.0
  %1422 = vmatprep.subr.mxu0 0.0
  %1423 = vmatpush1.msra.mxu0 0.0
  %1424 = vmatprep.subr.mxu0 0.0
  %1425 = vmatpush1.msra.mxu0 0.0
  %1426 = vmatprep.subr.mxu0 0.0
  %1427 = vmatpush1.msra.mxu0 0.0
  %1428 = vmatprep.subr.mxu0 0.0
  %1429 = vmatpush1.msra.mxu0 0.0
  %1430 = vmatprep.subr.mxu0 0.0
  %1431 = vmatpush1.msra.mxu0 0.0
  %1432 = vmatprep.subr.mxu0 0.0
  %1433 = vmatpush1.msra.mxu0 %v1397
  %1434 = vmatprep.subr.mxu0 0.0
  %1435 = vmatpush2.msra.mxu0 0.0
  %1436 = vmatprep.subr.mxu0 0.0
  %1437 = vmatpush2.msra.mxu0 0.0
  %1438 = vmatprep.subr.mxu0 0.0
  %1439 = vmatpush2.msra.mxu0 0.0
  %1440 = vmatprep.subr.mxu0 0.0
  %1441 = vmatpush2.msra.mxu0 0.0
  %1442 = vmatprep.subr.mxu0 0.0
  %1443 = vmatpush2.msra.mxu0 0.0
  %1444 = vmatprep.subr.mxu0 0.0
  %1445 = vmatpush2.msra.mxu0 0.0
  %1446 = vmatprep.subr.mxu0 0.0
  %1447 = vmatpush2.msra.mxu0 0.0
  %1448 = vmatprep.subr.mxu0 0.0
  %1449 = vmatpush2.msra.mxu0 0.0
  %1450 = vmatprep.subr.mxu0 0.0
  %1451 = vmatpush2.msra.mxu0 0.0
  %1452 = vmatprep.subr.mxu0 0.0
  %1453 = vmatpush2.msra.mxu0 0.0
  %1454 = vmatprep.subr.mxu0 0.0
  %1455 = vmatpush2.msra.mxu0 0.0
  %1456 = vmatprep.subr.mxu0 0.0
  %1457 = vmatpush2.msra.mxu0 0.0
  %1458 = vmatprep.subr.mxu0 0.0
  %1459 = vmatpush2.msra.mxu0 0.0
  %1460 = vmatprep.subr.mxu0 0.0
  %1461 = vmatpush2.msra.mxu0 0.0
  %1462 = vmatprep.subr.mxu0 0.0
  %1463 = vmatpush2.msra.mxu0 0.0
  %1464 = vmatprep.subr.mxu0 0.0
  %1465 = vmatpush2.msra.mxu0 0.0
  %1466 = vmatprep.mubr.f32.mxu0 0.0
  %1467 = vmatmul.mubr.f32.gmra.mxu0 %v1400
  %v1468 = vpop.f32.mrf.mxu0
  %v1469 = vadd.f32 0.0, %v1468
  %v1470 = vpop.f32.mrf.mxu0
  %1471 = vdwg.mxu0
  %1472 = vrot.lane.b32.xlu0 %v531, 64
  %v1473 = vpop.permute.xlu0 %1472
  %v1476 = vsel %vm541, %v1235, 0
  %1478 = vmatprep.subr.mxu0 0.0
  %1479 = vmatpush1.msra.mxu0 0.0
  %1480 = vmatprep.subr.mxu0 0.0
  %1481 = vmatpush1.msra.mxu0 0.0
  %1482 = vmatprep.subr.mxu0 0.0
  %1483 = vmatpush1.msra.mxu0 0.0
  %1484 = vmatprep.subr.mxu0 0.0
  %1485 = vmatpush1.msra.mxu0 0.0
  %1486 = vmatprep.subr.mxu0 0.0
  %1487 = vmatpush1.msra.mxu0 0.0
  %1488 = vmatprep.subr.mxu0 0.0
  %1489 = vmatpush1.msra.mxu0 0.0
  %1490 = vmatprep.subr.mxu0 0.0
  %1491 = vmatpush1.msra.mxu0 0.0
  %1492 = vmatprep.subr.mxu0 0.0
  %1493 = vmatpush1.msra.mxu0 0.0
  %1494 = vmatprep.subr.mxu0 0.0
  %1495 = vmatpush1.msra.mxu0 0.0
  %1496 = vmatprep.subr.mxu0 0.0
  %1497 = vmatpush1.msra.mxu0 0.0
  %1498 = vmatprep.subr.mxu0 0.0
  %1499 = vmatpush1.msra.mxu0 0.0
  %1500 = vmatprep.subr.mxu0 0.0
  %1501 = vmatpush1.msra.mxu0 0.0
  %1502 = vmatprep.subr.mxu0 0.0
  %1503 = vmatpush1.msra.mxu0 0.0
  %1504 = vmatprep.subr.mxu0 0.0
  %1505 = vmatpush1.msra.mxu0 0.0
  %1506 = vmatprep.subr.mxu0 0.0
  %1507 = vmatpush1.msra.mxu0 0.0
  %1508 = vmatprep.subr.mxu0 0.0
  %1509 = vmatpush1.msra.mxu0 %v1473
  %1510 = vmatprep.subr.mxu0 0.0
  %1511 = vmatpush2.msra.mxu0 0.0
  %1512 = vmatprep.subr.mxu0 0.0
  %1513 = vmatpush2.msra.mxu0 0.0
  %1514 = vmatprep.subr.mxu0 0.0
  %1515 = vmatpush2.msra.mxu0 0.0
  %1516 = vmatprep.subr.mxu0 0.0
  %1517 = vmatpush2.msra.mxu0 0.0
  %1518 = vmatprep.subr.mxu0 0.0
  %1519 = vmatpush2.msra.mxu0 0.0
  %1520 = vmatprep.subr.mxu0 0.0
  %1521 = vmatpush2.msra.mxu0 0.0
  %1522 = vmatprep.subr.mxu0 0.0
  %1523 = vmatpush2.msra.mxu0 0.0
  %1524 = vmatprep.subr.mxu0 0.0
  %1525 = vmatpush2.msra.mxu0 0.0
  %1526 = vmatprep.subr.mxu0 0.0
  %1527 = vmatpush2.msra.mxu0 0.0
  %1528 = vmatprep.subr.mxu0 0.0
  %1529 = vmatpush2.msra.mxu0 0.0
  %1530 = vmatprep.subr.mxu0 0.0
  %1531 = vmatpush2.msra.mxu0 0.0
  %1532 = vmatprep.subr.mxu0 0.0
  %1533 = vmatpush2.msra.mxu0 0.0
  %1534 = vmatprep.subr.mxu0 0.0
  %1535 = vmatpush2.msra.mxu0 0.0
  %1536 = vmatprep.subr.mxu0 0.0
  %1537 = vmatpush2.msra.mxu0 0.0
  %1538 = vmatprep.subr.mxu0 0.0
  %1539 = vmatpush2.msra.mxu0 0.0
  %1540 = vmatprep.subr.mxu0 0.0
  %1541 = vmatpush2.msra.mxu0 0.0
  %1542 = vmatprep.mubr.f32.mxu0 0.0
  %1543 = vmatmul.mubr.f32.gmra.mxu0 %v1476
  %v1544 = vpop.f32.mrf.mxu0
  %v1545 = vadd.f32 0.0, %v1544
  %v1546 = vpop.f32.mrf.mxu0
  %1547 = vdwg.mxu0
  %1548 = vrot.lane.b32.xlu0 %v522, 64
  %v1549 = vpop.permute.xlu0 %1548
  %v1552 = vsel %vm541, %v1237, 0
  %1554 = vmatprep.subr.mxu0 0.0
  %1555 = vmatpush1.msra.mxu0 0.0
  %1556 = vmatprep.subr.mxu0 0.0
  %1557 = vmatpush1.msra.mxu0 0.0
  %1558 = vmatprep.subr.mxu0 0.0
  %1559 = vmatpush1.msra.mxu0 0.0
  %1560 = vmatprep.subr.mxu0 0.0
  %1561 = vmatpush1.msra.mxu0 0.0
  %1562 = vmatprep.subr.mxu0 0.0
  %1563 = vmatpush1.msra.mxu0 0.0
  %1564 = vmatprep.subr.mxu0 0.0
  %1565 = vmatpush1.msra.mxu0 0.0
  %1566 = vmatprep.subr.mxu0 0.0
  %1567 = vmatpush1.msra.mxu0 0.0
  %1568 = vmatprep.subr.mxu0 0.0
  %1569 = vmatpush1.msra.mxu0 0.0
  %1570 = vmatprep.subr.mxu0 0.0
  %1571 = vmatpush1.msra.mxu0 0.0
  %1572 = vmatprep.subr.mxu0 0.0
  %1573 = vmatpush1.msra.mxu0 0.0
  %1574 = vmatprep.subr.mxu0 0.0
  %1575 = vmatpush1.msra.mxu0 0.0
  %1576 = vmatprep.subr.mxu0 0.0
  %1577 = vmatpush1.msra.mxu0 0.0
  %1578 = vmatprep.subr.mxu0 0.0
  %1579 = vmatpush1.msra.mxu0 0.0
  %1580 = vmatprep.subr.mxu0 0.0
  %1581 = vmatpush1.msra.mxu0 0.0
  %1582 = vmatprep.subr.mxu0 0.0
  %1583 = vmatpush1.msra.mxu0 0.0
  %1584 = vmatprep.subr.mxu0 0.0
  %1585 = vmatpush1.msra.mxu0 %v1549
  %1586 = vmatprep.subr.mxu0 0.0
  %1587 = vmatpush2.msra.mxu0 0.0
  %1588 = vmatprep.subr.mxu0 0.0
  %1589 = vmatpush2.msra.mxu0 0.0
  %1590 = vmatprep.subr.mxu0 0.0
  %1591 = vmatpush2.msra.mxu0 0.0
  %1592 = vmatprep.subr.mxu0 0.0
  %1593 = vmatpush2.msra.mxu0 0.0
  %1594 = vmatprep.subr.mxu0 0.0
  %1595 = vmatpush2.msra.mxu0 0.0
  %1596 = vmatprep.subr.mxu0 0.0
  %1597 = vmatpush2.msra.mxu0 0.0
  %1598 = vmatprep.subr.mxu0 0.0
  %1599 = vmatpush2.msra.mxu0 0.0
  %1600 = vmatprep.subr.mxu0 0.0
  %1601 = vmatpush2.msra.mxu0 0.0
  %1602 = vmatprep.subr.mxu0 0.0
  %1603 = vmatpush2.msra.mxu0 0.0
  %1604 = vmatprep.subr.mxu0 0.0
  %1605 = vmatpush2.msra.mxu0 0.0
  %1606 = vmatprep.subr.mxu0 0.0
  %1607 = vmatpush2.msra.mxu0 0.0
  %1608 = vmatprep.subr.mxu0 0.0
  %1609 = vmatpush2.msra.mxu0 0.0
  %1610 = vmatprep.subr.mxu0 0.0
  %1611 = vmatpush2.msra.mxu0 0.0
  %1612 = vmatprep.subr.mxu0 0.0
  %1613 = vmatpush2.msra.mxu0 0.0
  %1614 = vmatprep.subr.mxu0 0.0
  %1615 = vmatpush2.msra.mxu0 0.0
  %1616 = vmatprep.subr.mxu0 0.0
  %1617 = vmatpush2.msra.mxu0 0.0
  %1618 = vmatprep.mubr.f32.mxu0 0.0
  %1619 = vmatmul.mubr.f32.gmra.mxu0 %v1552
  %v1620 = vpop.f32.mrf.mxu0
  %v1621 = vadd.f32 0.0, %v1620
  %v1622 = vpop.f32.mrf.mxu0
  %1623 = vdwg.mxu0
  %1624 = vrot.lane.b32.xlu0 %v534, 64
  %v1625 = vpop.permute.xlu0 %1624
  %v1628 = vsel %vm541, %v1239, 0
  %1630 = vmatprep.subr.mxu0 0.0
  %1631 = vmatpush1.msra.mxu0 0.0
  %1632 = vmatprep.subr.mxu0 0.0
  %1633 = vmatpush1.msra.mxu0 0.0
  %1634 = vmatprep.subr.mxu0 0.0
  %1635 = vmatpush1.msra.mxu0 0.0
  %1636 = vmatprep.subr.mxu0 0.0
  %1637 = vmatpush1.msra.mxu0 0.0
  %1638 = vmatprep.subr.mxu0 0.0
  %1639 = vmatpush1.msra.mxu0 0.0
  %1640 = vmatprep.subr.mxu0 0.0
  %1641 = vmatpush1.msra.mxu0 0.0
  %1642 = vmatprep.subr.mxu0 0.0
  %1643 = vmatpush1.msra.mxu0 0.0
  %1644 = vmatprep.subr.mxu0 0.0
  %1645 = vmatpush1.msra.mxu0 0.0
  %1646 = vmatprep.subr.mxu0 0.0
  %1647 = vmatpush1.msra.mxu0 0.0
  %1648 = vmatprep.subr.mxu0 0.0
  %1649 = vmatpush1.msra.mxu0 0.0
  %1650 = vmatprep.subr.mxu0 0.0
  %1651 = vmatpush1.msra.mxu0 0.0
  %1652 = vmatprep.subr.mxu0 0.0
  %1653 = vmatpush1.msra.mxu0 0.0
  %1654 = vmatprep.subr.mxu0 0.0
  %1655 = vmatpush1.msra.mxu0 0.0
  %1656 = vmatprep.subr.mxu0 0.0
  %1657 = vmatpush1.msra.mxu0 0.0
  %1658 = vmatprep.subr.mxu0 0.0
  %1659 = vmatpush1.msra.mxu0 0.0
  %1660 = vmatprep.subr.mxu0 0.0
  %1661 = vmatpush1.msra.mxu0 %v1625
  %1662 = vmatprep.subr.mxu0 0.0
  %1663 = vmatpush2.msra.mxu0 0.0
  %1664 = vmatprep.subr.mxu0 0.0
  %1665 = vmatpush2.msra.mxu0 0.0
  %1666 = vmatprep.subr.mxu0 0.0
  %1667 = vmatpush2.msra.mxu0 0.0
  %1668 = vmatprep.subr.mxu0 0.0
  %1669 = vmatpush2.msra.mxu0 0.0
  %1670 = vmatprep.subr.mxu0 0.0
  %1671 = vmatpush2.msra.mxu0 0.0
  %1672 = vmatprep.subr.mxu0 0.0
  %1673 = vmatpush2.msra.mxu0 0.0
  %1674 = vmatprep.subr.mxu0 0.0
  %1675 = vmatpush2.msra.mxu0 0.0
  %1676 = vmatprep.subr.mxu0 0.0
  %1677 = vmatpush2.msra.mxu0 0.0
  %1678 = vmatprep.subr.mxu0 0.0
  %1679 = vmatpush2.msra.mxu0 0.0
  %1680 = vmatprep.subr.mxu0 0.0
  %1681 = vmatpush2.msra.mxu0 0.0
  %1682 = vmatprep.subr.mxu0 0.0
  %1683 = vmatpush2.msra.mxu0 0.0
  %1684 = vmatprep.subr.mxu0 0.0
  %1685 = vmatpush2.msra.mxu0 0.0
  %1686 = vmatprep.subr.mxu0 0.0
  %1687 = vmatpush2.msra.mxu0 0.0
  %1688 = vmatprep.subr.mxu0 0.0
  %1689 = vmatpush2.msra.mxu0 0.0
  %1690 = vmatprep.subr.mxu0 0.0
  %1691 = vmatpush2.msra.mxu0 0.0
  %1692 = vmatprep.subr.mxu0 0.0
  %1693 = vmatpush2.msra.mxu0 0.0
  %1694 = vmatprep.mubr.f32.mxu0 0.0
  %1695 = vmatmul.mubr.f32.gmra.mxu0 %v1628
  %v1696 = vpop.f32.mrf.mxu0
  %v1697 = vadd.f32 0.0, %v1696
  %v1698 = vpop.f32.mrf.mxu0
  %1699 = vdwg.mxu0
  %1700 = vrot.lane.b32.xlu0 %v536, 64
  %v1701 = vpop.permute.xlu0 %1700
  %v1704 = vsel %vm541, %v1241, 0
  %1706 = vmatprep.subr.mxu0 0.0
  %1707 = vmatpush1.msra.mxu0 0.0
  %1708 = vmatprep.subr.mxu0 0.0
  %1709 = vmatpush1.msra.mxu0 0.0
  %1710 = vmatprep.subr.mxu0 0.0
  %1711 = vmatpush1.msra.mxu0 0.0
  %1712 = vmatprep.subr.mxu0 0.0
  %1713 = vmatpush1.msra.mxu0 0.0
  %1714 = vmatprep.subr.mxu0 0.0
  %1715 = vmatpush1.msra.mxu0 0.0
  %1716 = vmatprep.subr.mxu0 0.0
  %1717 = vmatpush1.msra.mxu0 0.0
  %1718 = vmatprep.subr.mxu0 0.0
  %1719 = vmatpush1.msra.mxu0 0.0
  %1720 = vmatprep.subr.mxu0 0.0
  %1721 = vmatpush1.msra.mxu0 0.0
  %1722 = vmatprep.subr.mxu0 0.0
  %1723 = vmatpush1.msra.mxu0 0.0
  %1724 = vmatprep.subr.mxu0 0.0
  %1725 = vmatpush1.msra.mxu0 0.0
  %1726 = vmatprep.subr.mxu0 0.0
  %1727 = vmatpush1.msra.mxu0 0.0
  %1728 = vmatprep.subr.mxu0 0.0
  %1729 = vmatpush1.msra.mxu0 0.0
  %1730 = vmatprep.subr.mxu0 0.0
  %1731 = vmatpush1.msra.mxu0 0.0
  %1732 = vmatprep.subr.mxu0 0.0
  %1733 = vmatpush1.msra.mxu0 0.0
  %1734 = vmatprep.subr.mxu0 0.0
  %1735 = vmatpush1.msra.mxu0 0.0
  %1736 = vmatprep.subr.mxu0 0.0
  %1737 = vmatpush1.msra.mxu0 %v1701
  %1738 = vmatprep.subr.mxu0 0.0
  %1739 = vmatpush2.msra.mxu0 0.0
  %1740 = vmatprep.subr.mxu0 0.0
  %1741 = vmatpush2.msra.mxu0 0.0
  %1742 = vmatprep.subr.mxu0 0.0
  %1743 = vmatpush2.msra.mxu0 0.0
  %1744 = vmatprep.subr.mxu0 0.0
  %1745 = vmatpush2.msra.mxu0 0.0
  %1746 = vmatprep.subr.mxu0 0.0
  %1747 = vmatpush2.msra.mxu0 0.0
  %1748 = vmatprep.subr.mxu0 0.0
  %1749 = vmatpush2.msra.mxu0 0.0
  %1750 = vmatprep.subr.mxu0 0.0
  %1751 = vmatpush2.msra.mxu0 0.0
  %1752 = vmatprep.subr.mxu0 0.0
  %1753 = vmatpush2.msra.mxu0 0.0
  %1754 = vmatprep.subr.mxu0 0.0
  %1755 = vmatpush2.msra.mxu0 0.0
  %1756 = vmatprep.subr.mxu0 0.0
  %1757 = vmatpush2.msra.mxu0 0.0
  %1758 = vmatprep.subr.mxu0 0.0
  %1759 = vmatpush2.msra.mxu0 0.0
  %1760 = vmatprep.subr.mxu0 0.0
  %1761 = vmatpush2.msra.mxu0 0.0
  %1762 = vmatprep.subr.mxu0 0.0
  %1763 = vmatpush2.msra.mxu0 0.0
  %1764 = vmatprep.subr.mxu0 0.0
  %1765 = vmatpush2.msra.mxu0 0.0
  %1766 = vmatprep.subr.mxu0 0.0
  %1767 = vmatpush2.msra.mxu0 0.0
  %1768 = vmatprep.subr.mxu0 0.0
  %1769 = vmatpush2.msra.mxu0 0.0
  %1770 = vmatprep.mubr.f32.mxu0 0.0
  %1771 = vmatmul.mubr.f32.gmra.mxu0 %v1704
  %v1772 = vpop.f32.mrf.mxu0
  %v1773 = vadd.f32 0.0, %v1772
  %v1774 = vpop.f32.mrf.mxu0
  %1775 = vdwg.mxu0
  %1776 = vrot.lane.b32.xlu0 %v538, 64
  %v1777 = vpop.permute.xlu0 %1776
  %v1780 = vsel %vm541, %v1243, 0
  %1782 = vmatprep.subr.mxu0 0.0
  %1783 = vmatpush1.msra.mxu0 0.0
  %1784 = vmatprep.subr.mxu0 0.0
  %1785 = vmatpush1.msra.mxu0 0.0
  %1786 = vmatprep.subr.mxu0 0.0
  %1787 = vmatpush1.msra.mxu0 0.0
  %1788 = vmatprep.subr.mxu0 0.0
  %1789 = vmatpush1.msra.mxu0 0.0
  %1790 = vmatprep.subr.mxu0 0.0
  %1791 = vmatpush1.msra.mxu0 0.0
  %1792 = vmatprep.subr.mxu0 0.0
  %1793 = vmatpush1.msra.mxu0 0.0
  %1794 = vmatprep.subr.mxu0 0.0
  %1795 = vmatpush1.msra.mxu0 0.0
  %1796 = vmatprep.subr.mxu0 0.0
  %1797 = vmatpush1.msra.mxu0 0.0
  %1798 = vmatprep.subr.mxu0 0.0
  %1799 = vmatpush1.msra.mxu0 0.0
  %1800 = vmatprep.subr.mxu0 0.0
  %1801 = vmatpush1.msra.mxu0 0.0
  %1802 = vmatprep.subr.mxu0 0.0
  %1803 = vmatpush1.msra.mxu0 0.0
  %1804 = vmatprep.subr.mxu0 0.0
  %1805 = vmatpush1.msra.mxu0 0.0
  %1806 = vmatprep.subr.mxu0 0.0
  %1807 = vmatpush1.msra.mxu0 0.0
  %1808 = vmatprep.subr.mxu0 0.0
  %1809 = vmatpush1.msra.mxu0 0.0
  %1810 = vmatprep.subr.mxu0 0.0
  %1811 = vmatpush1.msra.mxu0 0.0
  %1812 = vmatprep.subr.mxu0 0.0
  %1813 = vmatpush1.msra.mxu0 %v1777
  %1814 = vmatprep.subr.mxu0 0.0
  %1815 = vmatpush2.msra.mxu0 0.0
  %1816 = vmatprep.subr.mxu0 0.0
  %1817 = vmatpush2.msra.mxu0 0.0
  %1818 = vmatprep.subr.mxu0 0.0
  %1819 = vmatpush2.msra.mxu0 0.0
  %1820 = vmatprep.subr.mxu0 0.0
  %1821 = vmatpush2.msra.mxu0 0.0
  %1822 = vmatprep.subr.mxu0 0.0
  %1823 = vmatpush2.msra.mxu0 0.0
  %1824 = vmatprep.subr.mxu0 0.0
  %1825 = vmatpush2.msra.mxu0 0.0
  %1826 = vmatprep.subr.mxu0 0.0
  %1827 = vmatpush2.msra.mxu0 0.0
  %1828 = vmatprep.subr.mxu0 0.0
  %1829 = vmatpush2.msra.mxu0 0.0
  %1830 = vmatprep.subr.mxu0 0.0
  %1831 = vmatpush2.msra.mxu0 0.0
  %1832 = vmatprep.subr.mxu0 0.0
  %1833 = vmatpush2.msra.mxu0 0.0
  %1834 = vmatprep.subr.mxu0 0.0
  %1835 = vmatpush2.msra.mxu0 0.0
  %1836 = vmatprep.subr.mxu0 0.0
  %1837 = vmatpush2.msra.mxu0 0.0
  %1838 = vmatprep.subr.mxu0 0.0
  %1839 = vmatpush2.msra.mxu0 0.0
  %1840 = vmatprep.subr.mxu0 0.0
  %1841 = vmatpush2.msra.mxu0 0.0
  %1842 = vmatprep.subr.mxu0 0.0
  %1843 = vmatpush2.msra.mxu0 0.0
  %1844 = vmatprep.subr.mxu0 0.0
  %1845 = vmatpush2.msra.mxu0 0.0
  %1846 = vmatprep.mubr.f32.mxu0 0.0
  %1847 = vmatmul.mubr.f32.gmra.mxu0 %v1780
  %v1848 = vpop.f32.mrf.mxu0
  %v1849 = vadd.f32 0.0, %v1848
  %v1850 = vpop.f32.mrf.mxu0
  %1851 = vdwg.mxu0
  %1853 = vrot.lane.b32.xlu0 %v1393, 8
  %v1854 = vpop.permute.xlu0 %1853
  %1857 = vrot.lane.b32.xlu0 %v1469, 16
  %v1858 = vpop.permute.xlu0 %1857
  %1861 = vrot.lane.b32.xlu0 %v1545, 24
  %v1862 = vpop.permute.xlu0 %1861
  %v1864 = vsel %vm541, %v1317, %v1854
  %vm1865 = vcmask 130048
  %v1866 = vsel %vm1865, %v1864, %v1858
  %vm1867 = vcmask 195584
  %v1868 = vsel %vm1867, %v1866, %v1862
  %1870 = vrot.lane.b32.xlu0 %v1697, 8
  %v1871 = vpop.permute.xlu0 %1870
  %1874 = vrot.lane.b32.xlu0 %v1773, 16
  %v1875 = vpop.permute.xlu0 %1874
  %1878 = vrot.lane.b32.xlu0 %v1849, 24
  %v1879 = vpop.permute.xlu0 %1878
  %v1881 = vsel %vm541, %v1621, %v1871
  %v1882 = vsel %vm1865, %v1881, %v1875
  %v1883 = vsel %vm1867, %v1882, %v1879
  %v1885 = vlaneseq
  %v1886 = vshrl.u32 %v1885, 7
  %v1887 = vsub.s32 0, %v1886
  %v1888 = vrot.slane %v369, %v1887
  %v1891 = vsel %vm394, %v1868, 0
  %v1894 = vsel %vm394, %v1883, 0
  %1896 = vmatprep.subr.mxu0 0.0
  %1897 = vmatpush1.msra.mxu0 0.0
  %1898 = vmatprep.subr.mxu0 0.0
  %1899 = vmatpush1.msra.mxu0 0.0
  %1900 = vmatprep.subr.mxu0 0.0
  %1901 = vmatpush1.msra.mxu0 0.0
  %1902 = vmatprep.subr.mxu0 0.0
  %1903 = vmatpush1.msra.mxu0 0.0
  %1904 = vmatprep.subr.mxu0 0.0
  %1905 = vmatpush1.msra.mxu0 0.0
  %1906 = vmatprep.subr.mxu0 0.0
  %1907 = vmatpush1.msra.mxu0 0.0
  %1908 = vmatprep.subr.mxu0 0.0
  %1909 = vmatpush1.msra.mxu0 0.0
  %1910 = vmatprep.subr.mxu0 0.0
  %1911 = vmatpush1.msra.mxu0 0.0
  %1912 = vmatprep.subr.mxu0 0.0
  %1913 = vmatpush1.msra.mxu0 0.0
  %1914 = vmatprep.subr.mxu0 0.0
  %1915 = vmatpush1.msra.mxu0 0.0
  %1916 = vmatprep.subr.mxu0 0.0
  %1917 = vmatpush1.msra.mxu0 0.0
  %1918 = vmatprep.subr.mxu0 0.0
  %1919 = vmatpush1.msra.mxu0 0.0
  %1920 = vmatprep.subr.mxu0 0.0
  %1921 = vmatpush1.msra.mxu0 %v368
  %1922 = vmatprep.subr.mxu0 0.0
  %1923 = vmatpush1.msra.mxu0 %v367
  %1924 = vmatprep.subr.mxu0 0.0
  %1925 = vmatpush1.msra.mxu0 %v366
  %1926 = vmatprep.subr.mxu0 0.0
  %1927 = vmatpush1.msra.mxu0 %v365
  %1928 = vmatprep.subr.mxu0 0.0
  %1929 = vmatpush2.msra.mxu0 0.0
  %1930 = vmatprep.subr.mxu0 0.0
  %1931 = vmatpush2.msra.mxu0 0.0
  %1932 = vmatprep.subr.mxu0 0.0
  %1933 = vmatpush2.msra.mxu0 0.0
  %1934 = vmatprep.subr.mxu0 0.0
  %1935 = vmatpush2.msra.mxu0 0.0
  %1936 = vmatprep.subr.mxu0 0.0
  %1937 = vmatpush2.msra.mxu0 0.0
  %1938 = vmatprep.subr.mxu0 0.0
  %1939 = vmatpush2.msra.mxu0 0.0
  %1940 = vmatprep.subr.mxu0 0.0
  %1941 = vmatpush2.msra.mxu0 0.0
  %1942 = vmatprep.subr.mxu0 0.0
  %1943 = vmatpush2.msra.mxu0 0.0
  %1944 = vmatprep.subr.mxu0 0.0
  %1945 = vmatpush2.msra.mxu0 0.0
  %1946 = vmatprep.subr.mxu0 0.0
  %1947 = vmatpush2.msra.mxu0 0.0
  %1948 = vmatprep.subr.mxu0 0.0
  %1949 = vmatpush2.msra.mxu0 0.0
  %1950 = vmatprep.subr.mxu0 0.0
  %1951 = vmatpush2.msra.mxu0 0.0
  %1952 = vmatprep.subr.mxu0 0.0
  %1953 = vmatpush2.msra.mxu0 0.0
  %1954 = vmatprep.subr.mxu0 0.0
  %1955 = vmatpush2.msra.mxu0 0.0
  %1956 = vmatprep.subr.mxu0 0.0
  %1957 = vmatpush2.msra.mxu0 0.0
  %1958 = vmatprep.subr.mxu0 0.0
  %1959 = vmatpush2.msra.mxu0 0.0
  %1960 = vmatprep.mubr.f32.mxu0 0.0
  %1961 = vmatmul.mubr.f32.gmra.mxu0 %v1891
  %v1962 = vpop.f32.mrf.mxu0
  %v1963 = vadd.f32 %v1888, %v1962
  %v1964 = vpop.f32.mrf.mxu0
  %1965 = vmatprep.mubr.f32.mxu0 0.0
  %1966 = vmatmul.mubr.f32.gmra.mxu0 %v1894
  %v1967 = vpop.f32.mrf.mxu0
  %v1968 = vadd.f32 %v1888, %v1967
  %v1969 = vpop.f32.mrf.mxu0
  %1970 = vdwg.mxu0
  %v1971 = vadd.f32 %v356, %v1963
  %v1972 = vadd.f32 %v357, %v1968
  %v1973 = vsel %vm394, %v1971, 0.0
  %1974 = vadd.xlane.f32.xlu0 %v1973
  %v1975 = vpop.xlane.xlu0 %1974
  %v1976 = vsel %vm394, %v1972, 0.0
  %1977 = vadd.xlane.f32.xlu0 %v1976
  %v1978 = vpop.xlane.xlu0 %1977
  %v1979 = vmul.f32 %v1975, %v401
  %v1980 = vmul.f32 %v1978, %v401
  %v1981 = vsub.f32 %v1971, %v1979
  %v1982 = vsub.f32 %v1972, %v1980
  %v1983 = vmul.f32 %v1981, %v1981
  %v1984 = vmul.f32 %v1982, %v1982
  %v1985 = vsel %vm394, %v1983, 0.0
  %1986 = vadd.xlane.f32.xlu0 %v1985
  %v1987 = vpop.xlane.xlu0 %1986
  %v1988 = vsel %vm394, %v1984, 0.0
  %1989 = vadd.xlane.f32.xlu0 %v1988
  %v1990 = vpop.xlane.xlu0 %1989
  %v1991 = vmul.f32 %v1987, %v401
  %v1992 = vmul.f32 %v1990, %v401
  %v1993 = vadd.f32 %v1991, 1e-05
  %v1994 = vadd.f32 %v1992, 1e-05
  %v1995 = vrsqrt.pop %v1993
  %v1996 = vrsqrt.pop %v1994
  %v1997 = vmul.f32 %v1981, %v1995
  %v1998 = vmul.f32 %v1982, %v1996
  %v2000 = vlaneseq
  %v2001 = vshrl.u32 %v2000, 7
  %v2002 = vsub.s32 0, %v2001
  %v2003 = vrot.slane %v370, %v2002
  %v2005 = vmul.f32 %v1997, %v2003
  %v2006 = vmul.f32 %v1998, %v2003
  %v2008 = vlaneseq
  %v2009 = vshrl.u32 %v2008, 7
  %v2010 = vsub.s32 0, %v2009
  %v2011 = vrot.slane %v371, %v2010
  %v2013 = vadd.f32 %v2005, %v2011
  %v2014 = vadd.f32 %v2006, %v2011
  %v2016 = vlaneseq
  %v2017 = vshrl.u32 %v2016, 7
  %v2018 = vsub.s32 0, %v2017
  %v2019 = vrot.slane %v376, %v2018
  %v2022 = vsel %vm394, %v2013, 0
  %v2025 = vsel %vm394, %v2014, 0
  %2027 = vmatprep.subr.mxu0 0.0
  %2028 = vmatpush1.msra.mxu0 0.0
  %2029 = vmatprep.subr.mxu0 0.0
  %2030 = vmatpush1.msra.mxu0 0.0
  %2031 = vmatprep.subr.mxu0 0.0
  %2032 = vmatpush1.msra.mxu0 0.0
  %2033 = vmatprep.subr.mxu0 0.0
  %2034 = vmatpush1.msra.mxu0 0.0
  %2035 = vmatprep.subr.mxu0 0.0
  %2036 = vmatpush1.msra.mxu0 0.0
  %2037 = vmatprep.subr.mxu0 0.0
  %2038 = vmatpush1.msra.mxu0 0.0
  %2039 = vmatprep.subr.mxu0 0.0
  %2040 = vmatpush1.msra.mxu0 0.0
  %2041 = vmatprep.subr.mxu0 0.0
  %2042 = vmatpush1.msra.mxu0 0.0
  %2043 = vmatprep.subr.mxu0 0.0
  %2044 = vmatpush1.msra.mxu0 0.0
  %2045 = vmatprep.subr.mxu0 0.0
  %2046 = vmatpush1.msra.mxu0 0.0
  %2047 = vmatprep.subr.mxu0 0.0
  %2048 = vmatpush1.msra.mxu0 0.0
  %2049 = vmatprep.subr.mxu0 0.0
  %2050 = vmatpush1.msra.mxu0 0.0
  %2051 = vmatprep.subr.mxu0 0.0
  %2052 = vmatpush1.msra.mxu0 %v375
  %2053 = vmatprep.subr.mxu0 0.0
  %2054 = vmatpush1.msra.mxu0 %v374
  %2055 = vmatprep.subr.mxu0 0.0
  %2056 = vmatpush1.msra.mxu0 %v373
  %2057 = vmatprep.subr.mxu0 0.0
  %2058 = vmatpush1.msra.mxu0 %v372
  %2059 = vmatprep.subr.mxu0 0.0
  %2060 = vmatpush2.msra.mxu0 0.0
  %2061 = vmatprep.subr.mxu0 0.0
  %2062 = vmatpush2.msra.mxu0 0.0
  %2063 = vmatprep.subr.mxu0 0.0
  %2064 = vmatpush2.msra.mxu0 0.0
  %2065 = vmatprep.subr.mxu0 0.0
  %2066 = vmatpush2.msra.mxu0 0.0
  %2067 = vmatprep.subr.mxu0 0.0
  %2068 = vmatpush2.msra.mxu0 0.0
  %2069 = vmatprep.subr.mxu0 0.0
  %2070 = vmatpush2.msra.mxu0 0.0
  %2071 = vmatprep.subr.mxu0 0.0
  %2072 = vmatpush2.msra.mxu0 0.0
  %2073 = vmatprep.subr.mxu0 0.0
  %2074 = vmatpush2.msra.mxu0 0.0
  %2075 = vmatprep.subr.mxu0 0.0
  %2076 = vmatpush2.msra.mxu0 0.0
  %2077 = vmatprep.subr.mxu0 0.0
  %2078 = vmatpush2.msra.mxu0 0.0
  %2079 = vmatprep.subr.mxu0 0.0
  %2080 = vmatpush2.msra.mxu0 0.0
  %2081 = vmatprep.subr.mxu0 0.0
  %2082 = vmatpush2.msra.mxu0 0.0
  %2083 = vmatprep.subr.mxu0 0.0
  %2084 = vmatpush2.msra.mxu0 0.0
  %2085 = vmatprep.subr.mxu0 0.0
  %2086 = vmatpush2.msra.mxu0 0.0
  %2087 = vmatprep.subr.mxu0 0.0
  %2088 = vmatpush2.msra.mxu0 0.0
  %2089 = vmatprep.subr.mxu0 0.0
  %2090 = vmatpush2.msra.mxu0 0.0
  %2091 = vmatprep.mubr.f32.mxu0 0.0
  %2092 = vmatmul.mubr.f32.gmra.mxu0 %v2022
  %v2093 = vpop.f32.mrf.mxu0
  %v2094 = vadd.f32 %v2019, %v2093
  %v2095 = vpop.f32.mrf.mxu0
  %2096 = vmatprep.mubr.f32.mxu0 0.0
  %2097 = vmatmul.mubr.f32.gmra.mxu0 %v2025
  %v2098 = vpop.f32.mrf.mxu0
  %v2099 = vadd.f32 %v2019, %v2098
  %v2100 = vpop.f32.mrf.mxu0
  %2101 = vdwg.mxu0
  %v2102 = vmul.f32 %v2094, 0.5
  %v2103 = vmul.f32 %v2099, 0.5
  %v2104 = vmul.f32 %v2094, 0.044715
  %v2105 = vmul.f32 %v2099, 0.044715
  %v2106 = vmul.f32 %v2104, %v2094
  %v2107 = vmul.f32 %v2105, %v2099
  %v2108 = vmul.f32 %v2106, %v2094
  %v2109 = vmul.f32 %v2107, %v2099
  %v2110 = vadd.f32 %v2094, %v2108
  %v2111 = vadd.f32 %v2099, %v2109
  %v2112 = vmul.f32 %v2110, 0.7978846
  %v2113 = vmul.f32 %v2111, 0.7978846
  %v2114 = vtanh.pop %v2112
  %v2115 = vtanh.pop %v2113
  %v2116 = vadd.f32 %v2114, 1.0
  %v2117 = vadd.f32 %v2115, 1.0
  %v2118 = vmul.f32 %v2102, %v2116
  %v2119 = vmul.f32 %v2103, %v2117
  %v2121 = vlaneseq
  %v2122 = vshrl.u32 %v2121, 7
  %v2123 = vsub.s32 0, %v2122
  %v2124 = vrot.slane %v393, %v2123
  %2126 = vmatprep.subr.mxu0 0.0
  %2127 = vmatpush1.msra.mxu0 %v392
  %2128 = vmatprep.subr.mxu0 0.0
  %2129 = vmatpush1.msra.mxu0 %v391
  %2130 = vmatprep.subr.mxu0 0.0
  %2131 = vmatpush1.msra.mxu0 %v390
  %2132 = vmatprep.subr.mxu0 0.0
  %2133 = vmatpush1.msra.mxu0 %v389
  %2134 = vmatprep.subr.mxu0 0.0
  %2135 = vmatpush1.msra.mxu0 %v388
  %2136 = vmatprep.subr.mxu0 0.0
  %2137 = vmatpush1.msra.mxu0 %v387
  %2138 = vmatprep.subr.mxu0 0.0
  %2139 = vmatpush1.msra.mxu0 %v386
  %2140 = vmatprep.subr.mxu0 0.0
  %2141 = vmatpush1.msra.mxu0 %v385
  %2142 = vmatprep.subr.mxu0 0.0
  %2143 = vmatpush1.msra.mxu0 %v384
  %2144 = vmatprep.subr.mxu0 0.0
  %2145 = vmatpush1.msra.mxu0 %v383
  %2146 = vmatprep.subr.mxu0 0.0
  %2147 = vmatpush1.msra.mxu0 %v382
  %2148 = vmatprep.subr.mxu0 0.0
  %2149 = vmatpush1.msra.mxu0 %v381
  %2150 = vmatprep.subr.mxu0 0.0
  %2151 = vmatpush1.msra.mxu0 %v380
  %2152 = vmatprep.subr.mxu0 0.0
  %2153 = vmatpush1.msra.mxu0 %v379
  %2154 = vmatprep.subr.mxu0 0.0
  %2155 = vmatpush1.msra.mxu0 %v378
  %2156 = vmatprep.subr.mxu0 0.0
  %2157 = vmatpush1.msra.mxu0 %v377
  %2158 = vmatprep.subr.mxu0 0.0
  %2159 = vmatpush2.msra.mxu0 0.0
  %2160 = vmatprep.subr.mxu0 0.0
  %2161 = vmatpush2.msra.mxu0 0.0
  %2162 = vmatprep.subr.mxu0 0.0
  %2163 = vmatpush2.msra.mxu0 0.0
  %2164 = vmatprep.subr.mxu0 0.0
  %2165 = vmatpush2.msra.mxu0 0.0
  %2166 = vmatprep.subr.mxu0 0.0
  %2167 = vmatpush2.msra.mxu0 0.0
  %2168 = vmatprep.subr.mxu0 0.0
  %2169 = vmatpush2.msra.mxu0 0.0
  %2170 = vmatprep.subr.mxu0 0.0
  %2171 = vmatpush2.msra.mxu0 0.0
  %2172 = vmatprep.subr.mxu0 0.0
  %2173 = vmatpush2.msra.mxu0 0.0
  %2174 = vmatprep.subr.mxu0 0.0
  %2175 = vmatpush2.msra.mxu0 0.0
  %2176 = vmatprep.subr.mxu0 0.0
  %2177 = vmatpush2.msra.mxu0 0.0
  %2178 = vmatprep.subr.mxu0 0.0
  %2179 = vmatpush2.msra.mxu0 0.0
  %2180 = vmatprep.subr.mxu0 0.0
  %2181 = vmatpush2.msra.mxu0 0.0
  %2182 = vmatprep.subr.mxu0 0.0
  %2183 = vmatpush2.msra.mxu0 0.0
  %2184 = vmatprep.subr.mxu0 0.0
  %2185 = vmatpush2.msra.mxu0 0.0
  %2186 = vmatprep.subr.mxu0 0.0
  %2187 = vmatpush2.msra.mxu0 0.0
  %2188 = vmatprep.subr.mxu0 0.0
  %2189 = vmatpush2.msra.mxu0 0.0
  %2190 = vmatprep.mubr.f32.mxu0 0.0
  %2191 = vmatmul.mubr.f32.gmra.mxu0 %v2118
  %v2192 = vpop.f32.mrf.mxu0
  %v2193 = vadd.f32 %v2124, %v2192
  %v2194 = vpop.f32.mrf.mxu0
  %2195 = vmatprep.mubr.f32.mxu0 0.0
  %2196 = vmatmul.mubr.f32.gmra.mxu0 %v2119
  %v2197 = vpop.f32.mrf.mxu0
  %v2198 = vadd.f32 %v2124, %v2197
  %v2199 = vpop.f32.mrf.mxu0
  %2200 = vdwg.mxu0
  %v2201 = vadd.f32 %v1971, %v2193
  %v2202 = vadd.f32 %v1972, %v2198
  %v2203 = vld [vmem:[%s37] sm:$0x1]
  %v2204 = vld [vmem:[%s39] sm:$0x1]
  %v2205 = vld [vmem:[%s41] sm:$0xff]
  %v2206 = vld [vmem:[%s41 + $0x8] sm:$0xff]
  %v2207 = vld [vmem:[%s41 + $0x10] sm:$0xff]
  %v2208 = vld [vmem:[%s41 + $0x18] sm:$0xff]
  %v2209 = vld [vmem:[%s43] sm:$0x1]
  %v2210 = vld [vmem:[%s45] sm:$0xff]
  %v2211 = vld [vmem:[%s45 + $0x8] sm:$0xff]
  %v2212 = vld [vmem:[%s45 + $0x10] sm:$0xff]
  %v2213 = vld [vmem:[%s45 + $0x18] sm:$0xff]
  %v2214 = vld [vmem:[%s47] sm:$0x1]
  %v2215 = vld [vmem:[%s49] sm:$0x1]
  %v2216 = vld [vmem:[%s51] sm:$0x1]
  %v2217 = vld [vmem:[%s53] sm:$0xff]
  %v2218 = vld [vmem:[%s53 + $0x8] sm:$0xff]
  %v2219 = vld [vmem:[%s53 + $0x10] sm:$0xff]
  %v2220 = vld [vmem:[%s53 + $0x18] sm:$0xff]
  %v2221 = vld [vmem:[%s55] sm:$0x1]
  %v2222 = vld [vmem:[%s57] sm:$0xff]
  %v2223 = vld [vmem:[%s57 + $0x8] sm:$0xff]
  %v2224 = vld [vmem:[%s57 + $0x10] sm:$0xff]
  %v2225 = vld [vmem:[%s57 + $0x18] sm:$0xff]
  %v2226 = vld [vmem:[%s57 + $0x20] sm:$0xff]
  %v2227 = vld [vmem:[%s57 + $0x28] sm:$0xff]
  %v2228 = vld [vmem:[%s57 + $0x30] sm:$0xff]
  %v2229 = vld [vmem:[%s57 + $0x38] sm:$0xff]
  %v2230 = vld [vmem:[%s57 + $0x40] sm:$0xff]
  %v2231 = vld [vmem:[%s57 + $0x48] sm:$0xff]
  %v2232 = vld [vmem:[%s57 + $0x50] sm:$0xff]
  %v2233 = vld [vmem:[%s57 + $0x58] sm:$0xff]
  %v2234 = vld [vmem:[%s57 + $0x60] sm:$0xff]
  %v2235 = vld [vmem:[%s57 + $0x68] sm:$0xff]
  %v2236 = vld [vmem:[%s57 + $0x70] sm:$0xff]
  %v2237 = vld [vmem:[%s57 + $0x78] sm:$0xff]
  %v2238 = vld [vmem:[%s59] sm:$0x1]
  %v2239 = vsel %vm394, %v2201, 0.0
  %2240 = vadd.xlane.f32.xlu0 %v2239
  %v2241 = vpop.xlane.xlu0 %2240
  %v2242 = vsel %vm394, %v2202, 0.0
  %2243 = vadd.xlane.f32.xlu0 %v2242
  %v2244 = vpop.xlane.xlu0 %2243
  %v2245 = vmul.f32 %v2241, %v401
  %v2246 = vmul.f32 %v2244, %v401
  %v2247 = vsub.f32 %v2201, %v2245
  %v2248 = vsub.f32 %v2202, %v2246
  %v2249 = vmul.f32 %v2247, %v2247
  %v2250 = vmul.f32 %v2248, %v2248
  %v2251 = vsel %vm394, %v2249, 0.0
  %2252 = vadd.xlane.f32.xlu0 %v2251
  %v2253 = vpop.xlane.xlu0 %2252
  %v2254 = vsel %vm394, %v2250, 0.0
  %2255 = vadd.xlane.f32.xlu0 %v2254
  %v2256 = vpop.xlane.xlu0 %2255
  %v2257 = vmul.f32 %v2253, %v401
  %v2258 = vmul.f32 %v2256, %v401
  %v2259 = vadd.f32 %v2257, 1e-05
  %v2260 = vadd.f32 %v2258, 1e-05
  %v2261 = vrsqrt.pop %v2259
  %v2262 = vrsqrt.pop %v2260
  %v2263 = vmul.f32 %v2247, %v2261
  %v2264 = vmul.f32 %v2248, %v2262
  %v2266 = vlaneseq
  %v2267 = vshrl.u32 %v2266, 7
  %v2268 = vsub.s32 0, %v2267
  %v2269 = vrot.slane %v2203, %v2268
  %v2271 = vmul.f32 %v2263, %v2269
  %v2272 = vmul.f32 %v2264, %v2269
  %v2274 = vlaneseq
  %v2275 = vshrl.u32 %v2274, 7
  %v2276 = vsub.s32 0, %v2275
  %v2277 = vrot.slane %v2204, %v2276
  %v2279 = vadd.f32 %v2271, %v2277
  %v2280 = vadd.f32 %v2272, %v2277
  %v2282 = vlaneseq
  %v2283 = vshrl.u32 %v2282, 7
  %v2284 = vsub.s32 0, %v2283
  %v2285 = vrot.slane %v2209, %v2284
  %v2288 = vsel %vm394, %v2279, 0
  %v2291 = vsel %vm394, %v2280, 0
  %2293 = vmatprep.subr.mxu0 0.0
  %2294 = vmatpush1.msra.mxu0 0.0
  %2295 = vmatprep.subr.mxu0 0.0
  %2296 = vmatpush1.msra.mxu0 0.0
  %2297 = vmatprep.subr.mxu0 0.0
  %2298 = vmatpush1.msra.mxu0 0.0
  %2299 = vmatprep.subr.mxu0 0.0
  %2300 = vmatpush1.msra.mxu0 0.0
  %2301 = vmatprep.subr.mxu0 0.0
  %2302 = vmatpush1.msra.mxu0 0.0
  %2303 = vmatprep.subr.mxu0 0.0
  %2304 = vmatpush1.msra.mxu0 0.0
  %2305 = vmatprep.subr.mxu0 0.0
  %2306 = vmatpush1.msra.mxu0 0.0
  %2307 = vmatprep.subr.mxu0 0.0
  %2308 = vmatpush1.msra.mxu0 0.0
  %2309 = vmatprep.subr.mxu0 0.0
  %2310 = vmatpush1.msra.mxu0 0.0
  %2311 = vmatprep.subr.mxu0 0.0
  %2312 = vmatpush1.msra.mxu0 0.0
  %2313 = vmatprep.subr.mxu0 0.0
  %2314 = vmatpush1.msra.mxu0 0.0
  %2315 = vmatprep.subr.mxu0 0.0
  %2316 = vmatpush1.msra.mxu0 0.0
  %2317 = vmatprep.subr.mxu0 0.0
  %2318 = vmatpush1.msra.mxu0 %v2208
  %2319 = vmatprep.subr.mxu0 0.0
  %2320 = vmatpush1.msra.mxu0 %v2207
  %2321 = vmatprep.subr.mxu0 0.0
  %2322 = vmatpush1.msra.mxu0 %v2206
  %2323 = vmatprep.subr.mxu0 0.0
  %2324 = vmatpush1.msra.mxu0 %v2205
  %2325 = vmatprep.subr.mxu0 0.0
  %2326 = vmatpush2.msra.mxu0 0.0
  %2327 = vmatprep.subr.mxu0 0.0
  %2328 = vmatpush2.msra.mxu0 0.0
  %2329 = vmatprep.subr.mxu0 0.0
  %2330 = vmatpush2.msra.mxu0 0.0
  %2331 = vmatprep.subr.mxu0 0.0
  %2332 = vmatpush2.msra.mxu0 0.0
  %2333 = vmatprep.subr.mxu0 0.0
  %2334 = vmatpush2.msra.mxu0 0.0
  %2335 = vmatprep.subr.mxu0 0.0
  %2336 = vmatpush2.msra.mxu0 0.0
  %2337 = vmatprep.subr.mxu0 0.0
  %2338 = vmatpush2.msra.mxu0 0.0
  %2339 = vmatprep.subr.mxu0 0.0
  %2340 = vmatpush2.msra.mxu0 0.0
  %2341 = vmatprep.subr.mxu0 0.0
  %2342 = vmatpush2.msra.mxu0 0.0
  %2343 = vmatprep.subr.mxu0 0.0
  %2344 = vmatpush2.msra.mxu0 0.0
  %2345 = vmatprep.subr.mxu0 0.0
  %2346 = vmatpush2.msra.mxu0 0.0
  %2347 = vmatprep.subr.mxu0 0.0
  %2348 = vmatpush2.msra.mxu0 0.0
  %2349 = vmatprep.subr.mxu0 0.0
  %2350 = vmatpush2.msra.mxu0 0.0
  %2351 = vmatprep.subr.mxu0 0.0
  %2352 = vmatpush2.msra.mxu0 0.0
  %2353 = vmatprep.subr.mxu0 0.0
  %2354 = vmatpush2.msra.mxu0 0.0
  %2355 = vmatprep.subr.mxu0 0.0
  %2356 = vmatpush2.msra.mxu0 0.0
  %2357 = vmatprep.mubr.f32.mxu0 0.0
  %2358 = vmatmul.mubr.f32.gmra.mxu0 %v2288
  %v2359 = vpop.f32.mrf.mxu0
  %v2360 = vadd.f32 %v2285, %v2359
  %v2361 = vpop.f32.mrf.mxu0
  %2362 = vmatprep.mubr.f32.mxu0 0.0
  %2363 = vmatmul.mubr.f32.gmra.mxu0 %v2291
  %v2364 = vpop.f32.mrf.mxu0
  %v2365 = vadd.f32 %v2285, %v2364
  %v2366 = vpop.f32.mrf.mxu0
  %2367 = vdwg.mxu0
  %2369 = vrot.lane.b32.xlu0 %v2360, 120
  %v2370 = vpop.permute.xlu0 %2369
  %2371 = vrot.lane.b32.xlu0 %v2360, 112
  %v2372 = vpop.permute.xlu0 %2371
  %2373 = vrot.lane.b32.xlu0 %v2360, 104
  %v2374 = vpop.permute.xlu0 %2373
  %2376 = vrot.lane.b32.xlu0 %v2365, 120
  %v2377 = vpop.permute.xlu0 %2376
  %2378 = vrot.lane.b32.xlu0 %v2365, 112
  %v2379 = vpop.permute.xlu0 %2378
  %2380 = vrot.lane.b32.xlu0 %v2365, 104
  %v2381 = vpop.permute.xlu0 %2380
  %2382 = vrot.lane.b32.xlu0 %v2360, 96
  %v2383 = vpop.permute.xlu0 %2382
  %v2384 = vsel %vm541, %v2360, 0
  %v2386 = vsel %vm541, %v2383, 0
  %2388 = vmatprep.subr.mxu0 0.0
  %2389 = vmatpush1.xpose.msra.mxu0 0.0
  %2390 = vmatprep.subr.mxu0 0.0
  %2391 = vmatpush1.xpose.msra.mxu0 0.0
  %2392 = vmatprep.subr.mxu0 0.0
  %2393 = vmatpush1.xpose.msra.mxu0 0.0
  %2394 = vmatprep.subr.mxu0 0.0
  %2395 = vmatpush1.xpose.msra.mxu0 0.0
  %2396 = vmatprep.subr.mxu0 0.0
  %2397 = vmatpush1.xpose.msra.mxu0 0.0
  %2398 = vmatprep.subr.mxu0 0.0
  %2399 = vmatpush1.xpose.msra.mxu0 0.0
  %2400 = vmatprep.subr.mxu0 0.0
  %2401 = vmatpush1.xpose.msra.mxu0 0.0
  %2402 = vmatprep.subr.mxu0 0.0
  %2403 = vmatpush1.xpose.msra.mxu0 0.0
  %2404 = vmatprep.subr.mxu0 0.0
  %2405 = vmatpush1.xpose.msra.mxu0 0.0
  %2406 = vmatprep.subr.mxu0 0.0
  %2407 = vmatpush1.xpose.msra.mxu0 0.0
  %2408 = vmatprep.subr.mxu0 0.0
  %2409 = vmatpush1.xpose.msra.mxu0 0.0
  %2410 = vmatprep.subr.mxu0 0.0
  %2411 = vmatpush1.xpose.msra.mxu0 0.0
  %2412 = vmatprep.subr.mxu0 0.0
  %2413 = vmatpush1.xpose.msra.mxu0 0.0
  %2414 = vmatprep.subr.mxu0 0.0
  %2415 = vmatpush1.xpose.msra.mxu0 0.0
  %2416 = vmatprep.subr.mxu0 0.0
  %2417 = vmatpush1.xpose.msra.mxu0 0.0
  %2418 = vmatprep.subr.mxu0 0.0
  %2419 = vmatpush1.xpose.msra.mxu0 %v2386
  %2420 = vmatprep.subr.mxu0 0.0
  %2421 = vmatpush2.xpose.msra.mxu0 0.0
  %2422 = vmatprep.subr.mxu0 0.0
  %2423 = vmatpush2.xpose.msra.mxu0 0.0
  %2424 = vmatprep.subr.mxu0 0.0
  %2425 = vmatpush2.xpose.msra.mxu0 0.0
  %2426 = vmatprep.subr.mxu0 0.0
  %2427 = vmatpush2.xpose.msra.mxu0 0.0
  %2428 = vmatprep.subr.mxu0 0.0
  %2429 = vmatpush2.xpose.msra.mxu0 0.0
  %2430 = vmatprep.subr.mxu0 0.0
  %2431 = vmatpush2.xpose.msra.mxu0 0.0
  %2432 = vmatprep.subr.mxu0 0.0
  %2433 = vmatpush2.xpose.msra.mxu0 0.0
  %2434 = vmatprep.subr.mxu0 0.0
  %2435 = vmatpush2.xpose.msra.mxu0 0.0
  %2436 = vmatprep.subr.mxu0 0.0
  %2437 = vmatpush2.xpose.msra.mxu0 0.0
  %2438 = vmatprep.subr.mxu0 0.0
  %2439 = vmatpush2.xpose.msra.mxu0 0.0
  %2440 = vmatprep.subr.mxu0 0.0
  %2441 = vmatpush2.xpose.msra.mxu0 0.0
  %2442 = vmatprep.subr.mxu0 0.0
  %2443 = vmatpush2.xpose.msra.mxu0 0.0
  %2444 = vmatprep.subr.mxu0 0.0
  %2445 = vmatpush2.xpose.msra.mxu0 0.0
  %2446 = vmatprep.subr.mxu0 0.0
  %2447 = vmatpush2.xpose.msra.mxu0 0.0
  %2448 = vmatprep.subr.mxu0 0.0
  %2449 = vmatpush2.xpose.msra.mxu0 0.0
  %2450 = vmatprep.subr.mxu0 0.0
  %2451 = vmatpush2.xpose.msra.mxu0 0.0
  %2452 = vmatprep.mubr.f32.mxu0 0.0
  %2453 = vmatmul.mubr.f32.gmra.mxu0 %v2384
  %v2454 = vpop.f32.mrf.mxu0
  %v2455 = vadd.f32 0.0, %v2454
  %v2456 = vpop.f32.mrf.mxu0
  %2457 = vdwg.mxu0
  %2458 = vrot.lane.b32.xlu0 %v2370, 96
  %v2459 = vpop.permute.xlu0 %2458
  %v2460 = vsel %vm541, %v2370, 0
  %v2462 = vsel %vm541, %v2459, 0
  %2464 = vmatprep.subr.mxu0 0.0
  %2465 = vmatpush1.xpose.msra.mxu0 0.0
  %2466 = vmatprep.subr.mxu0 0.0
  %2467 = vmatpush1.xpose.msra.mxu0 0.0
  %2468 = vmatprep.subr.mxu0 0.0
  %2469 = vmatpush1.xpose.msra.mxu0 0.0
  %2470 = vmatprep.subr.mxu0 0.0
  %2471 = vmatpush1.xpose.msra.mxu0 0.0
  %2472 = vmatprep.subr.mxu0 0.0
  %2473 = vmatpush1.xpose.msra.mxu0 0.0
  %2474 = vmatprep.subr.mxu0 0.0
  %2475 = vmatpush1.xpose.msra.mxu0 0.0
  %2476 = vmatprep.subr.mxu0 0.0
  %2477 = vmatpush1.xpose.msra.mxu0 0.0
  %2478 = vmatprep.subr.mxu0 0.0
  %2479 = vmatpush1.xpose.msra.mxu0 0.0
  %2480 = vmatprep.subr.mxu0 0.0
  %2481 = vmatpush1.xpose.msra.mxu0 0.0
  %2482 = vmatprep.subr.mxu0 0.0
  %2483 = vmatpush1.xpose.msra.mxu0 0.0
  %2484 = vmatprep.subr.mxu0 0.0
  %2485 = vmatpush1.xpose.msra.mxu0 0.0
  %2486 = vmatprep.subr.mxu0 0.0
  %2487 = vmatpush1.xpose.msra.mxu0 0.0
  %2488 = vmatprep.subr.mxu0 0.0
  %2489 = vmatpush1.xpose.msra.mxu0 0.0
  %2490 = vmatprep.subr.mxu0 0.0
  %2491 = vmatpush1.xpose.msra.mxu0 0.0
  %2492 = vmatprep.subr.mxu0 0.0
  %2493 = vmatpush1.xpose.msra.mxu0 0.0
  %2494 = vmatprep.subr.mxu0 0.0
  %2495 = vmatpush1.xpose.msra.mxu0 %v2462
  %2496 = vmatprep.subr.mxu0 0.0
  %2497 = vmatpush2.xpose.msra.mxu0 0.0
  %2498 = vmatprep.subr.mxu0 0.0
  %2499 = vmatpush2.xpose.msra.mxu0 0.0
  %2500 = vmatprep.subr.mxu0 0.0
  %2501 = vmatpush2.xpose.msra.mxu0 0.0
  %2502 = vmatprep.subr.mxu0 0.0
  %2503 = vmatpush2.xpose.msra.mxu0 0.0
  %2504 = vmatprep.subr.mxu0 0.0
  %2505 = vmatpush2.xpose.msra.mxu0 0.0
  %2506 = vmatprep.subr.mxu0 0.0
  %2507 = vmatpush2.xpose.msra.mxu0 0.0
  %2508 = vmatprep.subr.mxu0 0.0
  %2509 = vmatpush2.xpose.msra.mxu0 0.0
  %2510 = vmatprep.subr.mxu0 0.0
  %2511 = vmatpush2.xpose.msra.mxu0 0.0
  %2512 = vmatprep.subr.mxu0 0.0
  %2513 = vmatpush2.xpose.msra.mxu0 0.0
  %2514 = vmatprep.subr.mxu0 0.0
  %2515 = vmatpush2.xpose.msra.mxu0 0.0
  %2516 = vmatprep.subr.mxu0 0.0
  %2517 = vmatpush2.xpose.msra.mxu0 0.0
  %2518 = vmatprep.subr.mxu0 0.0
  %2519 = vmatpush2.xpose.msra.mxu0 0.0
  %2520 = vmatprep.subr.mxu0 0.0
  %2521 = vmatpush2.xpose.msra.mxu0 0.0
  %2522 = vmatprep.subr.mxu0 0.0
  %2523 = vmatpush2.xpose.msra.mxu0 0.0
  %2524 = vmatprep.subr.mxu0 0.0
  %2525 = vmatpush2.xpose.msra.mxu0 0.0
  %2526 = vmatprep.subr.mxu0 0.0
  %2527 = vmatpush2.xpose.msra.mxu0 0.0
  %2528 = vmatprep.mubr.f32.mxu0 0.0
  %2529 = vmatmul.mubr.f32.gmra.mxu0 %v2460
  %v2530 = vpop.f32.mrf.mxu0
  %v2531 = vadd.f32 0.0, %v2530
  %v2532 = vpop.f32.mrf.mxu0
  %2533 = vdwg.mxu0
  %2534 = vrot.lane.b32.xlu0 %v2372, 96
  %v2535 = vpop.permute.xlu0 %2534
  %v2536 = vsel %vm541, %v2372, 0
  %v2538 = vsel %vm541, %v2535, 0
  %2540 = vmatprep.subr.mxu0 0.0
  %2541 = vmatpush1.xpose.msra.mxu0 0.0
  %2542 = vmatprep.subr.mxu0 0.0
  %2543 = vmatpush1.xpose.msra.mxu0 0.0
  %2544 = vmatprep.subr.mxu0 0.0
  %2545 = vmatpush1.xpose.msra.mxu0 0.0
  %2546 = vmatprep.subr.mxu0 0.0
  %2547 = vmatpush1.xpose.msra.mxu0 0.0
  %2548 = vmatprep.subr.mxu0 0.0
  %2549 = vmatpush1.xpose.msra.mxu0 0.0
  %2550 = vmatprep.subr.mxu0 0.0
  %2551 = vmatpush1.xpose.msra.mxu0 0.0
  %2552 = vmatprep.subr.mxu0 0.0
  %2553 = vmatpush1.xpose.msra.mxu0 0.0
  %2554 = vmatprep.subr.mxu0 0.0
  %2555 = vmatpush1.xpose.msra.mxu0 0.0
  %2556 = vmatprep.subr.mxu0 0.0
  %2557 = vmatpush1.xpose.msra.mxu0 0.0
  %2558 = vmatprep.subr.mxu0 0.0
  %2559 = vmatpush1.xpose.msra.mxu0 0.0
  %2560 = vmatprep.subr.mxu0 0.0
  %2561 = vmatpush1.xpose.msra.mxu0 0.0
  %2562 = vmatprep.subr.mxu0 0.0
  %2563 = vmatpush1.xpose.msra.mxu0 0.0
  %2564 = vmatprep.subr.mxu0 0.0
  %2565 = vmatpush1.xpose.msra.mxu0 0.0
  %2566 = vmatprep.subr.mxu0 0.0
  %2567 = vmatpush1.xpose.msra.mxu0 0.0
  %2568 = vmatprep.subr.mxu0 0.0
  %2569 = vmatpush1.xpose.msra.mxu0 0.0
  %2570 = vmatprep.subr.mxu0 0.0
  %2571 = vmatpush1.xpose.msra.mxu0 %v2538
  %2572 = vmatprep.subr.mxu0 0.0
  %2573 = vmatpush2.xpose.msra.mxu0 0.0
  %2574 = vmatprep.subr.mxu0 0.0
  %2575 = vmatpush2.xpose.msra.mxu0 0.0
  %2576 = vmatprep.subr.mxu0 0.0
  %2577 = vmatpush2.xpose.msra.mxu0 0.0
  %2578 = vmatprep.subr.mxu0 0.0
  %2579 = vmatpush2.xpose.msra.mxu0 0.0
  %2580 = vmatprep.subr.mxu0 0.0
  %2581 = vmatpush2.xpose.msra.mxu0 0.0
  %2582 = vmatprep.subr.mxu0 0.0
  %2583 = vmatpush2.xpose.msra.mxu0 0.0
  %2584 = vmatprep.subr.mxu0 0.0
  %2585 = vmatpush2.xpose.msra.mxu0 0.0
  %2586 = vmatprep.subr.mxu0 0.0
  %2587 = vmatpush2.xpose.msra.mxu0 0.0
  %2588 = vmatprep.subr.mxu0 0.0
  %2589 = vmatpush2.xpose.msra.mxu0 0.0
  %2590 = vmatprep.subr.mxu0 0.0
  %2591 = vmatpush2.xpose.msra.mxu0 0.0
  %2592 = vmatprep.subr.mxu0 0.0
  %2593 = vmatpush2.xpose.msra.mxu0 0.0
  %2594 = vmatprep.subr.mxu0 0.0
  %2595 = vmatpush2.xpose.msra.mxu0 0.0
  %2596 = vmatprep.subr.mxu0 0.0
  %2597 = vmatpush2.xpose.msra.mxu0 0.0
  %2598 = vmatprep.subr.mxu0 0.0
  %2599 = vmatpush2.xpose.msra.mxu0 0.0
  %2600 = vmatprep.subr.mxu0 0.0
  %2601 = vmatpush2.xpose.msra.mxu0 0.0
  %2602 = vmatprep.subr.mxu0 0.0
  %2603 = vmatpush2.xpose.msra.mxu0 0.0
  %2604 = vmatprep.mubr.f32.mxu0 0.0
  %2605 = vmatmul.mubr.f32.gmra.mxu0 %v2536
  %v2606 = vpop.f32.mrf.mxu0
  %v2607 = vadd.f32 0.0, %v2606
  %v2608 = vpop.f32.mrf.mxu0
  %2609 = vdwg.mxu0
  %2610 = vrot.lane.b32.xlu0 %v2374, 96
  %v2611 = vpop.permute.xlu0 %2610
  %v2612 = vsel %vm541, %v2374, 0
  %v2614 = vsel %vm541, %v2611, 0
  %2616 = vmatprep.subr.mxu0 0.0
  %2617 = vmatpush1.xpose.msra.mxu0 0.0
  %2618 = vmatprep.subr.mxu0 0.0
  %2619 = vmatpush1.xpose.msra.mxu0 0.0
  %2620 = vmatprep.subr.mxu0 0.0
  %2621 = vmatpush1.xpose.msra.mxu0 0.0
  %2622 = vmatprep.subr.mxu0 0.0
  %2623 = vmatpush1.xpose.msra.mxu0 0.0
  %2624 = vmatprep.subr.mxu0 0.0
  %2625 = vmatpush1.xpose.msra.mxu0 0.0
  %2626 = vmatprep.subr.mxu0 0.0
  %2627 = vmatpush1.xpose.msra.mxu0 0.0
  %2628 = vmatprep.subr.mxu0 0.0
  %2629 = vmatpush1.xpose.msra.mxu0 0.0
  %2630 = vmatprep.subr.mxu0 0.0
  %2631 = vmatpush1.xpose.msra.mxu0 0.0
  %2632 = vmatprep.subr.mxu0 0.0
  %2633 = vmatpush1.xpose.msra.mxu0 0.0
  %2634 = vmatprep.subr.mxu0 0.0
  %2635 = vmatpush1.xpose.msra.mxu0 0.0
  %2636 = vmatprep.subr.mxu0 0.0
  %2637 = vmatpush1.xpose.msra.mxu0 0.0
  %2638 = vmatprep.subr.mxu0 0.0
  %2639 = vmatpush1.xpose.msra.mxu0 0.0
  %2640 = vmatprep.subr.mxu0 0.0
  %2641 = vmatpush1.xpose.msra.mxu0 0.0
  %2642 = vmatprep.subr.mxu0 0.0
  %2643 = vmatpush1.xpose.msra.mxu0 0.0
  %2644 = vmatprep.subr.mxu0 0.0
  %2645 = vmatpush1.xpose.msra.mxu0 0.0
  %2646 = vmatprep.subr.mxu0 0.0
  %2647 = vmatpush1.xpose.msra.mxu0 %v2614
  %2648 = vmatprep.subr.mxu0 0.0
  %2649 = vmatpush2.xpose.msra.mxu0 0.0
  %2650 = vmatprep.subr.mxu0 0.0
  %2651 = vmatpush2.xpose.msra.mxu0 0.0
  %2652 = vmatprep.subr.mxu0 0.0
  %2653 = vmatpush2.xpose.msra.mxu0 0.0
  %2654 = vmatprep.subr.mxu0 0.0
  %2655 = vmatpush2.xpose.msra.mxu0 0.0
  %2656 = vmatprep.subr.mxu0 0.0
  %2657 = vmatpush2.xpose.msra.mxu0 0.0
  %2658 = vmatprep.subr.mxu0 0.0
  %2659 = vmatpush2.xpose.msra.mxu0 0.0
  %2660 = vmatprep.subr.mxu0 0.0
  %2661 = vmatpush2.xpose.msra.mxu0 0.0
  %2662 = vmatprep.subr.mxu0 0.0
  %2663 = vmatpush2.xpose.msra.mxu0 0.0
  %2664 = vmatprep.subr.mxu0 0.0
  %2665 = vmatpush2.xpose.msra.mxu0 0.0
  %2666 = vmatprep.subr.mxu0 0.0
  %2667 = vmatpush2.xpose.msra.mxu0 0.0
  %2668 = vmatprep.subr.mxu0 0.0
  %2669 = vmatpush2.xpose.msra.mxu0 0.0
  %2670 = vmatprep.subr.mxu0 0.0
  %2671 = vmatpush2.xpose.msra.mxu0 0.0
  %2672 = vmatprep.subr.mxu0 0.0
  %2673 = vmatpush2.xpose.msra.mxu0 0.0
  %2674 = vmatprep.subr.mxu0 0.0
  %2675 = vmatpush2.xpose.msra.mxu0 0.0
  %2676 = vmatprep.subr.mxu0 0.0
  %2677 = vmatpush2.xpose.msra.mxu0 0.0
  %2678 = vmatprep.subr.mxu0 0.0
  %2679 = vmatpush2.xpose.msra.mxu0 0.0
  %2680 = vmatprep.mubr.f32.mxu0 0.0
  %2681 = vmatmul.mubr.f32.gmra.mxu0 %v2612
  %v2682 = vpop.f32.mrf.mxu0
  %v2683 = vadd.f32 0.0, %v2682
  %v2684 = vpop.f32.mrf.mxu0
  %2685 = vdwg.mxu0
  %2686 = vrot.lane.b32.xlu0 %v2365, 96
  %v2687 = vpop.permute.xlu0 %2686
  %v2688 = vsel %vm541, %v2365, 0
  %v2690 = vsel %vm541, %v2687, 0
  %2692 = vmatprep.subr.mxu0 0.0
  %2693 = vmatpush1.xpose.msra.mxu0 0.0
  %2694 = vmatprep.subr.mxu0 0.0
  %2695 = vmatpush1.xpose.msra.mxu0 0.0
  %2696 = vmatprep.subr.mxu0 0.0
  %2697 = vmatpush1.xpose.msra.mxu0 0.0
  %2698 = vmatprep.subr.mxu0 0.0
  %2699 = vmatpush1.xpose.msra.mxu0 0.0
  %2700 = vmatprep.subr.mxu0 0.0
  %2701 = vmatpush1.xpose.msra.mxu0 0.0
  %2702 = vmatprep.subr.mxu0 0.0
  %2703 = vmatpush1.xpose.msra.mxu0 0.0
  %2704 = vmatprep.subr.mxu0 0.0
  %2705 = vmatpush1.xpose.msra.mxu0 0.0
  %2706 = vmatprep.subr.mxu0 0.0
  %2707 = vmatpush1.xpose.msra.mxu0 0.0
  %2708 = vmatprep.subr.mxu0 0.0
  %2709 = vmatpush1.xpose.msra.mxu0 0.0
  %2710 = vmatprep.subr.mxu0 0.0
  %2711 = vmatpush1.xpose.msra.mxu0 0.0
  %2712 = vmatprep.subr.mxu0 0.0
  %2713 = vmatpush1.xpose.msra.mxu0 0.0
  %2714 = vmatprep.subr.mxu0 0.0
  %2715 = vmatpush1.xpose.msra.mxu0 0.0
  %2716 = vmatprep.subr.mxu0 0.0
  %2717 = vmatpush1.xpose.msra.mxu0 0.0
  %2718 = vmatprep.subr.mxu0 0.0
  %2719 = vmatpush1.xpose.msra.mxu0 0.0
  %2720 = vmatprep.subr.mxu0 0.0
  %2721 = vmatpush1.xpose.msra.mxu0 0.0
  %2722 = vmatprep.subr.mxu0 0.0
  %2723 = vmatpush1.xpose.msra.mxu0 %v2690
  %2724 = vmatprep.subr.mxu0 0.0
  %2725 = vmatpush2.xpose.msra.mxu0 0.0
  %2726 = vmatprep.subr.mxu0 0.0
  %2727 = vmatpush2.xpose.msra.mxu0 0.0
  %2728 = vmatprep.subr.mxu0 0.0
  %2729 = vmatpush2.xpose.msra.mxu0 0.0
  %2730 = vmatprep.subr.mxu0 0.0
  %2731 = vmatpush2.xpose.msra.mxu0 0.0
  %2732 = vmatprep.subr.mxu0 0.0
  %2733 = vmatpush2.xpose.msra.mxu0 0.0
  %2734 = vmatprep.subr.mxu0 0.0
  %2735 = vmatpush2.xpose.msra.mxu0 0.0
  %2736 = vmatprep.subr.mxu0 0.0
  %2737 = vmatpush2.xpose.msra.mxu0 0.0
  %2738 = vmatprep.subr.mxu0 0.0
  %2739 = vmatpush2.xpose.msra.mxu0 0.0
  %2740 = vmatprep.subr.mxu0 0.0
  %2741 = vmatpush2.xpose.msra.mxu0 0.0
  %2742 = vmatprep.subr.mxu0 0.0
  %2743 = vmatpush2.xpose.msra.mxu0 0.0
  %2744 = vmatprep.subr.mxu0 0.0
  %2745 = vmatpush2.xpose.msra.mxu0 0.0
  %2746 = vmatprep.subr.mxu0 0.0
  %2747 = vmatpush2.xpose.msra.mxu0 0.0
  %2748 = vmatprep.subr.mxu0 0.0
  %2749 = vmatpush2.xpose.msra.mxu0 0.0
  %2750 = vmatprep.subr.mxu0 0.0
  %2751 = vmatpush2.xpose.msra.mxu0 0.0
  %2752 = vmatprep.subr.mxu0 0.0
  %2753 = vmatpush2.xpose.msra.mxu0 0.0
  %2754 = vmatprep.subr.mxu0 0.0
  %2755 = vmatpush2.xpose.msra.mxu0 0.0
  %2756 = vmatprep.mubr.f32.mxu0 0.0
  %2757 = vmatmul.mubr.f32.gmra.mxu0 %v2688
  %v2758 = vpop.f32.mrf.mxu0
  %v2759 = vadd.f32 0.0, %v2758
  %v2760 = vpop.f32.mrf.mxu0
  %2761 = vdwg.mxu0
  %2762 = vrot.lane.b32.xlu0 %v2377, 96
  %v2763 = vpop.permute.xlu0 %2762
  %v2764 = vsel %vm541, %v2377, 0
  %v2766 = vsel %vm541, %v2763, 0
  %2768 = vmatprep.subr.mxu0 0.0
  %2769 = vmatpush1.xpose.msra.mxu0 0.0
  %2770 = vmatprep.subr.mxu0 0.0
  %2771 = vmatpush1.xpose.msra.mxu0 0.0
  %2772 = vmatprep.subr.mxu0 0.0
  %2773 = vmatpush1.xpose.msra.mxu0 0.0
  %2774 = vmatprep.subr.mxu0 0.0
  %2775 = vmatpush1.xpose.msra.mxu0 0.0
  %2776 = vmatprep.subr.mxu0 0.0
  %2777 = vmatpush1.xpose.msra.mxu0 0.0
  %2778 = vmatprep.subr.mxu0 0.0
  %2779 = vmatpush1.xpose.msra.mxu0 0.0
  %2780 = vmatprep.subr.mxu0 0.0
  %2781 = vmatpush1.xpose.msra.mxu0 0.0
  %2782 = vmatprep.subr.mxu0 0.0
  %2783 = vmatpush1.xpose.msra.mxu0 0.0
  %2784 = vmatprep.subr.mxu0 0.0
  %2785 = vmatpush1.xpose.msra.mxu0 0.0
  %2786 = vmatprep.subr.mxu0 0.0
  %2787 = vmatpush1.xpose.msra.mxu0 0.0
  %2788 = vmatprep.subr.mxu0 0.0
  %2789 = vmatpush1.xpose.msra.mxu0 0.0
  %2790 = vmatprep.subr.mxu0 0.0
  %2791 = vmatpush1.xpose.msra.mxu0 0.0
  %2792 = vmatprep.subr.mxu0 0.0
  %2793 = vmatpush1.xpose.msra.mxu0 0.0
  %2794 = vmatprep.subr.mxu0 0.0
  %2795 = vmatpush1.xpose.msra.mxu0 0.0
  %2796 = vmatprep.subr.mxu0 0.0
  %2797 = vmatpush1.xpose.msra.mxu0 0.0
  %2798 = vmatprep.subr.mxu0 0.0
  %2799 = vmatpush1.xpose.msra.mxu0 %v2766
  %2800 = vmatprep.subr.mxu0 0.0
  %2801 = vmatpush2.xpose.msra.mxu0 0.0
  %2802 = vmatprep.subr.mxu0 0.0
  %2803 = vmatpush2.xpose.msra.mxu0 0.0
  %2804 = vmatprep.subr.mxu0 0.0
  %2805 = vmatpush2.xpose.msra.mxu0 0.0
  %2806 = vmatprep.subr.mxu0 0.0
  %2807 = vmatpush2.xpose.msra.mxu0 0.0
  %2808 = vmatprep.subr.mxu0 0.0
  %2809 = vmatpush2.xpose.msra.mxu0 0.0
  %2810 = vmatprep.subr.mxu0 0.0
  %2811 = vmatpush2.xpose.msra.mxu0 0.0
  %2812 = vmatprep.subr.mxu0 0.0
  %2813 = vmatpush2.xpose.msra.mxu0 0.0
  %2814 = vmatprep.subr.mxu0 0.0
  %2815 = vmatpush2.xpose.msra.mxu0 0.0
  %2816 = vmatprep.subr.mxu0 0.0
  %2817 = vmatpush2.xpose.msra.mxu0 0.0
  %2818 = vmatprep.subr.mxu0 0.0
  %2819 = vmatpush2.xpose.msra.mxu0 0.0
  %2820 = vmatprep.subr.mxu0 0.0
  %2821 = vmatpush2.xpose.msra.mxu0 0.0
  %2822 = vmatprep.subr.mxu0 0.0
  %2823 = vmatpush2.xpose.msra.mxu0 0.0
  %2824 = vmatprep.subr.mxu0 0.0
  %2825 = vmatpush2.xpose.msra.mxu0 0.0
  %2826 = vmatprep.subr.mxu0 0.0
  %2827 = vmatpush2.xpose.msra.mxu0 0.0
  %2828 = vmatprep.subr.mxu0 0.0
  %2829 = vmatpush2.xpose.msra.mxu0 0.0
  %2830 = vmatprep.subr.mxu0 0.0
  %2831 = vmatpush2.xpose.msra.mxu0 0.0
  %2832 = vmatprep.mubr.f32.mxu0 0.0
  %2833 = vmatmul.mubr.f32.gmra.mxu0 %v2764
  %v2834 = vpop.f32.mrf.mxu0
  %v2835 = vadd.f32 0.0, %v2834
  %v2836 = vpop.f32.mrf.mxu0
  %2837 = vdwg.mxu0
  %2838 = vrot.lane.b32.xlu0 %v2379, 96
  %v2839 = vpop.permute.xlu0 %2838
  %v2840 = vsel %vm541, %v2379, 0
  %v2842 = vsel %vm541, %v2839, 0
  %2844 = vmatprep.subr.mxu0 0.0
  %2845 = vmatpush1.xpose.msra.mxu0 0.0
  %2846 = vmatprep.subr.mxu0 0.0
  %2847 = vmatpush1.xpose.msra.mxu0 0.0
  %2848 = vmatprep.subr.mxu0 0.0
  %2849 = vmatpush1.xpose.msra.mxu0 0.0
  %2850 = vmatprep.subr.mxu0 0.0
  %2851 = vmatpush1.xpose.msra.mxu0 0.0
  %2852 = vmatprep.subr.mxu0 0.0
  %2853 = vmatpush1.xpose.msra.mxu0 0.0
  %2854 = vmatprep.subr.mxu0 0.0
  %2855 = vmatpush1.xpose.msra.mxu0 0.0
  %2856 = vmatprep.subr.mxu0 0.0
  %2857 = vmatpush1.xpose.msra.mxu0 0.0
  %2858 = vmatprep.subr.mxu0 0.0
  %2859 = vmatpush1.xpose.msra.mxu0 0.0
  %2860 = vmatprep.subr.mxu0 0.0
  %2861 = vmatpush1.xpose.msra.mxu0 0.0
  %2862 = vmatprep.subr.mxu0 0.0
  %2863 = vmatpush1.xpose.msra.mxu0 0.0
  %2864 = vmatprep.subr.mxu0 0.0
  %2865 = vmatpush1.xpose.msra.mxu0 0.0
  %2866 = vmatprep.subr.mxu0 0.0
  %2867 = vmatpush1.xpose.msra.mxu0 0.0
  %2868 = vmatprep.subr.mxu0 0.0
  %2869 = vmatpush1.xpose.msra.mxu0 0.0
  %2870 = vmatprep.subr.mxu0 0.0
  %2871 = vmatpush1.xpose.msra.mxu0 0.0
  %2872 = vmatprep.subr.mxu0 0.0
  %2873 = vmatpush1.xpose.msra.mxu0 0.0
  %2874 = vmatprep.subr.mxu0 0.0
  %2875 = vmatpush1.xpose.msra.mxu0 %v2842
  %2876 = vmatprep.subr.mxu0 0.0
  %2877 = vmatpush2.xpose.msra.mxu0 0.0
  %2878 = vmatprep.subr.mxu0 0.0
  %2879 = vmatpush2.xpose.msra.mxu0 0.0
  %2880 = vmatprep.subr.mxu0 0.0
  %2881 = vmatpush2.xpose.msra.mxu0 0.0
  %2882 = vmatprep.subr.mxu0 0.0
  %2883 = vmatpush2.xpose.msra.mxu0 0.0
  %2884 = vmatprep.subr.mxu0 0.0
  %2885 = vmatpush2.xpose.msra.mxu0 0.0
  %2886 = vmatprep.subr.mxu0 0.0
  %2887 = vmatpush2.xpose.msra.mxu0 0.0
  %2888 = vmatprep.subr.mxu0 0.0
  %2889 = vmatpush2.xpose.msra.mxu0 0.0
  %2890 = vmatprep.subr.mxu0 0.0
  %2891 = vmatpush2.xpose.msra.mxu0 0.0
  %2892 = vmatprep.subr.mxu0 0.0
  %2893 = vmatpush2.xpose.msra.mxu0 0.0
  %2894 = vmatprep.subr.mxu0 0.0
  %2895 = vmatpush2.xpose.msra.mxu0 0.0
  %2896 = vmatprep.subr.mxu0 0.0
  %2897 = vmatpush2.xpose.msra.mxu0 0.0
  %2898 = vmatprep.subr.mxu0 0.0
  %2899 = vmatpush2.xpose.msra.mxu0 0.0
  %2900 = vmatprep.subr.mxu0 0.0
  %2901 = vmatpush2.xpose.msra.mxu0 0.0
  %2902 = vmatprep.subr.mxu0 0.0
  %2903 = vmatpush2.xpose.msra.mxu0 0.0
  %2904 = vmatprep.subr.mxu0 0.0
  %2905 = vmatpush2.xpose.msra.mxu0 0.0
  %2906 = vmatprep.subr.mxu0 0.0
  %2907 = vmatpush2.xpose.msra.mxu0 0.0
  %2908 = vmatprep.mubr.f32.mxu0 0.0
  %2909 = vmatmul.mubr.f32.gmra.mxu0 %v2840
  %v2910 = vpop.f32.mrf.mxu0
  %v2911 = vadd.f32 0.0, %v2910
  %v2912 = vpop.f32.mrf.mxu0
  %2913 = vdwg.mxu0
  %2914 = vrot.lane.b32.xlu0 %v2381, 96
  %v2915 = vpop.permute.xlu0 %2914
  %v2916 = vsel %vm541, %v2381, 0
  %v2918 = vsel %vm541, %v2915, 0
  %2920 = vmatprep.subr.mxu0 0.0
  %2921 = vmatpush1.xpose.msra.mxu0 0.0
  %2922 = vmatprep.subr.mxu0 0.0
  %2923 = vmatpush1.xpose.msra.mxu0 0.0
  %2924 = vmatprep.subr.mxu0 0.0
  %2925 = vmatpush1.xpose.msra.mxu0 0.0
  %2926 = vmatprep.subr.mxu0 0.0
  %2927 = vmatpush1.xpose.msra.mxu0 0.0
  %2928 = vmatprep.subr.mxu0 0.0
  %2929 = vmatpush1.xpose.msra.mxu0 0.0
  %2930 = vmatprep.subr.mxu0 0.0
  %2931 = vmatpush1.xpose.msra.mxu0 0.0
  %2932 = vmatprep.subr.mxu0 0.0
  %2933 = vmatpush1.xpose.msra.mxu0 0.0
  %2934 = vmatprep.subr.mxu0 0.0
  %2935 = vmatpush1.xpose.msra.mxu0 0.0
  %2936 = vmatprep.subr.mxu0 0.0
  %2937 = vmatpush1.xpose.msra.mxu0 0.0
  %2938 = vmatprep.subr.mxu0 0.0
  %2939 = vmatpush1.xpose.msra.mxu0 0.0
  %2940 = vmatprep.subr.mxu0 0.0
  %2941 = vmatpush1.xpose.msra.mxu0 0.0
  %2942 = vmatprep.subr.mxu0 0.0
  %2943 = vmatpush1.xpose.msra.mxu0 0.0
  %2944 = vmatprep.subr.mxu0 0.0
  %2945 = vmatpush1.xpose.msra.mxu0 0.0
  %2946 = vmatprep.subr.mxu0 0.0
  %2947 = vmatpush1.xpose.msra.mxu0 0.0
  %2948 = vmatprep.subr.mxu0 0.0
  %2949 = vmatpush1.xpose.msra.mxu0 0.0
  %2950 = vmatprep.subr.mxu0 0.0
  %2951 = vmatpush1.xpose.msra.mxu0 %v2918
  %2952 = vmatprep.subr.mxu0 0.0
  %2953 = vmatpush2.xpose.msra.mxu0 0.0
  %2954 = vmatprep.subr.mxu0 0.0
  %2955 = vmatpush2.xpose.msra.mxu0 0.0
  %2956 = vmatprep.subr.mxu0 0.0
  %2957 = vmatpush2.xpose.msra.mxu0 0.0
  %2958 = vmatprep.subr.mxu0 0.0
  %2959 = vmatpush2.xpose.msra.mxu0 0.0
  %2960 = vmatprep.subr.mxu0 0.0
  %2961 = vmatpush2.xpose.msra.mxu0 0.0
  %2962 = vmatprep.subr.mxu0 0.0
  %2963 = vmatpush2.xpose.msra.mxu0 0.0
  %2964 = vmatprep.subr.mxu0 0.0
  %2965 = vmatpush2.xpose.msra.mxu0 0.0
  %2966 = vmatprep.subr.mxu0 0.0
  %2967 = vmatpush2.xpose.msra.mxu0 0.0
  %2968 = vmatprep.subr.mxu0 0.0
  %2969 = vmatpush2.xpose.msra.mxu0 0.0
  %2970 = vmatprep.subr.mxu0 0.0
  %2971 = vmatpush2.xpose.msra.mxu0 0.0
  %2972 = vmatprep.subr.mxu0 0.0
  %2973 = vmatpush2.xpose.msra.mxu0 0.0
  %2974 = vmatprep.subr.mxu0 0.0
  %2975 = vmatpush2.xpose.msra.mxu0 0.0
  %2976 = vmatprep.subr.mxu0 0.0
  %2977 = vmatpush2.xpose.msra.mxu0 0.0
  %2978 = vmatprep.subr.mxu0 0.0
  %2979 = vmatpush2.xpose.msra.mxu0 0.0
  %2980 = vmatprep.subr.mxu0 0.0
  %2981 = vmatpush2.xpose.msra.mxu0 0.0
  %2982 = vmatprep.subr.mxu0 0.0
  %2983 = vmatpush2.xpose.msra.mxu0 0.0
  %2984 = vmatprep.mubr.f32.mxu0 0.0
  %2985 = vmatmul.mubr.f32.gmra.mxu0 %v2916
  %v2986 = vpop.f32.mrf.mxu0
  %v2987 = vadd.f32 0.0, %v2986
  %v2988 = vpop.f32.mrf.mxu0
  %2989 = vdwg.mxu0
  %v2990 = vmul.f32 %v2455, 0.35355338
  %v2991 = vmul.f32 %v2531, 0.35355338
  %v2992 = vmul.f32 %v2607, 0.35355338
  %v2993 = vmul.f32 %v2683, 0.35355338
  %v2994 = vmul.f32 %v2759, 0.35355338
  %v2995 = vmul.f32 %v2835, 0.35355338
  %v2996 = vmul.f32 %v2911, 0.35355338
  %v2997 = vmul.f32 %v2987, 0.35355338
  %v2998 = vsel %vm541, %v2990, -inf
  %2999 = vmax.xlane.f32.xlu0 %v2998
  %v3000 = vpop.xlane.xlu0 %2999
  %v3001 = vsel %vm541, %v2991, -inf
  %3002 = vmax.xlane.f32.xlu0 %v3001
  %v3003 = vpop.xlane.xlu0 %3002
  %v3004 = vsel %vm541, %v2992, -inf
  %3005 = vmax.xlane.f32.xlu0 %v3004
  %v3006 = vpop.xlane.xlu0 %3005
  %v3007 = vsel %vm541, %v2993, -inf
  %3008 = vmax.xlane.f32.xlu0 %v3007
  %v3009 = vpop.xlane.xlu0 %3008
  %v3010 = vsel %vm541, %v2994, -inf
  %3011 = vmax.xlane.f32.xlu0 %v3010
  %v3012 = vpop.xlane.xlu0 %3011
  %v3013 = vsel %vm541, %v2995, -inf
  %3014 = vmax.xlane.f32.xlu0 %v3013
  %v3015 = vpop.xlane.xlu0 %3014
  %v3016 = vsel %vm541, %v2996, -inf
  %3017 = vmax.xlane.f32.xlu0 %v3016
  %v3018 = vpop.xlane.xlu0 %3017
  %v3019 = vsel %vm541, %v2997, -inf
  %3020 = vmax.xlane.f32.xlu0 %v3019
  %v3021 = vpop.xlane.xlu0 %3020
  %v3022 = vsub.f32 %v2990, %v3000
  %v3023 = vsub.f32 %v2991, %v3003
  %v3024 = vsub.f32 %v2992, %v3006
  %v3025 = vsub.f32 %v2993, %v3009
  %v3026 = vsub.f32 %v2994, %v3012
  %v3027 = vsub.f32 %v2995, %v3015
  %v3028 = vsub.f32 %v2996, %v3018
  %v3029 = vsub.f32 %v2997, %v3021
  %v3030 = vmul.f32 %v3022, 1.442695
  %v3031 = vpow.pop %v3030
  %v3032 = vmul.f32 %v3023, 1.442695
  %v3033 = vpow.pop %v3032
  %v3034 = vmul.f32 %v3024, 1.442695
  %v3035 = vpow.pop %v3034
  %v3036 = vmul.f32 %v3025, 1.442695
  %v3037 = vpow.pop %v3036
  %v3038 = vmul.f32 %v3026, 1.442695
  %v3039 = vpow.pop %v3038
  %v3040 = vmul.f32 %v3027, 1.442695
  %v3041 = vpow.pop %v3040
  %v3042 = vmul.f32 %v3028, 1.442695
  %v3043 = vpow.pop %v3042
  %v3044 = vmul.f32 %v3029, 1.442695
  %v3045 = vpow.pop %v3044
  %v3046 = vsel %vm541, %v3031, 0.0
  %3047 = vadd.xlane.f32.xlu0 %v3046
  %v3048 = vpop.xlane.xlu0 %3047
  %v3049 = vsel %vm541, %v3033, 0.0
  %3050 = vadd.xlane.f32.xlu0 %v3049
  %v3051 = vpop.xlane.xlu0 %3050
  %v3052 = vsel %vm541, %v3035, 0.0
  %3053 = vadd.xlane.f32.xlu0 %v3052
  %v3054 = vpop.xlane.xlu0 %3053
  %v3055 = vsel %vm541, %v3037, 0.0
  %3056 = vadd.xlane.f32.xlu0 %v3055
  %v3057 = vpop.xlane.xlu0 %3056
  %v3058 = vsel %vm541, %v3039, 0.0
  %3059 = vadd.xlane.f32.xlu0 %v3058
  %v3060 = vpop.xlane.xlu0 %3059
  %v3061 = vsel %vm541, %v3041, 0.0
  %3062 = vadd.xlane.f32.xlu0 %v3061
  %v3063 = vpop.xlane.xlu0 %3062
  %v3064 = vsel %vm541, %v3043, 0.0
  %3065 = vadd.xlane.f32.xlu0 %v3064
  %v3066 = vpop.xlane.xlu0 %3065
  %v3067 = vsel %vm541, %v3045, 0.0
  %3068 = vadd.xlane.f32.xlu0 %v3067
  %v3069 = vpop.xlane.xlu0 %3068
  %v3070 = vrcp.pop %v3048
  %v3071 = vmul.f32 %v3031, %v3070
  %v3072 = vrcp.pop %v3051
  %v3073 = vmul.f32 %v3033, %v3072
  %v3074 = vrcp.pop %v3054
  %v3075 = vmul.f32 %v3035, %v3074
  %v3076 = vrcp.pop %v3057
  %v3077 = vmul.f32 %v3037, %v3076
  %v3078 = vrcp.pop %v3060
  %v3079 = vmul.f32 %v3039, %v3078
  %v3080 = vrcp.pop %v3063
  %v3081 = vmul.f32 %v3041, %v3080
  %v3082 = vrcp.pop %v3066
  %v3083 = vmul.f32 %v3043, %v3082
  %v3084 = vrcp.pop %v3069
  %v3085 = vmul.f32 %v3045, %v3084
  %3086 = vrot.lane.b32.xlu0 %v2360, 64
  %v3087 = vpop.permute.xlu0 %3086
  %v3090 = vsel %vm541, %v3071, 0
  %3092 = vmatprep.subr.mxu0 0.0
  %3093 = vmatpush1.msra.mxu0 0.0
  %3094 = vmatprep.subr.mxu0 0.0
  %3095 = vmatpush1.msra.mxu0 0.0
  %3096 = vmatprep.subr.mxu0 0.0
  %3097 = vmatpush1.msra.mxu0 0.0
  %3098 = vmatprep.subr.mxu0 0.0
  %3099 = vmatpush1.msra.mxu0 0.0
  %3100 = vmatprep.subr.mxu0 0.0
  %3101 = vmatpush1.msra.mxu0 0.0
  %3102 = vmatprep.subr.mxu0 0.0
  %3103 = vmatpush1.msra.mxu0 0.0
  %3104 = vmatprep.subr.mxu0 0.0
  %3105 = vmatpush1.msra.mxu0 0.0
  %3106 = vmatprep.subr.mxu0 0.0
  %3107 = vmatpush1.msra.mxu0 0.0
  %3108 = vmatprep.subr.mxu0 0.0
  %3109 = vmatpush1.msra.mxu0 0.0
  %3110 = vmatprep.subr.mxu0 0.0
  %3111 = vmatpush1.msra.mxu0 0.0
  %3112 = vmatprep.subr.mxu0 0.0
  %3113 = vmatpush1.msra.mxu0 0.0
  %3114 = vmatprep.subr.mxu0 0.0
  %3115 = vmatpush1.msra.mxu0 0.0
  %3116 = vmatprep.subr.mxu0 0.0
  %3117 = vmatpush1.msra.mxu0 0.0
  %3118 = vmatprep.subr.mxu0 0.0
  %3119 = vmatpush1.msra.mxu0 0.0
  %3120 = vmatprep.subr.mxu0 0.0
  %3121 = vmatpush1.msra.mxu0 0.0
  %3122 = vmatprep.subr.mxu0 0.0
  %3123 = vmatpush1.msra.mxu0 %v3087
  %3124 = vmatprep.subr.mxu0 0.0
  %3125 = vmatpush2.msra.mxu0 0.0
  %3126 = vmatprep.subr.mxu0 0.0
  %3127 = vmatpush2.msra.mxu0 0.0
  %3128 = vmatprep.subr.mxu0 0.0
  %3129 = vmatpush2.msra.mxu0 0.0
  %3130 = vmatprep.subr.mxu0 0.0
  %3131 = vmatpush2.msra.mxu0 0.0
  %3132 = vmatprep.subr.mxu0 0.0
  %3133 = vmatpush2.msra.mxu0 0.0
  %3134 = vmatprep.subr.mxu0 0.0
  %3135 = vmatpush2.msra.mxu0 0.0
  %3136 = vmatprep.subr.mxu0 0.0
  %3137 = vmatpush2.msra.mxu0 0.0
  %3138 = vmatprep.subr.mxu0 0.0
  %3139 = vmatpush2.msra.mxu0 0.0
  %3140 = vmatprep.subr.mxu0 0.0
  %3141 = vmatpush2.msra.mxu0 0.0
  %3142 = vmatprep.subr.mxu0 0.0
  %3143 = vmatpush2.msra.mxu0 0.0
  %3144 = vmatprep.subr.mxu0 0.0
  %3145 = vmatpush2.msra.mxu0 0.0
  %3146 = vmatprep.subr.mxu0 0.0
  %3147 = vmatpush2.msra.mxu0 0.0
  %3148 = vmatprep.subr.mxu0 0.0
  %3149 = vmatpush2.msra.mxu0 0.0
  %3150 = vmatprep.subr.mxu0 0.0
  %3151 = vmatpush2.msra.mxu0 0.0
  %3152 = vmatprep.subr.mxu0 0.0
  %3153 = vmatpush2.msra.mxu0 0.0
  %3154 = vmatprep.subr.mxu0 0.0
  %3155 = vmatpush2.msra.mxu0 0.0
  %3156 = vmatprep.mubr.f32.mxu0 0.0
  %3157 = vmatmul.mubr.f32.gmra.mxu0 %v3090
  %v3158 = vpop.f32.mrf.mxu0
  %v3159 = vadd.f32 0.0, %v3158
  %v3160 = vpop.f32.mrf.mxu0
  %3161 = vdwg.mxu0
  %3162 = vrot.lane.b32.xlu0 %v2370, 64
  %v3163 = vpop.permute.xlu0 %3162
  %v3166 = vsel %vm541, %v3073, 0
  %3168 = vmatprep.subr.mxu0 0.0
  %3169 = vmatpush1.msra.mxu0 0.0
  %3170 = vmatprep.subr.mxu0 0.0
  %3171 = vmatpush1.msra.mxu0 0.0
  %3172 = vmatprep.subr.mxu0 0.0
  %3173 = vmatpush1.msra.mxu0 0.0
  %3174 = vmatprep.subr.mxu0 0.0
  %3175 = vmatpush1.msra.mxu0 0.0
  %3176 = vmatprep.subr.mxu0 0.0
  %3177 = vmatpush1.msra.mxu0 0.0
  %3178 = vmatprep.subr.mxu0 0.0
  %3179 = vmatpush1.msra.mxu0 0.0
  %3180 = vmatprep.subr.mxu0 0.0
  %3181 = vmatpush1.msra.mxu0 0.0
  %3182 = vmatprep.subr.mxu0 0.0
  %3183 = vmatpush1.msra.mxu0 0.0
  %3184 = vmatprep.subr.mxu0 0.0
  %3185 = vmatpush1.msra.mxu0 0.0
  %3186 = vmatprep.subr.mxu0 0.0
  %3187 = vmatpush1.msra.mxu0 0.0
  %3188 = vmatprep.subr.mxu0 0.0
  %3189 = vmatpush1.msra.mxu0 0.0
  %3190 = vmatprep.subr.mxu0 0.0
  %3191 = vmatpush1.msra.mxu0 0.0
  %3192 = vmatprep.subr.mxu0 0.0
  %3193 = vmatpush1.msra.mxu0 0.0
  %3194 = vmatprep.subr.mxu0 0.0
  %3195 = vmatpush1.msra.mxu0 0.0
  %3196 = vmatprep.subr.mxu0 0.0
  %3197 = vmatpush1.msra.mxu0 0.0
  %3198 = vmatprep.subr.mxu0 0.0
  %3199 = vmatpush1.msra.mxu0 %v3163
  %3200 = vmatprep.subr.mxu0 0.0
  %3201 = vmatpush2.msra.mxu0 0.0
  %3202 = vmatprep.subr.mxu0 0.0
  %3203 = vmatpush2.msra.mxu0 0.0
  %3204 = vmatprep.subr.mxu0 0.0
  %3205 = vmatpush2.msra.mxu0 0.0
  %3206 = vmatprep.subr.mxu0 0.0
  %3207 = vmatpush2.msra.mxu0 0.0
  %3208 = vmatprep.subr.mxu0 0.0
  %3209 = vmatpush2.msra.mxu0 0.0
  %3210 = vmatprep.subr.mxu0 0.0
  %3211 = vmatpush2.msra.mxu0 0.0
  %3212 = vmatprep.subr.mxu0 0.0
  %3213 = vmatpush2.msra.mxu0 0.0
  %3214 = vmatprep.subr.mxu0 0.0
  %3215 = vmatpush2.msra.mxu0 0.0
  %3216 = vmatprep.subr.mxu0 0.0
  %3217 = vmatpush2.msra.mxu0 0.0
  %3218 = vmatprep.subr.mxu0 0.0
  %3219 = vmatpush2.msra.mxu0 0.0
  %3220 = vmatprep.subr.mxu0 0.0
  %3221 = vmatpush2.msra.mxu0 0.0
  %3222 = vmatprep.subr.mxu0 0.0
  %3223 = vmatpush2.msra.mxu0 0.0
  %3224 = vmatprep.subr.mxu0 0.0
  %3225 = vmatpush2.msra.mxu0 0.0
  %3226 = vmatprep.subr.mxu0 0.0
  %3227 = vmatpush2.msra.mxu0 0.0
  %3228 = vmatprep.subr.mxu0 0.0
  %3229 = vmatpush2.msra.mxu0 0.0
  %3230 = vmatprep.subr.mxu0 0.0
  %3231 = vmatpush2.msra.mxu0 0.0
  %3232 = vmatprep.mubr.f32.mxu0 0.0
  %3233 = vmatmul.mubr.f32.gmra.mxu0 %v3166
  %v3234 = vpop.f32.mrf.mxu0
  %v3235 = vadd.f32 0.0, %v3234
  %v3236 = vpop.f32.mrf.mxu0
  %3237 = vdwg.mxu0
  %3238 = vrot.lane.b32.xlu0 %v2372, 64
  %v3239 = vpop.permute.xlu0 %3238
  %v3242 = vsel %vm541, %v3075, 0
  %3244 = vmatprep.subr.mxu0 0.0
  %3245 = vmatpush1.msra.mxu0 0.0
  %3246 = vmatprep.subr.mxu0 0.0
  %3247 = vmatpush1.msra.mxu0 0.0
  %3248 = vmatprep.subr.mxu0 0.0
  %3249 = vmatpush1.msra.mxu0 0.0
  %3250 = vmatprep.subr.mxu0 0.0
  %3251 = vmatpush1.msra.mxu0 0.0
  %3252 = vmatprep.subr.mxu0 0.0
  %3253 = vmatpush1.msra.mxu0 0.0
  %3254 = vmatprep.subr.mxu0 0.0
  %3255 = vmatpush1.msra.mxu0 0.0
  %3256 = vmatprep.subr.mxu0 0.0
  %3257 = vmatpush1.msra.mxu0 0.0
  %3258 = vmatprep.subr.mxu0 0.0
  %3259 = vmatpush1.msra.mxu0 0.0
  %3260 = vmatprep.subr.mxu0 0.0
  %3261 = vmatpush1.msra.mxu0 0.0
  %3262 = vmatprep.subr.mxu0 0.0
  %3263 = vmatpush1.msra.mxu0 0.0
  %3264 = vmatprep.subr.mxu0 0.0
  %3265 = vmatpush1.msra.mxu0 0.0
  %3266 = vmatprep.subr.mxu0 0.0
  %3267 = vmatpush1.msra.mxu0 0.0
  %3268 = vmatprep.subr.mxu0 0.0
  %3269 = vmatpush1.msra.mxu0 0.0
  %3270 = vmatprep.subr.mxu0 0.0
  %3271 = vmatpush1.msra.mxu0 0.0
  %3272 = vmatprep.subr.mxu0 0.0
  %3273 = vmatpush1.msra.mxu0 0.0
  %3274 = vmatprep.subr.mxu0 0.0
  %3275 = vmatpush1.msra.mxu0 %v3239
  %3276 = vmatprep.subr.mxu0 0.0
  %3277 = vmatpush2.msra.mxu0 0.0
  %3278 = vmatprep.subr.mxu0 0.0
  %3279 = vmatpush2.msra.mxu0 0.0
  %3280 = vmatprep.subr.mxu0 0.0
  %3281 = vmatpush2.msra.mxu0 0.0
  %3282 = vmatprep.subr.mxu0 0.0
  %3283 = vmatpush2.msra.mxu0 0.0
  %3284 = vmatprep.subr.mxu0 0.0
  %3285 = vmatpush2.msra.mxu0 0.0
  %3286 = vmatprep.subr.mxu0 0.0
  %3287 = vmatpush2.msra.mxu0 0.0
  %3288 = vmatprep.subr.mxu0 0.0
  %3289 = vmatpush2.msra.mxu0 0.0
  %3290 = vmatprep.subr.mxu0 0.0
  %3291 = vmatpush2.msra.mxu0 0.0
  %3292 = vmatprep.subr.mxu0 0.0
  %3293 = vmatpush2.msra.mxu0 0.0
  %3294 = vmatprep.subr.mxu0 0.0
  %3295 = vmatpush2.msra.mxu0 0.0
  %3296 = vmatprep.subr.mxu0 0.0
  %3297 = vmatpush2.msra.mxu0 0.0
  %3298 = vmatprep.subr.mxu0 0.0
  %3299 = vmatpush2.msra.mxu0 0.0
  %3300 = vmatprep.subr.mxu0 0.0
  %3301 = vmatpush2.msra.mxu0 0.0
  %3302 = vmatprep.subr.mxu0 0.0
  %3303 = vmatpush2.msra.mxu0 0.0
  %3304 = vmatprep.subr.mxu0 0.0
  %3305 = vmatpush2.msra.mxu0 0.0
  %3306 = vmatprep.subr.mxu0 0.0
  %3307 = vmatpush2.msra.mxu0 0.0
  %3308 = vmatprep.mubr.f32.mxu0 0.0
  %3309 = vmatmul.mubr.f32.gmra.mxu0 %v3242
  %v3310 = vpop.f32.mrf.mxu0
  %v3311 = vadd.f32 0.0, %v3310
  %v3312 = vpop.f32.mrf.mxu0
  %3313 = vdwg.mxu0
  %3314 = vrot.lane.b32.xlu0 %v2374, 64
  %v3315 = vpop.permute.xlu0 %3314
  %v3318 = vsel %vm541, %v3077, 0
  %3320 = vmatprep.subr.mxu0 0.0
  %3321 = vmatpush1.msra.mxu0 0.0
  %3322 = vmatprep.subr.mxu0 0.0
  %3323 = vmatpush1.msra.mxu0 0.0
  %3324 = vmatprep.subr.mxu0 0.0
  %3325 = vmatpush1.msra.mxu0 0.0
  %3326 = vmatprep.subr.mxu0 0.0
  %3327 = vmatpush1.msra.mxu0 0.0
  %3328 = vmatprep.subr.mxu0 0.0
  %3329 = vmatpush1.msra.mxu0 0.0
  %3330 = vmatprep.subr.mxu0 0.0
  %3331 = vmatpush1.msra.mxu0 0.0
  %3332 = vmatprep.subr.mxu0 0.0
  %3333 = vmatpush1.msra.mxu0 0.0
  %3334 = vmatprep.subr.mxu0 0.0
  %3335 = vmatpush1.msra.mxu0 0.0
  %3336 = vmatprep.subr.mxu0 0.0
  %3337 = vmatpush1.msra.mxu0 0.0
  %3338 = vmatprep.subr.mxu0 0.0
  %3339 = vmatpush1.msra.mxu0 0.0
  %3340 = vmatprep.subr.mxu0 0.0
  %3341 = vmatpush1.msra.mxu0 0.0
  %3342 = vmatprep.subr.mxu0 0.0
  %3343 = vmatpush1.msra.mxu0 0.0
  %3344 = vmatprep.subr.mxu0 0.0
  %3345 = vmatpush1.msra.mxu0 0.0
  %3346 = vmatprep.subr.mxu0 0.0
  %3347 = vmatpush1.msra.mxu0 0.0
  %3348 = vmatprep.subr.mxu0 0.0
  %3349 = vmatpush1.msra.mxu0 0.0
  %3350 = vmatprep.subr.mxu0 0.0
  %3351 = vmatpush1.msra.mxu0 %v3315
  %3352 = vmatprep.subr.mxu0 0.0
  %3353 = vmatpush2.msra.mxu0 0.0
  %3354 = vmatprep.subr.mxu0 0.0
  %3355 = vmatpush2.msra.mxu0 0.0
  %3356 = vmatprep.subr.mxu0 0.0
  %3357 = vmatpush2.msra.mxu0 0.0
  %3358 = vmatprep.subr.mxu0 0.0
  %3359 = vmatpush2.msra.mxu0 0.0
  %3360 = vmatprep.subr.mxu0 0.0
  %3361 = vmatpush2.msra.mxu0 0.0
  %3362 = vmatprep.subr.mxu0 0.0
  %3363 = vmatpush2.msra.mxu0 0.0
  %3364 = vmatprep.subr.mxu0 0.0
  %3365 = vmatpush2.msra.mxu0 0.0
  %3366 = vmatprep.subr.mxu0 0.0
  %3367 = vmatpush2.msra.mxu0 0.0
  %3368 = vmatprep.subr.mxu0 0.0
  %3369 = vmatpush2.msra.mxu0 0.0
  %3370 = vmatprep.subr.mxu0 0.0
  %3371 = vmatpush2.msra.mxu0 0.0
  %3372 = vmatprep.subr.mxu0 0.0
  %3373 = vmatpush2.msra.mxu0 0.0
  %3374 = vmatprep.subr.mxu0 0.0
  %3375 = vmatpush2.msra.mxu0 0.0
  %3376 = vmatprep.subr.mxu0 0.0
  %3377 = vmatpush2.msra.mxu0 0.0
  %3378 = vmatprep.subr.mxu0 0.0
  %3379 = vmatpush2.msra.mxu0 0.0
  %3380 = vmatprep.subr.mxu0 0.0
  %3381 = vmatpush2.msra.mxu0 0.0
  %3382 = vmatprep.subr.mxu0 0.0
  %3383 = vmatpush2.msra.mxu0 0.0
  %3384 = vmatprep.mubr.f32.mxu0 0.0
  %3385 = vmatmul.mubr.f32.gmra.mxu0 %v3318
  %v3386 = vpop.f32.mrf.mxu0
  %v3387 = vadd.f32 0.0, %v3386
  %v3388 = vpop.f32.mrf.mxu0
  %3389 = vdwg.mxu0
  %3390 = vrot.lane.b32.xlu0 %v2365, 64
  %v3391 = vpop.permute.xlu0 %3390
  %v3394 = vsel %vm541, %v3079, 0
  %3396 = vmatprep.subr.mxu0 0.0
  %3397 = vmatpush1.msra.mxu0 0.0
  %3398 = vmatprep.subr.mxu0 0.0
  %3399 = vmatpush1.msra.mxu0 0.0
  %3400 = vmatprep.subr.mxu0 0.0
  %3401 = vmatpush1.msra.mxu0 0.0
  %3402 = vmatprep.subr.mxu0 0.0
  %3403 = vmatpush1.msra.mxu0 0.0
  %3404 = vmatprep.subr.mxu0 0.0
  %3405 = vmatpush1.msra.mxu0 0.0
  %3406 = vmatprep.subr.mxu0 0.0
  %3407 = vmatpush1.msra.mxu0 0.0
  %3408 = vmatprep.subr.mxu0 0.0
  %3409 = vmatpush1.msra.mxu0 0.0
  %3410 = vmatprep.subr.mxu0 0.0
  %3411 = vmatpush1.msra.mxu0 0.0
  %3412 = vmatprep.subr.mxu0 0.0
  %3413 = vmatpush1.msra.mxu0 0.0
  %3414 = vmatprep.subr.mxu0 0.0
  %3415 = vmatpush1.msra.mxu0 0.0
  %3416 = vmatprep.subr.mxu0 0.0
  %3417 = vmatpush1.msra.mxu0 0.0
  %3418 = vmatprep.subr.mxu0 0.0
  %3419 = vmatpush1.msra.mxu0 0.0
  %3420 = vmatprep.subr.mxu0 0.0
  %3421 = vmatpush1.msra.mxu0 0.0
  %3422 = vmatprep.subr.mxu0 0.0
  %3423 = vmatpush1.msra.mxu0 0.0
  %3424 = vmatprep.subr.mxu0 0.0
  %3425 = vmatpush1.msra.mxu0 0.0
  %3426 = vmatprep.subr.mxu0 0.0
  %3427 = vmatpush1.msra.mxu0 %v3391
  %3428 = vmatprep.subr.mxu0 0.0
  %3429 = vmatpush2.msra.mxu0 0.0
  %3430 = vmatprep.subr.mxu0 0.0
  %3431 = vmatpush2.msra.mxu0 0.0
  %3432 = vmatprep.subr.mxu0 0.0
  %3433 = vmatpush2.msra.mxu0 0.0
  %3434 = vmatprep.subr.mxu0 0.0
  %3435 = vmatpush2.msra.mxu0 0.0
  %3436 = vmatprep.subr.mxu0 0.0
  %3437 = vmatpush2.msra.mxu0 0.0
  %3438 = vmatprep.subr.mxu0 0.0
  %3439 = vmatpush2.msra.mxu0 0.0
  %3440 = vmatprep.subr.mxu0 0.0
  %3441 = vmatpush2.msra.mxu0 0.0
  %3442 = vmatprep.subr.mxu0 0.0
  %3443 = vmatpush2.msra.mxu0 0.0
  %3444 = vmatprep.subr.mxu0 0.0
  %3445 = vmatpush2.msra.mxu0 0.0
  %3446 = vmatprep.subr.mxu0 0.0
  %3447 = vmatpush2.msra.mxu0 0.0
  %3448 = vmatprep.subr.mxu0 0.0
  %3449 = vmatpush2.msra.mxu0 0.0
  %3450 = vmatprep.subr.mxu0 0.0
  %3451 = vmatpush2.msra.mxu0 0.0
  %3452 = vmatprep.subr.mxu0 0.0
  %3453 = vmatpush2.msra.mxu0 0.0
  %3454 = vmatprep.subr.mxu0 0.0
  %3455 = vmatpush2.msra.mxu0 0.0
  %3456 = vmatprep.subr.mxu0 0.0
  %3457 = vmatpush2.msra.mxu0 0.0
  %3458 = vmatprep.subr.mxu0 0.0
  %3459 = vmatpush2.msra.mxu0 0.0
  %3460 = vmatprep.mubr.f32.mxu0 0.0
  %3461 = vmatmul.mubr.f32.gmra.mxu0 %v3394
  %v3462 = vpop.f32.mrf.mxu0
  %v3463 = vadd.f32 0.0, %v3462
  %v3464 = vpop.f32.mrf.mxu0
  %3465 = vdwg.mxu0
  %3466 = vrot.lane.b32.xlu0 %v2377, 64
  %v3467 = vpop.permute.xlu0 %3466
  %v3470 = vsel %vm541, %v3081, 0
  %3472 = vmatprep.subr.mxu0 0.0
  %3473 = vmatpush1.msra.mxu0 0.0
  %3474 = vmatprep.subr.mxu0 0.0
  %3475 = vmatpush1.msra.mxu0 0.0
  %3476 = vmatprep.subr.mxu0 0.0
  %3477 = vmatpush1.msra.mxu0 0.0
  %3478 = vmatprep.subr.mxu0 0.0
  %3479 = vmatpush1.msra.mxu0 0.0
  %3480 = vmatprep.subr.mxu0 0.0
  %3481 = vmatpush1.msra.mxu0 0.0
  %3482 = vmatprep.subr.mxu0 0.0
  %3483 = vmatpush1.msra.mxu0 0.0
  %3484 = vmatprep.subr.mxu0 0.0
  %3485 = vmatpush1.msra.mxu0 0.0
  %3486 = vmatprep.subr.mxu0 0.0
  %3487 = vmatpush1.msra.mxu0 0.0
  %3488 = vmatprep.subr.mxu0 0.0
  %3489 = vmatpush1.msra.mxu0 0.0
  %3490 = vmatprep.subr.mxu0 0.0
  %3491 = vmatpush1.msra.mxu0 0.0
  %3492 = vmatprep.subr.mxu0 0.0
  %3493 = vmatpush1.msra.mxu0 0.0
  %3494 = vmatprep.subr.mxu0 0.0
  %3495 = vmatpush1.msra.mxu0 0.0
  %3496 = vmatprep.subr.mxu0 0.0
  %3497 = vmatpush1.msra.mxu0 0.0
  %3498 = vmatprep.subr.mxu0 0.0
  %3499 = vmatpush1.msra.mxu0 0.0
  %3500 = vmatprep.subr.mxu0 0.0
  %3501 = vmatpush1.msra.mxu0 0.0
  %3502 = vmatprep.subr.mxu0 0.0
  %3503 = vmatpush1.msra.mxu0 %v3467
  %3504 = vmatprep.subr.mxu0 0.0
  %3505 = vmatpush2.msra.mxu0 0.0
  %3506 = vmatprep.subr.mxu0 0.0
  %3507 = vmatpush2.msra.mxu0 0.0
  %3508 = vmatprep.subr.mxu0 0.0
  %3509 = vmatpush2.msra.mxu0 0.0
  %3510 = vmatprep.subr.mxu0 0.0
  %3511 = vmatpush2.msra.mxu0 0.0
  %3512 = vmatprep.subr.mxu0 0.0
  %3513 = vmatpush2.msra.mxu0 0.0
  %3514 = vmatprep.subr.mxu0 0.0
  %3515 = vmatpush2.msra.mxu0 0.0
  %3516 = vmatprep.subr.mxu0 0.0
  %3517 = vmatpush2.msra.mxu0 0.0
  %3518 = vmatprep.subr.mxu0 0.0
  %3519 = vmatpush2.msra.mxu0 0.0
  %3520 = vmatprep.subr.mxu0 0.0
  %3521 = vmatpush2.msra.mxu0 0.0
  %3522 = vmatprep.subr.mxu0 0.0
  %3523 = vmatpush2.msra.mxu0 0.0
  %3524 = vmatprep.subr.mxu0 0.0
  %3525 = vmatpush2.msra.mxu0 0.0
  %3526 = vmatprep.subr.mxu0 0.0
  %3527 = vmatpush2.msra.mxu0 0.0
  %3528 = vmatprep.subr.mxu0 0.0
  %3529 = vmatpush2.msra.mxu0 0.0
  %3530 = vmatprep.subr.mxu0 0.0
  %3531 = vmatpush2.msra.mxu0 0.0
  %3532 = vmatprep.subr.mxu0 0.0
  %3533 = vmatpush2.msra.mxu0 0.0
  %3534 = vmatprep.subr.mxu0 0.0
  %3535 = vmatpush2.msra.mxu0 0.0
  %3536 = vmatprep.mubr.f32.mxu0 0.0
  %3537 = vmatmul.mubr.f32.gmra.mxu0 %v3470
  %v3538 = vpop.f32.mrf.mxu0
  %v3539 = vadd.f32 0.0, %v3538
  %v3540 = vpop.f32.mrf.mxu0
  %3541 = vdwg.mxu0
  %3542 = vrot.lane.b32.xlu0 %v2379, 64
  %v3543 = vpop.permute.xlu0 %3542
  %v3546 = vsel %vm541, %v3083, 0
  %3548 = vmatprep.subr.mxu0 0.0
  %3549 = vmatpush1.msra.mxu0 0.0
  %3550 = vmatprep.subr.mxu0 0.0
  %3551 = vmatpush1.msra.mxu0 0.0
  %3552 = vmatprep.subr.mxu0 0.0
  %3553 = vmatpush1.msra.mxu0 0.0
  %3554 = vmatprep.subr.mxu0 0.0
  %3555 = vmatpush1.msra.mxu0 0.0
  %3556 = vmatprep.subr.mxu0 0.0
  %3557 = vmatpush1.msra.mxu0 0.0
  %3558 = vmatprep.subr.mxu0 0.0
  %3559 = vmatpush1.msra.mxu0 0.0
  %3560 = vmatprep.subr.mxu0 0.0
  %3561 = vmatpush1.msra.mxu0 0.0
  %3562 = vmatprep.subr.mxu0 0.0
  %3563 = vmatpush1.msra.mxu0 0.0
  %3564 = vmatprep.subr.mxu0 0.0
  %3565 = vmatpush1.msra.mxu0 0.0
  %3566 = vmatprep.subr.mxu0 0.0
  %3567 = vmatpush1.msra.mxu0 0.0
  %3568 = vmatprep.subr.mxu0 0.0
  %3569 = vmatpush1.msra.mxu0 0.0
  %3570 = vmatprep.subr.mxu0 0.0
  %3571 = vmatpush1.msra.mxu0 0.0
  %3572 = vmatprep.subr.mxu0 0.0
  %3573 = vmatpush1.msra.mxu0 0.0
  %3574 = vmatprep.subr.mxu0 0.0
  %3575 = vmatpush1.msra.mxu0 0.0
  %3576 = vmatprep.subr.mxu0 0.0
  %3577 = vmatpush1.msra.mxu0 0.0
  %3578 = vmatprep.subr.mxu0 0.0
  %3579 = vmatpush1.msra.mxu0 %v3543
  %3580 = vmatprep.subr.mxu0 0.0
  %3581 = vmatpush2.msra.mxu0 0.0
  %3582 = vmatprep.subr.mxu0 0.0
  %3583 = vmatpush2.msra.mxu0 0.0
  %3584 = vmatprep.subr.mxu0 0.0
  %3585 = vmatpush2.msra.mxu0 0.0
  %3586 = vmatprep.subr.mxu0 0.0
  %3587 = vmatpush2.msra.mxu0 0.0
  %3588 = vmatprep.subr.mxu0 0.0
  %3589 = vmatpush2.msra.mxu0 0.0
  %3590 = vmatprep.subr.mxu0 0.0
  %3591 = vmatpush2.msra.mxu0 0.0
  %3592 = vmatprep.subr.mxu0 0.0
  %3593 = vmatpush2.msra.mxu0 0.0
  %3594 = vmatprep.subr.mxu0 0.0
  %3595 = vmatpush2.msra.mxu0 0.0
  %3596 = vmatprep.subr.mxu0 0.0
  %3597 = vmatpush2.msra.mxu0 0.0
  %3598 = vmatprep.subr.mxu0 0.0
  %3599 = vmatpush2.msra.mxu0 0.0
  %3600 = vmatprep.subr.mxu0 0.0
  %3601 = vmatpush2.msra.mxu0 0.0
  %3602 = vmatprep.subr.mxu0 0.0
  %3603 = vmatpush2.msra.mxu0 0.0
  %3604 = vmatprep.subr.mxu0 0.0
  %3605 = vmatpush2.msra.mxu0 0.0
  %3606 = vmatprep.subr.mxu0 0.0
  %3607 = vmatpush2.msra.mxu0 0.0
  %3608 = vmatprep.subr.mxu0 0.0
  %3609 = vmatpush2.msra.mxu0 0.0
  %3610 = vmatprep.subr.mxu0 0.0
  %3611 = vmatpush2.msra.mxu0 0.0
  %3612 = vmatprep.mubr.f32.mxu0 0.0
  %3613 = vmatmul.mubr.f32.gmra.mxu0 %v3546
  %v3614 = vpop.f32.mrf.mxu0
  %v3615 = vadd.f32 0.0, %v3614
  %v3616 = vpop.f32.mrf.mxu0
  %3617 = vdwg.mxu0
  %3618 = vrot.lane.b32.xlu0 %v2381, 64
  %v3619 = vpop.permute.xlu0 %3618
  %v3622 = vsel %vm541, %v3085, 0
  %3624 = vmatprep.subr.mxu0 0.0
  %3625 = vmatpush1.msra.mxu0 0.0
  %3626 = vmatprep.subr.mxu0 0.0
  %3627 = vmatpush1.msra.mxu0 0.0
  %3628 = vmatprep.subr.mxu0 0.0
  %3629 = vmatpush1.msra.mxu0 0.0
  %3630 = vmatprep.subr.mxu0 0.0
  %3631 = vmatpush1.msra.mxu0 0.0
  %3632 = vmatprep.subr.mxu0 0.0
  %3633 = vmatpush1.msra.mxu0 0.0
  %3634 = vmatprep.subr.mxu0 0.0
  %3635 = vmatpush1.msra.mxu0 0.0
  %3636 = vmatprep.subr.mxu0 0.0
  %3637 = vmatpush1.msra.mxu0 0.0
  %3638 = vmatprep.subr.mxu0 0.0
  %3639 = vmatpush1.msra.mxu0 0.0
  %3640 = vmatprep.subr.mxu0 0.0
  %3641 = vmatpush1.msra.mxu0 0.0
  %3642 = vmatprep.subr.mxu0 0.0
  %3643 = vmatpush1.msra.mxu0 0.0
  %3644 = vmatprep.subr.mxu0 0.0
  %3645 = vmatpush1.msra.mxu0 0.0
  %3646 = vmatprep.subr.mxu0 0.0
  %3647 = vmatpush1.msra.mxu0 0.0
  %3648 = vmatprep.subr.mxu0 0.0
  %3649 = vmatpush1.msra.mxu0 0.0
  %3650 = vmatprep.subr.mxu0 0.0
  %3651 = vmatpush1.msra.mxu0 0.0
  %3652 = vmatprep.subr.mxu0 0.0
  %3653 = vmatpush1.msra.mxu0 0.0
  %3654 = vmatprep.subr.mxu0 0.0
  %3655 = vmatpush1.msra.mxu0 %v3619
  %3656 = vmatprep.subr.mxu0 0.0
  %3657 = vmatpush2.msra.mxu0 0.0
  %3658 = vmatprep.subr.mxu0 0.0
  %3659 = vmatpush2.msra.mxu0 0.0
  %3660 = vmatprep.subr.mxu0 0.0
  %3661 = vmatpush2.msra.mxu0 0.0
  %3662 = vmatprep.subr.mxu0 0.0
  %3663 = vmatpush2.msra.mxu0 0.0
  %3664 = vmatprep.subr.mxu0 0.0
  %3665 = vmatpush2.msra.mxu0 0.0
  %3666 = vmatprep.subr.mxu0 0.0
  %3667 = vmatpush2.msra.mxu0 0.0
  %3668 = vmatprep.subr.mxu0 0.0
  %3669 = vmatpush2.msra.mxu0 0.0
  %3670 = vmatprep.subr.mxu0 0.0
  %3671 = vmatpush2.msra.mxu0 0.0
  %3672 = vmatprep.subr.mxu0 0.0
  %3673 = vmatpush2.msra.mxu0 0.0
  %3674 = vmatprep.subr.mxu0 0.0
  %3675 = vmatpush2.msra.mxu0 0.0
  %3676 = vmatprep.subr.mxu0 0.0
  %3677 = vmatpush2.msra.mxu0 0.0
  %3678 = vmatprep.subr.mxu0 0.0
  %3679 = vmatpush2.msra.mxu0 0.0
  %3680 = vmatprep.subr.mxu0 0.0
  %3681 = vmatpush2.msra.mxu0 0.0
  %3682 = vmatprep.subr.mxu0 0.0
  %3683 = vmatpush2.msra.mxu0 0.0
  %3684 = vmatprep.subr.mxu0 0.0
  %3685 = vmatpush2.msra.mxu0 0.0
  %3686 = vmatprep.subr.mxu0 0.0
  %3687 = vmatpush2.msra.mxu0 0.0
  %3688 = vmatprep.mubr.f32.mxu0 0.0
  %3689 = vmatmul.mubr.f32.gmra.mxu0 %v3622
  %v3690 = vpop.f32.mrf.mxu0
  %v3691 = vadd.f32 0.0, %v3690
  %v3692 = vpop.f32.mrf.mxu0
  %3693 = vdwg.mxu0
  %3695 = vrot.lane.b32.xlu0 %v3235, 8
  %v3696 = vpop.permute.xlu0 %3695
  %3699 = vrot.lane.b32.xlu0 %v3311, 16
  %v3700 = vpop.permute.xlu0 %3699
  %3703 = vrot.lane.b32.xlu0 %v3387, 24
  %v3704 = vpop.permute.xlu0 %3703
  %v3706 = vsel %vm541, %v3159, %v3696
  %v3707 = vsel %vm1865, %v3706, %v3700
  %v3708 = vsel %vm1867, %v3707, %v3704
  %3710 = vrot.lane.b32.xlu0 %v3539, 8
  %v3711 = vpop.permute.xlu0 %3710
  %3714 = vrot.lane.b32.xlu0 %v3615, 16
  %v3715 = vpop.permute.xlu0 %3714
  %3718 = vrot.lane.b32.xlu0 %v3691, 24
  %v3719 = vpop.permute.xlu0 %3718
  %v3721 = vsel %vm541, %v3463, %v3711
  %v3722 = vsel %vm1865, %v3721, %v3715
  %v3723 = vsel %vm1867, %v3722, %v3719
  %v3725 = vlaneseq
  %v3726 = vshrl.u32 %v3725, 7
  %v3727 = vsub.s32 0, %v3726
  %v3728 = vrot.slane %v2214, %v3727
  %v3731 = vsel %vm394, %v3708, 0
  %v3734 = vsel %vm394, %v3723, 0
  %3736 = vmatprep.subr.mxu0 0.0
  %3737 = vmatpush1.msra.mxu0 0.0
  %3738 = vmatprep.subr.mxu0 0.0
  %3739 = vmatpush1.msra.mxu0 0.0
  %3740 = vmatprep.subr.mxu0 0.0
  %3741 = vmatpush1.msra.mxu0 0.0
  %3742 = vmatprep.subr.mxu0 0.0
  %3743 = vmatpush1.msra.mxu0 0.0
  %3744 = vmatprep.subr.mxu0 0.0
  %3745 = vmatpush1.msra.mxu0 0.0
  %3746 = vmatprep.subr.mxu0 0.0
  %3747 = vmatpush1.msra.mxu0 0.0
  %3748 = vmatprep.subr.mxu0 0.0
  %3749 = vmatpush1.msra.mxu0 0.0
  %3750 = vmatprep.subr.mxu0 0.0
  %3751 = vmatpush1.msra.mxu0 0.0
  %3752 = vmatprep.subr.mxu0 0.0
  %3753 = vmatpush1.msra.mxu0 0.0
  %3754 = vmatprep.subr.mxu0 0.0
  %3755 = vmatpush1.msra.mxu0 0.0
  %3756 = vmatprep.subr.mxu0 0.0
  %3757 = vmatpush1.msra.mxu0 0.0
  %3758 = vmatprep.subr.mxu0 0.0
  %3759 = vmatpush1.msra.mxu0 0.0
  %3760 = vmatprep.subr.mxu0 0.0
  %3761 = vmatpush1.msra.mxu0 %v2213
  %3762 = vmatprep.subr.mxu0 0.0
  %3763 = vmatpush1.msra.mxu0 %v2212
  %3764 = vmatprep.subr.mxu0 0.0
  %3765 = vmatpush1.msra.mxu0 %v2211
  %3766 = vmatprep.subr.mxu0 0.0
  %3767 = vmatpush1.msra.mxu0 %v2210
  %3768 = vmatprep.subr.mxu0 0.0
  %3769 = vmatpush2.msra.mxu0 0.0
  %3770 = vmatprep.subr.mxu0 0.0
  %3771 = vmatpush2.msra.mxu0 0.0
  %3772 = vmatprep.subr.mxu0 0.0
  %3773 = vmatpush2.msra.mxu0 0.0
  %3774 = vmatprep.subr.mxu0 0.0
  %3775 = vmatpush2.msra.mxu0 0.0
  %3776 = vmatprep.subr.mxu0 0.0
  %3777 = vmatpush2.msra.mxu0 0.0
  %3778 = vmatprep.subr.mxu0 0.0
  %3779 = vmatpush2.msra.mxu0 0.0
  %3780 = vmatprep.subr.mxu0 0.0
  %3781 = vmatpush2.msra.mxu0 0.0
  %3782 = vmatprep.subr.mxu0 0.0
  %3783 = vmatpush2.msra.mxu0 0.0
  %3784 = vmatprep.subr.mxu0 0.0
  %3785 = vmatpush2.msra.mxu0 0.0
  %3786 = vmatprep.subr.mxu0 0.0
  %3787 = vmatpush2.msra.mxu0 0.0
  %3788 = vmatprep.subr.mxu0 0.0
  %3789 = vmatpush2.msra.mxu0 0.0
  %3790 = vmatprep.subr.mxu0 0.0
  %3791 = vmatpush2.msra.mxu0 0.0
  %3792 = vmatprep.subr.mxu0 0.0
  %3793 = vmatpush2.msra.mxu0 0.0
  %3794 = vmatprep.subr.mxu0 0.0
  %3795 = vmatpush2.msra.mxu0 0.0
  %3796 = vmatprep.subr.mxu0 0.0
  %3797 = vmatpush2.msra.mxu0 0.0
  %3798 = vmatprep.subr.mxu0 0.0
  %3799 = vmatpush2.msra.mxu0 0.0
  %3800 = vmatprep.mubr.f32.mxu0 0.0
  %3801 = vmatmul.mubr.f32.gmra.mxu0 %v3731
  %v3802 = vpop.f32.mrf.mxu0
  %v3803 = vadd.f32 %v3728, %v3802
  %v3804 = vpop.f32.mrf.mxu0
  %3805 = vmatprep.mubr.f32.mxu0 0.0
  %3806 = vmatmul.mubr.f32.gmra.mxu0 %v3734
  %v3807 = vpop.f32.mrf.mxu0
  %v3808 = vadd.f32 %v3728, %v3807
  %v3809 = vpop.f32.mrf.mxu0
  %3810 = vdwg.mxu0
  %v3811 = vadd.f32 %v2201, %v3803
  %v3812 = vadd.f32 %v2202, %v3808
  %v3813 = vsel %vm394, %v3811, 0.0
  %3814 = vadd.xlane.f32.xlu0 %v3813
  %v3815 = vpop.xlane.xlu0 %3814
  %v3816 = vsel %vm394, %v3812, 0.0
  %3817 = vadd.xlane.f32.xlu0 %v3816
  %v3818 = vpop.xlane.xlu0 %3817
  %v3819 = vmul.f32 %v3815, %v401
  %v3820 = vmul.f32 %v3818, %v401
  %v3821 = vsub.f32 %v3811, %v3819
  %v3822 = vsub.f32 %v3812, %v3820
  %v3823 = vmul.f32 %v3821, %v3821
  %v3824 = vmul.f32 %v3822, %v3822
  %v3825 = vsel %vm394, %v3823, 0.0
  %3826 = vadd.xlane.f32.xlu0 %v3825
  %v3827 = vpop.xlane.xlu0 %3826
  %v3828 = vsel %vm394, %v3824, 0.0
  %3829 = vadd.xlane.f32.xlu0 %v3828
  %v3830 = vpop.xlane.xlu0 %3829
  %v3831 = vmul.f32 %v3827, %v401
  %v3832 = vmul.f32 %v3830, %v401
  %v3833 = vadd.f32 %v3831, 1e-05
  %v3834 = vadd.f32 %v3832, 1e-05
  %v3835 = vrsqrt.pop %v3833
  %v3836 = vrsqrt.pop %v3834
  %v3837 = vmul.f32 %v3821, %v3835
  %v3838 = vmul.f32 %v3822, %v3836
  %v3840 = vlaneseq
  %v3841 = vshrl.u32 %v3840, 7
  %v3842 = vsub.s32 0, %v3841
  %v3843 = vrot.slane %v2215, %v3842
  %v3845 = vmul.f32 %v3837, %v3843
  %v3846 = vmul.f32 %v3838, %v3843
  %v3848 = vlaneseq
  %v3849 = vshrl.u32 %v3848, 7
  %v3850 = vsub.s32 0, %v3849
  %v3851 = vrot.slane %v2216, %v3850
  %v3853 = vadd.f32 %v3845, %v3851
  %v3854 = vadd.f32 %v3846, %v3851
  %v3856 = vlaneseq
  %v3857 = vshrl.u32 %v3856, 7
  %v3858 = vsub.s32 0, %v3857
  %v3859 = vrot.slane %v2221, %v3858
  %v3862 = vsel %vm394, %v3853, 0
  %v3865 = vsel %vm394, %v3854, 0
  %3867 = vmatprep.subr.mxu0 0.0
  %3868 = vmatpush1.msra.mxu0 0.0
  %3869 = vmatprep.subr.mxu0 0.0
  %3870 = vmatpush1.msra.mxu0 0.0
  %3871 = vmatprep.subr.mxu0 0.0
  %3872 = vmatpush1.msra.mxu0 0.0
  %3873 = vmatprep.subr.mxu0 0.0
  %3874 = vmatpush1.msra.mxu0 0.0
  %3875 = vmatprep.subr.mxu0 0.0
  %3876 = vmatpush1.msra.mxu0 0.0
  %3877 = vmatprep.subr.mxu0 0.0
  %3878 = vmatpush1.msra.mxu0 0.0
  %3879 = vmatprep.subr.mxu0 0.0
  %3880 = vmatpush1.msra.mxu0 0.0
  %3881 = vmatprep.subr.mxu0 0.0
  %3882 = vmatpush1.msra.mxu0 0.0
  %3883 = vmatprep.subr.mxu0 0.0
  %3884 = vmatpush1.msra.mxu0 0.0
  %3885 = vmatprep.subr.mxu0 0.0
  %3886 = vmatpush1.msra.mxu0 0.0
  %3887 = vmatprep.subr.mxu0 0.0
  %3888 = vmatpush1.msra.mxu0 0.0
  %3889 = vmatprep.subr.mxu0 0.0
  %3890 = vmatpush1.msra.mxu0 0.0
  %3891 = vmatprep.subr.mxu0 0.0
  %3892 = vmatpush1.msra.mxu0 %v2220
  %3893 = vmatprep.subr.mxu0 0.0
  %3894 = vmatpush1.msra.mxu0 %v2219
  %3895 = vmatprep.subr.mxu0 0.0
  %3896 = vmatpush1.msra.mxu0 %v2218
  %3897 = vmatprep.subr.mxu0 0.0
  %3898 = vmatpush1.msra.mxu0 %v2217
  %3899 = vmatprep.subr.mxu0 0.0
  %3900 = vmatpush2.msra.mxu0 0.0
  %3901 = vmatprep.subr.mxu0 0.0
  %3902 = vmatpush2.msra.mxu0 0.0
  %3903 = vmatprep.subr.mxu0 0.0
  %3904 = vmatpush2.msra.mxu0 0.0
  %3905 = vmatprep.subr.mxu0 0.0
  %3906 = vmatpush2.msra.mxu0 0.0
  %3907 = vmatprep.subr.mxu0 0.0
  %3908 = vmatpush2.msra.mxu0 0.0
  %3909 = vmatprep.subr.mxu0 0.0
  %3910 = vmatpush2.msra.mxu0 0.0
  %3911 = vmatprep.subr.mxu0 0.0
  %3912 = vmatpush2.msra.mxu0 0.0
  %3913 = vmatprep.subr.mxu0 0.0
  %3914 = vmatpush2.msra.mxu0 0.0
  %3915 = vmatprep.subr.mxu0 0.0
  %3916 = vmatpush2.msra.mxu0 0.0
  %3917 = vmatprep.subr.mxu0 0.0
  %3918 = vmatpush2.msra.mxu0 0.0
  %3919 = vmatprep.subr.mxu0 0.0
  %3920 = vmatpush2.msra.mxu0 0.0
  %3921 = vmatprep.subr.mxu0 0.0
  %3922 = vmatpush2.msra.mxu0 0.0
  %3923 = vmatprep.subr.mxu0 0.0
  %3924 = vmatpush2.msra.mxu0 0.0
  %3925 = vmatprep.subr.mxu0 0.0
  %3926 = vmatpush2.msra.mxu0 0.0
  %3927 = vmatprep.subr.mxu0 0.0
  %3928 = vmatpush2.msra.mxu0 0.0
  %3929 = vmatprep.subr.mxu0 0.0
  %3930 = vmatpush2.msra.mxu0 0.0
  %3931 = vmatprep.mubr.f32.mxu0 0.0
  %3932 = vmatmul.mubr.f32.gmra.mxu0 %v3862
  %v3933 = vpop.f32.mrf.mxu0
  %v3934 = vadd.f32 %v3859, %v3933
  %v3935 = vpop.f32.mrf.mxu0
  %3936 = vmatprep.mubr.f32.mxu0 0.0
  %3937 = vmatmul.mubr.f32.gmra.mxu0 %v3865
  %v3938 = vpop.f32.mrf.mxu0
  %v3939 = vadd.f32 %v3859, %v3938
  %v3940 = vpop.f32.mrf.mxu0
  %3941 = vdwg.mxu0
  %v3942 = vmul.f32 %v3934, 0.5
  %v3943 = vmul.f32 %v3939, 0.5
  %v3944 = vmul.f32 %v3934, 0.044715
  %v3945 = vmul.f32 %v3939, 0.044715
  %v3946 = vmul.f32 %v3944, %v3934
  %v3947 = vmul.f32 %v3945, %v3939
  %v3948 = vmul.f32 %v3946, %v3934
  %v3949 = vmul.f32 %v3947, %v3939
  %v3950 = vadd.f32 %v3934, %v3948
  %v3951 = vadd.f32 %v3939, %v3949
  %v3952 = vmul.f32 %v3950, 0.7978846
  %v3953 = vmul.f32 %v3951, 0.7978846
  %v3954 = vtanh.pop %v3952
  %v3955 = vtanh.pop %v3953
  %v3956 = vadd.f32 %v3954, 1.0
  %v3957 = vadd.f32 %v3955, 1.0
  %v3958 = vmul.f32 %v3942, %v3956
  %v3959 = vmul.f32 %v3943, %v3957
  %v3961 = vlaneseq
  %v3962 = vshrl.u32 %v3961, 7
  %v3963 = vsub.s32 0, %v3962
  %v3964 = vrot.slane %v2238, %v3963
  %3966 = vmatprep.subr.mxu0 0.0
  %3967 = vmatpush1.msra.mxu0 %v2237
  %3968 = vmatprep.subr.mxu0 0.0
  %3969 = vmatpush1.msra.mxu0 %v2236
  %3970 = vmatprep.subr.mxu0 0.0
  %3971 = vmatpush1.msra.mxu0 %v2235
  %3972 = vmatprep.subr.mxu0 0.0
  %3973 = vmatpush1.msra.mxu0 %v2234
  %3974 = vmatprep.subr.mxu0 0.0
  %3975 = vmatpush1.msra.mxu0 %v2233
  %3976 = vmatprep.subr.mxu0 0.0
  %3977 = vmatpush1.msra.mxu0 %v2232
  %3978 = vmatprep.subr.mxu0 0.0
  %3979 = vmatpush1.msra.mxu0 %v2231
  %3980 = vmatprep.subr.mxu0 0.0
  %3981 = vmatpush1.msra.mxu0 %v2230
  %3982 = vmatprep.subr.mxu0 0.0
  %3983 = vmatpush1.msra.mxu0 %v2229
  %3984 = vmatprep.subr.mxu0 0.0
  %3985 = vmatpush1.msra.mxu0 %v2228
  %3986 = vmatprep.subr.mxu0 0.0
  %3987 = vmatpush1.msra.mxu0 %v2227
  %3988 = vmatprep.subr.mxu0 0.0
  %3989 = vmatpush1.msra.mxu0 %v2226
  %3990 = vmatprep.subr.mxu0 0.0
  %3991 = vmatpush1.msra.mxu0 %v2225
  %3992 = vmatprep.subr.mxu0 0.0
  %3993 = vmatpush1.msra.mxu0 %v2224
  %3994 = vmatprep.subr.mxu0 0.0
  %3995 = vmatpush1.msra.mxu0 %v2223
  %3996 = vmatprep.subr.mxu0 0.0
  %3997 = vmatpush1.msra.mxu0 %v2222
  %3998 = vmatprep.subr.mxu0 0.0
  %3999 = vmatpush2.msra.mxu0 0.0
  %4000 = vmatprep.subr.mxu0 0.0
  %4001 = vmatpush2.msra.mxu0 0.0
  %4002 = vmatprep.subr.mxu0 0.0
  %4003 = vmatpush2.msra.mxu0 0.0
  %4004 = vmatprep.subr.mxu0 0.0
  %4005 = vmatpush2.msra.mxu0 0.0
  %4006 = vmatprep.subr.mxu0 0.0
  %4007 = vmatpush2.msra.mxu0 0.0
  %4008 = vmatprep.subr.mxu0 0.0
  %4009 = vmatpush2.msra.mxu0 0.0
  %4010 = vmatprep.subr.mxu0 0.0
  %4011 = vmatpush2.msra.mxu0 0.0
  %4012 = vmatprep.subr.mxu0 0.0
  %4013 = vmatpush2.msra.mxu0 0.0
  %4014 = vmatprep.subr.mxu0 0.0
  %4015 = vmatpush2.msra.mxu0 0.0
  %4016 = vmatprep.subr.mxu0 0.0
  %4017 = vmatpush2.msra.mxu0 0.0
  %4018 = vmatprep.subr.mxu0 0.0
  %4019 = vmatpush2.msra.mxu0 0.0
  %4020 = vmatprep.subr.mxu0 0.0
  %4021 = vmatpush2.msra.mxu0 0.0
  %4022 = vmatprep.subr.mxu0 0.0
  %4023 = vmatpush2.msra.mxu0 0.0
  %4024 = vmatprep.subr.mxu0 0.0
  %4025 = vmatpush2.msra.mxu0 0.0
  %4026 = vmatprep.subr.mxu0 0.0
  %4027 = vmatpush2.msra.mxu0 0.0
  %4028 = vmatprep.subr.mxu0 0.0
  %4029 = vmatpush2.msra.mxu0 0.0
  %4030 = vmatprep.mubr.f32.mxu0 0.0
  %4031 = vmatmul.mubr.f32.gmra.mxu0 %v3958
  %v4032 = vpop.f32.mrf.mxu0
  %v4033 = vadd.f32 %v3964, %v4032
  %v4034 = vpop.f32.mrf.mxu0
  %4035 = vmatprep.mubr.f32.mxu0 0.0
  %4036 = vmatmul.mubr.f32.gmra.mxu0 %v3959
  %v4037 = vpop.f32.mrf.mxu0
  %v4038 = vadd.f32 %v3964, %v4037
  %v4039 = vpop.f32.mrf.mxu0
  %4040 = vdwg.mxu0
  %v4041 = vadd.f32 %v3811, %v4033
  %v4042 = vadd.f32 %v3812, %v4038
  %v4043 = vld [vmem:[%s61] sm:$0xff]
  %v4044 = vld [vmem:[%s61 + $0x8] sm:$0xff]
  %v4045 = vld [vmem:[%s61 + $0x10] sm:$0xff]
  %v4046 = vld [vmem:[%s61 + $0x18] sm:$0xff]
  %v4047 = vld [vmem:[%s63] sm:$0x1]
  %v4048 = vld [vmem:[%s65] sm:$0xff]
  %v4049 = vld [vmem:[%s65 + $0x8] sm:$0xff]
  %v4050 = vld [vmem:[%s65 + $0x10] sm:$0xff]
  %v4051 = vld [vmem:[%s65 + $0x18] sm:$0xff]
  %v4052 = vld [vmem:[%s67] sm:$0x1]
  %v4054 = vlaneseq
  %v4055 = vshrl.u32 %v4054, 7
  %v4056 = vsub.s32 0, %v4055
  %v4057 = vrot.slane %v4047, %v4056
  %v4060 = vsel %vm394, %v4041, 0
  %v4063 = vsel %vm394, %v4042, 0
  %4065 = vmatprep.subr.mxu0 0.0
  %4066 = vmatpush1.msra.mxu0 0.0
  %4067 = vmatprep.subr.mxu0 0.0
  %4068 = vmatpush1.msra.mxu0 0.0
  %4069 = vmatprep.subr.mxu0 0.0
  %4070 = vmatpush1.msra.mxu0 0.0
  %4071 = vmatprep.subr.mxu0 0.0
  %4072 = vmatpush1.msra.mxu0 0.0
  %4073 = vmatprep.subr.mxu0 0.0
  %4074 = vmatpush1.msra.mxu0 0.0
  %4075 = vmatprep.subr.mxu0 0.0
  %4076 = vmatpush1.msra.mxu0 0.0
  %4077 = vmatprep.subr.mxu0 0.0
  %4078 = vmatpush1.msra.mxu0 0.0
  %4079 = vmatprep.subr.mxu0 0.0
  %4080 = vmatpush1.msra.mxu0 0.0
  %4081 = vmatprep.subr.mxu0 0.0
  %4082 = vmatpush1.msra.mxu0 0.0
  %4083 = vmatprep.subr.mxu0 0.0
  %4084 = vmatpush1.msra.mxu0 0.0
  %4085 = vmatprep.subr.mxu0 0.0
  %4086 = vmatpush1.msra.mxu0 0.0
  %4087 = vmatprep.subr.mxu0 0.0
  %4088 = vmatpush1.msra.mxu0 0.0
  %4089 = vmatprep.subr.mxu0 0.0
  %4090 = vmatpush1.msra.mxu0 %v4046
  %4091 = vmatprep.subr.mxu0 0.0
  %4092 = vmatpush1.msra.mxu0 %v4045
  %4093 = vmatprep.subr.mxu0 0.0
  %4094 = vmatpush1.msra.mxu0 %v4044
  %4095 = vmatprep.subr.mxu0 0.0
  %4096 = vmatpush1.msra.mxu0 %v4043
  %4097 = vmatprep.subr.mxu0 0.0
  %4098 = vmatpush2.msra.mxu0 0.0
  %4099 = vmatprep.subr.mxu0 0.0
  %4100 = vmatpush2.msra.mxu0 0.0
  %4101 = vmatprep.subr.mxu0 0.0
  %4102 = vmatpush2.msra.mxu0 0.0
  %4103 = vmatprep.subr.mxu0 0.0
  %4104 = vmatpush2.msra.mxu0 0.0
  %4105 = vmatprep.subr.mxu0 0.0
  %4106 = vmatpush2.msra.mxu0 0.0
  %4107 = vmatprep.subr.mxu0 0.0
  %4108 = vmatpush2.msra.mxu0 0.0
  %4109 = vmatprep.subr.mxu0 0.0
  %4110 = vmatpush2.msra.mxu0 0.0
  %4111 = vmatprep.subr.mxu0 0.0
  %4112 = vmatpush2.msra.mxu0 0.0
  %4113 = vmatprep.subr.mxu0 0.0
  %4114 = vmatpush2.msra.mxu0 0.0
  %4115 = vmatprep.subr.mxu0 0.0
  %4116 = vmatpush2.msra.mxu0 0.0
  %4117 = vmatprep.subr.mxu0 0.0
  %4118 = vmatpush2.msra.mxu0 0.0
  %4119 = vmatprep.subr.mxu0 0.0
  %4120 = vmatpush2.msra.mxu0 0.0
  %4121 = vmatprep.subr.mxu0 0.0
  %4122 = vmatpush2.msra.mxu0 0.0
  %4123 = vmatprep.subr.mxu0 0.0
  %4124 = vmatpush2.msra.mxu0 0.0
  %4125 = vmatprep.subr.mxu0 0.0
  %4126 = vmatpush2.msra.mxu0 0.0
  %4127 = vmatprep.subr.mxu0 0.0
  %4128 = vmatpush2.msra.mxu0 0.0
  %4129 = vmatprep.mubr.f32.mxu0 0.0
  %4130 = vmatmul.mubr.f32.gmra.mxu0 %v4060
  %v4131 = vpop.f32.mrf.mxu0
  %v4132 = vadd.f32 %v4057, %v4131
  %v4133 = vpop.f32.mrf.mxu0
  %4134 = vmatprep.mubr.f32.mxu0 0.0
  %4135 = vmatmul.mubr.f32.gmra.mxu0 %v4063
  %v4136 = vpop.f32.mrf.mxu0
  %v4137 = vadd.f32 %v4057, %v4136
  %v4138 = vpop.f32.mrf.mxu0
  %4139 = vdwg.mxu0
  %4141 = vrot.lane.b32.xlu0 %v4132, 120
  %v4142 = vpop.permute.xlu0 %4141
  %4143 = vrot.lane.b32.xlu0 %v4132, 112
  %v4144 = vpop.permute.xlu0 %4143
  %4145 = vrot.lane.b32.xlu0 %v4132, 104
  %v4146 = vpop.permute.xlu0 %4145
  %4148 = vrot.lane.b32.xlu0 %v4137, 120
  %v4149 = vpop.permute.xlu0 %4148
  %4150 = vrot.lane.b32.xlu0 %v4137, 112
  %v4151 = vpop.permute.xlu0 %4150
  %4152 = vrot.lane.b32.xlu0 %v4137, 104
  %v4153 = vpop.permute.xlu0 %4152
  %4154 = vrot.lane.b32.xlu0 %v4132, 96
  %v4155 = vpop.permute.xlu0 %4154
  %v4156 = vsel %vm541, %v4132, 0
  %v4158 = vsel %vm541, %v4155, 0
  %4160 = vmatprep.subr.mxu0 0.0
  %4161 = vmatpush1.xpose.msra.mxu0 0.0
  %4162 = vmatprep.subr.mxu0 0.0
  %4163 = vmatpush1.xpose.msra.mxu0 0.0
  %4164 = vmatprep.subr.mxu0 0.0
  %4165 = vmatpush1.xpose.msra.mxu0 0.0
  %4166 = vmatprep.subr.mxu0 0.0
  %4167 = vmatpush1.xpose.msra.mxu0 0.0
  %4168 = vmatprep.subr.mxu0 0.0
  %4169 = vmatpush1.xpose.msra.mxu0 0.0
  %4170 = vmatprep.subr.mxu0 0.0
  %4171 = vmatpush1.xpose.msra.mxu0 0.0
  %4172 = vmatprep.subr.mxu0 0.0
  %4173 = vmatpush1.xpose.msra.mxu0 0.0
  %4174 = vmatprep.subr.mxu0 0.0
  %4175 = vmatpush1.xpose.msra.mxu0 0.0
  %4176 = vmatprep.subr.mxu0 0.0
  %4177 = vmatpush1.xpose.msra.mxu0 0.0
  %4178 = vmatprep.subr.mxu0 0.0
  %4179 = vmatpush1.xpose.msra.mxu0 0.0
  %4180 = vmatprep.subr.mxu0 0.0
  %4181 = vmatpush1.xpose.msra.mxu0 0.0
  %4182 = vmatprep.subr.mxu0 0.0
  %4183 = vmatpush1.xpose.msra.mxu0 0.0
  %4184 = vmatprep.subr.mxu0 0.0
  %4185 = vmatpush1.xpose.msra.mxu0 0.0
  %4186 = vmatprep.subr.mxu0 0.0
  %4187 = vmatpush1.xpose.msra.mxu0 0.0
  %4188 = vmatprep.subr.mxu0 0.0
  %4189 = vmatpush1.xpose.msra.mxu0 0.0
  %4190 = vmatprep.subr.mxu0 0.0
  %4191 = vmatpush1.xpose.msra.mxu0 %v4158
  %4192 = vmatprep.subr.mxu0 0.0
  %4193 = vmatpush2.xpose.msra.mxu0 0.0
  %4194 = vmatprep.subr.mxu0 0.0
  %4195 = vmatpush2.xpose.msra.mxu0 0.0
  %4196 = vmatprep.subr.mxu0 0.0
  %4197 = vmatpush2.xpose.msra.mxu0 0.0
  %4198 = vmatprep.subr.mxu0 0.0
  %4199 = vmatpush2.xpose.msra.mxu0 0.0
  %4200 = vmatprep.subr.mxu0 0.0
  %4201 = vmatpush2.xpose.msra.mxu0 0.0
  %4202 = vmatprep.subr.mxu0 0.0
  %4203 = vmatpush2.xpose.msra.mxu0 0.0
  %4204 = vmatprep.subr.mxu0 0.0
  %4205 = vmatpush2.xpose.msra.mxu0 0.0
  %4206 = vmatprep.subr.mxu0 0.0
  %4207 = vmatpush2.xpose.msra.mxu0 0.0
  %4208 = vmatprep.subr.mxu0 0.0
  %4209 = vmatpush2.xpose.msra.mxu0 0.0
  %4210 = vmatprep.subr.mxu0 0.0
  %4211 = vmatpush2.xpose.msra.mxu0 0.0
  %4212 = vmatprep.subr.mxu0 0.0
  %4213 = vmatpush2.xpose.msra.mxu0 0.0
  %4214 = vmatprep.subr.mxu0 0.0
  %4215 = vmatpush2.xpose.msra.mxu0 0.0
  %4216 = vmatprep.subr.mxu0 0.0
  %4217 = vmatpush2.xpose.msra.mxu0 0.0
  %4218 = vmatprep.subr.mxu0 0.0
  %4219 = vmatpush2.xpose.msra.mxu0 0.0
  %4220 = vmatprep.subr.mxu0 0.0
  %4221 = vmatpush2.xpose.msra.mxu0 0.0
  %4222 = vmatprep.subr.mxu0 0.0
  %4223 = vmatpush2.xpose.msra.mxu0 0.0
  %4224 = vmatprep.mubr.f32.mxu0 0.0
  %4225 = vmatmul.mubr.f32.gmra.mxu0 %v4156
  %v4226 = vpop.f32.mrf.mxu0
  %v4227 = vadd.f32 0.0, %v4226
  %v4228 = vpop.f32.mrf.mxu0
  %4229 = vdwg.mxu0
  %4230 = vrot.lane.b32.xlu0 %v4142, 96
  %v4231 = vpop.permute.xlu0 %4230
  %v4232 = vsel %vm541, %v4142, 0
  %v4234 = vsel %vm541, %v4231, 0
  %4236 = vmatprep.subr.mxu0 0.0
  %4237 = vmatpush1.xpose.msra.mxu0 0.0
  %4238 = vmatprep.subr.mxu0 0.0
  %4239 = vmatpush1.xpose.msra.mxu0 0.0
  %4240 = vmatprep.subr.mxu0 0.0
  %4241 = vmatpush1.xpose.msra.mxu0 0.0
  %4242 = vmatprep.subr.mxu0 0.0
  %4243 = vmatpush1.xpose.msra.mxu0 0.0
  %4244 = vmatprep.subr.mxu0 0.0
  %4245 = vmatpush1.xpose.msra.mxu0 0.0
  %4246 = vmatprep.subr.mxu0 0.0
  %4247 = vmatpush1.xpose.msra.mxu0 0.0
  %4248 = vmatprep.subr.mxu0 0.0
  %4249 = vmatpush1.xpose.msra.mxu0 0.0
  %4250 = vmatprep.subr.mxu0 0.0
  %4251 = vmatpush1.xpose.msra.mxu0 0.0
  %4252 = vmatprep.subr.mxu0 0.0
  %4253 = vmatpush1.xpose.msra.mxu0 0.0
  %4254 = vmatprep.subr.mxu0 0.0
  %4255 = vmatpush1.xpose.msra.mxu0 0.0
  %4256 = vmatprep.subr.mxu0 0.0
  %4257 = vmatpush1.xpose.msra.mxu0 0.0
  %4258 = vmatprep.subr.mxu0 0.0
  %4259 = vmatpush1.xpose.msra.mxu0 0.0
  %4260 = vmatprep.subr.mxu0 0.0
  %4261 = vmatpush1.xpose.msra.mxu0 0.0
  %4262 = vmatprep.subr.mxu0 0.0
  %4263 = vmatpush1.xpose.msra.mxu0 0.0
  %4264 = vmatprep.subr.mxu0 0.0
  %4265 = vmatpush1.xpose.msra.mxu0 0.0
  %4266 = vmatprep.subr.mxu0 0.0
  %4267 = vmatpush1.xpose.msra.mxu0 %v4234
  %4268 = vmatprep.subr.mxu0 0.0
  %4269 = vmatpush2.xpose.msra.mxu0 0.0
  %4270 = vmatprep.subr.mxu0 0.0
  %4271 = vmatpush2.xpose.msra.mxu0 0.0
  %4272 = vmatprep.subr.mxu0 0.0
  %4273 = vmatpush2.xpose.msra.mxu0 0.0
  %4274 = vmatprep.subr.mxu0 0.0
  %4275 = vmatpush2.xpose.msra.mxu0 0.0
  %4276 = vmatprep.subr.mxu0 0.0
  %4277 = vmatpush2.xpose.msra.mxu0 0.0
  %4278 = vmatprep.subr.mxu0 0.0
  %4279 = vmatpush2.xpose.msra.mxu0 0.0
  %4280 = vmatprep.subr.mxu0 0.0
  %4281 = vmatpush2.xpose.msra.mxu0 0.0
  %4282 = vmatprep.subr.mxu0 0.0
  %4283 = vmatpush2.xpose.msra.mxu0 0.0
  %4284 = vmatprep.subr.mxu0 0.0
  %4285 = vmatpush2.xpose.msra.mxu0 0.0
  %4286 = vmatprep.subr.mxu0 0.0
  %4287 = vmatpush2.xpose.msra.mxu0 0.0
  %4288 = vmatprep.subr.mxu0 0.0
  %4289 = vmatpush2.xpose.msra.mxu0 0.0
  %4290 = vmatprep.subr.mxu0 0.0
  %4291 = vmatpush2.xpose.msra.mxu0 0.0
  %4292 = vmatprep.subr.mxu0 0.0
  %4293 = vmatpush2.xpose.msra.mxu0 0.0
  %4294 = vmatprep.subr.mxu0 0.0
  %4295 = vmatpush2.xpose.msra.mxu0 0.0
  %4296 = vmatprep.subr.mxu0 0.0
  %4297 = vmatpush2.xpose.msra.mxu0 0.0
  %4298 = vmatprep.subr.mxu0 0.0
  %4299 = vmatpush2.xpose.msra.mxu0 0.0
  %4300 = vmatprep.mubr.f32.mxu0 0.0
  %4301 = vmatmul.mubr.f32.gmra.mxu0 %v4232
  %v4302 = vpop.f32.mrf.mxu0
  %v4303 = vadd.f32 0.0, %v4302
  %v4304 = vpop.f32.mrf.mxu0
  %4305 = vdwg.mxu0
  %4306 = vrot.lane.b32.xlu0 %v4144, 96
  %v4307 = vpop.permute.xlu0 %4306
  %v4308 = vsel %vm541, %v4144, 0
  %v4310 = vsel %vm541, %v4307, 0
  %4312 = vmatprep.subr.mxu0 0.0
  %4313 = vmatpush1.xpose.msra.mxu0 0.0
  %4314 = vmatprep.subr.mxu0 0.0
  %4315 = vmatpush1.xpose.msra.mxu0 0.0
  %4316 = vmatprep.subr.mxu0 0.0
  %4317 = vmatpush1.xpose.msra.mxu0 0.0
  %4318 = vmatprep.subr.mxu0 0.0
  %4319 = vmatpush1.xpose.msra.mxu0 0.0
  %4320 = vmatprep.subr.mxu0 0.0
  %4321 = vmatpush1.xpose.msra.mxu0 0.0
  %4322 = vmatprep.subr.mxu0 0.0
  %4323 = vmatpush1.xpose.msra.mxu0 0.0
  %4324 = vmatprep.subr.mxu0 0.0
  %4325 = vmatpush1.xpose.msra.mxu0 0.0
  %4326 = vmatprep.subr.mxu0 0.0
  %4327 = vmatpush1.xpose.msra.mxu0 0.0
  %4328 = vmatprep.subr.mxu0 0.0
  %4329 = vmatpush1.xpose.msra.mxu0 0.0
  %4330 = vmatprep.subr.mxu0 0.0
  %4331 = vmatpush1.xpose.msra.mxu0 0.0
  %4332 = vmatprep.subr.mxu0 0.0
  %4333 = vmatpush1.xpose.msra.mxu0 0.0
  %4334 = vmatprep.subr.mxu0 0.0
  %4335 = vmatpush1.xpose.msra.mxu0 0.0
  %4336 = vmatprep.subr.mxu0 0.0
  %4337 = vmatpush1.xpose.msra.mxu0 0.0
  %4338 = vmatprep.subr.mxu0 0.0
  %4339 = vmatpush1.xpose.msra.mxu0 0.0
  %4340 = vmatprep.subr.mxu0 0.0
  %4341 = vmatpush1.xpose.msra.mxu0 0.0
  %4342 = vmatprep.subr.mxu0 0.0
  %4343 = vmatpush1.xpose.msra.mxu0 %v4310
  %4344 = vmatprep.subr.mxu0 0.0
  %4345 = vmatpush2.xpose.msra.mxu0 0.0
  %4346 = vmatprep.subr.mxu0 0.0
  %4347 = vmatpush2.xpose.msra.mxu0 0.0
  %4348 = vmatprep.subr.mxu0 0.0
  %4349 = vmatpush2.xpose.msra.mxu0 0.0
  %4350 = vmatprep.subr.mxu0 0.0
  %4351 = vmatpush2.xpose.msra.mxu0 0.0
  %4352 = vmatprep.subr.mxu0 0.0
  %4353 = vmatpush2.xpose.msra.mxu0 0.0
  %4354 = vmatprep.subr.mxu0 0.0
  %4355 = vmatpush2.xpose.msra.mxu0 0.0
  %4356 = vmatprep.subr.mxu0 0.0
  %4357 = vmatpush2.xpose.msra.mxu0 0.0
  %4358 = vmatprep.subr.mxu0 0.0
  %4359 = vmatpush2.xpose.msra.mxu0 0.0
  %4360 = vmatprep.subr.mxu0 0.0
  %4361 = vmatpush2.xpose.msra.mxu0 0.0
  %4362 = vmatprep.subr.mxu0 0.0
  %4363 = vmatpush2.xpose.msra.mxu0 0.0
  %4364 = vmatprep.subr.mxu0 0.0
  %4365 = vmatpush2.xpose.msra.mxu0 0.0
  %4366 = vmatprep.subr.mxu0 0.0
  %4367 = vmatpush2.xpose.msra.mxu0 0.0
  %4368 = vmatprep.subr.mxu0 0.0
  %4369 = vmatpush2.xpose.msra.mxu0 0.0
  %4370 = vmatprep.subr.mxu0 0.0
  %4371 = vmatpush2.xpose.msra.mxu0 0.0
  %4372 = vmatprep.subr.mxu0 0.0
  %4373 = vmatpush2.xpose.msra.mxu0 0.0
  %4374 = vmatprep.subr.mxu0 0.0
  %4375 = vmatpush2.xpose.msra.mxu0 0.0
  %4376 = vmatprep.mubr.f32.mxu0 0.0
  %4377 = vmatmul.mubr.f32.gmra.mxu0 %v4308
  %v4378 = vpop.f32.mrf.mxu0
  %v4379 = vadd.f32 0.0, %v4378
  %v4380 = vpop.f32.mrf.mxu0
  %4381 = vdwg.mxu0
  %4382 = vrot.lane.b32.xlu0 %v4146, 96
  %v4383 = vpop.permute.xlu0 %4382
  %v4384 = vsel %vm541, %v4146, 0
  %v4386 = vsel %vm541, %v4383, 0
  %4388 = vmatprep.subr.mxu0 0.0
  %4389 = vmatpush1.xpose.msra.mxu0 0.0
  %4390 = vmatprep.subr.mxu0 0.0
  %4391 = vmatpush1.xpose.msra.mxu0 0.0
  %4392 = vmatprep.subr.mxu0 0.0
  %4393 = vmatpush1.xpose.msra.mxu0 0.0
  %4394 = vmatprep.subr.mxu0 0.0
  %4395 = vmatpush1.xpose.msra.mxu0 0.0
  %4396 = vmatprep.subr.mxu0 0.0
  %4397 = vmatpush1.xpose.msra.mxu0 0.0
  %4398 = vmatprep.subr.mxu0 0.0
  %4399 = vmatpush1.xpose.msra.mxu0 0.0
  %4400 = vmatprep.subr.mxu0 0.0
  %4401 = vmatpush1.xpose.msra.mxu0 0.0
  %4402 = vmatprep.subr.mxu0 0.0
  %4403 = vmatpush1.xpose.msra.mxu0 0.0
  %4404 = vmatprep.subr.mxu0 0.0
  %4405 = vmatpush1.xpose.msra.mxu0 0.0
  %4406 = vmatprep.subr.mxu0 0.0
  %4407 = vmatpush1.xpose.msra.mxu0 0.0
  %4408 = vmatprep.subr.mxu0 0.0
  %4409 = vmatpush1.xpose.msra.mxu0 0.0
  %4410 = vmatprep.subr.mxu0 0.0
  %4411 = vmatpush1.xpose.msra.mxu0 0.0
  %4412 = vmatprep.subr.mxu0 0.0
  %4413 = vmatpush1.xpose.msra.mxu0 0.0
  %4414 = vmatprep.subr.mxu0 0.0
  %4415 = vmatpush1.xpose.msra.mxu0 0.0
  %4416 = vmatprep.subr.mxu0 0.0
  %4417 = vmatpush1.xpose.msra.mxu0 0.0
  %4418 = vmatprep.subr.mxu0 0.0
  %4419 = vmatpush1.xpose.msra.mxu0 %v4386
  %4420 = vmatprep.subr.mxu0 0.0
  %4421 = vmatpush2.xpose.msra.mxu0 0.0
  %4422 = vmatprep.subr.mxu0 0.0
  %4423 = vmatpush2.xpose.msra.mxu0 0.0
  %4424 = vmatprep.subr.mxu0 0.0
  %4425 = vmatpush2.xpose.msra.mxu0 0.0
  %4426 = vmatprep.subr.mxu0 0.0
  %4427 = vmatpush2.xpose.msra.mxu0 0.0
  %4428 = vmatprep.subr.mxu0 0.0
  %4429 = vmatpush2.xpose.msra.mxu0 0.0
  %4430 = vmatprep.subr.mxu0 0.0
  %4431 = vmatpush2.xpose.msra.mxu0 0.0
  %4432 = vmatprep.subr.mxu0 0.0
  %4433 = vmatpush2.xpose.msra.mxu0 0.0
  %4434 = vmatprep.subr.mxu0 0.0
  %4435 = vmatpush2.xpose.msra.mxu0 0.0
  %4436 = vmatprep.subr.mxu0 0.0
  %4437 = vmatpush2.xpose.msra.mxu0 0.0
  %4438 = vmatprep.subr.mxu0 0.0
  %4439 = vmatpush2.xpose.msra.mxu0 0.0
  %4440 = vmatprep.subr.mxu0 0.0
  %4441 = vmatpush2.xpose.msra.mxu0 0.0
  %4442 = vmatprep.subr.mxu0 0.0
  %4443 = vmatpush2.xpose.msra.mxu0 0.0
  %4444 = vmatprep.subr.mxu0 0.0
  %4445 = vmatpush2.xpose.msra.mxu0 0.0
  %4446 = vmatprep.subr.mxu0 0.0
  %4447 = vmatpush2.xpose.msra.mxu0 0.0
  %4448 = vmatprep.subr.mxu0 0.0
  %4449 = vmatpush2.xpose.msra.mxu0 0.0
  %4450 = vmatprep.subr.mxu0 0.0
  %4451 = vmatpush2.xpose.msra.mxu0 0.0
  %4452 = vmatprep.mubr.f32.mxu0 0.0
  %4453 = vmatmul.mubr.f32.gmra.mxu0 %v4384
  %v4454 = vpop.f32.mrf.mxu0
  %v4455 = vadd.f32 0.0, %v4454
  %v4456 = vpop.f32.mrf.mxu0
  %4457 = vdwg.mxu0
  %4458 = vrot.lane.b32.xlu0 %v4137, 96
  %v4459 = vpop.permute.xlu0 %4458
  %v4460 = vsel %vm541, %v4137, 0
  %v4462 = vsel %vm541, %v4459, 0
  %4464 = vmatprep.subr.mxu0 0.0
  %4465 = vmatpush1.xpose.msra.mxu0 0.0
  %4466 = vmatprep.subr.mxu0 0.0
  %4467 = vmatpush1.xpose.msra.mxu0 0.0
  %4468 = vmatprep.subr.mxu0 0.0
  %4469 = vmatpush1.xpose.msra.mxu0 0.0
  %4470 = vmatprep.subr.mxu0 0.0
  %4471 = vmatpush1.xpose.msra.mxu0 0.0
  %4472 = vmatprep.subr.mxu0 0.0
  %4473 = vmatpush1.xpose.msra.mxu0 0.0
  %4474 = vmatprep.subr.mxu0 0.0
  %4475 = vmatpush1.xpose.msra.mxu0 0.0
  %4476 = vmatprep.subr.mxu0 0.0
  %4477 = vmatpush1.xpose.msra.mxu0 0.0
  %4478 = vmatprep.subr.mxu0 0.0
  %4479 = vmatpush1.xpose.msra.mxu0 0.0
  %4480 = vmatprep.subr.mxu0 0.0
  %4481 = vmatpush1.xpose.msra.mxu0 0.0
  %4482 = vmatprep.subr.mxu0 0.0
  %4483 = vmatpush1.xpose.msra.mxu0 0.0
  %4484 = vmatprep.subr.mxu0 0.0
  %4485 = vmatpush1.xpose.msra.mxu0 0.0
  %4486 = vmatprep.subr.mxu0 0.0
  %4487 = vmatpush1.xpose.msra.mxu0 0.0
  %4488 = vmatprep.subr.mxu0 0.0
  %4489 = vmatpush1.xpose.msra.mxu0 0.0
  %4490 = vmatprep.subr.mxu0 0.0
  %4491 = vmatpush1.xpose.msra.mxu0 0.0
  %4492 = vmatprep.subr.mxu0 0.0
  %4493 = vmatpush1.xpose.msra.mxu0 0.0
  %4494 = vmatprep.subr.mxu0 0.0
  %4495 = vmatpush1.xpose.msra.mxu0 %v4462
  %4496 = vmatprep.subr.mxu0 0.0
  %4497 = vmatpush2.xpose.msra.mxu0 0.0
  %4498 = vmatprep.subr.mxu0 0.0
  %4499 = vmatpush2.xpose.msra.mxu0 0.0
  %4500 = vmatprep.subr.mxu0 0.0
  %4501 = vmatpush2.xpose.msra.mxu0 0.0
  %4502 = vmatprep.subr.mxu0 0.0
  %4503 = vmatpush2.xpose.msra.mxu0 0.0
  %4504 = vmatprep.subr.mxu0 0.0
  %4505 = vmatpush2.xpose.msra.mxu0 0.0
  %4506 = vmatprep.subr.mxu0 0.0
  %4507 = vmatpush2.xpose.msra.mxu0 0.0
  %4508 = vmatprep.subr.mxu0 0.0
  %4509 = vmatpush2.xpose.msra.mxu0 0.0
  %4510 = vmatprep.subr.mxu0 0.0
  %4511 = vmatpush2.xpose.msra.mxu0 0.0
  %4512 = vmatprep.subr.mxu0 0.0
  %4513 = vmatpush2.xpose.msra.mxu0 0.0
  %4514 = vmatprep.subr.mxu0 0.0
  %4515 = vmatpush2.xpose.msra.mxu0 0.0
  %4516 = vmatprep.subr.mxu0 0.0
  %4517 = vmatpush2.xpose.msra.mxu0 0.0
  %4518 = vmatprep.subr.mxu0 0.0
  %4519 = vmatpush2.xpose.msra.mxu0 0.0
  %4520 = vmatprep.subr.mxu0 0.0
  %4521 = vmatpush2.xpose.msra.mxu0 0.0
  %4522 = vmatprep.subr.mxu0 0.0
  %4523 = vmatpush2.xpose.msra.mxu0 0.0
  %4524 = vmatprep.subr.mxu0 0.0
  %4525 = vmatpush2.xpose.msra.mxu0 0.0
  %4526 = vmatprep.subr.mxu0 0.0
  %4527 = vmatpush2.xpose.msra.mxu0 0.0
  %4528 = vmatprep.mubr.f32.mxu0 0.0
  %4529 = vmatmul.mubr.f32.gmra.mxu0 %v4460
  %v4530 = vpop.f32.mrf.mxu0
  %v4531 = vadd.f32 0.0, %v4530
  %v4532 = vpop.f32.mrf.mxu0
  %4533 = vdwg.mxu0
  %4534 = vrot.lane.b32.xlu0 %v4149, 96
  %v4535 = vpop.permute.xlu0 %4534
  %v4536 = vsel %vm541, %v4149, 0
  %v4538 = vsel %vm541, %v4535, 0
  %4540 = vmatprep.subr.mxu0 0.0
  %4541 = vmatpush1.xpose.msra.mxu0 0.0
  %4542 = vmatprep.subr.mxu0 0.0
  %4543 = vmatpush1.xpose.msra.mxu0 0.0
  %4544 = vmatprep.subr.mxu0 0.0
  %4545 = vmatpush1.xpose.msra.mxu0 0.0
  %4546 = vmatprep.subr.mxu0 0.0
  %4547 = vmatpush1.xpose.msra.mxu0 0.0
  %4548 = vmatprep.subr.mxu0 0.0
  %4549 = vmatpush1.xpose.msra.mxu0 0.0
  %4550 = vmatprep.subr.mxu0 0.0
  %4551 = vmatpush1.xpose.msra.mxu0 0.0
  %4552 = vmatprep.subr.mxu0 0.0
  %4553 = vmatpush1.xpose.msra.mxu0 0.0
  %4554 = vmatprep.subr.mxu0 0.0
  %4555 = vmatpush1.xpose.msra.mxu0 0.0
  %4556 = vmatprep.subr.mxu0 0.0
  %4557 = vmatpush1.xpose.msra.mxu0 0.0
  %4558 = vmatprep.subr.mxu0 0.0
  %4559 = vmatpush1.xpose.msra.mxu0 0.0
  %4560 = vmatprep.subr.mxu0 0.0
  %4561 = vmatpush1.xpose.msra.mxu0 0.0
  %4562 = vmatprep.subr.mxu0 0.0
  %4563 = vmatpush1.xpose.msra.mxu0 0.0
  %4564 = vmatprep.subr.mxu0 0.0
  %4565 = vmatpush1.xpose.msra.mxu0 0.0
  %4566 = vmatprep.subr.mxu0 0.0
  %4567 = vmatpush1.xpose.msra.mxu0 0.0
  %4568 = vmatprep.subr.mxu0 0.0
  %4569 = vmatpush1.xpose.msra.mxu0 0.0
  %4570 = vmatprep.subr.mxu0 0.0
  %4571 = vmatpush1.xpose.msra.mxu0 %v4538
  %4572 = vmatprep.subr.mxu0 0.0
  %4573 = vmatpush2.xpose.msra.mxu0 0.0
  %4574 = vmatprep.subr.mxu0 0.0
  %4575 = vmatpush2.xpose.msra.mxu0 0.0
  %4576 = vmatprep.subr.mxu0 0.0
  %4577 = vmatpush2.xpose.msra.mxu0 0.0
  %4578 = vmatprep.subr.mxu0 0.0
  %4579 = vmatpush2.xpose.msra.mxu0 0.0
  %4580 = vmatprep.subr.mxu0 0.0
  %4581 = vmatpush2.xpose.msra.mxu0 0.0
  %4582 = vmatprep.subr.mxu0 0.0
  %4583 = vmatpush2.xpose.msra.mxu0 0.0
  %4584 = vmatprep.subr.mxu0 0.0
  %4585 = vmatpush2.xpose.msra.mxu0 0.0
  %4586 = vmatprep.subr.mxu0 0.0
  %4587 = vmatpush2.xpose.msra.mxu0 0.0
  %4588 = vmatprep.subr.mxu0 0.0
  %4589 = vmatpush2.xpose.msra.mxu0 0.0
  %4590 = vmatprep.subr.mxu0 0.0
  %4591 = vmatpush2.xpose.msra.mxu0 0.0
  %4592 = vmatprep.subr.mxu0 0.0
  %4593 = vmatpush2.xpose.msra.mxu0 0.0
  %4594 = vmatprep.subr.mxu0 0.0
  %4595 = vmatpush2.xpose.msra.mxu0 0.0
  %4596 = vmatprep.subr.mxu0 0.0
  %4597 = vmatpush2.xpose.msra.mxu0 0.0
  %4598 = vmatprep.subr.mxu0 0.0
  %4599 = vmatpush2.xpose.msra.mxu0 0.0
  %4600 = vmatprep.subr.mxu0 0.0
  %4601 = vmatpush2.xpose.msra.mxu0 0.0
  %4602 = vmatprep.subr.mxu0 0.0
  %4603 = vmatpush2.xpose.msra.mxu0 0.0
  %4604 = vmatprep.mubr.f32.mxu0 0.0
  %4605 = vmatmul.mubr.f32.gmra.mxu0 %v4536
  %v4606 = vpop.f32.mrf.mxu0
  %v4607 = vadd.f32 0.0, %v4606
  %v4608 = vpop.f32.mrf.mxu0
  %4609 = vdwg.mxu0
  %4610 = vrot.lane.b32.xlu0 %v4151, 96
  %v4611 = vpop.permute.xlu0 %4610
  %v4612 = vsel %vm541, %v4151, 0
  %v4614 = vsel %vm541, %v4611, 0
  %4616 = vmatprep.subr.mxu0 0.0
  %4617 = vmatpush1.xpose.msra.mxu0 0.0
  %4618 = vmatprep.subr.mxu0 0.0
  %4619 = vmatpush1.xpose.msra.mxu0 0.0
  %4620 = vmatprep.subr.mxu0 0.0
  %4621 = vmatpush1.xpose.msra.mxu0 0.0
  %4622 = vmatprep.subr.mxu0 0.0
  %4623 = vmatpush1.xpose.msra.mxu0 0.0
  %4624 = vmatprep.subr.mxu0 0.0
  %4625 = vmatpush1.xpose.msra.mxu0 0.0
  %4626 = vmatprep.subr.mxu0 0.0
  %4627 = vmatpush1.xpose.msra.mxu0 0.0
  %4628 = vmatprep.subr.mxu0 0.0
  %4629 = vmatpush1.xpose.msra.mxu0 0.0
  %4630 = vmatprep.subr.mxu0 0.0
  %4631 = vmatpush1.xpose.msra.mxu0 0.0
  %4632 = vmatprep.subr.mxu0 0.0
  %4633 = vmatpush1.xpose.msra.mxu0 0.0
  %4634 = vmatprep.subr.mxu0 0.0
  %4635 = vmatpush1.xpose.msra.mxu0 0.0
  %4636 = vmatprep.subr.mxu0 0.0
  %4637 = vmatpush1.xpose.msra.mxu0 0.0
  %4638 = vmatprep.subr.mxu0 0.0
  %4639 = vmatpush1.xpose.msra.mxu0 0.0
  %4640 = vmatprep.subr.mxu0 0.0
  %4641 = vmatpush1.xpose.msra.mxu0 0.0
  %4642 = vmatprep.subr.mxu0 0.0
  %4643 = vmatpush1.xpose.msra.mxu0 0.0
  %4644 = vmatprep.subr.mxu0 0.0
  %4645 = vmatpush1.xpose.msra.mxu0 0.0
  %4646 = vmatprep.subr.mxu0 0.0
  %4647 = vmatpush1.xpose.msra.mxu0 %v4614
  %4648 = vmatprep.subr.mxu0 0.0
  %4649 = vmatpush2.xpose.msra.mxu0 0.0
  %4650 = vmatprep.subr.mxu0 0.0
  %4651 = vmatpush2.xpose.msra.mxu0 0.0
  %4652 = vmatprep.subr.mxu0 0.0
  %4653 = vmatpush2.xpose.msra.mxu0 0.0
  %4654 = vmatprep.subr.mxu0 0.0
  %4655 = vmatpush2.xpose.msra.mxu0 0.0
  %4656 = vmatprep.subr.mxu0 0.0
  %4657 = vmatpush2.xpose.msra.mxu0 0.0
  %4658 = vmatprep.subr.mxu0 0.0
  %4659 = vmatpush2.xpose.msra.mxu0 0.0
  %4660 = vmatprep.subr.mxu0 0.0
  %4661 = vmatpush2.xpose.msra.mxu0 0.0
  %4662 = vmatprep.subr.mxu0 0.0
  %4663 = vmatpush2.xpose.msra.mxu0 0.0
  %4664 = vmatprep.subr.mxu0 0.0
  %4665 = vmatpush2.xpose.msra.mxu0 0.0
  %4666 = vmatprep.subr.mxu0 0.0
  %4667 = vmatpush2.xpose.msra.mxu0 0.0
  %4668 = vmatprep.subr.mxu0 0.0
  %4669 = vmatpush2.xpose.msra.mxu0 0.0
  %4670 = vmatprep.subr.mxu0 0.0
  %4671 = vmatpush2.xpose.msra.mxu0 0.0
  %4672 = vmatprep.subr.mxu0 0.0
  %4673 = vmatpush2.xpose.msra.mxu0 0.0
  %4674 = vmatprep.subr.mxu0 0.0
  %4675 = vmatpush2.xpose.msra.mxu0 0.0
  %4676 = vmatprep.subr.mxu0 0.0
  %4677 = vmatpush2.xpose.msra.mxu0 0.0
  %4678 = vmatprep.subr.mxu0 0.0
  %4679 = vmatpush2.xpose.msra.mxu0 0.0
  %4680 = vmatprep.mubr.f32.mxu0 0.0
  %4681 = vmatmul.mubr.f32.gmra.mxu0 %v4612
  %v4682 = vpop.f32.mrf.mxu0
  %v4683 = vadd.f32 0.0, %v4682
  %v4684 = vpop.f32.mrf.mxu0
  %4685 = vdwg.mxu0
  %4686 = vrot.lane.b32.xlu0 %v4153, 96
  %v4687 = vpop.permute.xlu0 %4686
  %v4688 = vsel %vm541, %v4153, 0
  %v4690 = vsel %vm541, %v4687, 0
  %4692 = vmatprep.subr.mxu0 0.0
  %4693 = vmatpush1.xpose.msra.mxu0 0.0
  %4694 = vmatprep.subr.mxu0 0.0
  %4695 = vmatpush1.xpose.msra.mxu0 0.0
  %4696 = vmatprep.subr.mxu0 0.0
  %4697 = vmatpush1.xpose.msra.mxu0 0.0
  %4698 = vmatprep.subr.mxu0 0.0
  %4699 = vmatpush1.xpose.msra.mxu0 0.0
  %4700 = vmatprep.subr.mxu0 0.0
  %4701 = vmatpush1.xpose.msra.mxu0 0.0
  %4702 = vmatprep.subr.mxu0 0.0
  %4703 = vmatpush1.xpose.msra.mxu0 0.0
  %4704 = vmatprep.subr.mxu0 0.0
  %4705 = vmatpush1.xpose.msra.mxu0 0.0
  %4706 = vmatprep.subr.mxu0 0.0
  %4707 = vmatpush1.xpose.msra.mxu0 0.0
  %4708 = vmatprep.subr.mxu0 0.0
  %4709 = vmatpush1.xpose.msra.mxu0 0.0
  %4710 = vmatprep.subr.mxu0 0.0
  %4711 = vmatpush1.xpose.msra.mxu0 0.0
  %4712 = vmatprep.subr.mxu0 0.0
  %4713 = vmatpush1.xpose.msra.mxu0 0.0
  %4714 = vmatprep.subr.mxu0 0.0
  %4715 = vmatpush1.xpose.msra.mxu0 0.0
  %4716 = vmatprep.subr.mxu0 0.0
  %4717 = vmatpush1.xpose.msra.mxu0 0.0
  %4718 = vmatprep.subr.mxu0 0.0
  %4719 = vmatpush1.xpose.msra.mxu0 0.0
  %4720 = vmatprep.subr.mxu0 0.0
  %4721 = vmatpush1.xpose.msra.mxu0 0.0
  %4722 = vmatprep.subr.mxu0 0.0
  %4723 = vmatpush1.xpose.msra.mxu0 %v4690
  %4724 = vmatprep.subr.mxu0 0.0
  %4725 = vmatpush2.xpose.msra.mxu0 0.0
  %4726 = vmatprep.subr.mxu0 0.0
  %4727 = vmatpush2.xpose.msra.mxu0 0.0
  %4728 = vmatprep.subr.mxu0 0.0
  %4729 = vmatpush2.xpose.msra.mxu0 0.0
  %4730 = vmatprep.subr.mxu0 0.0
  %4731 = vmatpush2.xpose.msra.mxu0 0.0
  %4732 = vmatprep.subr.mxu0 0.0
  %4733 = vmatpush2.xpose.msra.mxu0 0.0
  %4734 = vmatprep.subr.mxu0 0.0
  %4735 = vmatpush2.xpose.msra.mxu0 0.0
  %4736 = vmatprep.subr.mxu0 0.0
  %4737 = vmatpush2.xpose.msra.mxu0 0.0
  %4738 = vmatprep.subr.mxu0 0.0
  %4739 = vmatpush2.xpose.msra.mxu0 0.0
  %4740 = vmatprep.subr.mxu0 0.0
  %4741 = vmatpush2.xpose.msra.mxu0 0.0
  %4742 = vmatprep.subr.mxu0 0.0
  %4743 = vmatpush2.xpose.msra.mxu0 0.0
  %4744 = vmatprep.subr.mxu0 0.0
  %4745 = vmatpush2.xpose.msra.mxu0 0.0
  %4746 = vmatprep.subr.mxu0 0.0
  %4747 = vmatpush2.xpose.msra.mxu0 0.0
  %4748 = vmatprep.subr.mxu0 0.0
  %4749 = vmatpush2.xpose.msra.mxu0 0.0
  %4750 = vmatprep.subr.mxu0 0.0
  %4751 = vmatpush2.xpose.msra.mxu0 0.0
  %4752 = vmatprep.subr.mxu0 0.0
  %4753 = vmatpush2.xpose.msra.mxu0 0.0
  %4754 = vmatprep.subr.mxu0 0.0
  %4755 = vmatpush2.xpose.msra.mxu0 0.0
  %4756 = vmatprep.mubr.f32.mxu0 0.0
  %4757 = vmatmul.mubr.f32.gmra.mxu0 %v4688
  %v4758 = vpop.f32.mrf.mxu0
  %v4759 = vadd.f32 0.0, %v4758
  %v4760 = vpop.f32.mrf.mxu0
  %4761 = vdwg.mxu0
  %v4762 = vmul.f32 %v4227, 0.35355338
  %v4763 = vmul.f32 %v4303, 0.35355338
  %v4764 = vmul.f32 %v4379, 0.35355338
  %v4765 = vmul.f32 %v4455, 0.35355338
  %v4766 = vmul.f32 %v4531, 0.35355338
  %v4767 = vmul.f32 %v4607, 0.35355338
  %v4768 = vmul.f32 %v4683, 0.35355338
  %v4769 = vmul.f32 %v4759, 0.35355338
  %v4770 = vsel %vm541, %v4762, -inf
  %4771 = vmax.xlane.f32.xlu0 %v4770
  %v4772 = vpop.xlane.xlu0 %4771
  %v4773 = vsel %vm541, %v4763, -inf
  %4774 = vmax.xlane.f32.xlu0 %v4773
  %v4775 = vpop.xlane.xlu0 %4774
  %v4776 = vsel %vm541, %v4764, -inf
  %4777 = vmax.xlane.f32.xlu0 %v4776
  %v4778 = vpop.xlane.xlu0 %4777
  %v4779 = vsel %vm541, %v4765, -inf
  %4780 = vmax.xlane.f32.xlu0 %v4779
  %v4781 = vpop.xlane.xlu0 %4780
  %v4782 = vsel %vm541, %v4766, -inf
  %4783 = vmax.xlane.f32.xlu0 %v4782
  %v4784 = vpop.xlane.xlu0 %4783
  %v4785 = vsel %vm541, %v4767, -inf
  %4786 = vmax.xlane.f32.xlu0 %v4785
  %v4787 = vpop.xlane.xlu0 %4786
  %v4788 = vsel %vm541, %v4768, -inf
  %4789 = vmax.xlane.f32.xlu0 %v4788
  %v4790 = vpop.xlane.xlu0 %4789
  %v4791 = vsel %vm541, %v4769, -inf
  %4792 = vmax.xlane.f32.xlu0 %v4791
  %v4793 = vpop.xlane.xlu0 %4792
  %v4794 = vsub.f32 %v4762, %v4772
  %v4795 = vsub.f32 %v4763, %v4775
  %v4796 = vsub.f32 %v4764, %v4778
  %v4797 = vsub.f32 %v4765, %v4781
  %v4798 = vsub.f32 %v4766, %v4784
  %v4799 = vsub.f32 %v4767, %v4787
  %v4800 = vsub.f32 %v4768, %v4790
  %v4801 = vsub.f32 %v4769, %v4793
  %v4802 = vmul.f32 %v4794, 1.442695
  %v4803 = vpow.pop %v4802
  %v4804 = vmul.f32 %v4795, 1.442695
  %v4805 = vpow.pop %v4804
  %v4806 = vmul.f32 %v4796, 1.442695
  %v4807 = vpow.pop %v4806
  %v4808 = vmul.f32 %v4797, 1.442695
  %v4809 = vpow.pop %v4808
  %v4810 = vmul.f32 %v4798, 1.442695
  %v4811 = vpow.pop %v4810
  %v4812 = vmul.f32 %v4799, 1.442695
  %v4813 = vpow.pop %v4812
  %v4814 = vmul.f32 %v4800, 1.442695
  %v4815 = vpow.pop %v4814
  %v4816 = vmul.f32 %v4801, 1.442695
  %v4817 = vpow.pop %v4816
  %v4818 = vsel %vm541, %v4803, 0.0
  %4819 = vadd.xlane.f32.xlu0 %v4818
  %v4820 = vpop.xlane.xlu0 %4819
  %v4821 = vsel %vm541, %v4805, 0.0
  %4822 = vadd.xlane.f32.xlu0 %v4821
  %v4823 = vpop.xlane.xlu0 %4822
  %v4824 = vsel %vm541, %v4807, 0.0
  %4825 = vadd.xlane.f32.xlu0 %v4824
  %v4826 = vpop.xlane.xlu0 %4825
  %v4827 = vsel %vm541, %v4809, 0.0
  %4828 = vadd.xlane.f32.xlu0 %v4827
  %v4829 = vpop.xlane.xlu0 %4828
  %v4830 = vsel %vm541, %v4811, 0.0
  %4831 = vadd.xlane.f32.xlu0 %v4830
  %v4832 = vpop.xlane.xlu0 %4831
  %v4833 = vsel %vm541, %v4813, 0.0
  %4834 = vadd.xlane.f32.xlu0 %v4833
  %v4835 = vpop.xlane.xlu0 %4834
  %v4836 = vsel %vm541, %v4815, 0.0
  %4837 = vadd.xlane.f32.xlu0 %v4836
  %v4838 = vpop.xlane.xlu0 %4837
  %v4839 = vsel %vm541, %v4817, 0.0
  %4840 = vadd.xlane.f32.xlu0 %v4839
  %v4841 = vpop.xlane.xlu0 %4840
  %v4842 = vrcp.pop %v4820
  %v4843 = vmul.f32 %v4803, %v4842
  %v4844 = vrcp.pop %v4823
  %v4845 = vmul.f32 %v4805, %v4844
  %v4846 = vrcp.pop %v4826
  %v4847 = vmul.f32 %v4807, %v4846
  %v4848 = vrcp.pop %v4829
  %v4849 = vmul.f32 %v4809, %v4848
  %v4850 = vrcp.pop %v4832
  %v4851 = vmul.f32 %v4811, %v4850
  %v4852 = vrcp.pop %v4835
  %v4853 = vmul.f32 %v4813, %v4852
  %v4854 = vrcp.pop %v4838
  %v4855 = vmul.f32 %v4815, %v4854
  %v4856 = vrcp.pop %v4841
  %v4857 = vmul.f32 %v4817, %v4856
  %4858 = vrot.lane.b32.xlu0 %v4132, 64
  %v4859 = vpop.permute.xlu0 %4858
  %v4862 = vsel %vm541, %v4843, 0
  %4864 = vmatprep.subr.mxu0 0.0
  %4865 = vmatpush1.msra.mxu0 0.0
  %4866 = vmatprep.subr.mxu0 0.0
  %4867 = vmatpush1.msra.mxu0 0.0
  %4868 = vmatprep.subr.mxu0 0.0
  %4869 = vmatpush1.msra.mxu0 0.0
  %4870 = vmatprep.subr.mxu0 0.0
  %4871 = vmatpush1.msra.mxu0 0.0
  %4872 = vmatprep.subr.mxu0 0.0
  %4873 = vmatpush1.msra.mxu0 0.0
  %4874 = vmatprep.subr.mxu0 0.0
  %4875 = vmatpush1.msra.mxu0 0.0
  %4876 = vmatprep.subr.mxu0 0.0
  %4877 = vmatpush1.msra.mxu0 0.0
  %4878 = vmatprep.subr.mxu0 0.0
  %4879 = vmatpush1.msra.mxu0 0.0
  %4880 = vmatprep.subr.mxu0 0.0
  %4881 = vmatpush1.msra.mxu0 0.0
  %4882 = vmatprep.subr.mxu0 0.0
  %4883 = vmatpush1.msra.mxu0 0.0
  %4884 = vmatprep.subr.mxu0 0.0
  %4885 = vmatpush1.msra.mxu0 0.0
  %4886 = vmatprep.subr.mxu0 0.0
  %4887 = vmatpush1.msra.mxu0 0.0
  %4888 = vmatprep.subr.mxu0 0.0
  %4889 = vmatpush1.msra.mxu0 0.0
  %4890 = vmatprep.subr.mxu0 0.0
  %4891 = vmatpush1.msra.mxu0 0.0
  %4892 = vmatprep.subr.mxu0 0.0
  %4893 = vmatpush1.msra.mxu0 0.0
  %4894 = vmatprep.subr.mxu0 0.0
  %4895 = vmatpush1.msra.mxu0 %v4859
  %4896 = vmatprep.subr.mxu0 0.0
  %4897 = vmatpush2.msra.mxu0 0.0
  %4898 = vmatprep.subr.mxu0 0.0
  %4899 = vmatpush2.msra.mxu0 0.0
  %4900 = vmatprep.subr.mxu0 0.0
  %4901 = vmatpush2.msra.mxu0 0.0
  %4902 = vmatprep.subr.mxu0 0.0
  %4903 = vmatpush2.msra.mxu0 0.0
  %4904 = vmatprep.subr.mxu0 0.0
  %4905 = vmatpush2.msra.mxu0 0.0
  %4906 = vmatprep.subr.mxu0 0.0
  %4907 = vmatpush2.msra.mxu0 0.0
  %4908 = vmatprep.subr.mxu0 0.0
  %4909 = vmatpush2.msra.mxu0 0.0
  %4910 = vmatprep.subr.mxu0 0.0
  %4911 = vmatpush2.msra.mxu0 0.0
  %4912 = vmatprep.subr.mxu0 0.0
  %4913 = vmatpush2.msra.mxu0 0.0
  %4914 = vmatprep.subr.mxu0 0.0
  %4915 = vmatpush2.msra.mxu0 0.0
  %4916 = vmatprep.subr.mxu0 0.0
  %4917 = vmatpush2.msra.mxu0 0.0
  %4918 = vmatprep.subr.mxu0 0.0
  %4919 = vmatpush2.msra.mxu0 0.0
  %4920 = vmatprep.subr.mxu0 0.0
  %4921 = vmatpush2.msra.mxu0 0.0
  %4922 = vmatprep.subr.mxu0 0.0
  %4923 = vmatpush2.msra.mxu0 0.0
  %4924 = vmatprep.subr.mxu0 0.0
  %4925 = vmatpush2.msra.mxu0 0.0
  %4926 = vmatprep.subr.mxu0 0.0
  %4927 = vmatpush2.msra.mxu0 0.0
  %4928 = vmatprep.mubr.f32.mxu0 0.0
  %4929 = vmatmul.mubr.f32.gmra.mxu0 %v4862
  %v4930 = vpop.f32.mrf.mxu0
  %v4931 = vadd.f32 0.0, %v4930
  %v4932 = vpop.f32.mrf.mxu0
  %4933 = vdwg.mxu0
  %4934 = vrot.lane.b32.xlu0 %v4142, 64
  %v4935 = vpop.permute.xlu0 %4934
  %v4938 = vsel %vm541, %v4845, 0
  %4940 = vmatprep.subr.mxu0 0.0
  %4941 = vmatpush1.msra.mxu0 0.0
  %4942 = vmatprep.subr.mxu0 0.0
  %4943 = vmatpush1.msra.mxu0 0.0
  %4944 = vmatprep.subr.mxu0 0.0
  %4945 = vmatpush1.msra.mxu0 0.0
  %4946 = vmatprep.subr.mxu0 0.0
  %4947 = vmatpush1.msra.mxu0 0.0
  %4948 = vmatprep.subr.mxu0 0.0
  %4949 = vmatpush1.msra.mxu0 0.0
  %4950 = vmatprep.subr.mxu0 0.0
  %4951 = vmatpush1.msra.mxu0 0.0
  %4952 = vmatprep.subr.mxu0 0.0
  %4953 = vmatpush1.msra.mxu0 0.0
  %4954 = vmatprep.subr.mxu0 0.0
  %4955 = vmatpush1.msra.mxu0 0.0
  %4956 = vmatprep.subr.mxu0 0.0
  %4957 = vmatpush1.msra.mxu0 0.0
  %4958 = vmatprep.subr.mxu0 0.0
  %4959 = vmatpush1.msra.mxu0 0.0
  %4960 = vmatprep.subr.mxu0 0.0
  %4961 = vmatpush1.msra.mxu0 0.0
  %4962 = vmatprep.subr.mxu0 0.0
  %4963 = vmatpush1.msra.mxu0 0.0
  %4964 = vmatprep.subr.mxu0 0.0
  %4965 = vmatpush1.msra.mxu0 0.0
  %4966 = vmatprep.subr.mxu0 0.0
  %4967 = vmatpush1.msra.mxu0 0.0
  %4968 = vmatprep.subr.mxu0 0.0
  %4969 = vmatpush1.msra.mxu0 0.0
  %4970 = vmatprep.subr.mxu0 0.0
  %4971 = vmatpush1.msra.mxu0 %v4935
  %4972 = vmatprep.subr.mxu0 0.0
  %4973 = vmatpush2.msra.mxu0 0.0
  %4974 = vmatprep.subr.mxu0 0.0
  %4975 = vmatpush2.msra.mxu0 0.0
  %4976 = vmatprep.subr.mxu0 0.0
  %4977 = vmatpush2.msra.mxu0 0.0
  %4978 = vmatprep.subr.mxu0 0.0
  %4979 = vmatpush2.msra.mxu0 0.0
  %4980 = vmatprep.subr.mxu0 0.0
  %4981 = vmatpush2.msra.mxu0 0.0
  %4982 = vmatprep.subr.mxu0 0.0
  %4983 = vmatpush2.msra.mxu0 0.0
  %4984 = vmatprep.subr.mxu0 0.0
  %4985 = vmatpush2.msra.mxu0 0.0
  %4986 = vmatprep.subr.mxu0 0.0
  %4987 = vmatpush2.msra.mxu0 0.0
  %4988 = vmatprep.subr.mxu0 0.0
  %4989 = vmatpush2.msra.mxu0 0.0
  %4990 = vmatprep.subr.mxu0 0.0
  %4991 = vmatpush2.msra.mxu0 0.0
  %4992 = vmatprep.subr.mxu0 0.0
  %4993 = vmatpush2.msra.mxu0 0.0
  %4994 = vmatprep.subr.mxu0 0.0
  %4995 = vmatpush2.msra.mxu0 0.0
  %4996 = vmatprep.subr.mxu0 0.0
  %4997 = vmatpush2.msra.mxu0 0.0
  %4998 = vmatprep.subr.mxu0 0.0
  %4999 = vmatpush2.msra.mxu0 0.0
  %5000 = vmatprep.subr.mxu0 0.0
  %5001 = vmatpush2.msra.mxu0 0.0
  %5002 = vmatprep.subr.mxu0 0.0
  %5003 = vmatpush2.msra.mxu0 0.0
  %5004 = vmatprep.mubr.f32.mxu0 0.0
  %5005 = vmatmul.mubr.f32.gmra.mxu0 %v4938
  %v5006 = vpop.f32.mrf.mxu0
  %v5007 = vadd.f32 0.0, %v5006
  %v5008 = vpop.f32.mrf.mxu0
  %5009 = vdwg.mxu0
  %5010 = vrot.lane.b32.xlu0 %v4144, 64
  %v5011 = vpop.permute.xlu0 %5010
  %v5014 = vsel %vm541, %v4847, 0
  %5016 = vmatprep.subr.mxu0 0.0
  %5017 = vmatpush1.msra.mxu0 0.0
  %5018 = vmatprep.subr.mxu0 0.0
  %5019 = vmatpush1.msra.mxu0 0.0
  %5020 = vmatprep.subr.mxu0 0.0
  %5021 = vmatpush1.msra.mxu0 0.0
  %5022 = vmatprep.subr.mxu0 0.0
  %5023 = vmatpush1.msra.mxu0 0.0
  %5024 = vmatprep.subr.mxu0 0.0
  %5025 = vmatpush1.msra.mxu0 0.0
  %5026 = vmatprep.subr.mxu0 0.0
  %5027 = vmatpush1.msra.mxu0 0.0
  %5028 = vmatprep.subr.mxu0 0.0
  %5029 = vmatpush1.msra.mxu0 0.0
  %5030 = vmatprep.subr.mxu0 0.0
  %5031 = vmatpush1.msra.mxu0 0.0
  %5032 = vmatprep.subr.mxu0 0.0
  %5033 = vmatpush1.msra.mxu0 0.0
  %5034 = vmatprep.subr.mxu0 0.0
  %5035 = vmatpush1.msra.mxu0 0.0
  %5036 = vmatprep.subr.mxu0 0.0
  %5037 = vmatpush1.msra.mxu0 0.0
  %5038 = vmatprep.subr.mxu0 0.0
  %5039 = vmatpush1.msra.mxu0 0.0
  %5040 = vmatprep.subr.mxu0 0.0
  %5041 = vmatpush1.msra.mxu0 0.0
  %5042 = vmatprep.subr.mxu0 0.0
  %5043 = vmatpush1.msra.mxu0 0.0
  %5044 = vmatprep.subr.mxu0 0.0
  %5045 = vmatpush1.msra.mxu0 0.0
  %5046 = vmatprep.subr.mxu0 0.0
  %5047 = vmatpush1.msra.mxu0 %v5011
  %5048 = vmatprep.subr.mxu0 0.0
  %5049 = vmatpush2.msra.mxu0 0.0
  %5050 = vmatprep.subr.mxu0 0.0
  %5051 = vmatpush2.msra.mxu0 0.0
  %5052 = vmatprep.subr.mxu0 0.0
  %5053 = vmatpush2.msra.mxu0 0.0
  %5054 = vmatprep.subr.mxu0 0.0
  %5055 = vmatpush2.msra.mxu0 0.0
  %5056 = vmatprep.subr.mxu0 0.0
  %5057 = vmatpush2.msra.mxu0 0.0
  %5058 = vmatprep.subr.mxu0 0.0
  %5059 = vmatpush2.msra.mxu0 0.0
  %5060 = vmatprep.subr.mxu0 0.0
  %5061 = vmatpush2.msra.mxu0 0.0
  %5062 = vmatprep.subr.mxu0 0.0
  %5063 = vmatpush2.msra.mxu0 0.0
  %5064 = vmatprep.subr.mxu0 0.0
  %5065 = vmatpush2.msra.mxu0 0.0
  %5066 = vmatprep.subr.mxu0 0.0
  %5067 = vmatpush2.msra.mxu0 0.0
  %5068 = vmatprep.subr.mxu0 0.0
  %5069 = vmatpush2.msra.mxu0 0.0
  %5070 = vmatprep.subr.mxu0 0.0
  %5071 = vmatpush2.msra.mxu0 0.0
  %5072 = vmatprep.subr.mxu0 0.0
  %5073 = vmatpush2.msra.mxu0 0.0
  %5074 = vmatprep.subr.mxu0 0.0
  %5075 = vmatpush2.msra.mxu0 0.0
  %5076 = vmatprep.subr.mxu0 0.0
  %5077 = vmatpush2.msra.mxu0 0.0
  %5078 = vmatprep.subr.mxu0 0.0
  %5079 = vmatpush2.msra.mxu0 0.0
  %5080 = vmatprep.mubr.f32.mxu0 0.0
  %5081 = vmatmul.mubr.f32.gmra.mxu0 %v5014
  %v5082 = vpop.f32.mrf.mxu0
  %v5083 = vadd.f32 0.0, %v5082
  %v5084 = vpop.f32.mrf.mxu0
  %5085 = vdwg.mxu0
  %5086 = vrot.lane.b32.xlu0 %v4146, 64
  %v5087 = vpop.permute.xlu0 %5086
  %v5090 = vsel %vm541, %v4849, 0
  %5092 = vmatprep.subr.mxu0 0.0
  %5093 = vmatpush1.msra.mxu0 0.0
  %5094 = vmatprep.subr.mxu0 0.0
  %5095 = vmatpush1.msra.mxu0 0.0
  %5096 = vmatprep.subr.mxu0 0.0
  %5097 = vmatpush1.msra.mxu0 0.0
  %5098 = vmatprep.subr.mxu0 0.0
  %5099 = vmatpush1.msra.mxu0 0.0
  %5100 = vmatprep.subr.mxu0 0.0
  %5101 = vmatpush1.msra.mxu0 0.0
  %5102 = vmatprep.subr.mxu0 0.0
  %5103 = vmatpush1.msra.mxu0 0.0
  %5104 = vmatprep.subr.mxu0 0.0
  %5105 = vmatpush1.msra.mxu0 0.0
  %5106 = vmatprep.subr.mxu0 0.0
  %5107 = vmatpush1.msra.mxu0 0.0
  %5108 = vmatprep.subr.mxu0 0.0
  %5109 = vmatpush1.msra.mxu0 0.0
  %5110 = vmatprep.subr.mxu0 0.0
  %5111 = vmatpush1.msra.mxu0 0.0
  %5112 = vmatprep.subr.mxu0 0.0
  %5113 = vmatpush1.msra.mxu0 0.0
  %5114 = vmatprep.subr.mxu0 0.0
  %5115 = vmatpush1.msra.mxu0 0.0
  %5116 = vmatprep.subr.mxu0 0.0
  %5117 = vmatpush1.msra.mxu0 0.0
  %5118 = vmatprep.subr.mxu0 0.0
  %5119 = vmatpush1.msra.mxu0 0.0
  %5120 = vmatprep.subr.mxu0 0.0
  %5121 = vmatpush1.msra.mxu0 0.0
  %5122 = vmatprep.subr.mxu0 0.0
  %5123 = vmatpush1.msra.mxu0 %v5087
  %5124 = vmatprep.subr.mxu0 0.0
  %5125 = vmatpush2.msra.mxu0 0.0
  %5126 = vmatprep.subr.mxu0 0.0
  %5127 = vmatpush2.msra.mxu0 0.0
  %5128 = vmatprep.subr.mxu0 0.0
  %5129 = vmatpush2.msra.mxu0 0.0
  %5130 = vmatprep.subr.mxu0 0.0
  %5131 = vmatpush2.msra.mxu0 0.0
  %5132 = vmatprep.subr.mxu0 0.0
  %5133 = vmatpush2.msra.mxu0 0.0
  %5134 = vmatprep.subr.mxu0 0.0
  %5135 = vmatpush2.msra.mxu0 0.0
  %5136 = vmatprep.subr.mxu0 0.0
  %5137 = vmatpush2.msra.mxu0 0.0
  %5138 = vmatprep.subr.mxu0 0.0
  %5139 = vmatpush2.msra.mxu0 0.0
  %5140 = vmatprep.subr.mxu0 0.0
  %5141 = vmatpush2.msra.mxu0 0.0
  %5142 = vmatprep.subr.mxu0 0.0
  %5143 = vmatpush2.msra.mxu0 0.0
  %5144 = vmatprep.subr.mxu0 0.0
  %5145 = vmatpush2.msra.mxu0 0.0
  %5146 = vmatprep.subr.mxu0 0.0
  %5147 = vmatpush2.msra.mxu0 0.0
  %5148 = vmatprep.subr.mxu0 0.0
  %5149 = vmatpush2.msra.mxu0 0.0
  %5150 = vmatprep.subr.mxu0 0.0
  %5151 = vmatpush2.msra.mxu0 0.0
  %5152 = vmatprep.subr.mxu0 0.0
  %5153 = vmatpush2.msra.mxu0 0.0
  %5154 = vmatprep.subr.mxu0 0.0
  %5155 = vmatpush2.msra.mxu0 0.0
  %5156 = vmatprep.mubr.f32.mxu0 0.0
  %5157 = vmatmul.mubr.f32.gmra.mxu0 %v5090
  %v5158 = vpop.f32.mrf.mxu0
  %v5159 = vadd.f32 0.0, %v5158
  %v5160 = vpop.f32.mrf.mxu0
  %5161 = vdwg.mxu0
  %5162 = vrot.lane.b32.xlu0 %v4137, 64
  %v5163 = vpop.permute.xlu0 %5162
  %v5166 = vsel %vm541, %v4851, 0
  %5168 = vmatprep.subr.mxu0 0.0
  %5169 = vmatpush1.msra.mxu0 0.0
  %5170 = vmatprep.subr.mxu0 0.0
  %5171 = vmatpush1.msra.mxu0 0.0
  %5172 = vmatprep.subr.mxu0 0.0
  %5173 = vmatpush1.msra.mxu0 0.0
  %5174 = vmatprep.subr.mxu0 0.0
  %5175 = vmatpush1.msra.mxu0 0.0
  %5176 = vmatprep.subr.mxu0 0.0
  %5177 = vmatpush1.msra.mxu0 0.0
  %5178 = vmatprep.subr.mxu0 0.0
  %5179 = vmatpush1.msra.mxu0 0.0
  %5180 = vmatprep.subr.mxu0 0.0
  %5181 = vmatpush1.msra.mxu0 0.0
  %5182 = vmatprep.subr.mxu0 0.0
  %5183 = vmatpush1.msra.mxu0 0.0
  %5184 = vmatprep.subr.mxu0 0.0
  %5185 = vmatpush1.msra.mxu0 0.0
  %5186 = vmatprep.subr.mxu0 0.0
  %5187 = vmatpush1.msra.mxu0 0.0
  %5188 = vmatprep.subr.mxu0 0.0
  %5189 = vmatpush1.msra.mxu0 0.0
  %5190 = vmatprep.subr.mxu0 0.0
  %5191 = vmatpush1.msra.mxu0 0.0
  %5192 = vmatprep.subr.mxu0 0.0
  %5193 = vmatpush1.msra.mxu0 0.0
  %5194 = vmatprep.subr.mxu0 0.0
  %5195 = vmatpush1.msra.mxu0 0.0
  %5196 = vmatprep.subr.mxu0 0.0
  %5197 = vmatpush1.msra.mxu0 0.0
  %5198 = vmatprep.subr.mxu0 0.0
  %5199 = vmatpush1.msra.mxu0 %v5163
  %5200 = vmatprep.subr.mxu0 0.0
  %5201 = vmatpush2.msra.mxu0 0.0
  %5202 = vmatprep.subr.mxu0 0.0
  %5203 = vmatpush2.msra.mxu0 0.0
  %5204 = vmatprep.subr.mxu0 0.0
  %5205 = vmatpush2.msra.mxu0 0.0
  %5206 = vmatprep.subr.mxu0 0.0
  %5207 = vmatpush2.msra.mxu0 0.0
  %5208 = vmatprep.subr.mxu0 0.0
  %5209 = vmatpush2.msra.mxu0 0.0
  %5210 = vmatprep.subr.mxu0 0.0
  %5211 = vmatpush2.msra.mxu0 0.0
  %5212 = vmatprep.subr.mxu0 0.0
  %5213 = vmatpush2.msra.mxu0 0.0
  %5214 = vmatprep.subr.mxu0 0.0
  %5215 = vmatpush2.msra.mxu0 0.0
  %5216 = vmatprep.subr.mxu0 0.0
  %5217 = vmatpush2.msra.mxu0 0.0
  %5218 = vmatprep.subr.mxu0 0.0
  %5219 = vmatpush2.msra.mxu0 0.0
  %5220 = vmatprep.subr.mxu0 0.0
  %5221 = vmatpush2.msra.mxu0 0.0
  %5222 = vmatprep.subr.mxu0 0.0
  %5223 = vmatpush2.msra.mxu0 0.0
  %5224 = vmatprep.subr.mxu0 0.0
  %5225 = vmatpush2.msra.mxu0 0.0
  %5226 = vmatprep.subr.mxu0 0.0
  %5227 = vmatpush2.msra.mxu0 0.0
  %5228 = vmatprep.subr.mxu0 0.0
  %5229 = vmatpush2.msra.mxu0 0.0
  %5230 = vmatprep.subr.mxu0 0.0
  %5231 = vmatpush2.msra.mxu0 0.0
  %5232 = vmatprep.mubr.f32.mxu0 0.0
  %5233 = vmatmul.mubr.f32.gmra.mxu0 %v5166
  %v5234 = vpop.f32.mrf.mxu0
  %v5235 = vadd.f32 0.0, %v5234
  %v5236 = vpop.f32.mrf.mxu0
  %5237 = vdwg.mxu0
  %5238 = vrot.lane.b32.xlu0 %v4149, 64
  %v5239 = vpop.permute.xlu0 %5238
  %v5242 = vsel %vm541, %v4853, 0
  %5244 = vmatprep.subr.mxu0 0.0
  %5245 = vmatpush1.msra.mxu0 0.0
  %5246 = vmatprep.subr.mxu0 0.0
  %5247 = vmatpush1.msra.mxu0 0.0
  %5248 = vmatprep.subr.mxu0 0.0
  %5249 = vmatpush1.msra.mxu0 0.0
  %5250 = vmatprep.subr.mxu0 0.0
  %5251 = vmatpush1.msra.mxu0 0.0
  %5252 = vmatprep.subr.mxu0 0.0
  %5253 = vmatpush1.msra.mxu0 0.0
  %5254 = vmatprep.subr.mxu0 0.0
  %5255 = vmatpush1.msra.mxu0 0.0
  %5256 = vmatprep.subr.mxu0 0.0
  %5257 = vmatpush1.msra.mxu0 0.0
  %5258 = vmatprep.subr.mxu0 0.0
  %5259 = vmatpush1.msra.mxu0 0.0
  %5260 = vmatprep.subr.mxu0 0.0
  %5261 = vmatpush1.msra.mxu0 0.0
  %5262 = vmatprep.subr.mxu0 0.0
  %5263 = vmatpush1.msra.mxu0 0.0
  %5264 = vmatprep.subr.mxu0 0.0
  %5265 = vmatpush1.msra.mxu0 0.0
  %5266 = vmatprep.subr.mxu0 0.0
  %5267 = vmatpush1.msra.mxu0 0.0
  %5268 = vmatprep.subr.mxu0 0.0
  %5269 = vmatpush1.msra.mxu0 0.0
  %5270 = vmatprep.subr.mxu0 0.0
  %5271 = vmatpush1.msra.mxu0 0.0
  %5272 = vmatprep.subr.mxu0 0.0
  %5273 = vmatpush1.msra.mxu0 0.0
  %5274 = vmatprep.subr.mxu0 0.0
  %5275 = vmatpush1.msra.mxu0 %v5239
  %5276 = vmatprep.subr.mxu0 0.0
  %5277 = vmatpush2.msra.mxu0 0.0
  %5278 = vmatprep.subr.mxu0 0.0
  %5279 = vmatpush2.msra.mxu0 0.0
  %5280 = vmatprep.subr.mxu0 0.0
  %5281 = vmatpush2.msra.mxu0 0.0
  %5282 = vmatprep.subr.mxu0 0.0
  %5283 = vmatpush2.msra.mxu0 0.0
  %5284 = vmatprep.subr.mxu0 0.0
  %5285 = vmatpush2.msra.mxu0 0.0
  %5286 = vmatprep.subr.mxu0 0.0
  %5287 = vmatpush2.msra.mxu0 0.0
  %5288 = vmatprep.subr.mxu0 0.0
  %5289 = vmatpush2.msra.mxu0 0.0
  %5290 = vmatprep.subr.mxu0 0.0
  %5291 = vmatpush2.msra.mxu0 0.0
  %5292 = vmatprep.subr.mxu0 0.0
  %5293 = vmatpush2.msra.mxu0 0.0
  %5294 = vmatprep.subr.mxu0 0.0
  %5295 = vmatpush2.msra.mxu0 0.0
  %5296 = vmatprep.subr.mxu0 0.0
  %5297 = vmatpush2.msra.mxu0 0.0
  %5298 = vmatprep.subr.mxu0 0.0
  %5299 = vmatpush2.msra.mxu0 0.0
  %5300 = vmatprep.subr.mxu0 0.0
  %5301 = vmatpush2.msra.mxu0 0.0
  %5302 = vmatprep.subr.mxu0 0.0
  %5303 = vmatpush2.msra.mxu0 0.0
  %5304 = vmatprep.subr.mxu0 0.0
  %5305 = vmatpush2.msra.mxu0 0.0
  %5306 = vmatprep.subr.mxu0 0.0
  %5307 = vmatpush2.msra.mxu0 0.0
  %5308 = vmatprep.mubr.f32.mxu0 0.0
  %5309 = vmatmul.mubr.f32.gmra.mxu0 %v5242
  %v5310 = vpop.f32.mrf.mxu0
  %v5311 = vadd.f32 0.0, %v5310
  %v5312 = vpop.f32.mrf.mxu0
  %5313 = vdwg.mxu0
  %5314 = vrot.lane.b32.xlu0 %v4151, 64
  %v5315 = vpop.permute.xlu0 %5314
  %v5318 = vsel %vm541, %v4855, 0
  %5320 = vmatprep.subr.mxu0 0.0
  %5321 = vmatpush1.msra.mxu0 0.0
  %5322 = vmatprep.subr.mxu0 0.0
  %5323 = vmatpush1.msra.mxu0 0.0
  %5324 = vmatprep.subr.mxu0 0.0
  %5325 = vmatpush1.msra.mxu0 0.0
  %5326 = vmatprep.subr.mxu0 0.0
  %5327 = vmatpush1.msra.mxu0 0.0
  %5328 = vmatprep.subr.mxu0 0.0
  %5329 = vmatpush1.msra.mxu0 0.0
  %5330 = vmatprep.subr.mxu0 0.0
  %5331 = vmatpush1.msra.mxu0 0.0
  %5332 = vmatprep.subr.mxu0 0.0
  %5333 = vmatpush1.msra.mxu0 0.0
  %5334 = vmatprep.subr.mxu0 0.0
  %5335 = vmatpush1.msra.mxu0 0.0
  %5336 = vmatprep.subr.mxu0 0.0
  %5337 = vmatpush1.msra.mxu0 0.0
  %5338 = vmatprep.subr.mxu0 0.0
  %5339 = vmatpush1.msra.mxu0 0.0
  %5340 = vmatprep.subr.mxu0 0.0
  %5341 = vmatpush1.msra.mxu0 0.0
  %5342 = vmatprep.subr.mxu0 0.0
  %5343 = vmatpush1.msra.mxu0 0.0
  %5344 = vmatprep.subr.mxu0 0.0
  %5345 = vmatpush1.msra.mxu0 0.0
  %5346 = vmatprep.subr.mxu0 0.0
  %5347 = vmatpush1.msra.mxu0 0.0
  %5348 = vmatprep.subr.mxu0 0.0
  %5349 = vmatpush1.msra.mxu0 0.0
  %5350 = vmatprep.subr.mxu0 0.0
  %5351 = vmatpush1.msra.mxu0 %v5315
  %5352 = vmatprep.subr.mxu0 0.0
  %5353 = vmatpush2.msra.mxu0 0.0
  %5354 = vmatprep.subr.mxu0 0.0
  %5355 = vmatpush2.msra.mxu0 0.0
  %5356 = vmatprep.subr.mxu0 0.0
  %5357 = vmatpush2.msra.mxu0 0.0
  %5358 = vmatprep.subr.mxu0 0.0
  %5359 = vmatpush2.msra.mxu0 0.0
  %5360 = vmatprep.subr.mxu0 0.0
  %5361 = vmatpush2.msra.mxu0 0.0
  %5362 = vmatprep.subr.mxu0 0.0
  %5363 = vmatpush2.msra.mxu0 0.0
  %5364 = vmatprep.subr.mxu0 0.0
  %5365 = vmatpush2.msra.mxu0 0.0
  %5366 = vmatprep.subr.mxu0 0.0
  %5367 = vmatpush2.msra.mxu0 0.0
  %5368 = vmatprep.subr.mxu0 0.0
  %5369 = vmatpush2.msra.mxu0 0.0
  %5370 = vmatprep.subr.mxu0 0.0
  %5371 = vmatpush2.msra.mxu0 0.0
  %5372 = vmatprep.subr.mxu0 0.0
  %5373 = vmatpush2.msra.mxu0 0.0
  %5374 = vmatprep.subr.mxu0 0.0
  %5375 = vmatpush2.msra.mxu0 0.0
  %5376 = vmatprep.subr.mxu0 0.0
  %5377 = vmatpush2.msra.mxu0 0.0
  %5378 = vmatprep.subr.mxu0 0.0
  %5379 = vmatpush2.msra.mxu0 0.0
  %5380 = vmatprep.subr.mxu0 0.0
  %5381 = vmatpush2.msra.mxu0 0.0
  %5382 = vmatprep.subr.mxu0 0.0
  %5383 = vmatpush2.msra.mxu0 0.0
  %5384 = vmatprep.mubr.f32.mxu0 0.0
  %5385 = vmatmul.mubr.f32.gmra.mxu0 %v5318
  %v5386 = vpop.f32.mrf.mxu0
  %v5387 = vadd.f32 0.0, %v5386
  %v5388 = vpop.f32.mrf.mxu0
  %5389 = vdwg.mxu0
  %5390 = vrot.lane.b32.xlu0 %v4153, 64
  %v5391 = vpop.permute.xlu0 %5390
  %v5394 = vsel %vm541, %v4857, 0
  %5396 = vmatprep.subr.mxu0 0.0
  %5397 = vmatpush1.msra.mxu0 0.0
  %5398 = vmatprep.subr.mxu0 0.0
  %5399 = vmatpush1.msra.mxu0 0.0
  %5400 = vmatprep.subr.mxu0 0.0
  %5401 = vmatpush1.msra.mxu0 0.0
  %5402 = vmatprep.subr.mxu0 0.0
  %5403 = vmatpush1.msra.mxu0 0.0
  %5404 = vmatprep.subr.mxu0 0.0
  %5405 = vmatpush1.msra.mxu0 0.0
  %5406 = vmatprep.subr.mxu0 0.0
  %5407 = vmatpush1.msra.mxu0 0.0
  %5408 = vmatprep.subr.mxu0 0.0
  %5409 = vmatpush1.msra.mxu0 0.0
  %5410 = vmatprep.subr.mxu0 0.0
  %5411 = vmatpush1.msra.mxu0 0.0
  %5412 = vmatprep.subr.mxu0 0.0
  %5413 = vmatpush1.msra.mxu0 0.0
  %5414 = vmatprep.subr.mxu0 0.0
  %5415 = vmatpush1.msra.mxu0 0.0
  %5416 = vmatprep.subr.mxu0 0.0
  %5417 = vmatpush1.msra.mxu0 0.0
  %5418 = vmatprep.subr.mxu0 0.0
  %5419 = vmatpush1.msra.mxu0 0.0
  %5420 = vmatprep.subr.mxu0 0.0
  %5421 = vmatpush1.msra.mxu0 0.0
  %5422 = vmatprep.subr.mxu0 0.0
  %5423 = vmatpush1.msra.mxu0 0.0
  %5424 = vmatprep.subr.mxu0 0.0
  %5425 = vmatpush1.msra.mxu0 0.0
  %5426 = vmatprep.subr.mxu0 0.0
  %5427 = vmatpush1.msra.mxu0 %v5391
  %5428 = vmatprep.subr.mxu0 0.0
  %5429 = vmatpush2.msra.mxu0 0.0
  %5430 = vmatprep.subr.mxu0 0.0
  %5431 = vmatpush2.msra.mxu0 0.0
  %5432 = vmatprep.subr.mxu0 0.0
  %5433 = vmatpush2.msra.mxu0 0.0
  %5434 = vmatprep.subr.mxu0 0.0
  %5435 = vmatpush2.msra.mxu0 0.0
  %5436 = vmatprep.subr.mxu0 0.0
  %5437 = vmatpush2.msra.mxu0 0.0
  %5438 = vmatprep.subr.mxu0 0.0
  %5439 = vmatpush2.msra.mxu0 0.0
  %5440 = vmatprep.subr.mxu0 0.0
  %5441 = vmatpush2.msra.mxu0 0.0
  %5442 = vmatprep.subr.mxu0 0.0
  %5443 = vmatpush2.msra.mxu0 0.0
  %5444 = vmatprep.subr.mxu0 0.0
  %5445 = vmatpush2.msra.mxu0 0.0
  %5446 = vmatprep.subr.mxu0 0.0
  %5447 = vmatpush2.msra.mxu0 0.0
  %5448 = vmatprep.subr.mxu0 0.0
  %5449 = vmatpush2.msra.mxu0 0.0
  %5450 = vmatprep.subr.mxu0 0.0
  %5451 = vmatpush2.msra.mxu0 0.0
  %5452 = vmatprep.subr.mxu0 0.0
  %5453 = vmatpush2.msra.mxu0 0.0
  %5454 = vmatprep.subr.mxu0 0.0
  %5455 = vmatpush2.msra.mxu0 0.0
  %5456 = vmatprep.subr.mxu0 0.0
  %5457 = vmatpush2.msra.mxu0 0.0
  %5458 = vmatprep.subr.mxu0 0.0
  %5459 = vmatpush2.msra.mxu0 0.0
  %5460 = vmatprep.mubr.f32.mxu0 0.0
  %5461 = vmatmul.mubr.f32.gmra.mxu0 %v5394
  %v5462 = vpop.f32.mrf.mxu0
  %v5463 = vadd.f32 0.0, %v5462
  %v5464 = vpop.f32.mrf.mxu0
  %5465 = vdwg.mxu0
  %5467 = vrot.lane.b32.xlu0 %v5007, 8
  %v5468 = vpop.permute.xlu0 %5467
  %5471 = vrot.lane.b32.xlu0 %v5083, 16
  %v5472 = vpop.permute.xlu0 %5471
  %5475 = vrot.lane.b32.xlu0 %v5159, 24
  %v5476 = vpop.permute.xlu0 %5475
  %v5478 = vsel %vm541, %v4931, %v5468
  %v5479 = vsel %vm1865, %v5478, %v5472
  %v5480 = vsel %vm1867, %v5479, %v5476
  %5482 = vrot.lane.b32.xlu0 %v5311, 8
  %v5483 = vpop.permute.xlu0 %5482
  %5486 = vrot.lane.b32.xlu0 %v5387, 16
  %v5487 = vpop.permute.xlu0 %5486
  %5490 = vrot.lane.b32.xlu0 %v5463, 24
  %v5491 = vpop.permute.xlu0 %5490
  %v5493 = vsel %vm541, %v5235, %v5483
  %v5494 = vsel %vm1865, %v5493, %v5487
  %v5495 = vsel %vm1867, %v5494, %v5491
  %v5497 = vlaneseq
  %v5498 = vshrl.u32 %v5497, 7
  %v5499 = vsub.s32 0, %v5498
  %v5500 = vrot.slane %v4052, %v5499
  %v5503 = vsel %vm394, %v5480, 0
  %v5506 = vsel %vm394, %v5495, 0
  %5508 = vmatprep.subr.mxu0 0.0
  %5509 = vmatpush1.msra.mxu0 0.0
  %5510 = vmatprep.subr.mxu0 0.0
  %5511 = vmatpush1.msra.mxu0 0.0
  %5512 = vmatprep.subr.mxu0 0.0
  %5513 = vmatpush1.msra.mxu0 0.0
  %5514 = vmatprep.subr.mxu0 0.0
  %5515 = vmatpush1.msra.mxu0 0.0
  %5516 = vmatprep.subr.mxu0 0.0
  %5517 = vmatpush1.msra.mxu0 0.0
  %5518 = vmatprep.subr.mxu0 0.0
  %5519 = vmatpush1.msra.mxu0 0.0
  %5520 = vmatprep.subr.mxu0 0.0
  %5521 = vmatpush1.msra.mxu0 0.0
  %5522 = vmatprep.subr.mxu0 0.0
  %5523 = vmatpush1.msra.mxu0 0.0
  %5524 = vmatprep.subr.mxu0 0.0
  %5525 = vmatpush1.msra.mxu0 0.0
  %5526 = vmatprep.subr.mxu0 0.0
  %5527 = vmatpush1.msra.mxu0 0.0
  %5528 = vmatprep.subr.mxu0 0.0
  %5529 = vmatpush1.msra.mxu0 0.0
  %5530 = vmatprep.subr.mxu0 0.0
  %5531 = vmatpush1.msra.mxu0 0.0
  %5532 = vmatprep.subr.mxu0 0.0
  %5533 = vmatpush1.msra.mxu0 %v4051
  %5534 = vmatprep.subr.mxu0 0.0
  %5535 = vmatpush1.msra.mxu0 %v4050
  %5536 = vmatprep.subr.mxu0 0.0
  %5537 = vmatpush1.msra.mxu0 %v4049
  %5538 = vmatprep.subr.mxu0 0.0
  %5539 = vmatpush1.msra.mxu0 %v4048
  %5540 = vmatprep.subr.mxu0 0.0
  %5541 = vmatpush2.msra.mxu0 0.0
  %5542 = vmatprep.subr.mxu0 0.0
  %5543 = vmatpush2.msra.mxu0 0.0
  %5544 = vmatprep.subr.mxu0 0.0
  %5545 = vmatpush2.msra.mxu0 0.0
  %5546 = vmatprep.subr.mxu0 0.0
  %5547 = vmatpush2.msra.mxu0 0.0
  %5548 = vmatprep.subr.mxu0 0.0
  %5549 = vmatpush2.msra.mxu0 0.0
  %5550 = vmatprep.subr.mxu0 0.0
  %5551 = vmatpush2.msra.mxu0 0.0
  %5552 = vmatprep.subr.mxu0 0.0
  %5553 = vmatpush2.msra.mxu0 0.0
  %5554 = vmatprep.subr.mxu0 0.0
  %5555 = vmatpush2.msra.mxu0 0.0
  %5556 = vmatprep.subr.mxu0 0.0
  %5557 = vmatpush2.msra.mxu0 0.0
  %5558 = vmatprep.subr.mxu0 0.0
  %5559 = vmatpush2.msra.mxu0 0.0
  %5560 = vmatprep.subr.mxu0 0.0
  %5561 = vmatpush2.msra.mxu0 0.0
  %5562 = vmatprep.subr.mxu0 0.0
  %5563 = vmatpush2.msra.mxu0 0.0
  %5564 = vmatprep.subr.mxu0 0.0
  %5565 = vmatpush2.msra.mxu0 0.0
  %5566 = vmatprep.subr.mxu0 0.0
  %5567 = vmatpush2.msra.mxu0 0.0
  %5568 = vmatprep.subr.mxu0 0.0
  %5569 = vmatpush2.msra.mxu0 0.0
  %5570 = vmatprep.subr.mxu0 0.0
  %5571 = vmatpush2.msra.mxu0 0.0
  %5572 = vmatprep.mubr.f32.mxu0 0.0
  %5573 = vmatmul.mubr.f32.gmra.mxu0 %v5503
  %v5574 = vpop.f32.mrf.mxu0
  %v5575 = vadd.f32 %v5500, %v5574
  %v5576 = vpop.f32.mrf.mxu0
  %5577 = vmatprep.mubr.f32.mxu0 0.0
  %5578 = vmatmul.mubr.f32.gmra.mxu0 %v5506
  %v5579 = vpop.f32.mrf.mxu0
  %v5580 = vadd.f32 %v5500, %v5579
  %v5581 = vpop.f32.mrf.mxu0
  %5582 = vdwg.mxu0
  %v5583 = vlaneseq
  %v5584 = vshrl.u32 %v5583, 7
  %v5585 = vlaneseq
  %v5586 = vand.u32 %v5585, 127
  %v5587 = vmul.u32 %v5584, 8
  %vm5588 = vcmp.ge.s32.totalorder %v5586, %v5587
  %v5589 = vadd.s32 %v5584, 1
  %v5590 = vmul.u32 %v5589, 8
  %vm5591 = vcmp.lt.s32.totalorder %v5586, %v5590
  %vm5592 = vmand %vm5588, %vm5591
  %v5593 = vsel %vm5592, 0.125, 0.0
  %v5595 = vsel %vm1865, %v5593, 0
  %5597 = vmatprep.subr.mxu0 0.0
  %5598 = vmatpush1.msra.mxu0 0.0
  %5599 = vmatprep.subr.mxu0 0.0
  %5600 = vmatpush1.msra.mxu0 0.0
  %5601 = vmatprep.subr.mxu0 0.0
  %5602 = vmatpush1.msra.mxu0 0.0
  %5603 = vmatprep.subr.mxu0 0.0
  %5604 = vmatpush1.msra.mxu0 0.0
  %5605 = vmatprep.subr.mxu0 0.0
  %5606 = vmatpush1.msra.mxu0 0.0
  %5607 = vmatprep.subr.mxu0 0.0
  %5608 = vmatpush1.msra.mxu0 0.0
  %5609 = vmatprep.subr.mxu0 0.0
  %5610 = vmatpush1.msra.mxu0 0.0
  %5611 = vmatprep.subr.mxu0 0.0
  %5612 = vmatpush1.msra.mxu0 0.0
  %5613 = vmatprep.subr.mxu0 0.0
  %5614 = vmatpush1.msra.mxu0 0.0
  %5615 = vmatprep.subr.mxu0 0.0
  %5616 = vmatpush1.msra.mxu0 0.0
  %5617 = vmatprep.subr.mxu0 0.0
  %5618 = vmatpush1.msra.mxu0 0.0
  %5619 = vmatprep.subr.mxu0 0.0
  %5620 = vmatpush1.msra.mxu0 0.0
  %5621 = vmatprep.subr.mxu0 0.0
  %5622 = vmatpush1.msra.mxu0 0.0
  %5623 = vmatprep.subr.mxu0 0.0
  %5624 = vmatpush1.msra.mxu0 0.0
  %5625 = vmatprep.subr.mxu0 0.0
  %5626 = vmatpush1.msra.mxu0 %v5580
  %5627 = vmatprep.subr.mxu0 0.0
  %5628 = vmatpush1.msra.mxu0 %v5575
  %5629 = vmatprep.subr.mxu0 0.0
  %5630 = vmatpush2.msra.mxu0 0.0
  %5631 = vmatprep.subr.mxu0 0.0
  %5632 = vmatpush2.msra.mxu0 0.0
  %5633 = vmatprep.subr.mxu0 0.0
  %5634 = vmatpush2.msra.mxu0 0.0
  %5635 = vmatprep.subr.mxu0 0.0
  %5636 = vmatpush2.msra.mxu0 0.0
  %5637 = vmatprep.subr.mxu0 0.0
  %5638 = vmatpush2.msra.mxu0 0.0
  %5639 = vmatprep.subr.mxu0 0.0
  %5640 = vmatpush2.msra.mxu0 0.0
  %5641 = vmatprep.subr.mxu0 0.0
  %5642 = vmatpush2.msra.mxu0 0.0
  %5643 = vmatprep.subr.mxu0 0.0
  %5644 = vmatpush2.msra.mxu0 0.0
  %5645 = vmatprep.subr.mxu0 0.0
  %5646 = vmatpush2.msra.mxu0 0.0
  %5647 = vmatprep.subr.mxu0 0.0
  %5648 = vmatpush2.msra.mxu0 0.0
  %5649 = vmatprep.subr.mxu0 0.0
  %5650 = vmatpush2.msra.mxu0 0.0
  %5651 = vmatprep.subr.mxu0 0.0
  %5652 = vmatpush2.msra.mxu0 0.0
  %5653 = vmatprep.subr.mxu0 0.0
  %5654 = vmatpush2.msra.mxu0 0.0
  %5655 = vmatprep.subr.mxu0 0.0
  %5656 = vmatpush2.msra.mxu0 0.0
  %5657 = vmatprep.subr.mxu0 0.0
  %5658 = vmatpush2.msra.mxu0 0.0
  %5659 = vmatprep.subr.mxu0 0.0
  %5660 = vmatpush2.msra.mxu0 0.0
  %5661 = vmatprep.mubr.f32.mxu0 0.0
  %5662 = vmatmul.mubr.f32.gmra.mxu0 %v5595
  %v5663 = vpop.f32.mrf.mxu0
  %v5664 = vadd.f32 0.0, %v5663
  %v5665 = vpop.f32.mrf.mxu0
  %5666 = vdwg.mxu0
  %vm5667 = vcmask 254976
  %v5668 = vsel %vm5667, %v5664, 0.0
  %5669 = vadd.xlane.f32.xlu0 %v5668
  %v5670 = vpop.xlane.xlu0 %5669
  %v5671 = vmul.f32 %v5670, %v401
  %v5672 = vsub.f32 %v5664, %v5671
  %v5673 = vmul.f32 %v5672, %v5672
  %v5674 = vsel %vm5667, %v5673, 0.0
  %5675 = vadd.xlane.f32.xlu0 %v5674
  %v5676 = vpop.xlane.xlu0 %5675
  %v5677 = vmul.f32 %v5676, %v401
  %v5678 = vadd.f32 %v5677, 1e-05
  %v5679 = vrsqrt.pop %v5678
  %v5680 = vmul.f32 %v5672, %v5679
  %v5681 = vld [vmem:[%s69] sm:$0x1]
  %v5682 = vld [vmem:[%s71] sm:$0x1]
  %v5683 = vld [vmem:[%s73] sm:$0xff]
  %v5684 = vld [vmem:[%s73 + $0x8] sm:$0xff]
  %v5685 = vld [vmem:[%s73 + $0x10] sm:$0xff]
  %v5686 = vld [vmem:[%s73 + $0x18] sm:$0xff]
  %v5687 = vld [vmem:[%s75] sm:$0x1]
  %v5688 = vld [vmem:[%s77] sm:$0xff]
  %v5689 = vld [vmem:[%s77 + $0x8] sm:$0xff]
  %v5690 = vld [vmem:[%s79] sm:$0x1]
  %v5691 = vld [vmem:[%s81] sm:$0xff]
  %v5692 = vld [vmem:[#allocation2] sm:$0x1]
  %v5694 = vlaneseq
  %v5695 = vshrl.u32 %v5694, 7
  %v5696 = vsub.s32 0, %v5695
  %v5697 = vrot.slane %v5681, %v5696
  %v5699 = vmul.f32 %v5680, %v5697
  %v5701 = vlaneseq
  %v5702 = vshrl.u32 %v5701, 7
  %v5703 = vsub.s32 0, %v5702
  %v5704 = vrot.slane %v5682, %v5703
  %v5706 = vadd.f32 %v5699, %v5704
  %v5708 = vlaneseq
  %v5709 = vshrl.u32 %v5708, 7
  %v5710 = vsub.s32 0, %v5709
  %v5711 = vrot.slane %v5687, %v5710
  %v5714 = vsel %vm394, %v5706, 0
  %5716 = vmatprep.subr.mxu0 0.0
  %5717 = vmatpush1.msra.mxu0 0.0
  %5718 = vmatprep.subr.mxu0 0.0
  %5719 = vmatpush1.msra.mxu0 0.0
  %5720 = vmatprep.subr.mxu0 0.0
  %5721 = vmatpush1.msra.mxu0 0.0
  %5722 = vmatprep.subr.mxu0 0.0
  %5723 = vmatpush1.msra.mxu0 0.0
  %5724 = vmatprep.subr.mxu0 0.0
  %5725 = vmatpush1.msra.mxu0 0.0
  %5726 = vmatprep.subr.mxu0 0.0
  %5727 = vmatpush1.msra.mxu0 0.0
  %5728 = vmatprep.subr.mxu0 0.0
  %5729 = vmatpush1.msra.mxu0 0.0
  %5730 = vmatprep.subr.mxu0 0.0
  %5731 = vmatpush1.msra.mxu0 0.0
  %5732 = vmatprep.subr.mxu0 0.0
  %5733 = vmatpush1.msra.mxu0 0.0
  %5734 = vmatprep.subr.mxu0 0.0
  %5735 = vmatpush1.msra.mxu0 0.0
  %5736 = vmatprep.subr.mxu0 0.0
  %5737 = vmatpush1.msra.mxu0 0.0
  %5738 = vmatprep.subr.mxu0 0.0
  %5739 = vmatpush1.msra.mxu0 0.0
  %5740 = vmatprep.subr.mxu0 0.0
  %5741 = vmatpush1.msra.mxu0 %v5686
  %5742 = vmatprep.subr.mxu0 0.0
  %5743 = vmatpush1.msra.mxu0 %v5685
  %5744 = vmatprep.subr.mxu0 0.0
  %5745 = vmatpush1.msra.mxu0 %v5684
  %5746 = vmatprep.subr.mxu0 0.0
  %5747 = vmatpush1.msra.mxu0 %v5683
  %5748 = vmatprep.subr.mxu0 0.0
  %5749 = vmatpush2.msra.mxu0 0.0
  %5750 = vmatprep.subr.mxu0 0.0
  %5751 = vmatpush2.msra.mxu0 0.0
  %5752 = vmatprep.subr.mxu0 0.0
  %5753 = vmatpush2.msra.mxu0 0.0
  %5754 = vmatprep.subr.mxu0 0.0
  %5755 = vmatpush2.msra.mxu0 0.0
  %5756 = vmatprep.subr.mxu0 0.0
  %5757 = vmatpush2.msra.mxu0 0.0
  %5758 = vmatprep.subr.mxu0 0.0
  %5759 = vmatpush2.msra.mxu0 0.0
  %5760 = vmatprep.subr.mxu0 0.0
  %5761 = vmatpush2.msra.mxu0 0.0
  %5762 = vmatprep.subr.mxu0 0.0
  %5763 = vmatpush2.msra.mxu0 0.0
  %5764 = vmatprep.subr.mxu0 0.0
  %5765 = vmatpush2.msra.mxu0 0.0
  %5766 = vmatprep.subr.mxu0 0.0
  %5767 = vmatpush2.msra.mxu0 0.0
  %5768 = vmatprep.subr.mxu0 0.0
  %5769 = vmatpush2.msra.mxu0 0.0
  %5770 = vmatprep.subr.mxu0 0.0
  %5771 = vmatpush2.msra.mxu0 0.0
  %5772 = vmatprep.subr.mxu0 0.0
  %5773 = vmatpush2.msra.mxu0 0.0
  %5774 = vmatprep.subr.mxu0 0.0
  %5775 = vmatpush2.msra.mxu0 0.0
  %5776 = vmatprep.subr.mxu0 0.0
  %5777 = vmatpush2.msra.mxu0 0.0
  %5778 = vmatprep.subr.mxu0 0.0
  %5779 = vmatpush2.msra.mxu0 0.0
  %5780 = vmatprep.mubr.f32.mxu0 0.0
  %5781 = vmatmul.mubr.f32.gmra.mxu0 %v5714
  %v5782 = vpop.f32.mrf.mxu0
  %v5783 = vadd.f32 %v5711, %v5782
  %v5784 = vpop.f32.mrf.mxu0
  %5785 = vdwg.mxu0
  %v5786 = vmul.f32 %v5783, 0.5
  %v5787 = vmul.f32 %v5783, 0.044715
  %v5788 = vmul.f32 %v5787, %v5783
  %v5789 = vmul.f32 %v5788, %v5783
  %v5790 = vadd.f32 %v5783, %v5789
  %v5791 = vmul.f32 %v5790, 0.7978846
  %v5792 = vtanh.pop %v5791
  %v5793 = vadd.f32 %v5792, 1.0
  %v5794 = vmul.f32 %v5786, %v5793
  %v5796 = vlaneseq
  %v5797 = vshrl.u32 %v5796, 7
  %v5798 = vsub.s32 0, %v5797
  %v5799 = vrot.slane %v5690, %v5798
  %v5802 = vsel %vm1865, %v5794, 0
  %5804 = vmatprep.subr.mxu0 0.0
  %5805 = vmatpush1.msra.mxu0 0.0
  %5806 = vmatprep.subr.mxu0 0.0
  %5807 = vmatpush1.msra.mxu0 0.0
  %5808 = vmatprep.subr.mxu0 0.0
  %5809 = vmatpush1.msra.mxu0 0.0
  %5810 = vmatprep.subr.mxu0 0.0
  %5811 = vmatpush1.msra.mxu0 0.0
  %5812 = vmatprep.subr.mxu0 0.0
  %5813 = vmatpush1.msra.mxu0 0.0
  %5814 = vmatprep.subr.mxu0 0.0
  %5815 = vmatpush1.msra.mxu0 0.0
  %5816 = vmatprep.subr.mxu0 0.0
  %5817 = vmatpush1.msra.mxu0 0.0
  %5818 = vmatprep.subr.mxu0 0.0
  %5819 = vmatpush1.msra.mxu0 0.0
  %5820 = vmatprep.subr.mxu0 0.0
  %5821 = vmatpush1.msra.mxu0 0.0
  %5822 = vmatprep.subr.mxu0 0.0
  %5823 = vmatpush1.msra.mxu0 0.0
  %5824 = vmatprep.subr.mxu0 0.0
  %5825 = vmatpush1.msra.mxu0 0.0
  %5826 = vmatprep.subr.mxu0 0.0
  %5827 = vmatpush1.msra.mxu0 0.0
  %5828 = vmatprep.subr.mxu0 0.0
  %5829 = vmatpush1.msra.mxu0 0.0
  %5830 = vmatprep.subr.mxu0 0.0
  %5831 = vmatpush1.msra.mxu0 0.0
  %5832 = vmatprep.subr.mxu0 0.0
  %5833 = vmatpush1.msra.mxu0 %v5689
  %5834 = vmatprep.subr.mxu0 0.0
  %5835 = vmatpush1.msra.mxu0 %v5688
  %5836 = vmatprep.subr.mxu0 0.0
  %5837 = vmatpush2.msra.mxu0 0.0
  %5838 = vmatprep.subr.mxu0 0.0
  %5839 = vmatpush2.msra.mxu0 0.0
  %5840 = vmatprep.subr.mxu0 0.0
  %5841 = vmatpush2.msra.mxu0 0.0
  %5842 = vmatprep.subr.mxu0 0.0
  %5843 = vmatpush2.msra.mxu0 0.0
  %5844 = vmatprep.subr.mxu0 0.0
  %5845 = vmatpush2.msra.mxu0 0.0
  %5846 = vmatprep.subr.mxu0 0.0
  %5847 = vmatpush2.msra.mxu0 0.0
  %5848 = vmatprep.subr.mxu0 0.0
  %5849 = vmatpush2.msra.mxu0 0.0
  %5850 = vmatprep.subr.mxu0 0.0
  %5851 = vmatpush2.msra.mxu0 0.0
  %5852 = vmatprep.subr.mxu0 0.0
  %5853 = vmatpush2.msra.mxu0 0.0
  %5854 = vmatprep.subr.mxu0 0.0
  %5855 = vmatpush2.msra.mxu0 0.0
  %5856 = vmatprep.subr.mxu0 0.0
  %5857 = vmatpush2.msra.mxu0 0.0
  %5858 = vmatprep.subr.mxu0 0.0
  %5859 = vmatpush2.msra.mxu0 0.0
  %5860 = vmatprep.subr.mxu0 0.0
  %5861 = vmatpush2.msra.mxu0 0.0
  %5862 = vmatprep.subr.mxu0 0.0
  %5863 = vmatpush2.msra.mxu0 0.0
  %5864 = vmatprep.subr.mxu0 0.0
  %5865 = vmatpush2.msra.mxu0 0.0
  %5866 = vmatprep.subr.mxu0 0.0
  %5867 = vmatpush2.msra.mxu0 0.0
  %5868 = vmatprep.mubr.f32.mxu0 0.0
  %5869 = vmatmul.mubr.f32.gmra.mxu0 %v5802
  %v5870 = vpop.f32.mrf.mxu0
  %v5871 = vadd.f32 %v5799, %v5870
  %v5872 = vpop.f32.mrf.mxu0
  %5873 = vdwg.mxu0
  %v5874 = vmul.f32 %v5871, 0.5
  %v5875 = vmul.f32 %v5871, 0.044715
  %v5876 = vmul.f32 %v5875, %v5871
  %v5877 = vmul.f32 %v5876, %v5871
  %v5878 = vadd.f32 %v5871, %v5877
  %v5879 = vmul.f32 %v5878, 0.7978846
  %v5880 = vtanh.pop %v5879
  %v5881 = vadd.f32 %v5880, 1.0
  %v5882 = vmul.f32 %v5874, %v5881
  %v5884 = vlaneseq
  %v5885 = vshrl.u32 %v5884, 7
  %v5886 = vsub.s32 0, %v5885
  %v5887 = vrot.slane %v5692, %v5886
  %v5890 = vsel %vm541, %v5882, 0
  %5892 = vmatprep.subr.mxu0 0.0
  %5893 = vmatpush1.msra.mxu0 0.0
  %5894 = vmatprep.subr.mxu0 0.0
  %5895 = vmatpush1.msra.mxu0 0.0
  %5896 = vmatprep.subr.mxu0 0.0
  %5897 = vmatpush1.msra.mxu0 0.0
  %5898 = vmatprep.subr.mxu0 0.0
  %5899 = vmatpush1.msra.mxu0 0.0
  %5900 = vmatprep.subr.mxu0 0.0
  %5901 = vmatpush1.msra.mxu0 0.0
  %5902 = vmatprep.subr.mxu0 0.0
  %5903 = vmatpush1.msra.mxu0 0.0
  %5904 = vmatprep.subr.mxu0 0.0
  %5905 = vmatpush1.msra.mxu0 0.0
  %5906 = vmatprep.subr.mxu0 0.0
  %5907 = vmatpush1.msra.mxu0 0.0
  %5908 = vmatprep.subr.mxu0 0.0
  %5909 = vmatpush1.msra.mxu0 0.0
  %5910 = vmatprep.subr.mxu0 0.0
  %5911 = vmatpush1.msra.mxu0 0.0
  %5912 = vmatprep.subr.mxu0 0.0
  %5913 = vmatpush1.msra.mxu0 0.0
  %5914 = vmatprep.subr.mxu0 0.0
  %5915 = vmatpush1.msra.mxu0 0.0
  %5916 = vmatprep.subr.mxu0 0.0
  %5917 = vmatpush1.msra.mxu0 0.0
  %5918 = vmatprep.subr.mxu0 0.0
  %5919 = vmatpush1.msra.mxu0 0.0
  %5920 = vmatprep.subr.mxu0 0.0
  %5921 = vmatpush1.msra.mxu0 0.0
  %5922 = vmatprep.subr.mxu0 0.0
  %5923 = vmatpush1.msra.mxu0 %v5691
  %5924 = vmatprep.subr.mxu0 0.0
  %5925 = vmatpush2.msra.mxu0 0.0
  %5926 = vmatprep.subr.mxu0 0.0
  %5927 = vmatpush2.msra.mxu0 0.0
  %5928 = vmatprep.subr.mxu0 0.0
  %5929 = vmatpush2.msra.mxu0 0.0
  %5930 = vmatprep.subr.mxu0 0.0
  %5931 = vmatpush2.msra.mxu0 0.0
  %5932 = vmatprep.subr.mxu0 0.0
  %5933 = vmatpush2.msra.mxu0 0.0
  %5934 = vmatprep.subr.mxu0 0.0
  %5935 = vmatpush2.msra.mxu0 0.0
  %5936 = vmatprep.subr.mxu0 0.0
  %5937 = vmatpush2.msra.mxu0 0.0
  %5938 = vmatprep.subr.mxu0 0.0
  %5939 = vmatpush2.msra.mxu0 0.0
  %5940 = vmatprep.subr.mxu0 0.0
  %5941 = vmatpush2.msra.mxu0 0.0
  %5942 = vmatprep.subr.mxu0 0.0
  %5943 = vmatpush2.msra.mxu0 0.0
  %5944 = vmatprep.subr.mxu0 0.0
  %5945 = vmatpush2.msra.mxu0 0.0
  %5946 = vmatprep.subr.mxu0 0.0
  %5947 = vmatpush2.msra.mxu0 0.0
  %5948 = vmatprep.subr.mxu0 0.0
  %5949 = vmatpush2.msra.mxu0 0.0
  %5950 = vmatprep.subr.mxu0 0.0
  %5951 = vmatpush2.msra.mxu0 0.0
  %5952 = vmatprep.subr.mxu0 0.0
  %5953 = vmatpush2.msra.mxu0 0.0
  %5954 = vmatprep.subr.mxu0 0.0
  %5955 = vmatpush2.msra.mxu0 0.0
  %5956 = vmatprep.mubr.f32.mxu0 0.0
  %5957 = vmatmul.mubr.f32.gmra.mxu0 %v5890
  %v5958 = vpop.f32.mrf.mxu0
  %v5959 = vadd.f32 %v5887, %v5958
  %v5960 = vpop.f32.mrf.mxu0
  %5961 = vdwg.mxu0
  %v5962 = vld [vmem:[%s85] sm:$0xff]
  %v5963 = vld [vmem:[%s85 + $0x8] sm:$0xff]
  %v5964 = vld [vmem:[%s85 + $0x10] sm:$0xff]
  %v5965 = vld [vmem:[%s85 + $0x18] sm:$0xff]
  %v5966 = vld [vmem:[%s87] sm:$0x1]
  %v5967 = vld [vmem:[%s89] sm:$0xff]
  %v5968 = vld [vmem:[%s89 + $0x8] sm:$0xff]
  %v5969 = vld [vmem:[%s89 + $0x10] sm:$0xff]
  %v5970 = vld [vmem:[%s91] sm:$0x1]
  %v5972 = vlaneseq
  %v5973 = vshrl.u32 %v5972, 7
  %v5974 = vsub.s32 0, %v5973
  %v5975 = vrot.slane %v5966, %v5974
  %v5978 = vsel %vm394, %v5680, 0
  %5980 = vmatprep.subr.mxu0 0.0
  %5981 = vmatpush1.msra.mxu0 0.0
  %5982 = vmatprep.subr.mxu0 0.0
  %5983 = vmatpush1.msra.mxu0 0.0
  %5984 = vmatprep.subr.mxu0 0.0
  %5985 = vmatpush1.msra.mxu0 0.0
  %5986 = vmatprep.subr.mxu0 0.0
  %5987 = vmatpush1.msra.mxu0 0.0
  %5988 = vmatprep.subr.mxu0 0.0
  %5989 = vmatpush1.msra.mxu0 0.0
  %5990 = vmatprep.subr.mxu0 0.0
  %5991 = vmatpush1.msra.mxu0 0.0
  %5992 = vmatprep.subr.mxu0 0.0
  %5993 = vmatpush1.msra.mxu0 0.0
  %5994 = vmatprep.subr.mxu0 0.0
  %5995 = vmatpush1.msra.mxu0 0.0
  %5996 = vmatprep.subr.mxu0 0.0
  %5997 = vmatpush1.msra.mxu0 0.0
  %5998 = vmatprep.subr.mxu0 0.0
  %5999 = vmatpush1.msra.mxu0 0.0
  %6000 = vmatprep.subr.mxu0 0.0
  %6001 = vmatpush1.msra.mxu0 0.0
  %6002 = vmatprep.subr.mxu0 0.0
  %6003 = vmatpush1.msra.mxu0 0.0
  %6004 = vmatprep.subr.mxu0 0.0
  %6005 = vmatpush1.msra.mxu0 %v5965
  %6006 = vmatprep.subr.mxu0 0.0
  %6007 = vmatpush1.msra.mxu0 %v5964
  %6008 = vmatprep.subr.mxu0 0.0
  %6009 = vmatpush1.msra.mxu0 %v5963
  %6010 = vmatprep.subr.mxu0 0.0
  %6011 = vmatpush1.msra.mxu0 %v5962
  %6012 = vmatprep.subr.mxu0 0.0
  %6013 = vmatpush2.msra.mxu0 0.0
  %6014 = vmatprep.subr.mxu0 0.0
  %6015 = vmatpush2.msra.mxu0 0.0
  %6016 = vmatprep.subr.mxu0 0.0
  %6017 = vmatpush2.msra.mxu0 0.0
  %6018 = vmatprep.subr.mxu0 0.0
  %6019 = vmatpush2.msra.mxu0 0.0
  %6020 = vmatprep.subr.mxu0 0.0
  %6021 = vmatpush2.msra.mxu0 0.0
  %6022 = vmatprep.subr.mxu0 0.0
  %6023 = vmatpush2.msra.mxu0 0.0
  %6024 = vmatprep.subr.mxu0 0.0
  %6025 = vmatpush2.msra.mxu0 0.0
  %6026 = vmatprep.subr.mxu0 0.0
  %6027 = vmatpush2.msra.mxu0 0.0
  %6028 = vmatprep.subr.mxu0 0.0
  %6029 = vmatpush2.msra.mxu0 0.0
  %6030 = vmatprep.subr.mxu0 0.0
  %6031 = vmatpush2.msra.mxu0 0.0
  %6032 = vmatprep.subr.mxu0 0.0
  %6033 = vmatpush2.msra.mxu0 0.0
  %6034 = vmatprep.subr.mxu0 0.0
  %6035 = vmatpush2.msra.mxu0 0.0
  %6036 = vmatprep.subr.mxu0 0.0
  %6037 = vmatpush2.msra.mxu0 0.0
  %6038 = vmatprep.subr.mxu0 0.0
  %6039 = vmatpush2.msra.mxu0 0.0
  %6040 = vmatprep.subr.mxu0 0.0
  %6041 = vmatpush2.msra.mxu0 0.0
  %6042 = vmatprep.subr.mxu0 0.0
  %6043 = vmatpush2.msra.mxu0 0.0
  %6044 = vmatprep.mubr.f32.mxu0 0.0
  %6045 = vmatmul.mubr.f32.gmra.mxu0 %v5978
  %v6046 = vpop.f32.mrf.mxu0
  %v6047 = vadd.f32 %v5975, %v6046
  %v6048 = vpop.f32.mrf.mxu0
  %6049 = vdwg.mxu0
  %v6050 = vmul.f32 %v6047, 0.5
  %v6051 = vmul.f32 %v6047, 0.044715
  %v6052 = vmul.f32 %v6051, %v6047
  %v6053 = vmul.f32 %v6052, %v6047
  %v6054 = vadd.f32 %v6047, %v6053
  %v6055 = vmul.f32 %v6054, 0.7978846
  %v6056 = vtanh.pop %v6055
  %v6057 = vadd.f32 %v6056, 1.0
  %v6058 = vmul.f32 %v6050, %v6057
  %v6060 = vlaneseq
  %v6061 = vshrl.u32 %v6060, 7
  %v6062 = vsub.s32 0, %v6061
  %v6063 = vrot.slane %v5970, %v6062
  %v6066 = vsel %vm1867, %v6058, 0
  %6068 = vmatprep.subr.mxu0 0.0
  %6069 = vmatpush1.msra.mxu0 0.0
  %6070 = vmatprep.subr.mxu0 0.0
  %6071 = vmatpush1.msra.mxu0 0.0
  %6072 = vmatprep.subr.mxu0 0.0
  %6073 = vmatpush1.msra.mxu0 0.0
  %6074 = vmatprep.subr.mxu0 0.0
  %6075 = vmatpush1.msra.mxu0 0.0
  %6076 = vmatprep.subr.mxu0 0.0
  %6077 = vmatpush1.msra.mxu0 0.0
  %6078 = vmatprep.subr.mxu0 0.0
  %6079 = vmatpush1.msra.mxu0 0.0
  %6080 = vmatprep.subr.mxu0 0.0
  %6081 = vmatpush1.msra.mxu0 0.0
  %6082 = vmatprep.subr.mxu0 0.0
  %6083 = vmatpush1.msra.mxu0 0.0
  %6084 = vmatprep.subr.mxu0 0.0
  %6085 = vmatpush1.msra.mxu0 0.0
  %6086 = vmatprep.subr.mxu0 0.0
  %6087 = vmatpush1.msra.mxu0 0.0
  %6088 = vmatprep.subr.mxu0 0.0
  %6089 = vmatpush1.msra.mxu0 0.0
  %6090 = vmatprep.subr.mxu0 0.0
  %6091 = vmatpush1.msra.mxu0 0.0
  %6092 = vmatprep.subr.mxu0 0.0
  %6093 = vmatpush1.msra.mxu0 0.0
  %6094 = vmatprep.subr.mxu0 0.0
  %6095 = vmatpush1.msra.mxu0 %v5969
  %6096 = vmatprep.subr.mxu0 0.0
  %6097 = vmatpush1.msra.mxu0 %v5968
  %6098 = vmatprep.subr.mxu0 0.0
  %6099 = vmatpush1.msra.mxu0 %v5967
  %6100 = vmatprep.subr.mxu0 0.0
  %6101 = vmatpush2.msra.mxu0 0.0
  %6102 = vmatprep.subr.mxu0 0.0
  %6103 = vmatpush2.msra.mxu0 0.0
  %6104 = vmatprep.subr.mxu0 0.0
  %6105 = vmatpush2.msra.mxu0 0.0
  %6106 = vmatprep.subr.mxu0 0.0
  %6107 = vmatpush2.msra.mxu0 0.0
  %6108 = vmatprep.subr.mxu0 0.0
  %6109 = vmatpush2.msra.mxu0 0.0
  %6110 = vmatprep.subr.mxu0 0.0
  %6111 = vmatpush2.msra.mxu0 0.0
  %6112 = vmatprep.subr.mxu0 0.0
  %6113 = vmatpush2.msra.mxu0 0.0
  %6114 = vmatprep.subr.mxu0 0.0
  %6115 = vmatpush2.msra.mxu0 0.0
  %6116 = vmatprep.subr.mxu0 0.0
  %6117 = vmatpush2.msra.mxu0 0.0
  %6118 = vmatprep.subr.mxu0 0.0
  %6119 = vmatpush2.msra.mxu0 0.0
  %6120 = vmatprep.subr.mxu0 0.0
  %6121 = vmatpush2.msra.mxu0 0.0
  %6122 = vmatprep.subr.mxu0 0.0
  %6123 = vmatpush2.msra.mxu0 0.0
  %6124 = vmatprep.subr.mxu0 0.0
  %6125 = vmatpush2.msra.mxu0 0.0
  %6126 = vmatprep.subr.mxu0 0.0
  %6127 = vmatpush2.msra.mxu0 0.0
  %6128 = vmatprep.subr.mxu0 0.0
  %6129 = vmatpush2.msra.mxu0 0.0
  %6130 = vmatprep.subr.mxu0 0.0
  %6131 = vmatpush2.msra.mxu0 0.0
  %6132 = vmatprep.mubr.f32.mxu0 0.0
  %6133 = vmatmul.mubr.f32.gmra.mxu0 %v6066
  %v6134 = vpop.f32.mrf.mxu0
  %v6135 = vadd.f32 %v6063, %v6134
  %v6136 = vpop.f32.mrf.mxu0
  %6137 = vdwg.mxu0
  %vm6138 = vcmp.eq.s32.totalorder %v5586, 0
  %vm6139 = vcmp.eq.s32.totalorder %v5586, 1
  %v6140 = vsub.f32 0.0, %v6135
  %v6141 = vmul.f32 %v6140, 1.442695
  %v6142 = vpow.pop %v6141
  %v6143 = vadd.f32 %v6142, 1.0
  %v6144 = vrcp.pop %v6143
  %v6145 = vmul.f32 1.0, %v6144
  %vm6146 = vcmp.gt.f32.partialorder %v6135, 20.0
  %v6147 = vmax.f32 %v6135, 0.0
  %v6148 = vand.u32 2147483647, %v6135
  %v6149 = vsub.f32 0.0, %v6148
  %v6150 = vmul.f32 %v6149, 1.442695
  %v6151 = vpow.pop %v6150
  %v6152 = vadd.f32 %v6151, 1.0
  %v6153 = vlog2.pop %v6152
  %v6154 = vmul.f32 %v6153, 0.6931472
  %v6155 = vadd.f32 %v6147, %v6154
  %v6156 = vsel %vm6146, %v6135, %v6155
  %v6157 = vsel %vm6139, %v6145, %v6156
  %6159 = vset.pattern.permute.xlu0 0
  %6160 = vperm.xlu0 %6159, %v5959
  %v6161 = vpop.permute.xlu0 %6160
  %v6163 = vsel %vm6138, %v6161, %v6157
  %vm6164 = vcmask 25600
  %6165 = vst.msk [vmem:[%s93] sm:$0x3] %vm6164, %v6163
  // Predicated region
  $region186: #{quantum_transformer_forward.1} parent=0 // pred_check
    _
  $region187: #{quantum_transformer_forward.1} parent=0 // pred_check_branch
    %6167 = sbr.rel (0) target = $region189
  $region188: #{quantum_transformer_forward.1} parent=0 // pred_region
    _
  $region189: #{quantum_transformer_forward.1} parent=0 // pred_fallthru
    _
  // Predicated region
  $region190: #{quantum_transformer_forward.1} parent=0 // pred_check
    _
  $region191: #{quantum_transformer_forward.1} parent=0 // pred_check_branch
    %6169 = sbr.rel (0) target = $region193
  $region192: #{quantum_transformer_forward.1} parent=0 // pred_region
    _
  $region193: #{quantum_transformer_forward.1} parent=0 // pred_fallthru
    _

</llo_original>
